<compile_context>
chip_gen: v6e
topology: v6e:2x2x1
jax: 0.10.0
libtpu: 0.0.40
codegen_flags: <defaults>
</compile_context>

<pallas_src>
import functools

import jax
import jax.numpy as jnp
from jax.experimental import pallas as pl
from jax.experimental.pallas import tpu as pltpu


# ----------------------------------------------------------------------------
# Helpers
# ----------------------------------------------------------------------------
def _round_up(x, m):
    return (x + m - 1) // m * m


def _cdiv(a, b):
    return (a + b - 1) // b


def _derive_vmem_limit():
    # ~3/4 of per-core VMEM: ~96 MiB on 128 MiB chips (v5e/v6e), ~48 MiB on v7x.
    try:
        cap = pltpu.get_tpu_info().vmem_capacity_bytes
    except Exception:
        cap = 64 * 1024 * 1024
    return int(cap * 3 // 4)


_VMEM_LIMIT = _derive_vmem_limit()
_NEG_BIG = -1e30


def _const_spec(shape):
    # Weight / scale / shift: whole array, same block for every grid step.
    return pl.BlockSpec(shape, lambda *_: (0,) * len(shape))


# ----------------------------------------------------------------------------
# Kernel bodies
# ----------------------------------------------------------------------------
def _trunk_kernel(x_ref, w1_ref, s1_ref, b1_ref, w2_ref, s2_ref, b2_ref,
                  w3_ref, *out_refs, n_valid, tn, tpp, need_mask,
                  per_batch_w1, emit_pointfeat):
    """conv1(+BN+ReLU) -> conv2(+BN+ReLU) -> conv3 (raw, sign-folded weights)
    -> masked running max over the point axis.  Optionally also writes the
    64-wide conv1 activation (pointfeat)."""
    if emit_pointfeat:
        pf_ref, mx_ref = out_refs
    else:
        (mx_ref,) = out_refs
    p = pl.program_id(1)
    t = pl.program_id(2)

    @pl.when(t == 0)
    def _():
        mx_ref[...] = jnp.full(mx_ref.shape, -jnp.inf, dtype=mx_ref.dtype)

    w1 = w1_ref[0] if per_batch_w1 else w1_ref[...]
    h = jnp.dot(x_ref[0], w1, preferred_element_type=jnp.float32)
    h = jnp.maximum(h * s1_ref[...] + b1_ref[...], 0.0)
    h = h.astype(jnp.bfloat16)
    if emit_pointfeat:
        pf_ref[0] = h
    h = jnp.dot(h, w2_ref[...], preferred_element_type=jnp.float32)
    h = jnp.maximum(h * s2_ref[...] + b2_ref[...], 0.0)
    y = jnp.dot(h.astype(jnp.bfloat16), w3_ref[...],
                preferred_element_type=jnp.float32)
    if need_mask:
        row = (p * tpp + t) * tn + jax.lax.broadcasted_iota(jnp.int32, y.shape, 0)
        y = jnp.where(row < n_valid, y, -jnp.inf)
    mx_ref[0] = jnp.maximum(mx_ref[0], jnp.max(y, axis=0, keepdims=True))


def _stn_fc_kernel(raw_ref, s_pool_ref, b_pool_ref, w1_ref, s1_ref, b1_ref,
                   w2_ref, s2_ref, b2_ref, w3_ref, b3_ref, o_ref):
    """Combine partial maxima, apply the (commuted) BN3+ReLU, then the STN MLP
    fc1->fc2->fc3 (+identity folded into the fc3 bias)."""
    g = jnp.max(raw_ref[...], axis=1)                         # (B, 1024) f32
    g = jnp.maximum(g * s_pool_ref[...] + b_pool_ref[...], 0.0)
    h = jnp.dot(g.astype(jnp.bfloat16), w1_ref[...],
                preferred_element_type=jnp.float32)
    h = jnp.maximum(h * s1_ref[...] + b1_ref[...], 0.0)
    h = jnp.dot(h.astype(jnp.bfloat16), w2_ref[...],
                preferred_element_type=jnp.float32)
    h = jnp.maximum(h * s2_ref[...] + b2_ref[...], 0.0)
    y = jnp.dot(h.astype(jnp.bfloat16), w3_ref[...],
                preferred_element_type=jnp.float32)
    o_ref[...] = y + b3_ref[...]                              # (B, 9)


def _gproj_kernel(raw_ref, s_pool_ref, b_pool_ref, w_ref, o_ref):
    """Combine partial maxima, apply (commuted) BN3 (no ReLU), and project the
    global feature through W_head1[:1024] -> per-batch 512-wide head bias."""
    gf = jnp.max(raw_ref[...], axis=1)                        # (B, 1024) f32
    gf = gf * s_pool_ref[...] + b_pool_ref[...]
    o_ref[...] = jnp.dot(gf.astype(jnp.bfloat16), w_ref[...],
                         preferred_element_type=jnp.float32)  # (B, 512)


def _head_kernel(pf_ref, g_ref, w1_ref, s1_ref, b1_ref, w2_ref, s2_ref, b2_ref,
                 w3_ref, s3_ref, b3_ref, w4_ref, b4_ref, o_ref):
    """Fused dense head: conv1(64->512, +per-batch g)+BN+ReLU -> conv2(512->256)
    +BN+ReLU -> conv3(256->128)+BN+ReLU -> conv4(128->kp) + log_softmax."""
    h = jnp.dot(pf_ref[0], w1_ref[...], preferred_element_type=jnp.float32)
    h = jnp.maximum((h + g_ref[0]) * s1_ref[...] + b1_ref[...], 0.0)
    h = jnp.dot(h.astype(jnp.bfloat16), w2_ref[...],
                preferred_element_type=jnp.float32)
    h = jnp.maximum(h * s2_ref[...] + b2_ref[...], 0.0)
    h = jnp.dot(h.astype(jnp.bfloat16), w3_ref[...],
                preferred_element_type=jnp.float32)
    h = jnp.maximum(h * s3_ref[...] + b3_ref[...], 0.0)
    y = jnp.dot(h.astype(jnp.bfloat16), w4_ref[...],
                preferred_element_type=jnp.float32)
    y = y + b4_ref[...]                       # padded columns forced to -1e30
    m = jnp.max(y, axis=-1, keepdims=True)
    s = y - m
    y = s - jnp.log(jnp.sum(jnp.exp(s), axis=-1, keepdims=True))
    o_ref[0] = y.astype(o_ref.dtype)


# ----------------------------------------------------------------------------
# Deterministic parameter construction (synthetic weights, BN folded eval-mode)
# ----------------------------------------------------------------------------
def init_layer(key, c_in, c_out, with_bn=True):
    """Returns (w[K,N], scale[N], shift[N]) with conv bias + BN(eval) folded."""
    k1, k2, k3, k4, k5, k6 = jax.random.split(key, 6)
    w = 0.05 * jax.random.normal(k1, (c_in, c_out), jnp.float32)
    b = 0.05 * jax.random.normal(k2, (c_out,), jnp.float32)
    if with_bn:
        gamma = 1.0 + 0.1 * jax.random.normal(k3, (c_out,), jnp.float32)
        beta = 0.1 * jax.random.normal(k4, (c_out,), jnp.float32)
        mean = 0.1 * jax.random.normal(k5, (c_out,), jnp.float32)
        var = 1.0 + 0.1 * jnp.abs(jax.random.normal(k6, (c_out,), jnp.float32))
        scale = gamma / jnp.sqrt(var + 1e-5)
        shift = (b - mean) * scale + beta
    else:
        scale = jnp.ones((c_out,), jnp.float32)
        shift = b
    return w, scale, shift


def make_params(key, k_cls):
    keys = iter(jax.random.split(key, 16))
    lin = lambda ci, co, bn=True: init_layer(next(keys), ci, co, with_bn=bn)
    return {
        "feat": {
            "stn": {
                "conv1": lin(3, 64), "conv2": lin(64, 128), "conv3": lin(128, 1024),
                "fc1": lin(1024, 512), "fc2": lin(512, 256),
                "fc3": lin(256, 9, bn=False),
            },
            "conv1": lin(3, 64), "conv2": lin(64, 128), "conv3": lin(128, 1024),
        },
        "conv1": lin(1088, 512),
        "conv2": lin(512, 256),
        "conv3": lin(256, 128),
        "conv4": lin(128, k_cls, bn=False),
    }


def prepare_params(raw, k_cls):
    """Pre-cast / pre-reshape / pre-fold everything once (outside the fwd)."""
    def aff(s, b):
        c = s.shape[0]
        return (s.reshape(1, c).astype(jnp.float32),
                b.reshape(1, c).astype(jnp.float32))

    def std(p):
        w, s, b = p
        sr, br = aff(s, b)
        return (w.astype(jnp.bfloat16), sr, br)

    def pool(p):
        # Layer feeding a points-max pool: flip columns with negative BN scale
        # so the affine (+ReLU) commutes exactly with the max.
        w, s, b = p
        w = w * jnp.where(s >= 0, 1.0, -1.0)[None, :]
        sr, br = aff(jnp.abs(s), b)
        return (w.astype(jnp.bfloat16), sr, br)

    stn_raw = raw["feat"]["stn"]
    eye9 = jnp.eye(3, dtype=jnp.float32).reshape(9)
    stn = {
        "conv1": std(stn_raw["conv1"]),
        "conv2": std(stn_raw["conv2"]),
        "conv3": pool(stn_raw["conv3"]),
        "fc1": std(stn_raw["fc1"]),
        "fc2": std(stn_raw["fc2"]),
        "fc3_w": stn_raw["fc3"][0].astype(jnp.bfloat16),
        "fc3_b": (stn_raw["fc3"][2] + eye9).reshape(1, 9).astype(jnp.float32),
    }
    feat = {
        "conv1_w": raw["feat"]["conv1"][0].astype(jnp.float32),  # f32, folded with trans
        "conv1_aff": aff(raw["feat"]["conv1"][1], raw["feat"]["conv1"][2]),
        "conv2": std(raw["feat"]["conv2"]),
        "conv3": pool(raw["feat"]["conv3"]),
    }
    w1, s1, b1 = raw["conv1"]                      # 1088 -> 512
    s1r, b1r = aff(s1, b1)
    w4, _, bias4 = raw["conv4"]                    # 128 -> k (no BN)
    kp = _round_up(k_cls, 128)                     # lane-dense final output
    w4p = jnp.zeros((128, kp), jnp.float32).at[:, :k_cls].set(w4)
    b4p = jnp.full((1, kp), _NEG_BIG, jnp.float32).at[0, :k_cls].set(bias4)
    head = {
        "w_glob": w1[:1024].astype(jnp.bfloat16),  # global feature part of concat
        "w_pt": w1[1024:].astype(jnp.bfloat16),    # pointfeat part of concat
        "s1": s1r, "b1": b1r,
        "conv2": std(raw["conv2"]),
        "conv3": std(raw["conv3"]),
        "w4": w4p.astype(jnp.bfloat16), "b4": b4p,
    }
    return {"stn": stn, "feat": feat, "head": head}


# ----------------------------------------------------------------------------
# Forward pass (points-major layout: x is (B, N, 3))
# ----------------------------------------------------------------------------
def pointnet_dense_cls_forward(x_bnc, prep, *, k_cls, tn_max=512):
    B, N, _ = x_bnc.shape
    tn = min(tn_max, _round_up(N, 8))
    n_tiles = _cdiv(N, tn)
    n_par = 2 if n_tiles >= 2 else 1          # batch-independent core split
    tpp = _cdiv(n_tiles, n_par)               # row tiles per partition
    n_pad = n_par * tpp * tn
    need_mask = (n_pad != N)

    xb = x_bnc.astype(jnp.bfloat16)
    if n_pad != N:
        xb = jnp.pad(xb, ((0, 0), (0, n_pad - N), (0, 0)))  # pad ONCE

    sp, fp, hp = prep["stn"], prep["feat"], prep["head"]

    trunk_params = pltpu.CompilerParams(
        dimension_semantics=("parallel", "parallel", "arbitrary"),
        vmem_limit_bytes=_VMEM_LIMIT)
    small_params = pltpu.CompilerParams(vmem_limit_bytes=_VMEM_LIMIT)

    x_spec = pl.BlockSpec((1, tn, 3), lambda b, p, t: (b, p * tpp + t, 0))
    mx_spec = pl.BlockSpec((1, 1, 1024), lambda b, p, t: (b * n_par + p, 0, 0))

    # ---- STN trunk: conv1 -> conv2 -> conv3(raw) + masked max over points ---
    raw_stn = pl.pallas_call(
        functools.partial(_trunk_kernel, n_valid=N, tn=tn, tpp=tpp,
                          need_mask=need_mask, per_batch_w1=False,
                          emit_pointfeat=False),
        grid=(B, n_par, tpp),
        in_specs=[
            x_spec,
            _const_spec((3, 64)), _const_spec((1, 64)), _const_spec((1, 64)),
            _const_spec((64, 128)), _const_spec((1, 128)), _const_spec((1, 128)),
            _const_spec((128, 1024)),
        ],
        out_specs=mx_spec,
        out_shape=jax.ShapeDtypeStruct((B * n_par, 1, 1024), jnp.float32),
        compiler_params=trunk_params,
    )(xb, *sp["conv1"], *sp["conv2"], sp["conv3"][0])

    # ---- STN MLP: combine partial maxima + BN3/ReLU + fc1/fc2/fc3(+I) -------
    trans9 = pl.pallas_call(
        _stn_fc_kernel,
        out_shape=jax.ShapeDtypeStruct((B, 9), jnp.float32),
        compiler_params=small_params,
    )(raw_stn.reshape(B, n_par, 1024), sp["conv3"][1], sp["conv3"][2],
      *sp["fc1"], *sp["fc2"], sp["fc3_w"], sp["fc3_b"])
    trans = trans9.reshape(B, 3, 3)

    # ---- feat trunk: bmm(x, trans) folded into conv1 (per-batch weights) ----
    w1_fold = jnp.einsum("bij,jk->bik", trans, fp["conv1_w"]).astype(jnp.bfloat16)
    s1f, b1f = fp["conv1_aff"]
    pointfeat, raw_feat = pl.pallas_call(
        functools.partial(_trunk_kernel, n_valid=N, tn=tn, tpp=tpp,
                          need_mask=need_mask, per_batch_w1=True,
                          emit_pointfeat=True),
        grid=(B, n_par, tpp),
        in_specs=[
            x_spec,
            pl.BlockSpec((1, 3, 64), lambda b, p, t: (b, 0, 0)),
            _const_spec((1, 64)), _const_spec((1, 64)),
            _const_spec((64, 128)), _const_spec((1, 128)), _const_spec((1, 128)),
            _const_spec((128, 1024)),
        ],
        out_specs=(
            pl.BlockSpec((1, tn, 64), lambda b, p, t: (b, p * tpp + t, 0)),
            mx_spec,
        ),
        out_shape=(
            jax.ShapeDtypeStruct((B, n_pad, 64), jnp.bfloat16),
            jax.ShapeDtypeStruct((B * n_par, 1, 1024), jnp.float32),
        ),
        compiler_params=trunk_params,
    )(xb, w1_fold, s1f, b1f, *fp["conv2"], fp["conv3"][0])

    # ---- global feature -> per-batch 512-wide head bias (concat never built)
    g = pl.pallas_call(
        _gproj_kernel,
        out_shape=jax.ShapeDtypeStruct((B, 512), jnp.float32),
        compiler_params=small_params,
    )(raw_feat.reshape(B, n_par, 1024), fp["conv3"][1], fp["conv3"][2],
      hp["w_glob"])

    # ---- fused dense head: 64 -> 512 -> 256 -> 128 -> k (+log_softmax) ------
    kp = hp["w4"].shape[1]
    logp = pl.pallas_call(
        _head_kernel,
        grid=(B, n_pad // tn),
        in_specs=[
            pl.BlockSpec((1, tn, 64), lambda b, t: (b, t, 0)),
            pl.BlockSpec((1, 1, 512), lambda b, t: (b, 0, 0)),
            _const_spec((64, 512)), _const_spec((1, 512)), _const_spec((1, 512)),
            _const_spec((512, 256)), _const_spec((1, 256)), _const_spec((1, 256)),
            _const_spec((256, 128)), _const_spec((1, 128)), _const_spec((1, 128)),
            _const_spec((128, kp)), _const_spec((1, kp)),
        ],
        out_specs=pl.BlockSpec((1, tn, kp), lambda b, t: (b, t, 0)),
        out_shape=jax.ShapeDtypeStruct((B, n_pad, kp), jnp.float32),
        compiler_params=pltpu.CompilerParams(
            dimension_semantics=("parallel", "parallel"),
            vmem_limit_bytes=_VMEM_LIMIT),
    )(pointfeat, g.reshape(B, 1, 512), hp["w_pt"], hp["s1"], hp["b1"],
      *hp["conv2"], *hp["conv3"], hp["w4"], hp["b4"])

    return logp[:, :N, :k_cls], trans


# ----------------------------------------------------------------------------
if __name__ == "__main__":
    B, N, K_CLS = 2, 64, 2           # small num_points for the demo
    key = jax.random.PRNGKey(0)
    kx, kp_ = jax.random.split(key, 2)

    # PyTorch-style input: x is NCL (B, 3, num_points)
    x_ncl = jax.random.normal(kx, (B, 3, N), jnp.float32)
    raw_params = make_params(kp_, K_CLS)
    params = prepare_params(raw_params, K_CLS)

    x_bnc = jnp.transpose(x_ncl, (0, 2, 1))   # -> kernel layout (B, N, 3)
    fwd = jax.jit(functools.partial(pointnet_dense_cls_forward, k_cls=K_CLS))
    pred, trans = fwd(x_bnc, params)
    jax.block_until_ready((pred, trans))

    assert pred.shape == (B, N, K_CLS)
    assert trans.shape == (B, 3, 3)
    assert bool(jnp.all(jnp.isfinite(pred)))
    assert bool(jnp.all(jnp.isfinite(trans)))
    # log-softmax rows should (approximately) sum to 1 in prob space
    assert bool(jnp.allclose(jnp.sum(jnp.exp(pred), axis=-1), 1.0, atol=1e-3))
    print("KERNEL_OK")
</pallas_src>

<mosaic_0001>
module attributes {stable_mosaic.version = 11 : i64} {
  func.func @_trunk_kernel(%arg0: i32, %arg1: i32, %arg2: i32, %arg3: memref<1x64x3xbf16, #tpu.memory_space<vmem>>, %arg4: memref<3x64xbf16, #tpu.memory_space<vmem>>, %arg5: memref<1x64xf32, #tpu.memory_space<vmem>>, %arg6: memref<1x64xf32, #tpu.memory_space<vmem>>, %arg7: memref<64x128xbf16, #tpu.memory_space<vmem>>, %arg8: memref<1x128xf32, #tpu.memory_space<vmem>>, %arg9: memref<1x128xf32, #tpu.memory_space<vmem>>, %arg10: memref<128x1024xbf16, #tpu.memory_space<vmem>>, %arg11: memref<1x1x1024xf32, #tpu.memory_space<vmem>>) attributes {dimension_semantics = [#tpu.dimension_semantics<parallel>, #tpu.dimension_semantics<parallel>, #tpu.dimension_semantics<arbitrary>], iteration_bounds = array<i64: 2, 1, 1>, scalar_prefetch = 0 : i64, scratch_operands = 0 : i64, tpu.core_type = #tpu.core_type<tc>, window_params = [{transform_indices = @transform_0, window_bounds = array<i64: 1, 64, 3>}, {pipeline_mode = #tpu.pipeline_mode<synchronous>, transform_indices = @transform_1, window_bounds = array<i64: 3, 64>}, {pipeline_mode = #tpu.pipeline_mode<synchronous>, transform_indices = @transform_2, window_bounds = array<i64: 1, 64>}, {pipeline_mode = #tpu.pipeline_mode<synchronous>, transform_indices = @transform_3, window_bounds = array<i64: 1, 64>}, {pipeline_mode = #tpu.pipeline_mode<synchronous>, transform_indices = @transform_4, window_bounds = array<i64: 64, 128>}, {pipeline_mode = #tpu.pipeline_mode<synchronous>, transform_indices = @transform_5, window_bounds = array<i64: 1, 128>}, {pipeline_mode = #tpu.pipeline_mode<synchronous>, transform_indices = @transform_6, window_bounds = array<i64: 1, 128>}, {pipeline_mode = #tpu.pipeline_mode<synchronous>, transform_indices = @transform_7, window_bounds = array<i64: 128, 1024>}, {transform_indices = @transform_8, window_bounds = array<i64: 1, 1, 1024>}]} {
    %c0_i32 = arith.constant 0 : i32
    %0 = arith.cmpi eq, %arg2, %c0_i32 : i32
    %1 = arith.extui %0 : i1 to i32
    %c0_i32_0 = arith.constant 0 : i32
    %2 = arith.cmpi ne, %1, %c0_i32_0 : i32
    scf.if %2 {
      %cst_28 = arith.constant 0xFF800000 : f32
      %37 = vector.broadcast %cst_28 : f32 to vector<1x1x1024xf32>
      %c0_29 = arith.constant 0 : index
      %c0_30 = arith.constant 0 : index
      %c0_31 = arith.constant 0 : index
      %38 = vector.load %arg11[%c0_29, %c0_30, %c0_31] : memref<1x1x1024xf32, #tpu.memory_space<vmem>>, vector<1x1x1024xf32>
      tpu.vector_store %arg11[%c0_29, %c0_30, %c0_31], %37 {strides = array<i32>} : memref<1x1x1024xf32, #tpu.memory_space<vmem>>, vector<1x1x1024xf32>,
    } else {
    }
    %c0 = arith.constant 0 : index
    %c0_1 = arith.constant 0 : index
    %3 = vector.load %arg4[%c0, %c0_1] : memref<3x64xbf16, #tpu.memory_space<vmem>>, vector<3x64xbf16>
    %c0_2 = arith.constant 0 : index
    %c0_3 = arith.constant 0 : index
    %c0_4 = arith.constant 0 : index
    %4 = vector.load %arg3[%c0_2, %c0_3, %c0_4] : memref<1x64x3xbf16, #tpu.memory_space<vmem>>, vector<1x64x3xbf16>
    %5 = vector.shape_cast %4 : vector<1x64x3xbf16> to vector<64x3xbf16>
    %cst = arith.constant dense<0.000000e+00> : vector<64x64xf32>
    %6 = tpu.matmul %5, %3, %cst {dimension_numbers = #tpu.dot_dimension_numbers<[1], [0], [0], [1], [0, 0, 1, 1], [], []>} : vector<64x3xbf16>, vector<3x64xbf16>, vector<64x64xf32> -> vector<64x64xf32>
    %c0_5 = arith.constant 0 : index
    %c0_6 = arith.constant 0 : index
    %7 = vector.load %arg5[%c0_5, %c0_6] : memref<1x64xf32, #tpu.memory_space<vmem>>, vector<1x64xf32>
    %8 = vector.broadcast %7 : vector<1x64xf32> to vector<64x64xf32>
    %9 = arith.mulf %6, %8 : vector<64x64xf32>
    %c0_7 = arith.constant 0 : index
    %c0_8 = arith.constant 0 : index
    %10 = vector.load %arg6[%c0_7, %c0_8] : memref<1x64xf32, #tpu.memory_space<vmem>>, vector<1x64xf32>
    %11 = vector.broadcast %10 : vector<1x64xf32> to vector<64x64xf32>
    %12 = arith.addf %9, %11 : vector<64x64xf32>
    %cst_9 = arith.constant 0.000000e+00 : f32
    %13 = vector.broadcast %cst_9 : f32 to vector<64x64xf32>
    %14 = arith.maximumf %12, %13 : vector<64x64xf32>
    %15 = arith.truncf %14 : vector<64x64xf32> to vector<64x64xbf16>
    %c0_10 = arith.constant 0 : index
    %c0_11 = arith.constant 0 : index
    %16 = vector.load %arg7[%c0_10, %c0_11] : memref<64x128xbf16, #tpu.memory_space<vmem>>, vector<64x128xbf16>
    %cst_12 = arith.constant dense<0.000000e+00> : vector<64x128xf32>
    %17 = tpu.matmul %15, %16, %cst_12 {dimension_numbers = #tpu.dot_dimension_numbers<[1], [0], [0], [1], [0, 0, 1, 1], [], []>} : vector<64x64xbf16>, vector<64x128xbf16>, vector<64x128xf32> -> vector<64x128xf32>
    %c0_13 = arith.constant 0 : index
    %c0_14 = arith.constant 0 : index
    %18 = vector.load %arg8[%c0_13, %c0_14] : memref<1x128xf32, #tpu.memory_space<vmem>>, vector<1x128xf32>
    %19 = vector.broadcast %18 : vector<1x128xf32> to vector<64x128xf32>
    %20 = arith.mulf %17, %19 : vector<64x128xf32>
    %c0_15 = arith.constant 0 : index
    %c0_16 = arith.constant 0 : index
    %21 = vector.load %arg9[%c0_15, %c0_16] : memref<1x128xf32, #tpu.memory_space<vmem>>, vector<1x128xf32>
    %22 = vector.broadcast %21 : vector<1x128xf32> to vector<64x128xf32>
    %23 = arith.addf %20, %22 : vector<64x128xf32>
    %cst_17 = arith.constant 0.000000e+00 : f32
    %24 = vector.broadcast %cst_17 : f32 to vector<64x128xf32>
    %25 = arith.maximumf %23, %24 : vector<64x128xf32>
    %26 = arith.truncf %25 : vector<64x128xf32> to vector<64x128xbf16>
    %c0_18 = arith.constant 0 : index
    %c0_19 = arith.constant 0 : index
    %27 = vector.load %arg10[%c0_18, %c0_19] : memref<128x1024xbf16, #tpu.memory_space<vmem>>, vector<128x1024xbf16>
    %cst_20 = arith.constant dense<0.000000e+00> : vector<64x1024xf32>
    %28 = tpu.matmul %26, %27, %cst_20 {dimension_numbers = #tpu.dot_dimension_numbers<[1], [0], [0], [1], [0, 0, 1, 1], [], []>} : vector<64x128xbf16>, vector<128x1024xbf16>, vector<64x1024xf32> -> vector<64x1024xf32>
    %c0_21 = arith.constant 0 : index
    %c0_22 = arith.constant 0 : index
    %c0_23 = arith.constant 0 : index
    %29 = vector.load %arg11[%c0_21, %c0_22, %c0_23] : memref<1x1x1024xf32, #tpu.memory_space<vmem>>, vector<1x1x1024xf32>
    %30 = vector.shape_cast %29 : vector<1x1x1024xf32> to vector<1x1024xf32>
    %cst_24 = arith.constant dense<0xFF800000> : vector<1024xf32>
    %31 = vector.multi_reduction <maximumf>, %28, %cst_24 [0] : vector<64x1024xf32> to vector<1024xf32>
    %32 = vector.shape_cast %31 : vector<1024xf32> to vector<1x1024xf32>
    %33 = arith.maximumf %30, %32 : vector<1x1024xf32>
    %c0_25 = arith.constant 0 : index
    %c0_26 = arith.constant 0 : index
    %c0_27 = arith.constant 0 : index
    %34 = vector.load %arg11[%c0_25, %c0_26, %c0_27] : memref<1x1x1024xf32, #tpu.memory_space<vmem>>, vector<1x1x1024xf32>
    %35 = vector.shape_cast %34 : vector<1x1x1024xf32> to vector<1x1024xf32>
    %36 = vector.shape_cast %33 : vector<1x1024xf32> to vector<1x1x1024xf32>
    tpu.vector_store %arg11[%c0_25, %c0_26, %c0_27], %36 {strides = array<i32>} : memref<1x1x1024xf32, #tpu.memory_space<vmem>>, vector<1x1x1024xf32>,
    return
  }
  func.func @transform_0(%arg0: i32, %arg1: i32, %arg2: i32) -> (i32, i32, i32) {
    %c1_i32 = arith.constant 1 : i32
    %0 = arith.muli %arg1, %c1_i32 : i32
    %1 = arith.addi %0, %arg2 : i32
    %c0_i32 = arith.constant 0 : i32
    %c0_i32_0 = arith.constant 0 : i32
    return %arg0, %1, %c0_i32 : i32, i32, i32
  }
  func.func @transform_1(%arg0: i32, %arg1: i32, %arg2: i32) -> (i32, i32) {
    %c0_i32 = arith.constant 0 : i32
    %c0_i32_0 = arith.constant 0 : i32
    %c0_i32_1 = arith.constant 0 : i32
    return %c0_i32, %c0_i32_0 : i32, i32
  }
  func.func @transform_2(%arg0: i32, %arg1: i32, %arg2: i32) -> (i32, i32) {
    %c0_i32 = arith.constant 0 : i32
    %c0_i32_0 = arith.constant 0 : i32
    %c0_i32_1 = arith.constant 0 : i32
    return %c0_i32, %c0_i32_0 : i32, i32
  }
  func.func @transform_3(%arg0: i32, %arg1: i32, %arg2: i32) -> (i32, i32) {
    %c0_i32 = arith.constant 0 : i32
    %c0_i32_0 = arith.constant 0 : i32
    %c0_i32_1 = arith.constant 0 : i32
    return %c0_i32, %c0_i32_0 : i32, i32
  }
  func.func @transform_4(%arg0: i32, %arg1: i32, %arg2: i32) -> (i32, i32) {
    %c0_i32 = arith.constant 0 : i32
    %c0_i32_0 = arith.constant 0 : i32
    %c0_i32_1 = arith.constant 0 : i32
    return %c0_i32, %c0_i32_0 : i32, i32
  }
  func.func @transform_5(%arg0: i32, %arg1: i32, %arg2: i32) -> (i32, i32) {
    %c0_i32 = arith.constant 0 : i32
    %c0_i32_0 = arith.constant 0 : i32
    %c0_i32_1 = arith.constant 0 : i32
    return %c0_i32, %c0_i32_0 : i32, i32
  }
  func.func @transform_6(%arg0: i32, %arg1: i32, %arg2: i32) -> (i32, i32) {
    %c0_i32 = arith.constant 0 : i32
    %c0_i32_0 = arith.constant 0 : i32
    %c0_i32_1 = arith.constant 0 : i32
    return %c0_i32, %c0_i32_0 : i32, i32
  }
  func.func @transform_7(%arg0: i32, %arg1: i32, %arg2: i32) -> (i32, i32) {
    %c0_i32 = arith.constant 0 : i32
    %c0_i32_0 = arith.constant 0 : i32
    %c0_i32_1 = arith.constant 0 : i32
    return %c0_i32, %c0_i32_0 : i32, i32
  }
  func.func @transform_8(%arg0: i32, %arg1: i32, %arg2: i32) -> (i32, i32, i32) {
    %c1_i32 = arith.constant 1 : i32
    %0 = arith.muli %arg0, %c1_i32 : i32
    %1 = arith.addi %0, %arg1 : i32
    %c0_i32 = arith.constant 0 : i32
    %c0_i32_0 = arith.constant 0 : i32
    %c0_i32_1 = arith.constant 0 : i32
    return %1, %c0_i32, %c0_i32_0 : i32, i32, i32
  }
}

module attributes {stable_mosaic.version = 11 : i64} {
  func.func @_stn_fc_kernel(%arg0: memref<2x1x1024xf32, #tpu.memory_space<vmem>>, %arg1: memref<1x1024xf32, #tpu.memory_space<vmem>>, %arg2: memref<1x1024xf32, #tpu.memory_space<vmem>>, %arg3: memref<1024x512xbf16, #tpu.memory_space<vmem>>, %arg4: memref<1x512xf32, #tpu.memory_space<vmem>>, %arg5: memref<1x512xf32, #tpu.memory_space<vmem>>, %arg6: memref<512x256xbf16, #tpu.memory_space<vmem>>, %arg7: memref<1x256xf32, #tpu.memory_space<vmem>>, %arg8: memref<1x256xf32, #tpu.memory_space<vmem>>, %arg9: memref<256x9xbf16, #tpu.memory_space<vmem>>, %arg10: memref<1x9xf32, #tpu.memory_space<vmem>>, %arg11: memref<2x9xf32, #tpu.memory_space<vmem>>) attributes {dimension_semantics = [], scalar_prefetch = 0 : i64, scratch_operands = 0 : i64, tpu.core_type = #tpu.core_type<tc>} {
    %c0 = arith.constant 0 : index
    %c0_0 = arith.constant 0 : index
    %c0_1 = arith.constant 0 : index
    %0 = vector.load %arg0[%c0, %c0_0, %c0_1] : memref<2x1x1024xf32, #tpu.memory_space<vmem>>, vector<2x1x1024xf32>
    %cst = arith.constant dense<0xFF800000> : vector<2x1024xf32>
    %1 = vector.multi_reduction <maximumf>, %0, %cst [1] : vector<2x1x1024xf32> to vector<2x1024xf32>
    %c0_2 = arith.constant 0 : index
    %c0_3 = arith.constant 0 : index
    %2 = vector.load %arg1[%c0_2, %c0_3] : memref<1x1024xf32, #tpu.memory_space<vmem>>, vector<1x1024xf32>
    %3 = vector.broadcast %2 : vector<1x1024xf32> to vector<2x1024xf32>
    %4 = arith.mulf %1, %3 : vector<2x1024xf32>
    %c0_4 = arith.constant 0 : index
    %c0_5 = arith.constant 0 : index
    %5 = vector.load %arg2[%c0_4, %c0_5] : memref<1x1024xf32, #tpu.memory_space<vmem>>, vector<1x1024xf32>
    %6 = vector.broadcast %5 : vector<1x1024xf32> to vector<2x1024xf32>
    %7 = arith.addf %4, %6 : vector<2x1024xf32>
    %cst_6 = arith.constant 0.000000e+00 : f32
    %8 = vector.broadcast %cst_6 : f32 to vector<2x1024xf32>
    %9 = arith.maximumf %7, %8 : vector<2x1024xf32>
    %10 = arith.truncf %9 : vector<2x1024xf32> to vector<2x1024xbf16>
    %c0_7 = arith.constant 0 : index
    %c0_8 = arith.constant 0 : index
    %11 = vector.load %arg3[%c0_7, %c0_8] : memref<1024x512xbf16, #tpu.memory_space<vmem>>, vector<1024x512xbf16>
    %cst_9 = arith.constant dense<0.000000e+00> : vector<2x512xf32>
    %12 = tpu.matmul %10, %11, %cst_9 {dimension_numbers = #tpu.dot_dimension_numbers<[1], [0], [0], [1], [0, 0, 1, 1], [], []>} : vector<2x1024xbf16>, vector<1024x512xbf16>, vector<2x512xf32> -> vector<2x512xf32>
    %c0_10 = arith.constant 0 : index
    %c0_11 = arith.constant 0 : index
    %13 = vector.load %arg4[%c0_10, %c0_11] : memref<1x512xf32, #tpu.memory_space<vmem>>, vector<1x512xf32>
    %14 = vector.broadcast %13 : vector<1x512xf32> to vector<2x512xf32>
    %15 = arith.mulf %12, %14 : vector<2x512xf32>
    %c0_12 = arith.constant 0 : index
    %c0_13 = arith.constant 0 : index
    %16 = vector.load %arg5[%c0_12, %c0_13] : memref<1x512xf32, #tpu.memory_space<vmem>>, vector<1x512xf32>
    %17 = vector.broadcast %16 : vector<1x512xf32> to vector<2x512xf32>
    %18 = arith.addf %15, %17 : vector<2x512xf32>
    %cst_14 = arith.constant 0.000000e+00 : f32
    %19 = vector.broadcast %cst_14 : f32 to vector<2x512xf32>
    %20 = arith.maximumf %18, %19 : vector<2x512xf32>
    %21 = arith.truncf %20 : vector<2x512xf32> to vector<2x512xbf16>
    %c0_15 = arith.constant 0 : index
    %c0_16 = arith.constant 0 : index
    %22 = vector.load %arg6[%c0_15, %c0_16] : memref<512x256xbf16, #tpu.memory_space<vmem>>, vector<512x256xbf16>
    %cst_17 = arith.constant dense<0.000000e+00> : vector<2x256xf32>
    %23 = tpu.matmul %21, %22, %cst_17 {dimension_numbers = #tpu.dot_dimension_numbers<[1], [0], [0], [1], [0, 0, 1, 1], [], []>} : vector<2x512xbf16>, vector<512x256xbf16>, vector<2x256xf32> -> vector<2x256xf32>
    %c0_18 = arith.constant 0 : index
    %c0_19 = arith.constant 0 : index
    %24 = vector.load %arg7[%c0_18, %c0_19] : memref<1x256xf32, #tpu.memory_space<vmem>>, vector<1x256xf32>
    %25 = vector.broadcast %24 : vector<1x256xf32> to vector<2x256xf32>
    %26 = arith.mulf %23, %25 : vector<2x256xf32>
    %c0_20 = arith.constant 0 : index
    %c0_21 = arith.constant 0 : index
    %27 = vector.load %arg8[%c0_20, %c0_21] : memref<1x256xf32, #tpu.memory_space<vmem>>, vector<1x256xf32>
    %28 = vector.broadcast %27 : vector<1x256xf32> to vector<2x256xf32>
    %29 = arith.addf %26, %28 : vector<2x256xf32>
    %cst_22 = arith.constant 0.000000e+00 : f32
    %30 = vector.broadcast %cst_22 : f32 to vector<2x256xf32>
    %31 = arith.maximumf %29, %30 : vector<2x256xf32>
    %32 = arith.truncf %31 : vector<2x256xf32> to vector<2x256xbf16>
    %c0_23 = arith.constant 0 : index
    %c0_24 = arith.constant 0 : index
    %33 = vector.load %arg9[%c0_23, %c0_24] : memref<256x9xbf16, #tpu.memory_space<vmem>>, vector<256x9xbf16>
    %cst_25 = arith.constant dense<0.000000e+00> : vector<2x9xf32>
    %34 = tpu.matmul %32, %33, %cst_25 {dimension_numbers = #tpu.dot_dimension_numbers<[1], [0], [0], [1], [0, 0, 1, 1], [], []>} : vector<2x256xbf16>, vector<256x9xbf16>, vector<2x9xf32> -> vector<2x9xf32>
    %c0_26 = arith.constant 0 : index
    %c0_27 = arith.constant 0 : index
    %35 = vector.load %arg10[%c0_26, %c0_27] : memref<1x9xf32, #tpu.memory_space<vmem>>, vector<1x9xf32>
    %36 = vector.broadcast %35 : vector<1x9xf32> to vector<2x9xf32>
    %37 = arith.addf %34, %36 : vector<2x9xf32>
    %c0_28 = arith.constant 0 : index
    %c0_29 = arith.constant 0 : index
    %38 = vector.load %arg11[%c0_28, %c0_29] : memref<2x9xf32, #tpu.memory_space<vmem>>, vector<2x9xf32>
    tpu.vector_store %arg11[%c0_28, %c0_29], %37 {strides = array<i32>} : memref<2x9xf32, #tpu.memory_space<vmem>>, vector<2x9xf32>,
    return
  }
}

module attributes {stable_mosaic.version = 11 : i64} {
  func.func @_trunk_kernel(%arg0: i32, %arg1: i32, %arg2: i32, %arg3: memref<1x64x3xbf16, #tpu.memory_space<vmem>>, %arg4: memref<1x3x64xbf16, #tpu.memory_space<vmem>>, %arg5: memref<1x64xf32, #tpu.memory_space<vmem>>, %arg6: memref<1x64xf32, #tpu.memory_space<vmem>>, %arg7: memref<64x128xbf16, #tpu.memory_space<vmem>>, %arg8: memref<1x128xf32, #tpu.memory_space<vmem>>, %arg9: memref<1x128xf32, #tpu.memory_space<vmem>>, %arg10: memref<128x1024xbf16, #tpu.memory_space<vmem>>, %arg11: memref<1x64x64xbf16, #tpu.memory_space<vmem>>, %arg12: memref<1x1x1024xf32, #tpu.memory_space<vmem>>) attributes {dimension_semantics = [#tpu.dimension_semantics<parallel>, #tpu.dimension_semantics<parallel>, #tpu.dimension_semantics<arbitrary>], iteration_bounds = array<i64: 2, 1, 1>, scalar_prefetch = 0 : i64, scratch_operands = 0 : i64, tpu.core_type = #tpu.core_type<tc>, window_params = [{transform_indices = @transform_0, window_bounds = array<i64: 1, 64, 3>}, {transform_indices = @transform_1, window_bounds = array<i64: 1, 3, 64>}, {pipeline_mode = #tpu.pipeline_mode<synchronous>, transform_indices = @transform_2, window_bounds = array<i64: 1, 64>}, {pipeline_mode = #tpu.pipeline_mode<synchronous>, transform_indices = @transform_3, window_bounds = array<i64: 1, 64>}, {pipeline_mode = #tpu.pipeline_mode<synchronous>, transform_indices = @transform_4, window_bounds = array<i64: 64, 128>}, {pipeline_mode = #tpu.pipeline_mode<synchronous>, transform_indices = @transform_5, window_bounds = array<i64: 1, 128>}, {pipeline_mode = #tpu.pipeline_mode<synchronous>, transform_indices = @transform_6, window_bounds = array<i64: 1, 128>}, {pipeline_mode = #tpu.pipeline_mode<synchronous>, transform_indices = @transform_7, window_bounds = array<i64: 128, 1024>}, {transform_indices = @transform_8, window_bounds = array<i64: 1, 64, 64>}, {transform_indices = @transform_9, window_bounds = array<i64: 1, 1, 1024>}]} {
    %c0_i32 = arith.constant 0 : i32
    %0 = arith.cmpi eq, %arg2, %c0_i32 : i32
    %1 = arith.extui %0 : i1 to i32
    %c0_i32_0 = arith.constant 0 : i32
    %2 = arith.cmpi ne, %1, %c0_i32_0 : i32
    scf.if %2 {
      %cst_32 = arith.constant 0xFF800000 : f32
      %41 = vector.broadcast %cst_32 : f32 to vector<1x1x1024xf32>
      %c0_33 = arith.constant 0 : index
      %c0_34 = arith.constant 0 : index
      %c0_35 = arith.constant 0 : index
      %42 = vector.load %arg12[%c0_33, %c0_34, %c0_35] : memref<1x1x1024xf32, #tpu.memory_space<vmem>>, vector<1x1x1024xf32>
      tpu.vector_store %arg12[%c0_33, %c0_34, %c0_35], %41 {strides = array<i32>} : memref<1x1x1024xf32, #tpu.memory_space<vmem>>, vector<1x1x1024xf32>,
    } else {
    }
    %c0 = arith.constant 0 : index
    %c0_1 = arith.constant 0 : index
    %c0_2 = arith.constant 0 : index
    %3 = vector.load %arg4[%c0, %c0_1, %c0_2] : memref<1x3x64xbf16, #tpu.memory_space<vmem>>, vector<1x3x64xbf16>
    %4 = vector.shape_cast %3 : vector<1x3x64xbf16> to vector<3x64xbf16>
    %c0_3 = arith.constant 0 : index
    %c0_4 = arith.constant 0 : index
    %c0_5 = arith.constant 0 : index
    %5 = vector.load %arg3[%c0_3, %c0_4, %c0_5] : memref<1x64x3xbf16, #tpu.memory_space<vmem>>, vector<1x64x3xbf16>
    %6 = vector.shape_cast %5 : vector<1x64x3xbf16> to vector<64x3xbf16>
    %cst = arith.constant dense<0.000000e+00> : vector<64x64xf32>
    %7 = tpu.matmul %6, %4, %cst {dimension_numbers = #tpu.dot_dimension_numbers<[1], [0], [0], [1], [0, 0, 1, 1], [], []>} : vector<64x3xbf16>, vector<3x64xbf16>, vector<64x64xf32> -> vector<64x64xf32>
    %c0_6 = arith.constant 0 : index
    %c0_7 = arith.constant 0 : index
    %8 = vector.load %arg5[%c0_6, %c0_7] : memref<1x64xf32, #tpu.memory_space<vmem>>, vector<1x64xf32>
    %9 = vector.broadcast %8 : vector<1x64xf32> to vector<64x64xf32>
    %10 = arith.mulf %7, %9 : vector<64x64xf32>
    %c0_8 = arith.constant 0 : index
    %c0_9 = arith.constant 0 : index
    %11 = vector.load %arg6[%c0_8, %c0_9] : memref<1x64xf32, #tpu.memory_space<vmem>>, vector<1x64xf32>
    %12 = vector.broadcast %11 : vector<1x64xf32> to vector<64x64xf32>
    %13 = arith.addf %10, %12 : vector<64x64xf32>
    %cst_10 = arith.constant 0.000000e+00 : f32
    %14 = vector.broadcast %cst_10 : f32 to vector<64x64xf32>
    %15 = arith.maximumf %13, %14 : vector<64x64xf32>
    %16 = arith.truncf %15 : vector<64x64xf32> to vector<64x64xbf16>
    %c0_11 = arith.constant 0 : index
    %c0_12 = arith.constant 0 : index
    %c0_13 = arith.constant 0 : index
    %17 = vector.load %arg11[%c0_11, %c0_12, %c0_13] : memref<1x64x64xbf16, #tpu.memory_space<vmem>>, vector<1x64x64xbf16>
    %18 = vector.shape_cast %17 : vector<1x64x64xbf16> to vector<64x64xbf16>
    %19 = vector.shape_cast %16 : vector<64x64xbf16> to vector<1x64x64xbf16>
    tpu.vector_store %arg11[%c0_11, %c0_12, %c0_13], %19 {strides = array<i32>} : memref<1x64x64xbf16, #tpu.memory_space<vmem>>, vector<1x64x64xbf16>,
    %c0_14 = arith.constant 0 : index
    %c0_15 = arith.constant 0 : index
    %20 = vector.load %arg7[%c0_14, %c0_15] : memref<64x128xbf16, #tpu.memory_space<vmem>>, vector<64x128xbf16>
    %cst_16 = arith.constant dense<0.000000e+00> : vector<64x128xf32>
    %21 = tpu.matmul %16, %20, %cst_16 {dimension_numbers = #tpu.dot_dimension_numbers<[1], [0], [0], [1], [0, 0, 1, 1], [], []>} : vector<64x64xbf16>, vector<64x128xbf16>, vector<64x128xf32> -> vector<64x128xf32>
    %c0_17 = arith.constant 0 : index
    %c0_18 = arith.constant 0 : index
    %22 = vector.load %arg8[%c0_17, %c0_18] : memref<1x128xf32, #tpu.memory_space<vmem>>, vector<1x128xf32>
    %23 = vector.broadcast %22 : vector<1x128xf32> to vector<64x128xf32>
    %24 = arith.mulf %21, %23 : vector<64x128xf32>
    %c0_19 = arith.constant 0 : index
    %c0_20 = arith.constant 0 : index
    %25 = vector.load %arg9[%c0_19, %c0_20] : memref<1x128xf32, #tpu.memory_space<vmem>>, vector<1x128xf32>
    %26 = vector.broadcast %25 : vector<1x128xf32> to vector<64x128xf32>
    %27 = arith.addf %24, %26 : vector<64x128xf32>
    %cst_21 = arith.constant 0.000000e+00 : f32
    %28 = vector.broadcast %cst_21 : f32 to vector<64x128xf32>
    %29 = arith.maximumf %27, %28 : vector<64x128xf32>
    %30 = arith.truncf %29 : vector<64x128xf32> to vector<64x128xbf16>
    %c0_22 = arith.constant 0 : index
    %c0_23 = arith.constant 0 : index
    %31 = vector.load %arg10[%c0_22, %c0_23] : memref<128x1024xbf16, #tpu.memory_space<vmem>>, vector<128x1024xbf16>
    %cst_24 = arith.constant dense<0.000000e+00> : vector<64x1024xf32>
    %32 = tpu.matmul %30, %31, %cst_24 {dimension_numbers = #tpu.dot_dimension_numbers<[1], [0], [0], [1], [0, 0, 1, 1], [], []>} : vector<64x128xbf16>, vector<128x1024xbf16>, vector<64x1024xf32> -> vector<64x1024xf32>
    %c0_25 = arith.constant 0 : index
    %c0_26 = arith.constant 0 : index
    %c0_27 = arith.constant 0 : index
    %33 = vector.load %arg12[%c0_25, %c0_26, %c0_27] : memref<1x1x1024xf32, #tpu.memory_space<vmem>>, vector<1x1x1024xf32>
    %34 = vector.shape_cast %33 : vector<1x1x1024xf32> to vector<1x1024xf32>
    %cst_28 = arith.constant dense<0xFF800000> : vector<1024xf32>
    %35 = vector.multi_reduction <maximumf>, %32, %cst_28 [0] : vector<64x1024xf32> to vector<1024xf32>
    %36 = vector.shape_cast %35 : vector<1024xf32> to vector<1x1024xf32>
    %37 = arith.maximumf %34, %36 : vector<1x1024xf32>
    %c0_29 = arith.constant 0 : index
    %c0_30 = arith.constant 0 : index
    %c0_31 = arith.constant 0 : index
    %38 = vector.load %arg12[%c0_29, %c0_30, %c0_31] : memref<1x1x1024xf32, #tpu.memory_space<vmem>>, vector<1x1x1024xf32>
    %39 = vector.shape_cast %38 : vector<1x1x1024xf32> to vector<1x1024xf32>
    %40 = vector.shape_cast %37 : vector<1x1024xf32> to vector<1x1x1024xf32>
    tpu.vector_store %arg12[%c0_29, %c0_30, %c0_31], %40 {strides = array<i32>} : memref<1x1x1024xf32, #tpu.memory_space<vmem>>, vector<1x1x1024xf32>,
    return
  }
  func.func @transform_0(%arg0: i32, %arg1: i32, %arg2: i32) -> (i32, i32, i32) {
    %c1_i32 = arith.constant 1 : i32
    %0 = arith.muli %arg1, %c1_i32 : i32
    %1 = arith.addi %0, %arg2 : i32
    %c0_i32 = arith.constant 0 : i32
    %c0_i32_0 = arith.constant 0 : i32
    return %arg0, %1, %c0_i32 : i32, i32, i32
  }
  func.func @transform_1(%arg0: i32, %arg1: i32, %arg2: i32) -> (i32, i32, i32) {
    %c0_i32 = arith.constant 0 : i32
    %c0_i32_0 = arith.constant 0 : i32
    %c0_i32_1 = arith.constant 0 : i32
    return %arg0, %c0_i32, %c0_i32_0 : i32, i32, i32
  }
  func.func @transform_2(%arg0: i32, %arg1: i32, %arg2: i32) -> (i32, i32) {
    %c0_i32 = arith.constant 0 : i32
    %c0_i32_0 = arith.constant 0 : i32
    %c0_i32_1 = arith.constant 0 : i32
    return %c0_i32, %c0_i32_0 : i32, i32
  }
  func.func @transform_3(%arg0: i32, %arg1: i32, %arg2: i32) -> (i32, i32) {
    %c0_i32 = arith.constant 0 : i32
    %c0_i32_0 = arith.constant 0 : i32
    %c0_i32_1 = arith.constant 0 : i32
    return %c0_i32, %c0_i32_0 : i32, i32
  }
  func.func @transform_4(%arg0: i32, %arg1: i32, %arg2: i32) -> (i32, i32) {
    %c0_i32 = arith.constant 0 : i32
    %c0_i32_0 = arith.constant 0 : i32
    %c0_i32_1 = arith.constant 0 : i32
    return %c0_i32, %c0_i32_0 : i32, i32
  }
  func.func @transform_5(%arg0: i32, %arg1: i32, %arg2: i32) -> (i32, i32) {
    %c0_i32 = arith.constant 0 : i32
    %c0_i32_0 = arith.constant 0 : i32
    %c0_i32_1 = arith.constant 0 : i32
    return %c0_i32, %c0_i32_0 : i32, i32
  }
  func.func @transform_6(%arg0: i32, %arg1: i32, %arg2: i32) -> (i32, i32) {
    %c0_i32 = arith.constant 0 : i32
    %c0_i32_0 = arith.constant 0 : i32
    %c0_i32_1 = arith.constant 0 : i32
    return %c0_i32, %c0_i32_0 : i32, i32
  }
  func.func @transform_7(%arg0: i32, %arg1: i32, %arg2: i32) -> (i32, i32) {
    %c0_i32 = arith.constant 0 : i32
    %c0_i32_0 = arith.constant 0 : i32
    %c0_i32_1 = arith.constant 0 : i32
    return %c0_i32, %c0_i32_0 : i32, i32
  }
  func.func @transform_8(%arg0: i32, %arg1: i32, %arg2: i32) -> (i32, i32, i32) {
    %c1_i32 = arith.constant 1 : i32
    %0 = arith.muli %arg1, %c1_i32 : i32
    %1 = arith.addi %0, %arg2 : i32
    %c0_i32 = arith.constant 0 : i32
    %c0_i32_0 = arith.constant 0 : i32
    return %arg0, %1, %c0_i32 : i32, i32, i32
  }
  func.func @transform_9(%arg0: i32, %arg1: i32, %arg2: i32) -> (i32, i32, i32) {
    %c1_i32 = arith.constant 1 : i32
    %0 = arith.muli %arg0, %c1_i32 : i32
    %1 = arith.addi %0, %arg1 : i32
    %c0_i32 = arith.constant 0 : i32
    %c0_i32_0 = arith.constant 0 : i32
    %c0_i32_1 = arith.constant 0 : i32
    return %1, %c0_i32, %c0_i32_0 : i32, i32, i32
  }
}

module attributes {stable_mosaic.version = 11 : i64} {
  func.func @_gproj_kernel(%arg0: memref<2x1x1024xf32, #tpu.memory_space<vmem>>, %arg1: memref<1x1024xf32, #tpu.memory_space<vmem>>, %arg2: memref<1x1024xf32, #tpu.memory_space<vmem>>, %arg3: memref<1024x512xbf16, #tpu.memory_space<vmem>>, %arg4: memref<2x512xf32, #tpu.memory_space<vmem>>) attributes {dimension_semantics = [], scalar_prefetch = 0 : i64, scratch_operands = 0 : i64, tpu.core_type = #tpu.core_type<tc>} {
    %c0 = arith.constant 0 : index
    %c0_0 = arith.constant 0 : index
    %c0_1 = arith.constant 0 : index
    %0 = vector.load %arg0[%c0, %c0_0, %c0_1] : memref<2x1x1024xf32, #tpu.memory_space<vmem>>, vector<2x1x1024xf32>
    %cst = arith.constant dense<0xFF800000> : vector<2x1024xf32>
    %1 = vector.multi_reduction <maximumf>, %0, %cst [1] : vector<2x1x1024xf32> to vector<2x1024xf32>
    %c0_2 = arith.constant 0 : index
    %c0_3 = arith.constant 0 : index
    %2 = vector.load %arg1[%c0_2, %c0_3] : memref<1x1024xf32, #tpu.memory_space<vmem>>, vector<1x1024xf32>
    %3 = vector.broadcast %2 : vector<1x1024xf32> to vector<2x1024xf32>
    %4 = arith.mulf %1, %3 : vector<2x1024xf32>
    %c0_4 = arith.constant 0 : index
    %c0_5 = arith.constant 0 : index
    %5 = vector.load %arg2[%c0_4, %c0_5] : memref<1x1024xf32, #tpu.memory_space<vmem>>, vector<1x1024xf32>
    %6 = vector.broadcast %5 : vector<1x1024xf32> to vector<2x1024xf32>
    %7 = arith.addf %4, %6 : vector<2x1024xf32>
    %8 = arith.truncf %7 : vector<2x1024xf32> to vector<2x1024xbf16>
    %c0_6 = arith.constant 0 : index
    %c0_7 = arith.constant 0 : index
    %9 = vector.load %arg3[%c0_6, %c0_7] : memref<1024x512xbf16, #tpu.memory_space<vmem>>, vector<1024x512xbf16>
    %cst_8 = arith.constant dense<0.000000e+00> : vector<2x512xf32>
    %10 = tpu.matmul %8, %9, %cst_8 {dimension_numbers = #tpu.dot_dimension_numbers<[1], [0], [0], [1], [0, 0, 1, 1], [], []>} : vector<2x1024xbf16>, vector<1024x512xbf16>, vector<2x512xf32> -> vector<2x512xf32>
    %c0_9 = arith.constant 0 : index
    %c0_10 = arith.constant 0 : index
    %11 = vector.load %arg4[%c0_9, %c0_10] : memref<2x512xf32, #tpu.memory_space<vmem>>, vector<2x512xf32>
    tpu.vector_store %arg4[%c0_9, %c0_10], %10 {strides = array<i32>} : memref<2x512xf32, #tpu.memory_space<vmem>>, vector<2x512xf32>,
    return
  }
}

module attributes {stable_mosaic.version = 11 : i64} {
  func.func @_head_kernel(%arg0: i32, %arg1: i32, %arg2: memref<1x64x64xbf16, #tpu.memory_space<vmem>>, %arg3: memref<1x1x512xf32, #tpu.memory_space<vmem>>, %arg4: memref<64x512xbf16, #tpu.memory_space<vmem>>, %arg5: memref<1x512xf32, #tpu.memory_space<vmem>>, %arg6: memref<1x512xf32, #tpu.memory_space<vmem>>, %arg7: memref<512x256xbf16, #tpu.memory_space<vmem>>, %arg8: memref<1x256xf32, #tpu.memory_space<vmem>>, %arg9: memref<1x256xf32, #tpu.memory_space<vmem>>, %arg10: memref<256x128xbf16, #tpu.memory_space<vmem>>, %arg11: memref<1x128xf32, #tpu.memory_space<vmem>>, %arg12: memref<1x128xf32, #tpu.memory_space<vmem>>, %arg13: memref<128x128xbf16, #tpu.memory_space<vmem>>, %arg14: memref<1x128xf32, #tpu.memory_space<vmem>>, %arg15: memref<1x64x128xf32, #tpu.memory_space<vmem>>) attributes {dimension_semantics = [#tpu.dimension_semantics<parallel>, #tpu.dimension_semantics<parallel>], iteration_bounds = array<i64: 2, 1>, scalar_prefetch = 0 : i64, scratch_operands = 0 : i64, tpu.core_type = #tpu.core_type<tc>, window_params = [{transform_indices = @transform_0, window_bounds = array<i64: 1, 64, 64>}, {transform_indices = @transform_1, window_bounds = array<i64: 1, 1, 512>}, {pipeline_mode = #tpu.pipeline_mode<synchronous>, transform_indices = @transform_2, window_bounds = array<i64: 64, 512>}, {pipeline_mode = #tpu.pipeline_mode<synchronous>, transform_indices = @transform_3, window_bounds = array<i64: 1, 512>}, {pipeline_mode = #tpu.pipeline_mode<synchronous>, transform_indices = @transform_4, window_bounds = array<i64: 1, 512>}, {pipeline_mode = #tpu.pipeline_mode<synchronous>, transform_indices = @transform_5, window_bounds = array<i64: 512, 256>}, {pipeline_mode = #tpu.pipeline_mode<synchronous>, transform_indices = @transform_6, window_bounds = array<i64: 1, 256>}, {pipeline_mode = #tpu.pipeline_mode<synchronous>, transform_indices = @transform_7, window_bounds = array<i64: 1, 256>}, {pipeline_mode = #tpu.pipeline_mode<synchronous>, transform_indices = @transform_8, window_bounds = array<i64: 256, 128>}, {pipeline_mode = #tpu.pipeline_mode<synchronous>, transform_indices = @transform_9, window_bounds = array<i64: 1, 128>}, {pipeline_mode = #tpu.pipeline_mode<synchronous>, transform_indices = @transform_10, window_bounds = array<i64: 1, 128>}, {pipeline_mode = #tpu.pipeline_mode<synchronous>, transform_indices = @transform_11, window_bounds = array<i64: 128, 128>}, {pipeline_mode = #tpu.pipeline_mode<synchronous>, transform_indices = @transform_12, window_bounds = array<i64: 1, 128>}, {transform_indices = @transform_13, window_bounds = array<i64: 1, 64, 128>}]} {
    %c0 = arith.constant 0 : index
    %c0_0 = arith.constant 0 : index
    %c0_1 = arith.constant 0 : index
    %0 = vector.load %arg2[%c0, %c0_0, %c0_1] : memref<1x64x64xbf16, #tpu.memory_space<vmem>>, vector<1x64x64xbf16>
    %1 = vector.shape_cast %0 : vector<1x64x64xbf16> to vector<64x64xbf16>
    %c0_2 = arith.constant 0 : index
    %c0_3 = arith.constant 0 : index
    %2 = vector.load %arg4[%c0_2, %c0_3] : memref<64x512xbf16, #tpu.memory_space<vmem>>, vector<64x512xbf16>
    %cst = arith.constant dense<0.000000e+00> : vector<64x512xf32>
    %3 = tpu.matmul %1, %2, %cst {dimension_numbers = #tpu.dot_dimension_numbers<[1], [0], [0], [1], [0, 0, 1, 1], [], []>} : vector<64x64xbf16>, vector<64x512xbf16>, vector<64x512xf32> -> vector<64x512xf32>
    %c0_4 = arith.constant 0 : index
    %c0_5 = arith.constant 0 : index
    %c0_6 = arith.constant 0 : index
    %4 = vector.load %arg3[%c0_4, %c0_5, %c0_6] : memref<1x1x512xf32, #tpu.memory_space<vmem>>, vector<1x1x512xf32>
    %5 = vector.shape_cast %4 : vector<1x1x512xf32> to vector<1x512xf32>
    %6 = vector.broadcast %5 : vector<1x512xf32> to vector<64x512xf32>
    %7 = arith.addf %3, %6 : vector<64x512xf32>
    %c0_7 = arith.constant 0 : index
    %c0_8 = arith.constant 0 : index
    %8 = vector.load %arg5[%c0_7, %c0_8] : memref<1x512xf32, #tpu.memory_space<vmem>>, vector<1x512xf32>
    %9 = vector.broadcast %8 : vector<1x512xf32> to vector<64x512xf32>
    %10 = arith.mulf %7, %9 : vector<64x512xf32>
    %c0_9 = arith.constant 0 : index
    %c0_10 = arith.constant 0 : index
    %11 = vector.load %arg6[%c0_9, %c0_10] : memref<1x512xf32, #tpu.memory_space<vmem>>, vector<1x512xf32>
    %12 = vector.broadcast %11 : vector<1x512xf32> to vector<64x512xf32>
    %13 = arith.addf %10, %12 : vector<64x512xf32>
    %cst_11 = arith.constant 0.000000e+00 : f32
    %14 = vector.broadcast %cst_11 : f32 to vector<64x512xf32>
    %15 = arith.maximumf %13, %14 : vector<64x512xf32>
    %16 = arith.truncf %15 : vector<64x512xf32> to vector<64x512xbf16>
    %c0_12 = arith.constant 0 : index
    %c0_13 = arith.constant 0 : index
    %17 = vector.load %arg7[%c0_12, %c0_13] : memref<512x256xbf16, #tpu.memory_space<vmem>>, vector<512x256xbf16>
    %cst_14 = arith.constant dense<0.000000e+00> : vector<64x256xf32>
    %18 = tpu.matmul %16, %17, %cst_14 {dimension_numbers = #tpu.dot_dimension_numbers<[1], [0], [0], [1], [0, 0, 1, 1], [], []>} : vector<64x512xbf16>, vector<512x256xbf16>, vector<64x256xf32> -> vector<64x256xf32>
    %c0_15 = arith.constant 0 : index
    %c0_16 = arith.constant 0 : index
    %19 = vector.load %arg8[%c0_15, %c0_16] : memref<1x256xf32, #tpu.memory_space<vmem>>, vector<1x256xf32>
    %20 = vector.broadcast %19 : vector<1x256xf32> to vector<64x256xf32>
    %21 = arith.mulf %18, %20 : vector<64x256xf32>
    %c0_17 = arith.constant 0 : index
    %c0_18 = arith.constant 0 : index
    %22 = vector.load %arg9[%c0_17, %c0_18] : memref<1x256xf32, #tpu.memory_space<vmem>>, vector<1x256xf32>
    %23 = vector.broadcast %22 : vector<1x256xf32> to vector<64x256xf32>
    %24 = arith.addf %21, %23 : vector<64x256xf32>
    %cst_19 = arith.constant 0.000000e+00 : f32
    %25 = vector.broadcast %cst_19 : f32 to vector<64x256xf32>
    %26 = arith.maximumf %24, %25 : vector<64x256xf32>
    %27 = arith.truncf %26 : vector<64x256xf32> to vector<64x256xbf16>
    %c0_20 = arith.constant 0 : index
    %c0_21 = arith.constant 0 : index
    %28 = vector.load %arg10[%c0_20, %c0_21] : memref<256x128xbf16, #tpu.memory_space<vmem>>, vector<256x128xbf16>
    %cst_22 = arith.constant dense<0.000000e+00> : vector<64x128xf32>
    %29 = tpu.matmul %27, %28, %cst_22 {dimension_numbers = #tpu.dot_dimension_numbers<[1], [0], [0], [1], [0, 0, 1, 1], [], []>} : vector<64x256xbf16>, vector<256x128xbf16>, vector<64x128xf32> -> vector<64x128xf32>
    %c0_23 = arith.constant 0 : index
    %c0_24 = arith.constant 0 : index
    %30 = vector.load %arg11[%c0_23, %c0_24] : memref<1x128xf32, #tpu.memory_space<vmem>>, vector<1x128xf32>
    %31 = vector.broadcast %30 : vector<1x128xf32> to vector<64x128xf32>
    %32 = arith.mulf %29, %31 : vector<64x128xf32>
    %c0_25 = arith.constant 0 : index
    %c0_26 = arith.constant 0 : index
    %33 = vector.load %arg12[%c0_25, %c0_26] : memref<1x128xf32, #tpu.memory_space<vmem>>, vector<1x128xf32>
    %34 = vector.broadcast %33 : vector<1x128xf32> to vector<64x128xf32>
    %35 = arith.addf %32, %34 : vector<64x128xf32>
    %cst_27 = arith.constant 0.000000e+00 : f32
    %36 = vector.broadcast %cst_27 : f32 to vector<64x128xf32>
    %37 = arith.maximumf %35, %36 : vector<64x128xf32>
    %38 = arith.truncf %37 : vector<64x128xf32> to vector<64x128xbf16>
    %c0_28 = arith.constant 0 : index
    %c0_29 = arith.constant 0 : index
    %39 = vector.load %arg13[%c0_28, %c0_29] : memref<128x128xbf16, #tpu.memory_space<vmem>>, vector<128x128xbf16>
    %cst_30 = arith.constant dense<0.000000e+00> : vector<64x128xf32>
    %40 = tpu.matmul %38, %39, %cst_30 {dimension_numbers = #tpu.dot_dimension_numbers<[1], [0], [0], [1], [0, 0, 1, 1], [], []>} : vector<64x128xbf16>, vector<128x128xbf16>, vector<64x128xf32> -> vector<64x128xf32>
    %c0_31 = arith.constant 0 : index
    %c0_32 = arith.constant 0 : index
    %41 = vector.load %arg14[%c0_31, %c0_32] : memref<1x128xf32, #tpu.memory_space<vmem>>, vector<1x128xf32>
    %42 = vector.broadcast %41 : vector<1x128xf32> to vector<64x128xf32>
    %43 = arith.addf %40, %42 : vector<64x128xf32>
    %cst_33 = arith.constant dense<0xFF800000> : vector<64xf32>
    %44 = vector.multi_reduction <maximumf>, %43, %cst_33 [1] : vector<64x128xf32> to vector<64xf32>
    %45 = vector.shape_cast %44 : vector<64xf32> to vector<64x1xf32>
    %46 = vector.broadcast %45 : vector<64x1xf32> to vector<64x128xf32>
    %47 = arith.subf %43, %46 : vector<64x128xf32>
    %48 = math.exp %47 : vector<64x128xf32>
    %cst_34 = arith.constant dense<0.000000e+00> : vector<64xf32>
    %49 = vector.multi_reduction <add>, %48, %cst_34 [1] : vector<64x128xf32> to vector<64xf32>
    %50 = vector.shape_cast %49 : vector<64xf32> to vector<64x1xf32>
    %51 = math.log %50 : vector<64x1xf32>
    %52 = vector.broadcast %51 : vector<64x1xf32> to vector<64x128xf32>
    %53 = arith.subf %47, %52 : vector<64x128xf32>
    %c0_35 = arith.constant 0 : index
    %c0_36 = arith.constant 0 : index
    %c0_37 = arith.constant 0 : index
    %54 = vector.load %arg15[%c0_35, %c0_36, %c0_37] : memref<1x64x128xf32, #tpu.memory_space<vmem>>, vector<1x64x128xf32>
    %55 = vector.shape_cast %54 : vector<1x64x128xf32> to vector<64x128xf32>
    %56 = vector.shape_cast %53 : vector<64x128xf32> to vector<1x64x128xf32>
    tpu.vector_store %arg15[%c0_35, %c0_36, %c0_37], %56 {strides = array<i32>} : memref<1x64x128xf32, #tpu.memory_space<vmem>>, vector<1x64x128xf32>,
    return
  }
  func.func @transform_0(%arg0: i32, %arg1: i32) -> (i32, i32, i32) {
    %c0_i32 = arith.constant 0 : i32
    %c0_i32_0 = arith.constant 0 : i32
    return %arg0, %arg1, %c0_i32 : i32, i32, i32
  }
  func.func @transform_1(%arg0: i32, %arg1: i32) -> (i32, i32, i32) {
    %c0_i32 = arith.constant 0 : i32
    %c0_i32_0 = arith.constant 0 : i32
    %c0_i32_1 = arith.constant 0 : i32
    return %arg0, %c0_i32, %c0_i32_0 : i32, i32, i32
  }
  func.func @transform_2(%arg0: i32, %arg1: i32) -> (i32, i32) {
    %c0_i32 = arith.constant 0 : i32
    %c0_i32_0 = arith.constant 0 : i32
    %c0_i32_1 = arith.constant 0 : i32
    return %c0_i32, %c0_i32_0 : i32, i32
  }
  func.func @transform_3(%arg0: i32, %arg1: i32) -> (i32, i32) {
    %c0_i32 = arith.constant 0 : i32
    %c0_i32_0 = arith.constant 0 : i32
    %c0_i32_1 = arith.constant 0 : i32
    return %c0_i32, %c0_i32_0 : i32, i32
  }
  func.func @transform_4(%arg0: i32, %arg1: i32) -> (i32, i32) {
    %c0_i32 = arith.constant 0 : i32
    %c0_i32_0 = arith.constant 0 : i32
    %c0_i32_1 = arith.constant 0 : i32
    return %c0_i32, %c0_i32_0 : i32, i32
  }
  func.func @transform_5(%arg0: i32, %arg1: i32) -> (i32, i32) {
    %c0_i32 = arith.constant 0 : i32
    %c0_i32_0 = arith.constant 0 : i32
    %c0_i32_1 = arith.constant 0 : i32
    return %c0_i32, %c0_i32_0 : i32, i32
  }
  func.func @transform_6(%arg0: i32, %arg1: i32) -> (i32, i32) {
    %c0_i32 = arith.constant 0 : i32
    %c0_i32_0 = arith.constant 0 : i32
    %c0_i32_1 = arith.constant 0 : i32
    return %c0_i32, %c0_i32_0 : i32, i32
  }
  func.func @transform_7(%arg0: i32, %arg1: i32) -> (i32, i32) {
    %c0_i32 = arith.constant 0 : i32
    %c0_i32_0 = arith.constant 0 : i32
    %c0_i32_1 = arith.constant 0 : i32
    return %c0_i32, %c0_i32_0 : i32, i32
  }
  func.func @transform_8(%arg0: i32, %arg1: i32) -> (i32, i32) {
    %c0_i32 = arith.constant 0 : i32
    %c0_i32_0 = arith.constant 0 : i32
    %c0_i32_1 = arith.constant 0 : i32
    return %c0_i32, %c0_i32_0 : i32, i32
  }
  func.func @transform_9(%arg0: i32, %arg1: i32) -> (i32, i32) {
    %c0_i32 = arith.constant 0 : i32
    %c0_i32_0 = arith.constant 0 : i32
    %c0_i32_1 = arith.constant 0 : i32
    return %c0_i32, %c0_i32_0 : i32, i32
  }
  func.func @transform_10(%arg0: i32, %arg1: i32) -> (i32, i32) {
    %c0_i32 = arith.constant 0 : i32
    %c0_i32_0 = arith.constant 0 : i32
    %c0_i32_1 = arith.constant 0 : i32
    return %c0_i32, %c0_i32_0 : i32, i32
  }
  func.func @transform_11(%arg0: i32, %arg1: i32) -> (i32, i32) {
    %c0_i32 = arith.constant 0 : i32
    %c0_i32_0 = arith.constant 0 : i32
    %c0_i32_1 = arith.constant 0 : i32
    return %c0_i32, %c0_i32_0 : i32, i32
  }
  func.func @transform_12(%arg0: i32, %arg1: i32) -> (i32, i32) {
    %c0_i32 = arith.constant 0 : i32
    %c0_i32_0 = arith.constant 0 : i32
    %c0_i32_1 = arith.constant 0 : i32
    return %c0_i32, %c0_i32_0 : i32, i32
  }
  func.func @transform_13(%arg0: i32, %arg1: i32) -> (i32, i32, i32) {
    %c0_i32 = arith.constant 0 : i32
    %c0_i32_0 = arith.constant 0 : i32
    return %arg0, %arg1, %c0_i32 : i32, i32, i32
  }
}

</mosaic_0001>

<llo_original>
// kernel: pointnet_dense_cls_forward.5
$region0: #{pointnet_dense_cls_forward.5}
  #allocation0 [shape = 'u32[]', space=smem, size = 0x4, offset = 0x4, fixed_abs, tag = 'smem constant byte address 0x4 - core index']
  #allocation1 [shape = 'u32[144,128]{1,0:T(1,128)}', space=vmem, size = 0x12000, scoped, tag = 'internal scratch']
  %s0 = inlined_call_operand.vmem [shape: bf16[2,64,3], index: 0, kind: input, shape index: {}]
  %s1 = inlined_call_operand.hbm [shape: bf16[3,64], index: 1, kind: input, shape index: {}]
  %s2 = inlined_call_operand.hbm [shape: f32[1,64], index: 2, kind: input, shape index: {}]
  %s3 = inlined_call_operand.hbm [shape: f32[1,64], index: 3, kind: input, shape index: {}]
  %s4 = inlined_call_operand.hbm [shape: bf16[64,128], index: 4, kind: input, shape index: {}]
  %s5 = inlined_call_operand.hbm [shape: f32[1,128], index: 5, kind: input, shape index: {}]
  %s6 = inlined_call_operand.hbm [shape: f32[1,128], index: 6, kind: input, shape index: {}]
  %s7 = inlined_call_operand.hbm [shape: bf16[128,1024], index: 7, kind: input, shape index: {}]
  %s8 = inlined_call_operand.vmem [shape: f32[2,1,1024], index: 8, kind: output, shape index: {}]
  %s9 = sld [smem:[#allocation0]]
  $region97: #{pointnet_dense_cls_forward.5} parent=0
    _
  %s11 = ssub.s32 1, %s9
  %s12 = scalar_select 0, %s11, %s9
  $region1: #{pointnet_dense_cls_forward.5} parent=0
    #allocation2 [shape = 'u8[1024]{0}', space=vmem, size = 0x400, scoped, tag = 'input window, operand 1, single buffered']
    #allocation3 [shape = 's32[2]{0}', space=sflag, size = 0x8, scoped, tag = 'scoped memory for pointnet_dense_cls_forward.5']
    #allocation4 [shape = 'u8[512]{0}', space=vmem, size = 0x400, scoped, tag = 'input window, operand 2, single buffered']
    #allocation5 [shape = 's32[1]{0}', space=sflag, size = 0x4, scoped, tag = 'scoped memory for pointnet_dense_cls_forward.5']
    #allocation6 [shape = 'u8[512]{0}', space=vmem, size = 0x400, scoped, tag = 'input window, operand 3, single buffered']
    #allocation7 [shape = 'u8[16384]{0}', space=vmem, size = 0x4000, scoped, tag = 'input window, operand 4, single buffered']
    #allocation8 [shape = 's32[1]{0}', space=sflag, size = 0x4, scoped, tag = 'scoped memory for pointnet_dense_cls_forward.5']
    #allocation9 [shape = 'u8[512]{0}', space=vmem, size = 0x400, scoped, tag = 'input window, operand 5, single buffered']
    #allocation10 [shape = 'u8[512]{0}', space=vmem, size = 0x400, scoped, tag = 'input window, operand 6, single buffered']
    #allocation11 [shape = 's32[1]{0}', space=sflag, size = 0x4, scoped, tag = 'scoped memory for pointnet_dense_cls_forward.5']
    #allocation12 [shape = 'u8[262144]{0}', space=vmem, size = 0x40000, scoped, tag = 'input window, operand 7, single buffered']
    %13 = vsyncpa [#allocation3], 0
    %14 = vsyncpa [#allocation5], 0
    %15 = vsyncpa [#allocation8], 0
    %16 = vsyncpa [#allocation11], 0
    loop: start=0, step=1, limit=4
    $region2: #{pointnet_dense_cls_forward.5} parent=1 // loop_pre_header
      _
    $region3: #{pointnet_dense_cls_forward.5} parent=1 // loop_header
      %s18 = sphi 0, %s22
      %p19 = scmp.ge.s32.totalorder %s18, 4
      %s25 = sphi 0, %s44
      %s26 = sphi 0, %s40
      %s27 = sphi 0, %s36
      %s28 = sphi 0, %s25
      %s29 = sphi 0, %s26
      %s30 = sphi 0, %s27
      %s31 = sphi 0, %s28
      %s32 = sphi 0, %s29
      %s33 = sphi 0, %s30
      %s51 = sphi 0, %s53
      %s54 = sphi 0, %s51
      %s55 = sphi 0, %s54
      %s71 = sphi 0, %s55
      %s75 = sphi 0, %s75
      %s77 = sphi 0, %s75
      %s78 = sphi 0, %s77
      %s92 = sphi 0, %s78
      %s96 = sphi 0, %s96
      %s98 = sphi 0, %s96
      %s99 = sphi 0, %s98
      %s113 = sphi 0, %s99
      %s117 = sphi 0, %s117
      %s119 = sphi 0, %s117
      %s120 = sphi 0, %s119
      %s134 = sphi 0, %s120
      %s138 = sphi 0, %s138
      %s140 = sphi 0, %s138
      %s141 = sphi 0, %s140
      %s155 = sphi 0, %s141
      %s159 = sphi 0, %s159
      %s161 = sphi 0, %s159
      %s162 = sphi 0, %s161
      %s176 = sphi 0, %s162
      %s180 = sphi 0, %s180
      %s182 = sphi 0, %s180
      %s183 = sphi 0, %s182
      %s197 = sphi 0, %s183
      %s201 = sphi 0, %s201
      %s203 = sphi 0, %s201
      %s204 = sphi 0, %s203
      %s218 = sphi 0, %s204
      %s226 = sphi 0, %s228
      %s229 = sphi 0, %s226
      %s230 = sphi 0, %s229
      %s246 = sphi 0, %s230
    $region4: #{pointnet_dense_cls_forward.5} parent=1 // loop_header_branch
      %21 = sbr.rel (%p19) target = $region8
    $region5: #{pointnet_dense_cls_forward.5} parent=1 // loop_body
      %s23 = ssub.s32 %s18, 1
      %s24 = ssub.s32 %s18, 2
      %s34 = sadd.s32 1, %s27
      %p35 = scmp.ge.s32.totalorder %s34, 1
      %s36 = scalar_select %p35, 0, %s34
      %s37 = sadd.s32 1, %s26
      %s38 = scalar_select %p35, %s37, %s26
      %p39 = scmp.ge.s32.totalorder %s38, 1
      %s40 = scalar_select %p39, 0, %s38
      %s41 = sadd.s32 1, %s25
      %s42 = scalar_select %p39, %s41, %s25
      %p43 = scmp.ge.s32.totalorder %s42, 2
      %s44 = scalar_select %p43, 0, %s42
      %s45 = sadd.s32 %s26, %s27
      %s46 = sadd.s32 %s40, %s36
      %s47 = ssub.s32 %s25, %s44
      %s48 = ssub.s32 %s45, %s46
      %s49 = sor.u32 %s47, %s48
      %p50 = scmp.eq.s32.totalorder %s49, 0
      %s52 = sadd.s32 %s51, 1
      %s53 = scalar_select %p50, %s51, %s52
      %p56 = pneg %p50
      %p57 = scmp.eq.s32.totalorder %s18, 1
      %p58 = por %p56, %p57
      %p59 = scmp.ne.s32.totalorder %s51, %s54
      %p60 = scmp.eq.s32.totalorder %s18, 0
      %p61 = por %p59, %p60
      %p62 = scmp.ne.s32.totalorder %s51, %s54
      %p63 = scmp.eq.s32.totalorder %s23, 1
      %p64 = por %p62, %p63
      %p65 = scmp.ne.s32.totalorder %s54, %s55
      %p66 = scmp.eq.s32.totalorder %s23, 0
      %p67 = por %p65, %p66
      %p68 = scmp.ne.s32.totalorder %s54, %s55
      %p69 = scmp.eq.s32.totalorder %s24, 1
      %p70 = por %p68, %p69
      %p72 = scmp.ne.s32.totalorder %s55, %s71
      %p73 = scmp.eq.s32.totalorder %s24, 0
      %p74 = por %p72, %p73
      %s76 = sadd.s32 %s75, 1
      %p79 = scmp.eq.s32.totalorder %s18, 1
      %p80 = scmp.ne.s32.totalorder %s75, %s77
      %p81 = scmp.eq.s32.totalorder %s18, 0
      %p82 = por %p80, %p81
      %p83 = scmp.ne.s32.totalorder %s75, %s77
      %p84 = scmp.eq.s32.totalorder %s23, 1
      %p85 = por %p83, %p84
      %p86 = scmp.ne.s32.totalorder %s77, %s78
      %p87 = scmp.eq.s32.totalorder %s23, 0
      %p88 = por %p86, %p87
      %p89 = scmp.ne.s32.totalorder %s77, %s78
      %p90 = scmp.eq.s32.totalorder %s24, 1
      %p91 = por %p89, %p90
      %p93 = scmp.ne.s32.totalorder %s78, %s92
      %p94 = scmp.eq.s32.totalorder %s24, 0
      %p95 = por %p93, %p94
      %s97 = sadd.s32 %s96, 1
      %p100 = scmp.eq.s32.totalorder %s18, 1
      %p101 = scmp.ne.s32.totalorder %s96, %s98
      %p102 = scmp.eq.s32.totalorder %s18, 0
      %p103 = por %p101, %p102
      %p104 = scmp.ne.s32.totalorder %s96, %s98
      %p105 = scmp.eq.s32.totalorder %s23, 1
      %p106 = por %p104, %p105
      %p107 = scmp.ne.s32.totalorder %s98, %s99
      %p108 = scmp.eq.s32.totalorder %s23, 0
      %p109 = por %p107, %p108
      %p110 = scmp.ne.s32.totalorder %s98, %s99
      %p111 = scmp.eq.s32.totalorder %s24, 1
      %p112 = por %p110, %p111
      %p114 = scmp.ne.s32.totalorder %s99, %s113
      %p115 = scmp.eq.s32.totalorder %s24, 0
      %p116 = por %p114, %p115
      %s118 = sadd.s32 %s117, 1
      %p121 = scmp.eq.s32.totalorder %s18, 1
      %p122 = scmp.ne.s32.totalorder %s117, %s119
      %p123 = scmp.eq.s32.totalorder %s18, 0
      %p124 = por %p122, %p123
      %p125 = scmp.ne.s32.totalorder %s117, %s119
      %p126 = scmp.eq.s32.totalorder %s23, 1
      %p127 = por %p125, %p126
      %p128 = scmp.ne.s32.totalorder %s119, %s120
      %p129 = scmp.eq.s32.totalorder %s23, 0
      %p130 = por %p128, %p129
      %p131 = scmp.ne.s32.totalorder %s119, %s120
      %p132 = scmp.eq.s32.totalorder %s24, 1
      %p133 = por %p131, %p132
      %p135 = scmp.ne.s32.totalorder %s120, %s134
      %p136 = scmp.eq.s32.totalorder %s24, 0
      %p137 = por %p135, %p136
      %s139 = sadd.s32 %s138, 1
      %p142 = scmp.eq.s32.totalorder %s18, 1
      %p143 = scmp.ne.s32.totalorder %s138, %s140
      %p144 = scmp.eq.s32.totalorder %s18, 0
      %p145 = por %p143, %p144
      %p146 = scmp.ne.s32.totalorder %s138, %s140
      %p147 = scmp.eq.s32.totalorder %s23, 1
      %p148 = por %p146, %p147
      %p149 = scmp.ne.s32.totalorder %s140, %s141
      %p150 = scmp.eq.s32.totalorder %s23, 0
      %p151 = por %p149, %p150
      %p152 = scmp.ne.s32.totalorder %s140, %s141
      %p153 = scmp.eq.s32.totalorder %s24, 1
      %p154 = por %p152, %p153
      %p156 = scmp.ne.s32.totalorder %s141, %s155
      %p157 = scmp.eq.s32.totalorder %s24, 0
      %p158 = por %p156, %p157
      %s160 = sadd.s32 %s159, 1
      %p163 = scmp.eq.s32.totalorder %s18, 1
      %p164 = scmp.ne.s32.totalorder %s159, %s161
      %p165 = scmp.eq.s32.totalorder %s18, 0
      %p166 = por %p164, %p165
      %p167 = scmp.ne.s32.totalorder %s159, %s161
      %p168 = scmp.eq.s32.totalorder %s23, 1
      %p169 = por %p167, %p168
      %p170 = scmp.ne.s32.totalorder %s161, %s162
      %p171 = scmp.eq.s32.totalorder %s23, 0
      %p172 = por %p170, %p171
      %p173 = scmp.ne.s32.totalorder %s161, %s162
      %p174 = scmp.eq.s32.totalorder %s24, 1
      %p175 = por %p173, %p174
      %p177 = scmp.ne.s32.totalorder %s162, %s176
      %p178 = scmp.eq.s32.totalorder %s24, 0
      %p179 = por %p177, %p178
      %s181 = sadd.s32 %s180, 1
      %p184 = scmp.eq.s32.totalorder %s18, 1
      %p185 = scmp.ne.s32.totalorder %s180, %s182
      %p186 = scmp.eq.s32.totalorder %s18, 0
      %p187 = por %p185, %p186
      %p188 = scmp.ne.s32.totalorder %s180, %s182
      %p189 = scmp.eq.s32.totalorder %s23, 1
      %p190 = por %p188, %p189
      %p191 = scmp.ne.s32.totalorder %s182, %s183
      %p192 = scmp.eq.s32.totalorder %s23, 0
      %p193 = por %p191, %p192
      %p194 = scmp.ne.s32.totalorder %s182, %s183
      %p195 = scmp.eq.s32.totalorder %s24, 1
      %p196 = por %p194, %p195
      %p198 = scmp.ne.s32.totalorder %s183, %s197
      %p199 = scmp.eq.s32.totalorder %s24, 0
      %p200 = por %p198, %p199
      %s202 = sadd.s32 %s201, 1
      %p205 = scmp.eq.s32.totalorder %s18, 1
      %p206 = scmp.ne.s32.totalorder %s201, %s203
      %p207 = scmp.eq.s32.totalorder %s18, 0
      %p208 = por %p206, %p207
      %p209 = scmp.ne.s32.totalorder %s201, %s203
      %p210 = scmp.eq.s32.totalorder %s23, 1
      %p211 = por %p209, %p210
      %p212 = scmp.ne.s32.totalorder %s203, %s204
      %p213 = scmp.eq.s32.totalorder %s23, 0
      %p214 = por %p212, %p213
      %p215 = scmp.ne.s32.totalorder %s203, %s204
      %p216 = scmp.eq.s32.totalorder %s24, 1
      %p217 = por %p215, %p216
      %p219 = scmp.ne.s32.totalorder %s204, %s218
      %p220 = scmp.eq.s32.totalorder %s24, 0
      %p221 = por %p219, %p220
      %s222 = sadd.s32 %s25, %s26
      %s223 = sadd.s32 %s44, %s40
      %s224 = ssub.s32 %s222, %s223
      %p225 = scmp.eq.s32.totalorder %s224, 0
      %s227 = sadd.s32 %s226, 1
      %s228 = scalar_select %p225, %s226, %s227
      %p231 = pneg %p225
      %p232 = scmp.eq.s32.totalorder %s18, 1
      %p233 = por %p231, %p232
      %p234 = scmp.ne.s32.totalorder %s226, %s229
      %p235 = scmp.eq.s32.totalorder %s18, 0
      %p236 = por %p234, %p235
      %p237 = scmp.ne.s32.totalorder %s226, %s229
      %p238 = scmp.eq.s32.totalorder %s23, 1
      %p239 = por %p237, %p238
      %p240 = scmp.ne.s32.totalorder %s229, %s230
      %p241 = scmp.eq.s32.totalorder %s23, 0
      %p242 = por %p240, %p241
      %p243 = scmp.ne.s32.totalorder %s229, %s230
      %p244 = scmp.eq.s32.totalorder %s24, 1
      %p245 = por %p243, %p244
      %p247 = scmp.ne.s32.totalorder %s230, %s246
      %p248 = scmp.eq.s32.totalorder %s24, 0
      %p249 = por %p247, %p248
      %p250 = scmp.le.s32.totalorder 1, %s18
      %p251 = scmp.lt.s32.totalorder %s18, 3
      %p252 = pnand %p250, %p251
      %p253 = pneg %p252
      // Predicated region
      $region9: #{pointnet_dense_cls_forward.5} parent=5 // pred_check
        _
      $region10: #{pointnet_dense_cls_forward.5} parent=5 // pred_check_branch
        %255 = sbr.rel (%p252) target = $region12
      $region11: #{pointnet_dense_cls_forward.5} parent=5 // pred_region
        %s256 = ssub.s32 %s18, 1
        // Predicated region
        $region13: #{pointnet_dense_cls_forward.5} parent=11 // pred_check
          %p257 = pneg %p88
        $region14: #{pointnet_dense_cls_forward.5} parent=11 // pred_check_branch
          %259 = sbr.rel (%p257) target = $region16
        $region15: #{pointnet_dense_cls_forward.5} parent=11 // pred_region
          %s261 = ssub.s32 32, 32
          %262 = vsyncadd [#allocation3], %s261
          %s264 = sshll.u32 [#allocation2], 4
          %s265 = int_to_ptr.vmem [resolvable:$true] %s264
          %267 = dma.hbm_to_vmem [thread:$0]  %s1, 32, %s265, [#allocation3]
        $region16: #{pointnet_dense_cls_forward.5} parent=11 // pred_fallthru
          _
        // Predicated region
        $region17: #{pointnet_dense_cls_forward.5} parent=11 // pred_check
          %p268 = pneg %p109
        $region18: #{pointnet_dense_cls_forward.5} parent=11 // pred_check_branch
          %270 = sbr.rel (%p268) target = $region20
        $region19: #{pointnet_dense_cls_forward.5} parent=11 // pred_region
          %s272 = ssub.s32 16, 16
          %273 = vsyncadd [#allocation5], %s272
          %s275 = sshll.u32 [#allocation4], 4
          %s276 = int_to_ptr.vmem [resolvable:$true] %s275
          %278 = dma.hbm_to_vmem [thread:$0]  %s2, 16, %s276, [#allocation5]
        $region20: #{pointnet_dense_cls_forward.5} parent=11 // pred_fallthru
          _
        // Predicated region
        $region21: #{pointnet_dense_cls_forward.5} parent=11 // pred_check
          %p279 = pneg %p130
        $region22: #{pointnet_dense_cls_forward.5} parent=11 // pred_check_branch
          %281 = sbr.rel (%p279) target = $region24
        $region23: #{pointnet_dense_cls_forward.5} parent=11 // pred_region
          %s283 = ssub.s32 16, 16
          %284 = vsyncadd [#allocation5], %s283
          %s286 = sshll.u32 [#allocation6], 4
          %s287 = int_to_ptr.vmem [resolvable:$true] %s286
          %289 = dma.hbm_to_vmem [thread:$0]  %s3, 16, %s287, [#allocation5]
        $region24: #{pointnet_dense_cls_forward.5} parent=11 // pred_fallthru
          _
        // Predicated region
        $region25: #{pointnet_dense_cls_forward.5} parent=11 // pred_check
          %p290 = pneg %p151
        $region26: #{pointnet_dense_cls_forward.5} parent=11 // pred_check_branch
          %292 = sbr.rel (%p290) target = $region28
        $region27: #{pointnet_dense_cls_forward.5} parent=11 // pred_region
          %s294 = ssub.s32 512, 512
          %295 = vsyncadd [#allocation8], %s294
          %s296 = sshll.u32 [#allocation7], 4
          %s297 = int_to_ptr.vmem [resolvable:$true] %s296
          %302 = dma.hbm_to_vmem [thread:$0]  %s4, 512, %s297, [#allocation8], 64, 64, 4
        $region28: #{pointnet_dense_cls_forward.5} parent=11 // pred_fallthru
          _
        // Predicated region
        $region29: #{pointnet_dense_cls_forward.5} parent=11 // pred_check
          %p303 = pneg %p172
        $region30: #{pointnet_dense_cls_forward.5} parent=11 // pred_check_branch
          %305 = sbr.rel (%p303) target = $region32
        $region31: #{pointnet_dense_cls_forward.5} parent=11 // pred_region
          %s307 = ssub.s32 16, 16
          %308 = vsyncadd [#allocation8], %s307
          %s310 = sshll.u32 [#allocation9], 4
          %s311 = int_to_ptr.vmem [resolvable:$true] %s310
          %313 = dma.hbm_to_vmem [thread:$0]  %s5, 16, %s311, [#allocation8]
        $region32: #{pointnet_dense_cls_forward.5} parent=11 // pred_fallthru
          _
        // Predicated region
        $region33: #{pointnet_dense_cls_forward.5} parent=11 // pred_check
          %p314 = pneg %p193
        $region34: #{pointnet_dense_cls_forward.5} parent=11 // pred_check_branch
          %316 = sbr.rel (%p314) target = $region36
        $region35: #{pointnet_dense_cls_forward.5} parent=11 // pred_region
          %s318 = ssub.s32 16, 16
          %319 = vsyncadd [#allocation11], %s318
          %s321 = sshll.u32 [#allocation10], 4
          %s322 = int_to_ptr.vmem [resolvable:$true] %s321
          %324 = dma.hbm_to_vmem [thread:$0]  %s6, 16, %s322, [#allocation11]
        $region36: #{pointnet_dense_cls_forward.5} parent=11 // pred_fallthru
          _
        // Predicated region
        $region37: #{pointnet_dense_cls_forward.5} parent=11 // pred_check
          %p325 = pneg %p214
        $region38: #{pointnet_dense_cls_forward.5} parent=11 // pred_check_branch
          %327 = sbr.rel (%p325) target = $region40
        $region39: #{pointnet_dense_cls_forward.5} parent=11 // pred_region
          %s329 = ssub.s32 8192, 8192
          %330 = vsyncadd [#allocation11], %s329
          %s331 = sshll.u32 [#allocation12], 4
          %s332 = int_to_ptr.vmem [resolvable:$true] %s331
          %337 = dma.hbm_to_vmem [thread:$0]  %s7, 8192, %s332, [#allocation11], 512, 512, 32
        $region40: #{pointnet_dense_cls_forward.5} parent=11 // pred_fallthru
          _
      $region12: #{pointnet_dense_cls_forward.5} parent=5 // pred_fallthru
        _
      %p338 = scmp.lt.s32.totalorder %s18, 2
      // Predicated region
      $region41: #{pointnet_dense_cls_forward.5} parent=5 // pred_check
        %p339 = pneg %p338
      $region42: #{pointnet_dense_cls_forward.5} parent=5 // pred_check_branch
        %341 = sbr.rel (%p339) target = $region44
      $region43: #{pointnet_dense_cls_forward.5} parent=5 // pred_region
        // Predicated region
        $region45: #{pointnet_dense_cls_forward.5} parent=43 // pred_check
          %p342 = pneg %p61
        $region46: #{pointnet_dense_cls_forward.5} parent=43 // pred_check_branch
          %344 = sbr.rel (%p342) target = $region48
        $region47: #{pointnet_dense_cls_forward.5} parent=43 // pred_region
          %s345 = sadd.s32 %s26, %s27
          %s346 = smul.u32 8, %s345
          %p347 = scmp.lt.s32.totalorder %s25, 1
          %s348 = scalar_select %p347, %s25, 1
          %p349 = scmp.lt.s32.totalorder %s346, 7
          %s350 = scalar_select %p349, %s346, 7
          %s351 = smul.addr %s348, 8
          %s352 = sadd.s32 %s350, %s351
          %s353 = smul.addr %s352, 4
          %s354 = scalar_lea.vmem %s0, %s353
          %s355 = sadd.s32 %s26, %s27
          %s356 = smul.u32 8, %s355
        $region48: #{pointnet_dense_cls_forward.5} parent=43 // pred_fallthru
          _
      $region44: #{pointnet_dense_cls_forward.5} parent=5 // pred_fallthru
        _
      %p357 = scmp.le.s32.totalorder 1, %s18
      %p358 = scmp.lt.s32.totalorder %s18, 3
      %p359 = pnand %p357, %p358
      %p360 = pneg %p359
      // Predicated region
      $region49: #{pointnet_dense_cls_forward.5} parent=5 // pred_check
        _
      $region50: #{pointnet_dense_cls_forward.5} parent=5 // pred_check_branch
        %362 = sbr.rel (%p359) target = $region52
      $region51: #{pointnet_dense_cls_forward.5} parent=5 // pred_region
        %s363 = ssub.s32 %s18, 1
        // Predicated region
        $region53: #{pointnet_dense_cls_forward.5} parent=51 // pred_check
          %p364 = pneg %p88
        $region54: #{pointnet_dense_cls_forward.5} parent=51 // pred_check_branch
          %366 = sbr.rel (%p364) target = $region56
        $region55: #{pointnet_dense_cls_forward.5} parent=51 // pred_region
          %367 = dma.done [#allocation3], 32
        $region56: #{pointnet_dense_cls_forward.5} parent=51 // pred_fallthru
          _
        // Predicated region
        $region57: #{pointnet_dense_cls_forward.5} parent=51 // pred_check
          %p368 = pneg %p109
        $region58: #{pointnet_dense_cls_forward.5} parent=51 // pred_check_branch
          %370 = sbr.rel (%p368) target = $region60
        $region59: #{pointnet_dense_cls_forward.5} parent=51 // pred_region
          %371 = dma.done [#allocation5], 16
        $region60: #{pointnet_dense_cls_forward.5} parent=51 // pred_fallthru
          _
        // Predicated region
        $region61: #{pointnet_dense_cls_forward.5} parent=51 // pred_check
          %p372 = pneg %p130
        $region62: #{pointnet_dense_cls_forward.5} parent=51 // pred_check_branch
          %374 = sbr.rel (%p372) target = $region64
        $region63: #{pointnet_dense_cls_forward.5} parent=51 // pred_region
          %375 = dma.done [#allocation5], 16
        $region64: #{pointnet_dense_cls_forward.5} parent=51 // pred_fallthru
          _
        // Predicated region
        $region65: #{pointnet_dense_cls_forward.5} parent=51 // pred_check
          %p376 = pneg %p151
        $region66: #{pointnet_dense_cls_forward.5} parent=51 // pred_check_branch
          %378 = sbr.rel (%p376) target = $region68
        $region67: #{pointnet_dense_cls_forward.5} parent=51 // pred_region
          %379 = dma.done [#allocation8], 512
        $region68: #{pointnet_dense_cls_forward.5} parent=51 // pred_fallthru
          _
        // Predicated region
        $region69: #{pointnet_dense_cls_forward.5} parent=51 // pred_check
          %p380 = pneg %p172
        $region70: #{pointnet_dense_cls_forward.5} parent=51 // pred_check_branch
          %382 = sbr.rel (%p380) target = $region72
        $region71: #{pointnet_dense_cls_forward.5} parent=51 // pred_region
          %383 = dma.done [#allocation8], 16
        $region72: #{pointnet_dense_cls_forward.5} parent=51 // pred_fallthru
          _
        // Predicated region
        $region73: #{pointnet_dense_cls_forward.5} parent=51 // pred_check
          %p384 = pneg %p193
        $region74: #{pointnet_dense_cls_forward.5} parent=51 // pred_check_branch
          %386 = sbr.rel (%p384) target = $region76
        $region75: #{pointnet_dense_cls_forward.5} parent=51 // pred_region
          %387 = dma.done [#allocation11], 16
        $region76: #{pointnet_dense_cls_forward.5} parent=51 // pred_fallthru
          _
        // Predicated region
        $region77: #{pointnet_dense_cls_forward.5} parent=51 // pred_check
          %p388 = pneg %p214
        $region78: #{pointnet_dense_cls_forward.5} parent=51 // pred_check_branch
          %390 = sbr.rel (%p388) target = $region80
        $region79: #{pointnet_dense_cls_forward.5} parent=51 // pred_region
          %391 = dma.done [#allocation11], 8192
        $region80: #{pointnet_dense_cls_forward.5} parent=51 // pred_fallthru
          _
        %s392 = sadd.s32 %s29, %s30
        %s393 = smul.u32 8, %s392
        %p394 = scmp.lt.s32.totalorder %s28, 1
        %s395 = scalar_select %p394, %s28, 1
        %p396 = scmp.lt.s32.totalorder %s393, 7
        %s397 = scalar_select %p396, %s393, 7
        %s398 = smul.addr %s395, 8
        %s399 = sadd.s32 %s397, %s398
        %s400 = smul.addr %s399, 4
        %s401 = scalar_lea.vmem %s0, %s400
        %p402 = pneg %p67
        %p403 = pneg %p64
        %p404 = pneg %p88
        %p405 = pneg %p85
        %p406 = pneg %p109
        %p407 = pneg %p106
        %p408 = pneg %p130
        %p409 = pneg %p127
        %p410 = pneg %p151
        %p411 = pneg %p148
        %p412 = pneg %p172
        %p413 = pneg %p169
        %p414 = pneg %p193
        %p415 = pneg %p190
        %p416 = pneg %p214
        %p417 = pneg %p211
        %p418 = pneg %p242
        %p419 = pneg %p239
        %s420 = sadd.s32 %s28, %s29
        %p421 = scmp.lt.s32.totalorder %s420, 1
        %s422 = scalar_select %p421, %s420, 1
        %s423 = smul.addr %s422, 8
        %s424 = scalar_lea.vmem %s8, %s423
        %s425 = sadd.s32 %s29, %s30
        %s426 = smul.u32 8, %s425
        %p427 = scmp.lt.s32.totalorder %s28, 1
        %s428 = scalar_select %p427, %s28, 1
        %p429 = scmp.lt.s32.totalorder %s426, 7
        %s430 = scalar_select %p429, %s426, 7
        %s431 = smul.addr %s428, 8
        %s432 = sadd.s32 %s430, %s431
        %s433 = smul.addr %s432, 4
        %s434 = scalar_lea.vmem %s0, %s433
        %s435 = sadd.s32 %s29, %s30
        %s436 = smul.u32 8, %s435
        %s437 = sadd.s32 %s28, %s29
        %p438 = scmp.lt.s32.totalorder %s437, 1
        %s439 = scalar_select %p438, %s437, 1
        %s440 = smul.addr %s439, 8
        %s441 = scalar_lea.vmem %s8, %s440
        %s442 = sadd.s32 %s28, %s29
        %p444 = scmp.eq.s32.totalorder %s30, 0
        // Predicated region
        $region81: #{pointnet_dense_cls_forward.5} parent=51 // pred_check
          %p445 = pneg %p444
        $region82: #{pointnet_dense_cls_forward.5} parent=51 // pred_check_branch
          %447 = sbr.rel (%p445) target = $region84
        $region83: #{pointnet_dense_cls_forward.5} parent=51 // pred_region
          %448 = vst [vmem:[%s441] sm:$0xff] -inf
        $region84: #{pointnet_dense_cls_forward.5} parent=51 // pred_fallthru
          _
        %v449 = vld [vmem:[#allocation2] sm:$0x3]
        %v450 = vld [vmem:[%s434] sm:$0xf]
        %v451 = vld [vmem:[%s434 + $0x4] sm:$0xf]
        %v452 = vld [vmem:[%s434 + $0x8] sm:$0xf]
        %v453 = vld [vmem:[%s434 + $0xc] sm:$0xf]
        %v454 = vld [vmem:[%s434 + $0x10] sm:$0xf]
        %v455 = vld [vmem:[%s434 + $0x14] sm:$0xf]
        %v456 = vld [vmem:[%s434 + $0x18] sm:$0xf]
        %v457 = vld [vmem:[%s434 + $0x1c] sm:$0xf]
        %v466 = vunpack.c.l.b16 %v450
        %v467 = vunpack.c.l.b16 %v451
        %v468 = vunpack.c.l.b16 %v452
        %v469 = vunpack.c.l.b16 %v453
        %v470 = vunpack.c.l.b16 %v454
        %v471 = vunpack.c.l.b16 %v455
        %v472 = vunpack.c.l.b16 %v456
        %v473 = vunpack.c.l.b16 %v457
        %v474 = vpack.c.b16 %v467, %v466
        %v475 = vpack.c.b16 %v469, %v468
        %v476 = vpack.c.b16 %v471, %v470
        %v477 = vpack.c.b16 %v473, %v472
        %vm478 = vcmask 23552
        %v480 = vsel %vm478, %v474, 0
        %v483 = vsel %vm478, %v475, 0
        %v486 = vsel %vm478, %v476, 0
        %v489 = vsel %vm478, %v477, 0
        %vm491 = vcmask 1040384
        %vm492 = vcmask 1041408
        %v493 = vsel %vm491, 4294967295, 65535
        %v494 = vsel %vm492, %v493, 0
        %v496 = vand.u32 %v449, %v494
        %498 = vmatprep.subr.bf16.mxu0 0
        %499 = vmatpush1.bf16.msra.mxu0 0
        %500 = vmatprep.subr.bf16.mxu0 0
        %501 = vmatpush1.bf16.msra.mxu0 0
        %502 = vmatprep.subr.bf16.mxu0 0
        %503 = vmatpush1.bf16.msra.mxu0 0
        %504 = vmatprep.subr.bf16.mxu0 0
        %505 = vmatpush1.bf16.msra.mxu0 0
        %506 = vmatprep.subr.bf16.mxu0 0
        %507 = vmatpush1.bf16.msra.mxu0 0
        %508 = vmatprep.subr.bf16.mxu0 0
        %509 = vmatpush1.bf16.msra.mxu0 0
        %510 = vmatprep.subr.bf16.mxu0 0
        %511 = vmatpush1.bf16.msra.mxu0 0
        %512 = vmatprep.subr.bf16.mxu0 0
        %513 = vmatpush1.bf16.msra.mxu0 %v496
        %514 = vmatprep.subr.bf16.mxu0 0
        %515 = vmatpush2.bf16.msra.mxu0 0
        %516 = vmatprep.subr.bf16.mxu0 0
        %517 = vmatpush2.bf16.msra.mxu0 0
        %518 = vmatprep.subr.bf16.mxu0 0
        %519 = vmatpush2.bf16.msra.mxu0 0
        %520 = vmatprep.subr.bf16.mxu0 0
        %521 = vmatpush2.bf16.msra.mxu0 0
        %522 = vmatprep.subr.bf16.mxu0 0
        %523 = vmatpush2.bf16.msra.mxu0 0
        %524 = vmatprep.subr.bf16.mxu0 0
        %525 = vmatpush2.bf16.msra.mxu0 0
        %526 = vmatprep.subr.bf16.mxu0 0
        %527 = vmatpush2.bf16.msra.mxu0 0
        %528 = vmatprep.subr.bf16.mxu0 0
        %529 = vmatpush2.bf16.msra.mxu0 0
        %530 = vmatprep.mubr.bf16.mxu0 0
        %531 = vmatmul.mubr.bf16.gmra.mxu0 %v480
        %v532 = vpop.f32.mrf.mxu0
        %v533 = vadd.f32 0.0, %v532
        %v534 = vpop.f32.mrf.mxu0
        %v535 = vpop.f32.mrf.mxu0
        %v536 = vadd.f32 0.0, %v535
        %v537 = vpop.f32.mrf.mxu0
        %538 = vmatprep.mubr.bf16.mxu0 0
        %539 = vmatmul.mubr.bf16.gmra.mxu0 %v483
        %v540 = vpop.f32.mrf.mxu0
        %v541 = vadd.f32 0.0, %v540
        %v542 = vpop.f32.mrf.mxu0
        %v543 = vpop.f32.mrf.mxu0
        %v544 = vadd.f32 0.0, %v543
        %v545 = vpop.f32.mrf.mxu0
        %546 = vmatprep.mubr.bf16.mxu0 0
        %547 = vmatmul.mubr.bf16.gmra.mxu0 %v486
        %v548 = vpop.f32.mrf.mxu0
        %v549 = vadd.f32 0.0, %v548
        %v550 = vpop.f32.mrf.mxu0
        %v551 = vpop.f32.mrf.mxu0
        %v552 = vadd.f32 0.0, %v551
        %v553 = vpop.f32.mrf.mxu0
        %554 = vmatprep.mubr.bf16.mxu0 0
        %555 = vmatmul.mubr.bf16.gmra.mxu0 %v489
        %v556 = vpop.f32.mrf.mxu0
        %v557 = vadd.f32 0.0, %v556
        %v558 = vpop.f32.mrf.mxu0
        %v559 = vpop.f32.mrf.mxu0
        %v560 = vadd.f32 0.0, %v559
        %v561 = vpop.f32.mrf.mxu0
        %562 = vdwg.mxu0
        %v563 = vld [vmem:[#allocation4] sm:$0x1]
        %v565 = vlaneseq
        %v566 = vshrl.u32 %v565, 7
        %v567 = vsub.s32 0, %v566
        %v568 = vrot.slane %v563, %v567
        %v570 = vmul.f32 %v533, %v568
        %v571 = vmul.f32 %v536, %v568
        %v572 = vmul.f32 %v541, %v568
        %v573 = vmul.f32 %v544, %v568
        %v574 = vmul.f32 %v549, %v568
        %v575 = vmul.f32 %v552, %v568
        %v576 = vmul.f32 %v557, %v568
        %v577 = vmul.f32 %v560, %v568
        %v578 = vld [vmem:[#allocation6] sm:$0x1]
        %v580 = vlaneseq
        %v581 = vshrl.u32 %v580, 7
        %v582 = vsub.s32 0, %v581
        %v583 = vrot.slane %v578, %v582
        %v585 = vadd.f32 %v570, %v583
        %v586 = vadd.f32 %v571, %v583
        %v587 = vadd.f32 %v572, %v583
        %v588 = vadd.f32 %v573, %v583
        %v589 = vadd.f32 %v574, %v583
        %v590 = vadd.f32 %v575, %v583
        %v591 = vadd.f32 %v576, %v583
        %v592 = vadd.f32 %v577, %v583
        %v593 = vmax.f32 %v585, 0.0
        %v594 = vmax.f32 %v586, 0.0
        %v595 = vmax.f32 %v587, 0.0
        %v596 = vmax.f32 %v588, 0.0
        %v597 = vmax.f32 %v589, 0.0
        %v598 = vmax.f32 %v590, 0.0
        %v599 = vmax.f32 %v591, 0.0
        %v600 = vmax.f32 %v592, 0.0
        %v601 = vpack.c.bf16 %v594, %v593
        %v602 = vpack.c.bf16 %v596, %v595
        %v603 = vpack.c.bf16 %v598, %v597
        %v604 = vpack.c.bf16 %v600, %v599
        %v605 = vld [vmem:[#allocation7] sm:$0xf]
        %v606 = vld [vmem:[#allocation7 + $0x4] sm:$0xf]
        %v607 = vld [vmem:[#allocation7 + $0x8] sm:$0xf]
        %v608 = vld [vmem:[#allocation7 + $0xc] sm:$0xf]
        %v609 = vld [vmem:[#allocation7 + $0x10] sm:$0xf]
        %v610 = vld [vmem:[#allocation7 + $0x14] sm:$0xf]
        %v611 = vld [vmem:[#allocation7 + $0x18] sm:$0xf]
        %v612 = vld [vmem:[#allocation7 + $0x1c] sm:$0xf]
        %v621 = vunpack.c.l.b16 %v605
        %v622 = vunpack.c.l.b16 %v606
        %v623 = vunpack.c.l.b16 %v607
        %v624 = vunpack.c.l.b16 %v608
        %v625 = vunpack.c.l.b16 %v609
        %v626 = vunpack.c.l.b16 %v610
        %v627 = vunpack.c.l.b16 %v611
        %v628 = vunpack.c.l.b16 %v612
        %v629 = vpack.c.b16 %v622, %v621
        %v630 = vpack.c.b16 %v624, %v623
        %v631 = vpack.c.b16 %v626, %v625
        %v632 = vpack.c.b16 %v628, %v627
        %vm637 = vcmask 523264
        %v639 = vsel %vm637, %v601, 0
        %v642 = vsel %vm637, %v602, 0
        %v645 = vsel %vm637, %v603, 0
        %v648 = vsel %vm637, %v604, 0
        %650 = vmatprep.subr.bf16.mxu0 0
        %651 = vmatpush1.bf16.msra.mxu0 0
        %652 = vmatprep.subr.bf16.mxu0 0
        %653 = vmatpush1.bf16.msra.mxu0 0
        %654 = vmatprep.subr.bf16.mxu0 0
        %655 = vmatpush1.bf16.msra.mxu0 0
        %656 = vmatprep.subr.bf16.mxu0 0
        %657 = vmatpush1.bf16.msra.mxu0 0
        %658 = vmatprep.subr.bf16.mxu0 0
        %659 = vmatpush1.bf16.msra.mxu0 %v632
        %660 = vmatprep.subr.bf16.mxu0 0
        %661 = vmatpush1.bf16.msra.mxu0 %v631
        %662 = vmatprep.subr.bf16.mxu0 0
        %663 = vmatpush1.bf16.msra.mxu0 %v630
        %664 = vmatprep.subr.bf16.mxu0 0
        %665 = vmatpush1.bf16.msra.mxu0 %v629
        %666 = vmatprep.subr.bf16.mxu0 0
        %667 = vmatpush2.bf16.msra.mxu0 0
        %668 = vmatprep.subr.bf16.mxu0 0
        %669 = vmatpush2.bf16.msra.mxu0 0
        %670 = vmatprep.subr.bf16.mxu0 0
        %671 = vmatpush2.bf16.msra.mxu0 0
        %672 = vmatprep.subr.bf16.mxu0 0
        %673 = vmatpush2.bf16.msra.mxu0 0
        %674 = vmatprep.subr.bf16.mxu0 0
        %675 = vmatpush2.bf16.msra.mxu0 0
        %676 = vmatprep.subr.bf16.mxu0 0
        %677 = vmatpush2.bf16.msra.mxu0 0
        %678 = vmatprep.subr.bf16.mxu0 0
        %679 = vmatpush2.bf16.msra.mxu0 0
        %680 = vmatprep.subr.bf16.mxu0 0
        %681 = vmatpush2.bf16.msra.mxu0 0
        %682 = vmatprep.mubr.bf16.mxu0 0
        %683 = vmatmul.mubr.bf16.gmra.mxu0 %v639
        %v684 = vpop.f32.mrf.mxu0
        %v685 = vadd.f32 0.0, %v684
        %v686 = vpop.f32.mrf.mxu0
        %v687 = vpop.f32.mrf.mxu0
        %v688 = vadd.f32 0.0, %v687
        %v689 = vpop.f32.mrf.mxu0
        %690 = vmatprep.mubr.bf16.mxu0 0
        %691 = vmatmul.mubr.bf16.gmra.mxu0 %v642
        %v692 = vpop.f32.mrf.mxu0
        %v693 = vadd.f32 0.0, %v692
        %v694 = vpop.f32.mrf.mxu0
        %v695 = vpop.f32.mrf.mxu0
        %v696 = vadd.f32 0.0, %v695
        %v697 = vpop.f32.mrf.mxu0
        %698 = vmatprep.mubr.bf16.mxu0 0
        %699 = vmatmul.mubr.bf16.gmra.mxu0 %v645
        %v700 = vpop.f32.mrf.mxu0
        %v701 = vadd.f32 0.0, %v700
        %v702 = vpop.f32.mrf.mxu0
        %v703 = vpop.f32.mrf.mxu0
        %v704 = vadd.f32 0.0, %v703
        %v705 = vpop.f32.mrf.mxu0
        %706 = vmatprep.mubr.bf16.mxu0 0
        %707 = vmatmul.mubr.bf16.gmra.mxu0 %v648
        %v708 = vpop.f32.mrf.mxu0
        %v709 = vadd.f32 0.0, %v708
        %v710 = vpop.f32.mrf.mxu0
        %v711 = vpop.f32.mrf.mxu0
        %v712 = vadd.f32 0.0, %v711
        %v713 = vpop.f32.mrf.mxu0
        %714 = vdwg.mxu0
        %v715 = vld [vmem:[#allocation9] sm:$0x1]
        %v717 = vlaneseq
        %v718 = vshrl.u32 %v717, 7
        %v719 = vsub.s32 0, %v718
        %v720 = vrot.slane %v715, %v719
        %v722 = vmul.f32 %v685, %v720
        %v723 = vmul.f32 %v688, %v720
        %v724 = vmul.f32 %v693, %v720
        %v725 = vmul.f32 %v696, %v720
        %v726 = vmul.f32 %v701, %v720
        %v727 = vmul.f32 %v704, %v720
        %v728 = vmul.f32 %v709, %v720
        %v729 = vmul.f32 %v712, %v720
        %v730 = vld [vmem:[#allocation10] sm:$0x1]
        %v732 = vlaneseq
        %v733 = vshrl.u32 %v732, 7
        %v734 = vsub.s32 0, %v733
        %v735 = vrot.slane %v730, %v734
        %v737 = vadd.f32 %v722, %v735
        %v738 = vadd.f32 %v723, %v735
        %v739 = vadd.f32 %v724, %v735
        %v740 = vadd.f32 %v725, %v735
        %v741 = vadd.f32 %v726, %v735
        %v742 = vadd.f32 %v727, %v735
        %v743 = vadd.f32 %v728, %v735
        %v744 = vadd.f32 %v729, %v735
        %v745 = vmax.f32 %v737, 0.0
        %v746 = vmax.f32 %v738, 0.0
        %v747 = vmax.f32 %v739, 0.0
        %v748 = vmax.f32 %v740, 0.0
        %v749 = vmax.f32 %v741, 0.0
        %v750 = vmax.f32 %v742, 0.0
        %v751 = vmax.f32 %v743, 0.0
        %v752 = vmax.f32 %v744, 0.0
        %v753 = vpack.c.bf16 %v746, %v745
        %v754 = vpack.c.bf16 %v748, %v747
        %v755 = vpack.c.bf16 %v750, %v749
        %v756 = vpack.c.bf16 %v752, %v751
        %v757 = vld [vmem:[#allocation12] sm:$0xff]
        %v758 = vld [vmem:[#allocation12 + $0x8] sm:$0xff]
        %v759 = vld [vmem:[#allocation12 + $0x10] sm:$0xff]
        %v760 = vld [vmem:[#allocation12 + $0x18] sm:$0xff]
        %v761 = vld [vmem:[#allocation12 + $0x20] sm:$0xff]
        %v762 = vld [vmem:[#allocation12 + $0x28] sm:$0xff]
        %v763 = vld [vmem:[#allocation12 + $0x30] sm:$0xff]
        %v764 = vld [vmem:[#allocation12 + $0x38] sm:$0xff]
        %v765 = vld [vmem:[#allocation12 + $0x40] sm:$0xff]
        %v766 = vld [vmem:[#allocation12 + $0x48] sm:$0xff]
        %v767 = vld [vmem:[#allocation12 + $0x50] sm:$0xff]
        %v768 = vld [vmem:[#allocation12 + $0x58] sm:$0xff]
        %v769 = vld [vmem:[#allocation12 + $0x60] sm:$0xff]
        %v770 = vld [vmem:[#allocation12 + $0x68] sm:$0xff]
        %v771 = vld [vmem:[#allocation12 + $0x70] sm:$0xff]
        %v772 = vld [vmem:[#allocation12 + $0x78] sm:$0xff]
        %v773 = vld [vmem:[#allocation12 + $0x80] sm:$0xff]
        %v774 = vld [vmem:[#allocation12 + $0x88] sm:$0xff]
        %v775 = vld [vmem:[#allocation12 + $0x90] sm:$0xff]
        %v776 = vld [vmem:[#allocation12 + $0x98] sm:$0xff]
        %v777 = vld [vmem:[#allocation12 + $0xa0] sm:$0xff]
        %v778 = vld [vmem:[#allocation12 + $0xa8] sm:$0xff]
        %v779 = vld [vmem:[#allocation12 + $0xb0] sm:$0xff]
        %v780 = vld [vmem:[#allocation12 + $0xb8] sm:$0xff]
        %v781 = vld [vmem:[#allocation12 + $0xc0] sm:$0xff]
        %v782 = vld [vmem:[#allocation12 + $0xc8] sm:$0xff]
        %v783 = vld [vmem:[#allocation12 + $0xd0] sm:$0xff]
        %v784 = vld [vmem:[#allocation12 + $0xd8] sm:$0xff]
        %v785 = vld [vmem:[#allocation12 + $0xe0] sm:$0xff]
        %v786 = vld [vmem:[#allocation12 + $0xe8] sm:$0xff]
        %v787 = vld [vmem:[#allocation12 + $0xf0] sm:$0xff]
        %v788 = vld [vmem:[#allocation12 + $0xf8] sm:$0xff]
        %v789 = vld [vmem:[#allocation12 + $0x100] sm:$0xff]
        %v790 = vld [vmem:[#allocation12 + $0x108] sm:$0xff]
        %v791 = vld [vmem:[#allocation12 + $0x110] sm:$0xff]
        %v792 = vld [vmem:[#allocation12 + $0x118] sm:$0xff]
        %v793 = vld [vmem:[#allocation12 + $0x120] sm:$0xff]
        %v794 = vld [vmem:[#allocation12 + $0x128] sm:$0xff]
        %v795 = vld [vmem:[#allocation12 + $0x130] sm:$0xff]
        %v796 = vld [vmem:[#allocation12 + $0x138] sm:$0xff]
        %v797 = vld [vmem:[#allocation12 + $0x140] sm:$0xff]
        %v798 = vld [vmem:[#allocation12 + $0x148] sm:$0xff]
        %v799 = vld [vmem:[#allocation12 + $0x150] sm:$0xff]
        %v800 = vld [vmem:[#allocation12 + $0x158] sm:$0xff]
        %v801 = vld [vmem:[#allocation12 + $0x160] sm:$0xff]
        %v802 = vld [vmem:[#allocation12 + $0x168] sm:$0xff]
        %v803 = vld [vmem:[#allocation12 + $0x170] sm:$0xff]
        %v804 = vld [vmem:[#allocation12 + $0x178] sm:$0xff]
        %v805 = vld [vmem:[#allocation12 + $0x180] sm:$0xff]
        %v806 = vld [vmem:[#allocation12 + $0x188] sm:$0xff]
        %v807 = vld [vmem:[#allocation12 + $0x190] sm:$0xff]
        %v808 = vld [vmem:[#allocation12 + $0x198] sm:$0xff]
        %v809 = vld [vmem:[#allocation12 + $0x1a0] sm:$0xff]
        %v810 = vld [vmem:[#allocation12 + $0x1a8] sm:$0xff]
        %v811 = vld [vmem:[#allocation12 + $0x1b0] sm:$0xff]
        %v812 = vld [vmem:[#allocation12 + $0x1b8] sm:$0xff]
        %v813 = vld [vmem:[#allocation12 + $0x1c0] sm:$0xff]
        %v814 = vld [vmem:[#allocation12 + $0x1c8] sm:$0xff]
        %v815 = vld [vmem:[#allocation12 + $0x1d0] sm:$0xff]
        %v816 = vld [vmem:[#allocation12 + $0x1d8] sm:$0xff]
        %v817 = vld [vmem:[#allocation12 + $0x1e0] sm:$0xff]
        %v818 = vld [vmem:[#allocation12 + $0x1e8] sm:$0xff]
        %v819 = vld [vmem:[#allocation12 + $0x1f0] sm:$0xff]
        %v820 = vld [vmem:[#allocation12 + $0x1f8] sm:$0xff]
        %v885 = vunpack.c.l.b16 %v757
        %v886 = vunpack.c.h.b16 %v757
        %v887 = vunpack.c.l.b16 %v758
        %v888 = vunpack.c.h.b16 %v758
        %v889 = vunpack.c.l.b16 %v759
        %v890 = vunpack.c.h.b16 %v759
        %v891 = vunpack.c.l.b16 %v760
        %v892 = vunpack.c.h.b16 %v760
        %v893 = vunpack.c.l.b16 %v761
        %v894 = vunpack.c.h.b16 %v761
        %v895 = vunpack.c.l.b16 %v762
        %v896 = vunpack.c.h.b16 %v762
        %v897 = vunpack.c.l.b16 %v763
        %v898 = vunpack.c.h.b16 %v763
        %v899 = vunpack.c.l.b16 %v764
        %v900 = vunpack.c.h.b16 %v764
        %v901 = vunpack.c.l.b16 %v765
        %v902 = vunpack.c.h.b16 %v765
        %v903 = vunpack.c.l.b16 %v766
        %v904 = vunpack.c.h.b16 %v766
        %v905 = vunpack.c.l.b16 %v767
        %v906 = vunpack.c.h.b16 %v767
        %v907 = vunpack.c.l.b16 %v768
        %v908 = vunpack.c.h.b16 %v768
        %v909 = vunpack.c.l.b16 %v769
        %v910 = vunpack.c.h.b16 %v769
        %v911 = vunpack.c.l.b16 %v770
        %v912 = vunpack.c.h.b16 %v770
        %v913 = vunpack.c.l.b16 %v771
        %v914 = vunpack.c.h.b16 %v771
        %v915 = vunpack.c.l.b16 %v772
        %v916 = vunpack.c.h.b16 %v772
        %v917 = vunpack.c.l.b16 %v773
        %v918 = vunpack.c.h.b16 %v773
        %v919 = vunpack.c.l.b16 %v774
        %v920 = vunpack.c.h.b16 %v774
        %v921 = vunpack.c.l.b16 %v775
        %v922 = vunpack.c.h.b16 %v775
        %v923 = vunpack.c.l.b16 %v776
        %v924 = vunpack.c.h.b16 %v776
        %v925 = vunpack.c.l.b16 %v777
        %v926 = vunpack.c.h.b16 %v777
        %v927 = vunpack.c.l.b16 %v778
        %v928 = vunpack.c.h.b16 %v778
        %v929 = vunpack.c.l.b16 %v779
        %v930 = vunpack.c.h.b16 %v779
        %v931 = vunpack.c.l.b16 %v780
        %v932 = vunpack.c.h.b16 %v780
        %v933 = vunpack.c.l.b16 %v781
        %v934 = vunpack.c.h.b16 %v781
        %v935 = vunpack.c.l.b16 %v782
        %v936 = vunpack.c.h.b16 %v782
        %v937 = vunpack.c.l.b16 %v783
        %v938 = vunpack.c.h.b16 %v783
        %v939 = vunpack.c.l.b16 %v784
        %v940 = vunpack.c.h.b16 %v784
        %v941 = vunpack.c.l.b16 %v785
        %v942 = vunpack.c.h.b16 %v785
        %v943 = vunpack.c.l.b16 %v786
        %v944 = vunpack.c.h.b16 %v786
        %v945 = vunpack.c.l.b16 %v787
        %v946 = vunpack.c.h.b16 %v787
        %v947 = vunpack.c.l.b16 %v788
        %v948 = vunpack.c.h.b16 %v788
        %v949 = vunpack.c.l.b16 %v789
        %v950 = vunpack.c.h.b16 %v789
        %v951 = vunpack.c.l.b16 %v790
        %v952 = vunpack.c.h.b16 %v790
        %v953 = vunpack.c.l.b16 %v791
        %v954 = vunpack.c.h.b16 %v791
        %v955 = vunpack.c.l.b16 %v792
        %v956 = vunpack.c.h.b16 %v792
        %v957 = vunpack.c.l.b16 %v793
        %v958 = vunpack.c.h.b16 %v793
        %v959 = vunpack.c.l.b16 %v794
        %v960 = vunpack.c.h.b16 %v794
        %v961 = vunpack.c.l.b16 %v795
        %v962 = vunpack.c.h.b16 %v795
        %v963 = vunpack.c.l.b16 %v796
        %v964 = vunpack.c.h.b16 %v796
        %v965 = vunpack.c.l.b16 %v797
        %v966 = vunpack.c.h.b16 %v797
        %v967 = vunpack.c.l.b16 %v798
        %v968 = vunpack.c.h.b16 %v798
        %v969 = vunpack.c.l.b16 %v799
        %v970 = vunpack.c.h.b16 %v799
        %v971 = vunpack.c.l.b16 %v800
        %v972 = vunpack.c.h.b16 %v800
        %v973 = vunpack.c.l.b16 %v801
        %v974 = vunpack.c.h.b16 %v801
        %v975 = vunpack.c.l.b16 %v802
        %v976 = vunpack.c.h.b16 %v802
        %v977 = vunpack.c.l.b16 %v803
        %v978 = vunpack.c.h.b16 %v803
        %v979 = vunpack.c.l.b16 %v804
        %v980 = vunpack.c.h.b16 %v804
        %v981 = vunpack.c.l.b16 %v805
        %v982 = vunpack.c.h.b16 %v805
        %v983 = vunpack.c.l.b16 %v806
        %v984 = vunpack.c.h.b16 %v806
        %v985 = vunpack.c.l.b16 %v807
        %v986 = vunpack.c.h.b16 %v807
        %v987 = vunpack.c.l.b16 %v808
        %v988 = vunpack.c.h.b16 %v808
        %v989 = vunpack.c.l.b16 %v809
        %v990 = vunpack.c.h.b16 %v809
        %v991 = vunpack.c.l.b16 %v810
        %v992 = vunpack.c.h.b16 %v810
        %v993 = vunpack.c.l.b16 %v811
        %v994 = vunpack.c.h.b16 %v811
        %v995 = vunpack.c.l.b16 %v812
        %v996 = vunpack.c.h.b16 %v812
        %v997 = vunpack.c.l.b16 %v813
        %v998 = vunpack.c.h.b16 %v813
        %v999 = vunpack.c.l.b16 %v814
        %v1000 = vunpack.c.h.b16 %v814
        %v1001 = vunpack.c.l.b16 %v815
        %v1002 = vunpack.c.h.b16 %v815
        %v1003 = vunpack.c.l.b16 %v816
        %v1004 = vunpack.c.h.b16 %v816
        %v1005 = vunpack.c.l.b16 %v817
        %v1006 = vunpack.c.h.b16 %v817
        %v1007 = vunpack.c.l.b16 %v818
        %v1008 = vunpack.c.h.b16 %v818
        %v1009 = vunpack.c.l.b16 %v819
        %v1010 = vunpack.c.h.b16 %v819
        %v1011 = vunpack.c.l.b16 %v820
        %v1012 = vunpack.c.h.b16 %v820
        %v1013 = vpack.c.b16 %v893, %v885
        %v1014 = vpack.c.b16 %v894, %v886
        %v1015 = vpack.c.b16 %v895, %v887
        %v1016 = vpack.c.b16 %v896, %v888
        %v1017 = vpack.c.b16 %v897, %v889
        %v1018 = vpack.c.b16 %v898, %v890
        %v1019 = vpack.c.b16 %v899, %v891
        %v1020 = vpack.c.b16 %v900, %v892
        %v1021 = vpack.c.b16 %v909, %v901
        %v1022 = vpack.c.b16 %v910, %v902
        %v1023 = vpack.c.b16 %v911, %v903
        %v1024 = vpack.c.b16 %v912, %v904
        %v1025 = vpack.c.b16 %v913, %v905
        %v1026 = vpack.c.b16 %v914, %v906
        %v1027 = vpack.c.b16 %v915, %v907
        %v1028 = vpack.c.b16 %v916, %v908
        %v1029 = vpack.c.b16 %v925, %v917
        %v1030 = vpack.c.b16 %v926, %v918
        %v1031 = vpack.c.b16 %v927, %v919
        %v1032 = vpack.c.b16 %v928, %v920
        %v1033 = vpack.c.b16 %v929, %v921
        %v1034 = vpack.c.b16 %v930, %v922
        %v1035 = vpack.c.b16 %v931, %v923
        %v1036 = vpack.c.b16 %v932, %v924
        %v1037 = vpack.c.b16 %v941, %v933
        %v1038 = vpack.c.b16 %v942, %v934
        %v1039 = vpack.c.b16 %v943, %v935
        %v1040 = vpack.c.b16 %v944, %v936
        %v1041 = vpack.c.b16 %v945, %v937
        %v1042 = vpack.c.b16 %v946, %v938
        %v1043 = vpack.c.b16 %v947, %v939
        %v1044 = vpack.c.b16 %v948, %v940
        %v1045 = vpack.c.b16 %v957, %v949
        %v1046 = vpack.c.b16 %v958, %v950
        %v1047 = vpack.c.b16 %v959, %v951
        %v1048 = vpack.c.b16 %v960, %v952
        %v1049 = vpack.c.b16 %v961, %v953
        %v1050 = vpack.c.b16 %v962, %v954
        %v1051 = vpack.c.b16 %v963, %v955
        %v1052 = vpack.c.b16 %v964, %v956
        %v1053 = vpack.c.b16 %v973, %v965
        %v1054 = vpack.c.b16 %v974, %v966
        %v1055 = vpack.c.b16 %v975, %v967
        %v1056 = vpack.c.b16 %v976, %v968
        %v1057 = vpack.c.b16 %v977, %v969
        %v1058 = vpack.c.b16 %v978, %v970
        %v1059 = vpack.c.b16 %v979, %v971
        %v1060 = vpack.c.b16 %v980, %v972
        %v1061 = vpack.c.b16 %v989, %v981
        %v1062 = vpack.c.b16 %v990, %v982
        %v1063 = vpack.c.b16 %v991, %v983
        %v1064 = vpack.c.b16 %v992, %v984
        %v1065 = vpack.c.b16 %v993, %v985
        %v1066 = vpack.c.b16 %v994, %v986
        %v1067 = vpack.c.b16 %v995, %v987
        %v1068 = vpack.c.b16 %v996, %v988
        %v1069 = vpack.c.b16 %v1005, %v997
        %v1070 = vpack.c.b16 %v1006, %v998
        %v1071 = vpack.c.b16 %v1007, %v999
        %v1072 = vpack.c.b16 %v1008, %v1000
        %v1073 = vpack.c.b16 %v1009, %v1001
        %v1074 = vpack.c.b16 %v1010, %v1002
        %v1075 = vpack.c.b16 %v1011, %v1003
        %v1076 = vpack.c.b16 %v1012, %v1004
        %1141 = vmatprep.subr.bf16.mxu0 %v1070
        %1142 = vmatpush1.bf16.msra.mxu0 %v1069
        %1143 = vmatprep.subr.bf16.mxu0 %v1062
        %1144 = vmatpush1.bf16.msra.mxu0 %v1061
        %1145 = vmatprep.subr.bf16.mxu0 %v1054
        %1146 = vmatpush1.bf16.msra.mxu0 %v1053
        %1147 = vmatprep.subr.bf16.mxu0 %v1046
        %1148 = vmatpush1.bf16.msra.mxu0 %v1045
        %1149 = vmatprep.subr.bf16.mxu0 %v1038
        %1150 = vmatpush1.bf16.msra.mxu0 %v1037
        %1151 = vmatprep.subr.bf16.mxu0 %v1030
        %1152 = vmatpush1.bf16.msra.mxu0 %v1029
        %1153 = vmatprep.subr.bf16.mxu0 %v1022
        %1154 = vmatpush1.bf16.msra.mxu0 %v1021
        %1155 = vmatprep.subr.bf16.mxu0 %v1014
        %1156 = vmatpush1.bf16.msra.mxu0 %v1013
        %1157 = vmatprep.subr.bf16.mxu0 0
        %1158 = vmatpush2.bf16.msra.mxu0 0
        %1159 = vmatprep.subr.bf16.mxu0 0
        %1160 = vmatpush2.bf16.msra.mxu0 0
        %1161 = vmatprep.subr.bf16.mxu0 0
        %1162 = vmatpush2.bf16.msra.mxu0 0
        %1163 = vmatprep.subr.bf16.mxu0 0
        %1164 = vmatpush2.bf16.msra.mxu0 0
        %1165 = vmatprep.subr.bf16.mxu0 0
        %1166 = vmatpush2.bf16.msra.mxu0 0
        %1167 = vmatprep.subr.bf16.mxu0 0
        %1168 = vmatpush2.bf16.msra.mxu0 0
        %1169 = vmatprep.subr.bf16.mxu0 0
        %1170 = vmatpush2.bf16.msra.mxu0 0
        %1171 = vmatprep.subr.bf16.mxu0 0
        %1172 = vmatpush2.bf16.msra.mxu0 0
        %1173 = vmatprep.mubr.bf16.mxu0 0
        %1174 = vmatmul.mubr.bf16.gmra.mxu0 %v753
        %v1175 = vpop.f32.mrf.mxu0
        %v1176 = vadd.f32 0.0, %v1175
        %v1177 = vpop.f32.mrf.mxu0
        %v1178 = vadd.f32 0.0, %v1177
        %v1179 = vpop.f32.mrf.mxu0
        %v1180 = vadd.f32 0.0, %v1179
        %v1181 = vpop.f32.mrf.mxu0
        %v1182 = vadd.f32 0.0, %v1181
        %1183 = vmatprep.mubr.bf16.mxu0 0
        %1184 = vmatmul.mubr.bf16.gmra.mxu0 %v754
        %v1185 = vpop.f32.mrf.mxu0
        %v1186 = vadd.f32 0.0, %v1185
        %v1187 = vpop.f32.mrf.mxu0
        %v1188 = vadd.f32 0.0, %v1187
        %v1189 = vpop.f32.mrf.mxu0
        %v1190 = vadd.f32 0.0, %v1189
        %v1191 = vpop.f32.mrf.mxu0
        %v1192 = vadd.f32 0.0, %v1191
        %1193 = vmatprep.mubr.bf16.mxu0 0
        %1194 = vmatmul.mubr.bf16.gmra.mxu0 %v755
        %v1195 = vpop.f32.mrf.mxu0
        %v1196 = vadd.f32 0.0, %v1195
        %v1197 = vpop.f32.mrf.mxu0
        %v1198 = vadd.f32 0.0, %v1197
        %v1199 = vpop.f32.mrf.mxu0
        %v1200 = vadd.f32 0.0, %v1199
        %v1201 = vpop.f32.mrf.mxu0
        %v1202 = vadd.f32 0.0, %v1201
        %1203 = vmatprep.mubr.bf16.mxu0 0
        %1204 = vmatmul.mubr.bf16.gmra.mxu0 %v756
        %v1205 = vpop.f32.mrf.mxu0
        %v1206 = vadd.f32 0.0, %v1205
        %v1207 = vpop.f32.mrf.mxu0
        %v1208 = vadd.f32 0.0, %v1207
        %v1209 = vpop.f32.mrf.mxu0
        %v1210 = vadd.f32 0.0, %v1209
        %v1211 = vpop.f32.mrf.mxu0
        %v1212 = vadd.f32 0.0, %v1211
        %1213 = vdwg.mxu0
        %1214 = vmatprep.subr.bf16.mxu0 %v1072
        %1215 = vmatpush1.bf16.msra.mxu0 %v1071
        %1216 = vmatprep.subr.bf16.mxu0 %v1064
        %1217 = vmatpush1.bf16.msra.mxu0 %v1063
        %1218 = vmatprep.subr.bf16.mxu0 %v1056
        %1219 = vmatpush1.bf16.msra.mxu0 %v1055
        %1220 = vmatprep.subr.bf16.mxu0 %v1048
        %1221 = vmatpush1.bf16.msra.mxu0 %v1047
        %1222 = vmatprep.subr.bf16.mxu0 %v1040
        %1223 = vmatpush1.bf16.msra.mxu0 %v1039
        %1224 = vmatprep.subr.bf16.mxu0 %v1032
        %1225 = vmatpush1.bf16.msra.mxu0 %v1031
        %1226 = vmatprep.subr.bf16.mxu0 %v1024
        %1227 = vmatpush1.bf16.msra.mxu0 %v1023
        %1228 = vmatprep.subr.bf16.mxu0 %v1016
        %1229 = vmatpush1.bf16.msra.mxu0 %v1015
        %1230 = vmatprep.subr.bf16.mxu0 0
        %1231 = vmatpush2.bf16.msra.mxu0 0
        %1232 = vmatprep.subr.bf16.mxu0 0
        %1233 = vmatpush2.bf16.msra.mxu0 0
        %1234 = vmatprep.subr.bf16.mxu0 0
        %1235 = vmatpush2.bf16.msra.mxu0 0
        %1236 = vmatprep.subr.bf16.mxu0 0
        %1237 = vmatpush2.bf16.msra.mxu0 0
        %1238 = vmatprep.subr.bf16.mxu0 0
        %1239 = vmatpush2.bf16.msra.mxu0 0
        %1240 = vmatprep.subr.bf16.mxu0 0
        %1241 = vmatpush2.bf16.msra.mxu0 0
        %1242 = vmatprep.subr.bf16.mxu0 0
        %1243 = vmatpush2.bf16.msra.mxu0 0
        %1244 = vmatprep.subr.bf16.mxu0 0
        %1245 = vmatpush2.bf16.msra.mxu0 0
        %1246 = vmatprep.mubr.bf16.mxu0 0
        %1247 = vmatmul.mubr.bf16.gmra.mxu0 %v753
        %v1248 = vpop.f32.mrf.mxu0
        %v1249 = vadd.f32 0.0, %v1248
        %v1250 = vpop.f32.mrf.mxu0
        %v1251 = vadd.f32 0.0, %v1250
        %v1252 = vpop.f32.mrf.mxu0
        %v1253 = vadd.f32 0.0, %v1252
        %v1254 = vpop.f32.mrf.mxu0
        %v1255 = vadd.f32 0.0, %v1254
        %1256 = vmatprep.mubr.bf16.mxu0 0
        %1257 = vmatmul.mubr.bf16.gmra.mxu0 %v754
        %v1258 = vpop.f32.mrf.mxu0
        %v1259 = vadd.f32 0.0, %v1258
        %v1260 = vpop.f32.mrf.mxu0
        %v1261 = vadd.f32 0.0, %v1260
        %v1262 = vpop.f32.mrf.mxu0
        %v1263 = vadd.f32 0.0, %v1262
        %v1264 = vpop.f32.mrf.mxu0
        %v1265 = vadd.f32 0.0, %v1264
        %1266 = vmatprep.mubr.bf16.mxu0 0
        %1267 = vmatmul.mubr.bf16.gmra.mxu0 %v755
        %v1268 = vpop.f32.mrf.mxu0
        %v1269 = vadd.f32 0.0, %v1268
        %v1270 = vpop.f32.mrf.mxu0
        %v1271 = vadd.f32 0.0, %v1270
        %v1272 = vpop.f32.mrf.mxu0
        %v1273 = vadd.f32 0.0, %v1272
        %v1274 = vpop.f32.mrf.mxu0
        %v1275 = vadd.f32 0.0, %v1274
        %1276 = vmatprep.mubr.bf16.mxu0 0
        %1277 = vmatmul.mubr.bf16.gmra.mxu0 %v756
        %v1278 = vpop.f32.mrf.mxu0
        %v1279 = vadd.f32 0.0, %v1278
        %v1280 = vpop.f32.mrf.mxu0
        %v1281 = vadd.f32 0.0, %v1280
        %v1282 = vpop.f32.mrf.mxu0
        %v1283 = vadd.f32 0.0, %v1282
        %v1284 = vpop.f32.mrf.mxu0
        %v1285 = vadd.f32 0.0, %v1284
        %1286 = vdwg.mxu0
        %1287 = vmatprep.subr.bf16.mxu0 %v1074
        %1288 = vmatpush1.bf16.msra.mxu0 %v1073
        %1289 = vmatprep.subr.bf16.mxu0 %v1066
        %1290 = vmatpush1.bf16.msra.mxu0 %v1065
        %1291 = vmatprep.subr.bf16.mxu0 %v1058
        %1292 = vmatpush1.bf16.msra.mxu0 %v1057
        %1293 = vmatprep.subr.bf16.mxu0 %v1050
        %1294 = vmatpush1.bf16.msra.mxu0 %v1049
        %1295 = vmatprep.subr.bf16.mxu0 %v1042
        %1296 = vmatpush1.bf16.msra.mxu0 %v1041
        %1297 = vmatprep.subr.bf16.mxu0 %v1034
        %1298 = vmatpush1.bf16.msra.mxu0 %v1033
        %1299 = vmatprep.subr.bf16.mxu0 %v1026
        %1300 = vmatpush1.bf16.msra.mxu0 %v1025
        %1301 = vmatprep.subr.bf16.mxu0 %v1018
        %1302 = vmatpush1.bf16.msra.mxu0 %v1017
        %1303 = vmatprep.subr.bf16.mxu0 0
        %1304 = vmatpush2.bf16.msra.mxu0 0
        %1305 = vmatprep.subr.bf16.mxu0 0
        %1306 = vmatpush2.bf16.msra.mxu0 0
        %1307 = vmatprep.subr.bf16.mxu0 0
        %1308 = vmatpush2.bf16.msra.mxu0 0
        %1309 = vmatprep.subr.bf16.mxu0 0
        %1310 = vmatpush2.bf16.msra.mxu0 0
        %1311 = vmatprep.subr.bf16.mxu0 0
        %1312 = vmatpush2.bf16.msra.mxu0 0
        %1313 = vmatprep.subr.bf16.mxu0 0
        %1314 = vmatpush2.bf16.msra.mxu0 0
        %1315 = vmatprep.subr.bf16.mxu0 0
        %1316 = vmatpush2.bf16.msra.mxu0 0
        %1317 = vmatprep.subr.bf16.mxu0 0
        %1318 = vmatpush2.bf16.msra.mxu0 0
        %1319 = vmatprep.mubr.bf16.mxu0 0
        %1320 = vmatmul.mubr.bf16.gmra.mxu0 %v753
        %v1321 = vpop.f32.mrf.mxu0
        %v1322 = vadd.f32 0.0, %v1321
        %v1323 = vpop.f32.mrf.mxu0
        %v1324 = vadd.f32 0.0, %v1323
        %v1325 = vpop.f32.mrf.mxu0
        %v1326 = vadd.f32 0.0, %v1325
        %v1327 = vpop.f32.mrf.mxu0
        %v1328 = vadd.f32 0.0, %v1327
        %1329 = vmatprep.mubr.bf16.mxu0 0
        %1330 = vmatmul.mubr.bf16.gmra.mxu0 %v754
        %v1331 = vpop.f32.mrf.mxu0
        %v1332 = vadd.f32 0.0, %v1331
        %v1333 = vpop.f32.mrf.mxu0
        %v1334 = vadd.f32 0.0, %v1333
        %v1335 = vpop.f32.mrf.mxu0
        %v1336 = vadd.f32 0.0, %v1335
        %v1337 = vpop.f32.mrf.mxu0
        %v1338 = vadd.f32 0.0, %v1337
        %1339 = vmatprep.mubr.bf16.mxu0 0
        %1340 = vmatmul.mubr.bf16.gmra.mxu0 %v755
        %v1341 = vpop.f32.mrf.mxu0
        %v1342 = vadd.f32 0.0, %v1341
        %v1343 = vpop.f32.mrf.mxu0
        %v1344 = vadd.f32 0.0, %v1343
        %v1345 = vpop.f32.mrf.mxu0
        %v1346 = vadd.f32 0.0, %v1345
        %v1347 = vpop.f32.mrf.mxu0
        %v1348 = vadd.f32 0.0, %v1347
        %1349 = vmatprep.mubr.bf16.mxu0 0
        %1350 = vmatmul.mubr.bf16.gmra.mxu0 %v756
        %v1351 = vpop.f32.mrf.mxu0
        %v1352 = vadd.f32 0.0, %v1351
        %v1353 = vpop.f32.mrf.mxu0
        %v1354 = vadd.f32 0.0, %v1353
        %v1355 = vpop.f32.mrf.mxu0
        %v1356 = vadd.f32 0.0, %v1355
        %v1357 = vpop.f32.mrf.mxu0
        %v1358 = vadd.f32 0.0, %v1357
        %1359 = vdwg.mxu0
        %1360 = vmatprep.subr.bf16.mxu0 %v1076
        %1361 = vmatpush1.bf16.msra.mxu0 %v1075
        %1362 = vmatprep.subr.bf16.mxu0 %v1068
        %1363 = vmatpush1.bf16.msra.mxu0 %v1067
        %1364 = vmatprep.subr.bf16.mxu0 %v1060
        %1365 = vmatpush1.bf16.msra.mxu0 %v1059
        %1366 = vmatprep.subr.bf16.mxu0 %v1052
        %1367 = vmatpush1.bf16.msra.mxu0 %v1051
        %1368 = vmatprep.subr.bf16.mxu0 %v1044
        %1369 = vmatpush1.bf16.msra.mxu0 %v1043
        %1370 = vmatprep.subr.bf16.mxu0 %v1036
        %1371 = vmatpush1.bf16.msra.mxu0 %v1035
        %1372 = vmatprep.subr.bf16.mxu0 %v1028
        %1373 = vmatpush1.bf16.msra.mxu0 %v1027
        %1374 = vmatprep.subr.bf16.mxu0 %v1020
        %1375 = vmatpush1.bf16.msra.mxu0 %v1019
        %1376 = vmatprep.subr.bf16.mxu0 0
        %1377 = vmatpush2.bf16.msra.mxu0 0
        %1378 = vmatprep.subr.bf16.mxu0 0
        %1379 = vmatpush2.bf16.msra.mxu0 0
        %1380 = vmatprep.subr.bf16.mxu0 0
        %1381 = vmatpush2.bf16.msra.mxu0 0
        %1382 = vmatprep.subr.bf16.mxu0 0
        %1383 = vmatpush2.bf16.msra.mxu0 0
        %1384 = vmatprep.subr.bf16.mxu0 0
        %1385 = vmatpush2.bf16.msra.mxu0 0
        %1386 = vmatprep.subr.bf16.mxu0 0
        %1387 = vmatpush2.bf16.msra.mxu0 0
        %1388 = vmatprep.subr.bf16.mxu0 0
        %1389 = vmatpush2.bf16.msra.mxu0 0
        %1390 = vmatprep.subr.bf16.mxu0 0
        %1391 = vmatpush2.bf16.msra.mxu0 0
        %1392 = vmatprep.mubr.bf16.mxu0 0
        %1393 = vmatmul.mubr.bf16.gmra.mxu0 %v753
        %v1394 = vpop.f32.mrf.mxu0
        %v1395 = vadd.f32 0.0, %v1394
        %v1396 = vpop.f32.mrf.mxu0
        %v1397 = vadd.f32 0.0, %v1396
        %v1398 = vpop.f32.mrf.mxu0
        %v1399 = vadd.f32 0.0, %v1398
        %v1400 = vpop.f32.mrf.mxu0
        %v1401 = vadd.f32 0.0, %v1400
        %1402 = vmatprep.mubr.bf16.mxu0 0
        %1403 = vmatmul.mubr.bf16.gmra.mxu0 %v754
        %v1404 = vpop.f32.mrf.mxu0
        %v1405 = vadd.f32 0.0, %v1404
        %v1406 = vpop.f32.mrf.mxu0
        %v1407 = vadd.f32 0.0, %v1406
        %v1408 = vpop.f32.mrf.mxu0
        %v1409 = vadd.f32 0.0, %v1408
        %v1410 = vpop.f32.mrf.mxu0
        %v1411 = vadd.f32 0.0, %v1410
        %1412 = vmatprep.mubr.bf16.mxu0 0
        %1413 = vmatmul.mubr.bf16.gmra.mxu0 %v755
        %v1414 = vpop.f32.mrf.mxu0
        %v1415 = vadd.f32 0.0, %v1414
        %v1416 = vpop.f32.mrf.mxu0
        %v1417 = vadd.f32 0.0, %v1416
        %v1418 = vpop.f32.mrf.mxu0
        %v1419 = vadd.f32 0.0, %v1418
        %v1420 = vpop.f32.mrf.mxu0
        %v1421 = vadd.f32 0.0, %v1420
        %1422 = vmatprep.mubr.bf16.mxu0 0
        %1423 = vmatmul.mubr.bf16.gmra.mxu0 %v756
        %v1424 = vpop.f32.mrf.mxu0
        %v1425 = vadd.f32 0.0, %v1424
        %v1426 = vpop.f32.mrf.mxu0
        %v1427 = vadd.f32 0.0, %v1426
        %v1428 = vpop.f32.mrf.mxu0
        %v1429 = vadd.f32 0.0, %v1428
        %v1430 = vpop.f32.mrf.mxu0
        %v1431 = vadd.f32 0.0, %v1430
        %1432 = vdwg.mxu0
        %v1433 = vld [vmem:[%s441] sm:$0xff]
        %v1434 = vmax.f32 %v1176, %v1180
        %v1435 = vmax.f32 %v1434, %v1186
        %v1436 = vmax.f32 %v1435, %v1190
        %v1437 = vmax.f32 %v1436, %v1196
        %v1438 = vmax.f32 %v1437, %v1200
        %v1439 = vmax.f32 %v1438, %v1206
        %v1440 = vmax.f32 %v1439, %v1210
        %v1441 = vrot.slane %v1440, 4
        %v1442 = vmax.f32 %v1440, %v1441
        %v1443 = vrot.slane %v1442, 2
        %v1444 = vmax.f32 %v1442, %v1443
        %v1445 = vrot.slane %v1444, 1
        %v1446 = vmax.f32 %v1444, %v1445
        %v1447 = vmax.f32 %v1178, %v1182
        %v1448 = vmax.f32 %v1447, %v1188
        %v1449 = vmax.f32 %v1448, %v1192
        %v1450 = vmax.f32 %v1449, %v1198
        %v1451 = vmax.f32 %v1450, %v1202
        %v1452 = vmax.f32 %v1451, %v1208
        %v1453 = vmax.f32 %v1452, %v1212
        %v1454 = vrot.slane %v1453, 4
        %v1455 = vmax.f32 %v1453, %v1454
        %v1456 = vrot.slane %v1455, 2
        %v1457 = vmax.f32 %v1455, %v1456
        %v1458 = vrot.slane %v1457, 1
        %v1459 = vmax.f32 %v1457, %v1458
        %v1460 = vmax.f32 %v1249, %v1253
        %v1461 = vmax.f32 %v1460, %v1259
        %v1462 = vmax.f32 %v1461, %v1263
        %v1463 = vmax.f32 %v1462, %v1269
        %v1464 = vmax.f32 %v1463, %v1273
        %v1465 = vmax.f32 %v1464, %v1279
        %v1466 = vmax.f32 %v1465, %v1283
        %v1467 = vrot.slane %v1466, 4
        %v1468 = vmax.f32 %v1466, %v1467
        %v1469 = vrot.slane %v1468, 2
        %v1470 = vmax.f32 %v1468, %v1469
        %v1471 = vrot.slane %v1470, 1
        %v1472 = vmax.f32 %v1470, %v1471
        %v1473 = vmax.f32 %v1251, %v1255
        %v1474 = vmax.f32 %v1473, %v1261
        %v1475 = vmax.f32 %v1474, %v1265
        %v1476 = vmax.f32 %v1475, %v1271
        %v1477 = vmax.f32 %v1476, %v1275
        %v1478 = vmax.f32 %v1477, %v1281
        %v1479 = vmax.f32 %v1478, %v1285
        %v1480 = vrot.slane %v1479, 4
        %v1481 = vmax.f32 %v1479, %v1480
        %v1482 = vrot.slane %v1481, 2
        %v1483 = vmax.f32 %v1481, %v1482
        %v1484 = vrot.slane %v1483, 1
        %v1485 = vmax.f32 %v1483, %v1484
        %v1486 = vmax.f32 %v1322, %v1326
        %v1487 = vmax.f32 %v1486, %v1332
        %v1488 = vmax.f32 %v1487, %v1336
        %v1489 = vmax.f32 %v1488, %v1342
        %v1490 = vmax.f32 %v1489, %v1346
        %v1491 = vmax.f32 %v1490, %v1352
        %v1492 = vmax.f32 %v1491, %v1356
        %v1493 = vrot.slane %v1492, 4
        %v1494 = vmax.f32 %v1492, %v1493
        %v1495 = vrot.slane %v1494, 2
        %v1496 = vmax.f32 %v1494, %v1495
        %v1497 = vrot.slane %v1496, 1
        %v1498 = vmax.f32 %v1496, %v1497
        %v1499 = vmax.f32 %v1324, %v1328
        %v1500 = vmax.f32 %v1499, %v1334
        %v1501 = vmax.f32 %v1500, %v1338
        %v1502 = vmax.f32 %v1501, %v1344
        %v1503 = vmax.f32 %v1502, %v1348
        %v1504 = vmax.f32 %v1503, %v1354
        %v1505 = vmax.f32 %v1504, %v1358
        %v1506 = vrot.slane %v1505, 4
        %v1507 = vmax.f32 %v1505, %v1506
        %v1508 = vrot.slane %v1507, 2
        %v1509 = vmax.f32 %v1507, %v1508
        %v1510 = vrot.slane %v1509, 1
        %v1511 = vmax.f32 %v1509, %v1510
        %v1512 = vmax.f32 %v1395, %v1399
        %v1513 = vmax.f32 %v1512, %v1405
        %v1514 = vmax.f32 %v1513, %v1409
        %v1515 = vmax.f32 %v1514, %v1415
        %v1516 = vmax.f32 %v1515, %v1419
        %v1517 = vmax.f32 %v1516, %v1425
        %v1518 = vmax.f32 %v1517, %v1429
        %v1519 = vrot.slane %v1518, 4
        %v1520 = vmax.f32 %v1518, %v1519
        %v1521 = vrot.slane %v1520, 2
        %v1522 = vmax.f32 %v1520, %v1521
        %v1523 = vrot.slane %v1522, 1
        %v1524 = vmax.f32 %v1522, %v1523
        %v1525 = vmax.f32 %v1397, %v1401
        %v1526 = vmax.f32 %v1525, %v1407
        %v1527 = vmax.f32 %v1526, %v1411
        %v1528 = vmax.f32 %v1527, %v1417
        %v1529 = vmax.f32 %v1528, %v1421
        %v1530 = vmax.f32 %v1529, %v1427
        %v1531 = vmax.f32 %v1530, %v1431
        %v1532 = vrot.slane %v1531, 4
        %v1533 = vmax.f32 %v1531, %v1532
        %v1534 = vrot.slane %v1533, 2
        %v1535 = vmax.f32 %v1533, %v1534
        %v1536 = vrot.slane %v1535, 1
        %v1537 = vmax.f32 %v1535, %v1536
        %v1546 = vcombine.low %v1446, %v1459
        %v1547 = vcombine.low %v1472, %v1485
        %v1548 = vcombine.low %v1498, %v1511
        %v1549 = vcombine.low %v1524, %v1537
        %v1551 = vunpack.c.l.s4 1966171168
        %v1552 = vunpack.c.0.s8 %v1551
        %v1553 = vlaneseq
        %v1554 = vshrl.u32 %v1553, 7
        %v1555 = vsub.s32 %v1552, %v1554
        %v1556 = vrot.slane %v1546, %v1555
        %v1558 = vunpack.c.l.s4 1966171168
        %v1559 = vunpack.c.0.s8 %v1558
        %v1560 = vlaneseq
        %v1561 = vshrl.u32 %v1560, 7
        %v1562 = vsub.s32 %v1559, %v1561
        %v1563 = vrot.slane %v1547, %v1562
        %v1565 = vunpack.c.l.s4 1966171168
        %v1566 = vunpack.c.0.s8 %v1565
        %v1567 = vlaneseq
        %v1568 = vshrl.u32 %v1567, 7
        %v1569 = vsub.s32 %v1566, %v1568
        %v1570 = vrot.slane %v1548, %v1569
        %v1572 = vunpack.c.l.s4 1966171168
        %v1573 = vunpack.c.0.s8 %v1572
        %v1574 = vlaneseq
        %v1575 = vshrl.u32 %v1574, 7
        %v1576 = vsub.s32 %v1573, %v1575
        %v1577 = vrot.slane %v1549, %v1576
        %v1578 = vcombine.low %v1556, %v1563
        %v1579 = vcombine.low %v1570, %v1577
        %v1581 = vunpack.c.l.s4 1966171168
        %v1582 = vunpack.c.0.s8 %v1581
        %v1583 = vlaneseq
        %v1584 = vshrl.u32 %v1583, 7
        %v1585 = vsub.s32 %v1582, %v1584
        %v1586 = vrot.slane %v1578, %v1585
        %v1588 = vunpack.c.l.s4 1966171168
        %v1589 = vunpack.c.0.s8 %v1588
        %v1590 = vlaneseq
        %v1591 = vshrl.u32 %v1590, 7
        %v1592 = vsub.s32 %v1589, %v1591
        %v1593 = vrot.slane %v1579, %v1592
        %v1594 = vcombine.low %v1586, %v1593
        %v1596 = vmax.f32 %v1433, %v1594
        %1597 = vst [vmem:[%s441] sm:$0xff] %v1596
        %s1598 = sadd.s32 %s28, %s29
        %p1599 = scmp.lt.s32.totalorder %s1598, 1
        %s1600 = scalar_select %p1599, %s1598, 1
        %s1601 = smul.addr %s1600, 8
        %s1602 = scalar_lea.vmem %s8, %s1601
        // Predicated region
        $region85: #{pointnet_dense_cls_forward.5} parent=51 // pred_check
          %p1603 = pneg %p239
        $region86: #{pointnet_dense_cls_forward.5} parent=51 // pred_check_branch
          %1605 = sbr.rel (%p1603) target = $region88
        $region87: #{pointnet_dense_cls_forward.5} parent=51 // pred_region
          %s1606 = sadd.s32 %s28, %s29
        $region88: #{pointnet_dense_cls_forward.5} parent=51 // pred_fallthru
          _
      $region52: #{pointnet_dense_cls_forward.5} parent=5 // pred_fallthru
        _
      %p1607 = scmp.le.s32.totalorder 2, %s18
      // Predicated region
      $region89: #{pointnet_dense_cls_forward.5} parent=5 // pred_check
        %p1608 = pneg %p1607
      $region90: #{pointnet_dense_cls_forward.5} parent=5 // pred_check_branch
        %1610 = sbr.rel (%p1608) target = $region92
      $region91: #{pointnet_dense_cls_forward.5} parent=5 // pred_region
        %s1611 = ssub.s32 %s18, 2
        // Predicated region
        $region93: #{pointnet_dense_cls_forward.5} parent=91 // pred_check
          %p1612 = pneg %p245
        $region94: #{pointnet_dense_cls_forward.5} parent=91 // pred_check_branch
          %1614 = sbr.rel (%p1612) target = $region96
        $region95: #{pointnet_dense_cls_forward.5} parent=91 // pred_region
          %s1615 = sadd.s32 %s31, %s32
          %p1616 = scmp.lt.s32.totalorder %s1615, 1
          %s1617 = scalar_select %p1616, %s1615, 1
          %s1618 = smul.addr %s1617, 8
          %s1619 = scalar_lea.vmem %s8, %s1618
        $region96: #{pointnet_dense_cls_forward.5} parent=91 // pred_fallthru
          _
      $region92: #{pointnet_dense_cls_forward.5} parent=5 // pred_fallthru
        _
    $region6: #{pointnet_dense_cls_forward.5} parent=1 // loop_footer
      %s22 = sadd.s32 1, %s18
    $region7: #{pointnet_dense_cls_forward.5} parent=1 // loop_footer_branch
      %17 = sbr.rel target = $region3
    $region8: #{pointnet_dense_cls_forward.5} parent=1 // loop_exit
      _
    %1620 = vsyncpa [#allocation3], 1
    %s1621 = scalar_lea.sflag [#allocation3], 1
    %1622 = vsyncpa %s1621, 1
    %1623 = vsyncpa [#allocation5], 1
    %1624 = vsyncpa [#allocation8], 1
    %1625 = vsyncpa [#allocation11], 1

// kernel: pointnet_dense_cls_forward.7
$region0: #{pointnet_dense_cls_forward.7}
  #allocation0 [shape = 'u32[]', space=smem, size = 0x4, offset = 0x4, fixed_abs, tag = 'smem constant byte address 0x4 - core index']
  #allocation1 [shape = 'u32[144,128]{1,0:T(1,128)}', space=vmem, size = 0x12000, scoped, tag = 'internal scratch']
  %s0 = inlined_call_operand.vmem [shape: bf16[2,64,3], index: 0, kind: input, shape index: {}]
  %s1 = inlined_call_operand.vmem [shape: bf16[2,3,64], index: 1, kind: input, shape index: {}]
  %s2 = inlined_call_operand.vmem [shape: f32[1,64], index: 2, kind: input, shape index: {}]
  %s3 = inlined_call_operand.vmem [shape: f32[1,64], index: 3, kind: input, shape index: {}]
  %s4 = inlined_call_operand.vmem [shape: bf16[64,128], index: 4, kind: input, shape index: {}]
  %s5 = inlined_call_operand.vmem [shape: f32[1,128], index: 5, kind: input, shape index: {}]
  %s6 = inlined_call_operand.vmem [shape: f32[1,128], index: 6, kind: input, shape index: {}]
  %s7 = inlined_call_operand.vmem [shape: bf16[128,1024], index: 7, kind: input, shape index: {}]
  %s8 = inlined_call_operand.vmem [shape: bf16[2,64,64], index: 8, kind: output, shape index: {0}]
  %s9 = inlined_call_operand.vmem [shape: f32[2,1,1024], index: 9, kind: output, shape index: {1}]
  %10 = xla_tuple %s8, %s9
  %s11 = sld [smem:[#allocation0]]
  $region77: #{pointnet_dense_cls_forward.7} parent=0
    _
  %s13 = ssub.s32 1, %s11
  %s14 = scalar_select 0, %s13, %s11
  loop: start=0, step=1, limit=4
  $region2: #{pointnet_dense_cls_forward.7} parent=0 // loop_pre_header
    _
  $region3: #{pointnet_dense_cls_forward.7} parent=0 // loop_header
    %s16 = sphi 0, %s20
    %p17 = scmp.ge.s32.totalorder %s16, 4
    %s23 = sphi 0, %s42
    %s24 = sphi 0, %s38
    %s25 = sphi 0, %s34
    %s26 = sphi 0, %s23
    %s27 = sphi 0, %s24
    %s28 = sphi 0, %s25
    %s29 = sphi 0, %s26
    %s30 = sphi 0, %s27
    %s31 = sphi 0, %s28
    %s49 = sphi 0, %s51
    %s52 = sphi 0, %s49
    %s53 = sphi 0, %s52
    %s69 = sphi 0, %s53
    %s75 = sphi 0, %s77
    %s78 = sphi 0, %s75
    %s79 = sphi 0, %s78
    %s95 = sphi 0, %s79
    %s99 = sphi 0, %s99
    %s101 = sphi 0, %s99
    %s102 = sphi 0, %s101
    %s116 = sphi 0, %s102
    %s120 = sphi 0, %s120
    %s122 = sphi 0, %s120
    %s123 = sphi 0, %s122
    %s137 = sphi 0, %s123
    %s141 = sphi 0, %s141
    %s143 = sphi 0, %s141
    %s144 = sphi 0, %s143
    %s158 = sphi 0, %s144
    %s162 = sphi 0, %s162
    %s164 = sphi 0, %s162
    %s165 = sphi 0, %s164
    %s179 = sphi 0, %s165
    %s183 = sphi 0, %s183
    %s185 = sphi 0, %s183
    %s186 = sphi 0, %s185
    %s200 = sphi 0, %s186
    %s204 = sphi 0, %s204
    %s206 = sphi 0, %s204
    %s207 = sphi 0, %s206
    %s221 = sphi 0, %s207
    %s231 = sphi 0, %s233
    %s234 = sphi 0, %s231
    %s235 = sphi 0, %s234
    %s251 = sphi 0, %s235
    %s259 = sphi 0, %s261
    %s262 = sphi 0, %s259
    %s263 = sphi 0, %s262
    %s279 = sphi 0, %s263
  $region4: #{pointnet_dense_cls_forward.7} parent=0 // loop_header_branch
    %19 = sbr.rel (%p17) target = $region8
  $region5: #{pointnet_dense_cls_forward.7} parent=0 // loop_body
    %s21 = ssub.s32 %s16, 1
    %s22 = ssub.s32 %s16, 2
    %s32 = sadd.s32 1, %s25
    %p33 = scmp.ge.s32.totalorder %s32, 1
    %s34 = scalar_select %p33, 0, %s32
    %s35 = sadd.s32 1, %s24
    %s36 = scalar_select %p33, %s35, %s24
    %p37 = scmp.ge.s32.totalorder %s36, 1
    %s38 = scalar_select %p37, 0, %s36
    %s39 = sadd.s32 1, %s23
    %s40 = scalar_select %p37, %s39, %s23
    %p41 = scmp.ge.s32.totalorder %s40, 2
    %s42 = scalar_select %p41, 0, %s40
    %s43 = sadd.s32 %s24, %s25
    %s44 = sadd.s32 %s38, %s34
    %s45 = ssub.s32 %s23, %s42
    %s46 = ssub.s32 %s43, %s44
    %s47 = sor.u32 %s45, %s46
    %p48 = scmp.eq.s32.totalorder %s47, 0
    %s50 = sadd.s32 %s49, 1
    %s51 = scalar_select %p48, %s49, %s50
    %p54 = pneg %p48
    %p55 = scmp.eq.s32.totalorder %s16, 1
    %p56 = por %p54, %p55
    %p57 = scmp.ne.s32.totalorder %s49, %s52
    %p58 = scmp.eq.s32.totalorder %s16, 0
    %p59 = por %p57, %p58
    %p60 = scmp.ne.s32.totalorder %s49, %s52
    %p61 = scmp.eq.s32.totalorder %s21, 1
    %p62 = por %p60, %p61
    %p63 = scmp.ne.s32.totalorder %s52, %s53
    %p64 = scmp.eq.s32.totalorder %s21, 0
    %p65 = por %p63, %p64
    %p66 = scmp.ne.s32.totalorder %s52, %s53
    %p67 = scmp.eq.s32.totalorder %s22, 1
    %p68 = por %p66, %p67
    %p70 = scmp.ne.s32.totalorder %s53, %s69
    %p71 = scmp.eq.s32.totalorder %s22, 0
    %p72 = por %p70, %p71
    %s73 = ssub.s32 %s23, %s42
    %p74 = scmp.eq.s32.totalorder %s73, 0
    %s76 = sadd.s32 %s75, 1
    %s77 = scalar_select %p74, %s75, %s76
    %p80 = pneg %p74
    %p81 = scmp.eq.s32.totalorder %s16, 1
    %p82 = por %p80, %p81
    %p83 = scmp.ne.s32.totalorder %s75, %s78
    %p84 = scmp.eq.s32.totalorder %s16, 0
    %p85 = por %p83, %p84
    %p86 = scmp.ne.s32.totalorder %s75, %s78
    %p87 = scmp.eq.s32.totalorder %s21, 1
    %p88 = por %p86, %p87
    %p89 = scmp.ne.s32.totalorder %s78, %s79
    %p90 = scmp.eq.s32.totalorder %s21, 0
    %p91 = por %p89, %p90
    %p92 = scmp.ne.s32.totalorder %s78, %s79
    %p93 = scmp.eq.s32.totalorder %s22, 1
    %p94 = por %p92, %p93
    %p96 = scmp.ne.s32.totalorder %s79, %s95
    %p97 = scmp.eq.s32.totalorder %s22, 0
    %p98 = por %p96, %p97
    %s100 = sadd.s32 %s99, 1
    %p103 = scmp.eq.s32.totalorder %s16, 1
    %p104 = scmp.ne.s32.totalorder %s99, %s101
    %p105 = scmp.eq.s32.totalorder %s16, 0
    %p106 = por %p104, %p105
    %p107 = scmp.ne.s32.totalorder %s99, %s101
    %p108 = scmp.eq.s32.totalorder %s21, 1
    %p109 = por %p107, %p108
    %p110 = scmp.ne.s32.totalorder %s101, %s102
    %p111 = scmp.eq.s32.totalorder %s21, 0
    %p112 = por %p110, %p111
    %p113 = scmp.ne.s32.totalorder %s101, %s102
    %p114 = scmp.eq.s32.totalorder %s22, 1
    %p115 = por %p113, %p114
    %p117 = scmp.ne.s32.totalorder %s102, %s116
    %p118 = scmp.eq.s32.totalorder %s22, 0
    %p119 = por %p117, %p118
    %s121 = sadd.s32 %s120, 1
    %p124 = scmp.eq.s32.totalorder %s16, 1
    %p125 = scmp.ne.s32.totalorder %s120, %s122
    %p126 = scmp.eq.s32.totalorder %s16, 0
    %p127 = por %p125, %p126
    %p128 = scmp.ne.s32.totalorder %s120, %s122
    %p129 = scmp.eq.s32.totalorder %s21, 1
    %p130 = por %p128, %p129
    %p131 = scmp.ne.s32.totalorder %s122, %s123
    %p132 = scmp.eq.s32.totalorder %s21, 0
    %p133 = por %p131, %p132
    %p134 = scmp.ne.s32.totalorder %s122, %s123
    %p135 = scmp.eq.s32.totalorder %s22, 1
    %p136 = por %p134, %p135
    %p138 = scmp.ne.s32.totalorder %s123, %s137
    %p139 = scmp.eq.s32.totalorder %s22, 0
    %p140 = por %p138, %p139
    %s142 = sadd.s32 %s141, 1
    %p145 = scmp.eq.s32.totalorder %s16, 1
    %p146 = scmp.ne.s32.totalorder %s141, %s143
    %p147 = scmp.eq.s32.totalorder %s16, 0
    %p148 = por %p146, %p147
    %p149 = scmp.ne.s32.totalorder %s141, %s143
    %p150 = scmp.eq.s32.totalorder %s21, 1
    %p151 = por %p149, %p150
    %p152 = scmp.ne.s32.totalorder %s143, %s144
    %p153 = scmp.eq.s32.totalorder %s21, 0
    %p154 = por %p152, %p153
    %p155 = scmp.ne.s32.totalorder %s143, %s144
    %p156 = scmp.eq.s32.totalorder %s22, 1
    %p157 = por %p155, %p156
    %p159 = scmp.ne.s32.totalorder %s144, %s158
    %p160 = scmp.eq.s32.totalorder %s22, 0
    %p161 = por %p159, %p160
    %s163 = sadd.s32 %s162, 1
    %p166 = scmp.eq.s32.totalorder %s16, 1
    %p167 = scmp.ne.s32.totalorder %s162, %s164
    %p168 = scmp.eq.s32.totalorder %s16, 0
    %p169 = por %p167, %p168
    %p170 = scmp.ne.s32.totalorder %s162, %s164
    %p171 = scmp.eq.s32.totalorder %s21, 1
    %p172 = por %p170, %p171
    %p173 = scmp.ne.s32.totalorder %s164, %s165
    %p174 = scmp.eq.s32.totalorder %s21, 0
    %p175 = por %p173, %p174
    %p176 = scmp.ne.s32.totalorder %s164, %s165
    %p177 = scmp.eq.s32.totalorder %s22, 1
    %p178 = por %p176, %p177
    %p180 = scmp.ne.s32.totalorder %s165, %s179
    %p181 = scmp.eq.s32.totalorder %s22, 0
    %p182 = por %p180, %p181
    %s184 = sadd.s32 %s183, 1
    %p187 = scmp.eq.s32.totalorder %s16, 1
    %p188 = scmp.ne.s32.totalorder %s183, %s185
    %p189 = scmp.eq.s32.totalorder %s16, 0
    %p190 = por %p188, %p189
    %p191 = scmp.ne.s32.totalorder %s183, %s185
    %p192 = scmp.eq.s32.totalorder %s21, 1
    %p193 = por %p191, %p192
    %p194 = scmp.ne.s32.totalorder %s185, %s186
    %p195 = scmp.eq.s32.totalorder %s21, 0
    %p196 = por %p194, %p195
    %p197 = scmp.ne.s32.totalorder %s185, %s186
    %p198 = scmp.eq.s32.totalorder %s22, 1
    %p199 = por %p197, %p198
    %p201 = scmp.ne.s32.totalorder %s186, %s200
    %p202 = scmp.eq.s32.totalorder %s22, 0
    %p203 = por %p201, %p202
    %s205 = sadd.s32 %s204, 1
    %p208 = scmp.eq.s32.totalorder %s16, 1
    %p209 = scmp.ne.s32.totalorder %s204, %s206
    %p210 = scmp.eq.s32.totalorder %s16, 0
    %p211 = por %p209, %p210
    %p212 = scmp.ne.s32.totalorder %s204, %s206
    %p213 = scmp.eq.s32.totalorder %s21, 1
    %p214 = por %p212, %p213
    %p215 = scmp.ne.s32.totalorder %s206, %s207
    %p216 = scmp.eq.s32.totalorder %s21, 0
    %p217 = por %p215, %p216
    %p218 = scmp.ne.s32.totalorder %s206, %s207
    %p219 = scmp.eq.s32.totalorder %s22, 1
    %p220 = por %p218, %p219
    %p222 = scmp.ne.s32.totalorder %s207, %s221
    %p223 = scmp.eq.s32.totalorder %s22, 0
    %p224 = por %p222, %p223
    %s225 = sadd.s32 %s24, %s25
    %s226 = sadd.s32 %s38, %s34
    %s227 = ssub.s32 %s23, %s42
    %s228 = ssub.s32 %s225, %s226
    %s229 = sor.u32 %s227, %s228
    %p230 = scmp.eq.s32.totalorder %s229, 0
    %s232 = sadd.s32 %s231, 1
    %s233 = scalar_select %p230, %s231, %s232
    %p236 = pneg %p230
    %p237 = scmp.eq.s32.totalorder %s16, 1
    %p238 = por %p236, %p237
    %p239 = scmp.ne.s32.totalorder %s231, %s234
    %p240 = scmp.eq.s32.totalorder %s16, 0
    %p241 = por %p239, %p240
    %p242 = scmp.ne.s32.totalorder %s231, %s234
    %p243 = scmp.eq.s32.totalorder %s21, 1
    %p244 = por %p242, %p243
    %p245 = scmp.ne.s32.totalorder %s234, %s235
    %p246 = scmp.eq.s32.totalorder %s21, 0
    %p247 = por %p245, %p246
    %p248 = scmp.ne.s32.totalorder %s234, %s235
    %p249 = scmp.eq.s32.totalorder %s22, 1
    %p250 = por %p248, %p249
    %p252 = scmp.ne.s32.totalorder %s235, %s251
    %p253 = scmp.eq.s32.totalorder %s22, 0
    %p254 = por %p252, %p253
    %s255 = sadd.s32 %s23, %s24
    %s256 = sadd.s32 %s42, %s38
    %s257 = ssub.s32 %s255, %s256
    %p258 = scmp.eq.s32.totalorder %s257, 0
    %s260 = sadd.s32 %s259, 1
    %s261 = scalar_select %p258, %s259, %s260
    %p264 = pneg %p258
    %p265 = scmp.eq.s32.totalorder %s16, 1
    %p266 = por %p264, %p265
    %p267 = scmp.ne.s32.totalorder %s259, %s262
    %p268 = scmp.eq.s32.totalorder %s16, 0
    %p269 = por %p267, %p268
    %p270 = scmp.ne.s32.totalorder %s259, %s262
    %p271 = scmp.eq.s32.totalorder %s21, 1
    %p272 = por %p270, %p271
    %p273 = scmp.ne.s32.totalorder %s262, %s263
    %p274 = scmp.eq.s32.totalorder %s21, 0
    %p275 = por %p273, %p274
    %p276 = scmp.ne.s32.totalorder %s262, %s263
    %p277 = scmp.eq.s32.totalorder %s22, 1
    %p278 = por %p276, %p277
    %p280 = scmp.ne.s32.totalorder %s263, %s279
    %p281 = scmp.eq.s32.totalorder %s22, 0
    %p282 = por %p280, %p281
    %p283 = scmp.le.s32.totalorder 1, %s16
    %p284 = scmp.lt.s32.totalorder %s16, 3
    %p285 = pnand %p283, %p284
    %p286 = pneg %p285
    // Predicated region
    $region9: #{pointnet_dense_cls_forward.7} parent=5 // pred_check
      _
    $region10: #{pointnet_dense_cls_forward.7} parent=5 // pred_check_branch
      %288 = sbr.rel (%p285) target = $region12
    $region11: #{pointnet_dense_cls_forward.7} parent=5 // pred_region
      %s289 = ssub.s32 %s16, 1
      // Predicated region
      $region13: #{pointnet_dense_cls_forward.7} parent=11 // pred_check
        %p290 = pneg %p112
      $region14: #{pointnet_dense_cls_forward.7} parent=11 // pred_check_branch
        %292 = sbr.rel (%p290) target = $region16
      $region15: #{pointnet_dense_cls_forward.7} parent=11 // pred_region
        _
      $region16: #{pointnet_dense_cls_forward.7} parent=11 // pred_fallthru
        _
      // Predicated region
      $region17: #{pointnet_dense_cls_forward.7} parent=11 // pred_check
        %p293 = pneg %p133
      $region18: #{pointnet_dense_cls_forward.7} parent=11 // pred_check_branch
        %295 = sbr.rel (%p293) target = $region20
      $region19: #{pointnet_dense_cls_forward.7} parent=11 // pred_region
        _
      $region20: #{pointnet_dense_cls_forward.7} parent=11 // pred_fallthru
        _
      // Predicated region
      $region21: #{pointnet_dense_cls_forward.7} parent=11 // pred_check
        %p296 = pneg %p154
      $region22: #{pointnet_dense_cls_forward.7} parent=11 // pred_check_branch
        %298 = sbr.rel (%p296) target = $region24
      $region23: #{pointnet_dense_cls_forward.7} parent=11 // pred_region
        _
      $region24: #{pointnet_dense_cls_forward.7} parent=11 // pred_fallthru
        _
      // Predicated region
      $region25: #{pointnet_dense_cls_forward.7} parent=11 // pred_check
        %p299 = pneg %p175
      $region26: #{pointnet_dense_cls_forward.7} parent=11 // pred_check_branch
        %301 = sbr.rel (%p299) target = $region28
      $region27: #{pointnet_dense_cls_forward.7} parent=11 // pred_region
        _
      $region28: #{pointnet_dense_cls_forward.7} parent=11 // pred_fallthru
        _
      // Predicated region
      $region29: #{pointnet_dense_cls_forward.7} parent=11 // pred_check
        %p302 = pneg %p196
      $region30: #{pointnet_dense_cls_forward.7} parent=11 // pred_check_branch
        %304 = sbr.rel (%p302) target = $region32
      $region31: #{pointnet_dense_cls_forward.7} parent=11 // pred_region
        _
      $region32: #{pointnet_dense_cls_forward.7} parent=11 // pred_fallthru
        _
      // Predicated region
      $region33: #{pointnet_dense_cls_forward.7} parent=11 // pred_check
        %p305 = pneg %p217
      $region34: #{pointnet_dense_cls_forward.7} parent=11 // pred_check_branch
        %307 = sbr.rel (%p305) target = $region36
      $region35: #{pointnet_dense_cls_forward.7} parent=11 // pred_region
        _
      $region36: #{pointnet_dense_cls_forward.7} parent=11 // pred_fallthru
        _
    $region12: #{pointnet_dense_cls_forward.7} parent=5 // pred_fallthru
      _
    %p308 = scmp.lt.s32.totalorder %s16, 2
    // Predicated region
    $region37: #{pointnet_dense_cls_forward.7} parent=5 // pred_check
      %p309 = pneg %p308
    $region38: #{pointnet_dense_cls_forward.7} parent=5 // pred_check_branch
      %311 = sbr.rel (%p309) target = $region40
    $region39: #{pointnet_dense_cls_forward.7} parent=5 // pred_region
      // Predicated region
      $region41: #{pointnet_dense_cls_forward.7} parent=39 // pred_check
        %p312 = pneg %p59
      $region42: #{pointnet_dense_cls_forward.7} parent=39 // pred_check_branch
        %314 = sbr.rel (%p312) target = $region44
      $region43: #{pointnet_dense_cls_forward.7} parent=39 // pred_region
        %s315 = sadd.s32 %s24, %s25
        %s316 = smul.u32 8, %s315
        %p317 = scmp.lt.s32.totalorder %s23, 1
        %s318 = scalar_select %p317, %s23, 1
        %p319 = scmp.lt.s32.totalorder %s316, 7
        %s320 = scalar_select %p319, %s316, 7
        %s321 = smul.addr %s318, 8
        %s322 = sadd.s32 %s320, %s321
        %s323 = smul.addr %s322, 4
        %s324 = scalar_lea.vmem %s0, %s323
        %s325 = sadd.s32 %s24, %s25
        %s326 = smul.u32 8, %s325
      $region44: #{pointnet_dense_cls_forward.7} parent=39 // pred_fallthru
        _
      // Predicated region
      $region45: #{pointnet_dense_cls_forward.7} parent=39 // pred_check
        %p327 = pneg %p85
      $region46: #{pointnet_dense_cls_forward.7} parent=39 // pred_check_branch
        %329 = sbr.rel (%p327) target = $region48
      $region47: #{pointnet_dense_cls_forward.7} parent=39 // pred_region
        %p330 = scmp.lt.s32.totalorder %s23, 1
        %s331 = scalar_select %p330, %s23, 1
        %s332 = smul.addr %s331, 2
        %s333 = scalar_lea.vmem %s1, %s332
      $region48: #{pointnet_dense_cls_forward.7} parent=39 // pred_fallthru
        _
    $region40: #{pointnet_dense_cls_forward.7} parent=5 // pred_fallthru
      _
    %p334 = scmp.le.s32.totalorder 1, %s16
    %p335 = scmp.lt.s32.totalorder %s16, 3
    %p336 = pnand %p334, %p335
    %p337 = pneg %p336
    // Predicated region
    $region49: #{pointnet_dense_cls_forward.7} parent=5 // pred_check
      _
    $region50: #{pointnet_dense_cls_forward.7} parent=5 // pred_check_branch
      %339 = sbr.rel (%p336) target = $region52
    $region51: #{pointnet_dense_cls_forward.7} parent=5 // pred_region
      %s340 = ssub.s32 %s16, 1
      %s341 = sadd.s32 %s27, %s28
      %s342 = smul.u32 8, %s341
      %p343 = scmp.lt.s32.totalorder %s26, 1
      %s344 = scalar_select %p343, %s26, 1
      %p345 = scmp.lt.s32.totalorder %s342, 7
      %s346 = scalar_select %p345, %s342, 7
      %s347 = smul.addr %s344, 8
      %s348 = sadd.s32 %s346, %s347
      %s349 = smul.addr %s348, 4
      %s350 = scalar_lea.vmem %s0, %s349
      %p351 = pneg %p65
      %p352 = pneg %p62
      %p353 = scmp.lt.s32.totalorder %s26, 1
      %s354 = scalar_select %p353, %s26, 1
      %s355 = smul.addr %s354, 2
      %s356 = scalar_lea.vmem %s1, %s355
      %p357 = pneg %p91
      %p358 = pneg %p88
      %p359 = pneg %p112
      %p360 = pneg %p109
      %p361 = pneg %p133
      %p362 = pneg %p130
      %p363 = pneg %p154
      %p364 = pneg %p151
      %p365 = pneg %p175
      %p366 = pneg %p172
      %p367 = pneg %p196
      %p368 = pneg %p193
      %p369 = pneg %p217
      %p370 = pneg %p214
      %p371 = pneg %p247
      %p372 = pneg %p244
      %s373 = sadd.s32 %s27, %s28
      %s374 = smul.u32 8, %s373
      %p375 = scmp.lt.s32.totalorder %s26, 1
      %s376 = scalar_select %p375, %s26, 1
      %p377 = scmp.lt.s32.totalorder %s374, 7
      %s378 = scalar_select %p377, %s374, 7
      %s379 = smul.addr %s376, 8
      %s380 = sadd.s32 %s378, %s379
      %s381 = smul.addr %s380, 4
      %s382 = scalar_lea.vmem %s8, %s381
      %p383 = pneg %p275
      %p384 = pneg %p272
      %s385 = sadd.s32 %s26, %s27
      %p386 = scmp.lt.s32.totalorder %s385, 1
      %s387 = scalar_select %p386, %s385, 1
      %s388 = smul.addr %s387, 8
      %s389 = scalar_lea.vmem %s9, %s388
      %s390 = sadd.s32 %s27, %s28
      %s391 = smul.u32 8, %s390
      %p392 = scmp.lt.s32.totalorder %s26, 1
      %s393 = scalar_select %p392, %s26, 1
      %p394 = scmp.lt.s32.totalorder %s391, 7
      %s395 = scalar_select %p394, %s391, 7
      %s396 = smul.addr %s393, 8
      %s397 = sadd.s32 %s395, %s396
      %s398 = smul.addr %s397, 4
      %s399 = scalar_lea.vmem %s0, %s398
      %s400 = sadd.s32 %s27, %s28
      %s401 = smul.u32 8, %s400
      %p402 = scmp.lt.s32.totalorder %s26, 1
      %s403 = scalar_select %p402, %s26, 1
      %s404 = smul.addr %s403, 2
      %s405 = scalar_lea.vmem %s1, %s404
      %s406 = sadd.s32 %s27, %s28
      %s407 = smul.u32 8, %s406
      %p408 = scmp.lt.s32.totalorder %s26, 1
      %s409 = scalar_select %p408, %s26, 1
      %p410 = scmp.lt.s32.totalorder %s407, 7
      %s411 = scalar_select %p410, %s407, 7
      %s412 = smul.addr %s409, 8
      %s413 = sadd.s32 %s411, %s412
      %s414 = smul.addr %s413, 4
      %s415 = scalar_lea.vmem %s8, %s414
      %s416 = sadd.s32 %s27, %s28
      %s417 = smul.u32 8, %s416
      %s418 = sadd.s32 %s26, %s27
      %p419 = scmp.lt.s32.totalorder %s418, 1
      %s420 = scalar_select %p419, %s418, 1
      %s421 = smul.addr %s420, 8
      %s422 = scalar_lea.vmem %s9, %s421
      %s423 = sadd.s32 %s26, %s27
      %p425 = scmp.eq.s32.totalorder %s28, 0
      // Predicated region
      $region53: #{pointnet_dense_cls_forward.7} parent=51 // pred_check
        %p426 = pneg %p425
      $region54: #{pointnet_dense_cls_forward.7} parent=51 // pred_check_branch
        %428 = sbr.rel (%p426) target = $region56
      $region55: #{pointnet_dense_cls_forward.7} parent=51 // pred_region
        %429 = vst [vmem:[%s422] sm:$0xff] -inf
      $region56: #{pointnet_dense_cls_forward.7} parent=51 // pred_fallthru
        _
      %v430 = vld [vmem:[%s405] sm:$0x3]
      %v431 = vld [vmem:[%s399] sm:$0xf]
      %v432 = vld [vmem:[%s399 + $0x4] sm:$0xf]
      %v433 = vld [vmem:[%s399 + $0x8] sm:$0xf]
      %v434 = vld [vmem:[%s399 + $0xc] sm:$0xf]
      %v435 = vld [vmem:[%s399 + $0x10] sm:$0xf]
      %v436 = vld [vmem:[%s399 + $0x14] sm:$0xf]
      %v437 = vld [vmem:[%s399 + $0x18] sm:$0xf]
      %v438 = vld [vmem:[%s399 + $0x1c] sm:$0xf]
      %v447 = vunpack.c.l.b16 %v431
      %v448 = vunpack.c.l.b16 %v432
      %v449 = vunpack.c.l.b16 %v433
      %v450 = vunpack.c.l.b16 %v434
      %v451 = vunpack.c.l.b16 %v435
      %v452 = vunpack.c.l.b16 %v436
      %v453 = vunpack.c.l.b16 %v437
      %v454 = vunpack.c.l.b16 %v438
      %v455 = vpack.c.b16 %v448, %v447
      %v456 = vpack.c.b16 %v450, %v449
      %v457 = vpack.c.b16 %v452, %v451
      %v458 = vpack.c.b16 %v454, %v453
      %vm459 = vcmask 23552
      %v461 = vsel %vm459, %v455, 0
      %v464 = vsel %vm459, %v456, 0
      %v467 = vsel %vm459, %v457, 0
      %v470 = vsel %vm459, %v458, 0
      %vm472 = vcmask 1040384
      %vm473 = vcmask 1041408
      %v474 = vsel %vm472, 4294967295, 65535
      %v475 = vsel %vm473, %v474, 0
      %v477 = vand.u32 %v430, %v475
      %479 = vmatprep.subr.bf16.mxu0 0
      %480 = vmatpush1.bf16.msra.mxu0 0
      %481 = vmatprep.subr.bf16.mxu0 0
      %482 = vmatpush1.bf16.msra.mxu0 0
      %483 = vmatprep.subr.bf16.mxu0 0
      %484 = vmatpush1.bf16.msra.mxu0 0
      %485 = vmatprep.subr.bf16.mxu0 0
      %486 = vmatpush1.bf16.msra.mxu0 0
      %487 = vmatprep.subr.bf16.mxu0 0
      %488 = vmatpush1.bf16.msra.mxu0 0
      %489 = vmatprep.subr.bf16.mxu0 0
      %490 = vmatpush1.bf16.msra.mxu0 0
      %491 = vmatprep.subr.bf16.mxu0 0
      %492 = vmatpush1.bf16.msra.mxu0 0
      %493 = vmatprep.subr.bf16.mxu0 0
      %494 = vmatpush1.bf16.msra.mxu0 %v477
      %495 = vmatprep.subr.bf16.mxu0 0
      %496 = vmatpush2.bf16.msra.mxu0 0
      %497 = vmatprep.subr.bf16.mxu0 0
      %498 = vmatpush2.bf16.msra.mxu0 0
      %499 = vmatprep.subr.bf16.mxu0 0
      %500 = vmatpush2.bf16.msra.mxu0 0
      %501 = vmatprep.subr.bf16.mxu0 0
      %502 = vmatpush2.bf16.msra.mxu0 0
      %503 = vmatprep.subr.bf16.mxu0 0
      %504 = vmatpush2.bf16.msra.mxu0 0
      %505 = vmatprep.subr.bf16.mxu0 0
      %506 = vmatpush2.bf16.msra.mxu0 0
      %507 = vmatprep.subr.bf16.mxu0 0
      %508 = vmatpush2.bf16.msra.mxu0 0
      %509 = vmatprep.subr.bf16.mxu0 0
      %510 = vmatpush2.bf16.msra.mxu0 0
      %511 = vmatprep.mubr.bf16.mxu0 0
      %512 = vmatmul.mubr.bf16.gmra.mxu0 %v461
      %v513 = vpop.f32.mrf.mxu0
      %v514 = vadd.f32 0.0, %v513
      %v515 = vpop.f32.mrf.mxu0
      %v516 = vpop.f32.mrf.mxu0
      %v517 = vadd.f32 0.0, %v516
      %v518 = vpop.f32.mrf.mxu0
      %519 = vmatprep.mubr.bf16.mxu0 0
      %520 = vmatmul.mubr.bf16.gmra.mxu0 %v464
      %v521 = vpop.f32.mrf.mxu0
      %v522 = vadd.f32 0.0, %v521
      %v523 = vpop.f32.mrf.mxu0
      %v524 = vpop.f32.mrf.mxu0
      %v525 = vadd.f32 0.0, %v524
      %v526 = vpop.f32.mrf.mxu0
      %527 = vmatprep.mubr.bf16.mxu0 0
      %528 = vmatmul.mubr.bf16.gmra.mxu0 %v467
      %v529 = vpop.f32.mrf.mxu0
      %v530 = vadd.f32 0.0, %v529
      %v531 = vpop.f32.mrf.mxu0
      %v532 = vpop.f32.mrf.mxu0
      %v533 = vadd.f32 0.0, %v532
      %v534 = vpop.f32.mrf.mxu0
      %535 = vmatprep.mubr.bf16.mxu0 0
      %536 = vmatmul.mubr.bf16.gmra.mxu0 %v470
      %v537 = vpop.f32.mrf.mxu0
      %v538 = vadd.f32 0.0, %v537
      %v539 = vpop.f32.mrf.mxu0
      %v540 = vpop.f32.mrf.mxu0
      %v541 = vadd.f32 0.0, %v540
      %v542 = vpop.f32.mrf.mxu0
      %543 = vdwg.mxu0
      %v544 = vld [vmem:[%s2] sm:$0x1]
      %v546 = vlaneseq
      %v547 = vshrl.u32 %v546, 7
      %v548 = vsub.s32 0, %v547
      %v549 = vrot.slane %v544, %v548
      %v551 = vmul.f32 %v514, %v549
      %v552 = vmul.f32 %v517, %v549
      %v553 = vmul.f32 %v522, %v549
      %v554 = vmul.f32 %v525, %v549
      %v555 = vmul.f32 %v530, %v549
      %v556 = vmul.f32 %v533, %v549
      %v557 = vmul.f32 %v538, %v549
      %v558 = vmul.f32 %v541, %v549
      %v559 = vld [vmem:[%s3] sm:$0x1]
      %v561 = vlaneseq
      %v562 = vshrl.u32 %v561, 7
      %v563 = vsub.s32 0, %v562
      %v564 = vrot.slane %v559, %v563
      %v566 = vadd.f32 %v551, %v564
      %v567 = vadd.f32 %v552, %v564
      %v568 = vadd.f32 %v553, %v564
      %v569 = vadd.f32 %v554, %v564
      %v570 = vadd.f32 %v555, %v564
      %v571 = vadd.f32 %v556, %v564
      %v572 = vadd.f32 %v557, %v564
      %v573 = vadd.f32 %v558, %v564
      %v574 = vmax.f32 %v566, 0.0
      %v575 = vmax.f32 %v567, 0.0
      %v576 = vmax.f32 %v568, 0.0
      %v577 = vmax.f32 %v569, 0.0
      %v578 = vmax.f32 %v570, 0.0
      %v579 = vmax.f32 %v571, 0.0
      %v580 = vmax.f32 %v572, 0.0
      %v581 = vmax.f32 %v573, 0.0
      %v582 = vpack.c.bf16 %v575, %v574
      %v583 = vpack.c.bf16 %v577, %v576
      %v584 = vpack.c.bf16 %v579, %v578
      %v585 = vpack.c.bf16 %v581, %v580
      %v590 = vunpack.c.l.b16 %v582
      %v591 = vunpack.c.h.b16 %v582
      %v592 = vunpack.c.l.b16 %v583
      %v593 = vunpack.c.h.b16 %v583
      %v594 = vunpack.c.l.b16 %v584
      %v595 = vunpack.c.h.b16 %v584
      %v596 = vunpack.c.l.b16 %v585
      %v597 = vunpack.c.h.b16 %v585
      %v598 = vpack.c.b16 %v590, %v590
      %v599 = vpack.c.b16 %v591, %v591
      %v600 = vpack.c.b16 %v592, %v592
      %v601 = vpack.c.b16 %v593, %v593
      %v602 = vpack.c.b16 %v594, %v594
      %v603 = vpack.c.b16 %v595, %v595
      %v604 = vpack.c.b16 %v596, %v596
      %v605 = vpack.c.b16 %v597, %v597
      %vm614 = vcmask 519168
      %615 = vst.msk [vmem:[%s415] sm:$0xf] %vm614, %v598
      %616 = vst.msk [vmem:[%s415 + $0x4] sm:$0xf] %vm614, %v599
      %617 = vst.msk [vmem:[%s415 + $0x8] sm:$0xf] %vm614, %v600
      %618 = vst.msk [vmem:[%s415 + $0xc] sm:$0xf] %vm614, %v601
      %619 = vst.msk [vmem:[%s415 + $0x10] sm:$0xf] %vm614, %v602
      %620 = vst.msk [vmem:[%s415 + $0x14] sm:$0xf] %vm614, %v603
      %621 = vst.msk [vmem:[%s415 + $0x18] sm:$0xf] %vm614, %v604
      %622 = vst.msk [vmem:[%s415 + $0x1c] sm:$0xf] %vm614, %v605
      %v623 = vld [vmem:[%s4] sm:$0xf]
      %v624 = vld [vmem:[%s4 + $0x4] sm:$0xf]
      %v625 = vld [vmem:[%s4 + $0x8] sm:$0xf]
      %v626 = vld [vmem:[%s4 + $0xc] sm:$0xf]
      %v627 = vld [vmem:[%s4 + $0x10] sm:$0xf]
      %v628 = vld [vmem:[%s4 + $0x14] sm:$0xf]
      %v629 = vld [vmem:[%s4 + $0x18] sm:$0xf]
      %v630 = vld [vmem:[%s4 + $0x1c] sm:$0xf]
      %v639 = vunpack.c.l.b16 %v623
      %v640 = vunpack.c.l.b16 %v624
      %v641 = vunpack.c.l.b16 %v625
      %v642 = vunpack.c.l.b16 %v626
      %v643 = vunpack.c.l.b16 %v627
      %v644 = vunpack.c.l.b16 %v628
      %v645 = vunpack.c.l.b16 %v629
      %v646 = vunpack.c.l.b16 %v630
      %v647 = vpack.c.b16 %v640, %v639
      %v648 = vpack.c.b16 %v642, %v641
      %v649 = vpack.c.b16 %v644, %v643
      %v650 = vpack.c.b16 %v646, %v645
      %vm655 = vcmask 523264
      %v657 = vsel %vm655, %v582, 0
      %v660 = vsel %vm655, %v583, 0
      %v663 = vsel %vm655, %v584, 0
      %v666 = vsel %vm655, %v585, 0
      %668 = vmatprep.subr.bf16.mxu0 0
      %669 = vmatpush1.bf16.msra.mxu0 0
      %670 = vmatprep.subr.bf16.mxu0 0
      %671 = vmatpush1.bf16.msra.mxu0 0
      %672 = vmatprep.subr.bf16.mxu0 0
      %673 = vmatpush1.bf16.msra.mxu0 0
      %674 = vmatprep.subr.bf16.mxu0 0
      %675 = vmatpush1.bf16.msra.mxu0 0
      %676 = vmatprep.subr.bf16.mxu0 0
      %677 = vmatpush1.bf16.msra.mxu0 %v650
      %678 = vmatprep.subr.bf16.mxu0 0
      %679 = vmatpush1.bf16.msra.mxu0 %v649
      %680 = vmatprep.subr.bf16.mxu0 0
      %681 = vmatpush1.bf16.msra.mxu0 %v648
      %682 = vmatprep.subr.bf16.mxu0 0
      %683 = vmatpush1.bf16.msra.mxu0 %v647
      %684 = vmatprep.subr.bf16.mxu0 0
      %685 = vmatpush2.bf16.msra.mxu0 0
      %686 = vmatprep.subr.bf16.mxu0 0
      %687 = vmatpush2.bf16.msra.mxu0 0
      %688 = vmatprep.subr.bf16.mxu0 0
      %689 = vmatpush2.bf16.msra.mxu0 0
      %690 = vmatprep.subr.bf16.mxu0 0
      %691 = vmatpush2.bf16.msra.mxu0 0
      %692 = vmatprep.subr.bf16.mxu0 0
      %693 = vmatpush2.bf16.msra.mxu0 0
      %694 = vmatprep.subr.bf16.mxu0 0
      %695 = vmatpush2.bf16.msra.mxu0 0
      %696 = vmatprep.subr.bf16.mxu0 0
      %697 = vmatpush2.bf16.msra.mxu0 0
      %698 = vmatprep.subr.bf16.mxu0 0
      %699 = vmatpush2.bf16.msra.mxu0 0
      %700 = vmatprep.mubr.bf16.mxu0 0
      %701 = vmatmul.mubr.bf16.gmra.mxu0 %v657
      %v702 = vpop.f32.mrf.mxu0
      %v703 = vadd.f32 0.0, %v702
      %v704 = vpop.f32.mrf.mxu0
      %v705 = vpop.f32.mrf.mxu0
      %v706 = vadd.f32 0.0, %v705
      %v707 = vpop.f32.mrf.mxu0
      %708 = vmatprep.mubr.bf16.mxu0 0
      %709 = vmatmul.mubr.bf16.gmra.mxu0 %v660
      %v710 = vpop.f32.mrf.mxu0
      %v711 = vadd.f32 0.0, %v710
      %v712 = vpop.f32.mrf.mxu0
      %v713 = vpop.f32.mrf.mxu0
      %v714 = vadd.f32 0.0, %v713
      %v715 = vpop.f32.mrf.mxu0
      %716 = vmatprep.mubr.bf16.mxu0 0
      %717 = vmatmul.mubr.bf16.gmra.mxu0 %v663
      %v718 = vpop.f32.mrf.mxu0
      %v719 = vadd.f32 0.0, %v718
      %v720 = vpop.f32.mrf.mxu0
      %v721 = vpop.f32.mrf.mxu0
      %v722 = vadd.f32 0.0, %v721
      %v723 = vpop.f32.mrf.mxu0
      %724 = vmatprep.mubr.bf16.mxu0 0
      %725 = vmatmul.mubr.bf16.gmra.mxu0 %v666
      %v726 = vpop.f32.mrf.mxu0
      %v727 = vadd.f32 0.0, %v726
      %v728 = vpop.f32.mrf.mxu0
      %v729 = vpop.f32.mrf.mxu0
      %v730 = vadd.f32 0.0, %v729
      %v731 = vpop.f32.mrf.mxu0
      %732 = vdwg.mxu0
      %v733 = vld [vmem:[%s5] sm:$0x1]
      %v735 = vlaneseq
      %v736 = vshrl.u32 %v735, 7
      %v737 = vsub.s32 0, %v736
      %v738 = vrot.slane %v733, %v737
      %v740 = vmul.f32 %v703, %v738
      %v741 = vmul.f32 %v706, %v738
      %v742 = vmul.f32 %v711, %v738
      %v743 = vmul.f32 %v714, %v738
      %v744 = vmul.f32 %v719, %v738
      %v745 = vmul.f32 %v722, %v738
      %v746 = vmul.f32 %v727, %v738
      %v747 = vmul.f32 %v730, %v738
      %v748 = vld [vmem:[%s6] sm:$0x1]
      %v750 = vlaneseq
      %v751 = vshrl.u32 %v750, 7
      %v752 = vsub.s32 0, %v751
      %v753 = vrot.slane %v748, %v752
      %v755 = vadd.f32 %v740, %v753
      %v756 = vadd.f32 %v741, %v753
      %v757 = vadd.f32 %v742, %v753
      %v758 = vadd.f32 %v743, %v753
      %v759 = vadd.f32 %v744, %v753
      %v760 = vadd.f32 %v745, %v753
      %v761 = vadd.f32 %v746, %v753
      %v762 = vadd.f32 %v747, %v753
      %v763 = vmax.f32 %v755, 0.0
      %v764 = vmax.f32 %v756, 0.0
      %v765 = vmax.f32 %v757, 0.0
      %v766 = vmax.f32 %v758, 0.0
      %v767 = vmax.f32 %v759, 0.0
      %v768 = vmax.f32 %v760, 0.0
      %v769 = vmax.f32 %v761, 0.0
      %v770 = vmax.f32 %v762, 0.0
      %v771 = vpack.c.bf16 %v764, %v763
      %v772 = vpack.c.bf16 %v766, %v765
      %v773 = vpack.c.bf16 %v768, %v767
      %v774 = vpack.c.bf16 %v770, %v769
      %v775 = vld [vmem:[%s7] sm:$0xff]
      %v776 = vld [vmem:[%s7 + $0x8] sm:$0xff]
      %v777 = vld [vmem:[%s7 + $0x10] sm:$0xff]
      %v778 = vld [vmem:[%s7 + $0x18] sm:$0xff]
      %v779 = vld [vmem:[%s7 + $0x20] sm:$0xff]
      %v780 = vld [vmem:[%s7 + $0x28] sm:$0xff]
      %v781 = vld [vmem:[%s7 + $0x30] sm:$0xff]
      %v782 = vld [vmem:[%s7 + $0x38] sm:$0xff]
      %v783 = vld [vmem:[%s7 + $0x40] sm:$0xff]
      %v784 = vld [vmem:[%s7 + $0x48] sm:$0xff]
      %v785 = vld [vmem:[%s7 + $0x50] sm:$0xff]
      %v786 = vld [vmem:[%s7 + $0x58] sm:$0xff]
      %v787 = vld [vmem:[%s7 + $0x60] sm:$0xff]
      %v788 = vld [vmem:[%s7 + $0x68] sm:$0xff]
      %v789 = vld [vmem:[%s7 + $0x70] sm:$0xff]
      %v790 = vld [vmem:[%s7 + $0x78] sm:$0xff]
      %v791 = vld [vmem:[%s7 + $0x80] sm:$0xff]
      %v792 = vld [vmem:[%s7 + $0x88] sm:$0xff]
      %v793 = vld [vmem:[%s7 + $0x90] sm:$0xff]
      %v794 = vld [vmem:[%s7 + $0x98] sm:$0xff]
      %v795 = vld [vmem:[%s7 + $0xa0] sm:$0xff]
      %v796 = vld [vmem:[%s7 + $0xa8] sm:$0xff]
      %v797 = vld [vmem:[%s7 + $0xb0] sm:$0xff]
      %v798 = vld [vmem:[%s7 + $0xb8] sm:$0xff]
      %v799 = vld [vmem:[%s7 + $0xc0] sm:$0xff]
      %v800 = vld [vmem:[%s7 + $0xc8] sm:$0xff]
      %v801 = vld [vmem:[%s7 + $0xd0] sm:$0xff]
      %v802 = vld [vmem:[%s7 + $0xd8] sm:$0xff]
      %v803 = vld [vmem:[%s7 + $0xe0] sm:$0xff]
      %v804 = vld [vmem:[%s7 + $0xe8] sm:$0xff]
      %v805 = vld [vmem:[%s7 + $0xf0] sm:$0xff]
      %v806 = vld [vmem:[%s7 + $0xf8] sm:$0xff]
      %v807 = vld [vmem:[%s7 + $0x100] sm:$0xff]
      %v808 = vld [vmem:[%s7 + $0x108] sm:$0xff]
      %v809 = vld [vmem:[%s7 + $0x110] sm:$0xff]
      %v810 = vld [vmem:[%s7 + $0x118] sm:$0xff]
      %v811 = vld [vmem:[%s7 + $0x120] sm:$0xff]
      %v812 = vld [vmem:[%s7 + $0x128] sm:$0xff]
      %v813 = vld [vmem:[%s7 + $0x130] sm:$0xff]
      %v814 = vld [vmem:[%s7 + $0x138] sm:$0xff]
      %v815 = vld [vmem:[%s7 + $0x140] sm:$0xff]
      %v816 = vld [vmem:[%s7 + $0x148] sm:$0xff]
      %v817 = vld [vmem:[%s7 + $0x150] sm:$0xff]
      %v818 = vld [vmem:[%s7 + $0x158] sm:$0xff]
      %v819 = vld [vmem:[%s7 + $0x160] sm:$0xff]
      %v820 = vld [vmem:[%s7 + $0x168] sm:$0xff]
      %v821 = vld [vmem:[%s7 + $0x170] sm:$0xff]
      %v822 = vld [vmem:[%s7 + $0x178] sm:$0xff]
      %v823 = vld [vmem:[%s7 + $0x180] sm:$0xff]
      %v824 = vld [vmem:[%s7 + $0x188] sm:$0xff]
      %v825 = vld [vmem:[%s7 + $0x190] sm:$0xff]
      %v826 = vld [vmem:[%s7 + $0x198] sm:$0xff]
      %v827 = vld [vmem:[%s7 + $0x1a0] sm:$0xff]
      %v828 = vld [vmem:[%s7 + $0x1a8] sm:$0xff]
      %v829 = vld [vmem:[%s7 + $0x1b0] sm:$0xff]
      %v830 = vld [vmem:[%s7 + $0x1b8] sm:$0xff]
      %v831 = vld [vmem:[%s7 + $0x1c0] sm:$0xff]
      %v832 = vld [vmem:[%s7 + $0x1c8] sm:$0xff]
      %v833 = vld [vmem:[%s7 + $0x1d0] sm:$0xff]
      %v834 = vld [vmem:[%s7 + $0x1d8] sm:$0xff]
      %v835 = vld [vmem:[%s7 + $0x1e0] sm:$0xff]
      %v836 = vld [vmem:[%s7 + $0x1e8] sm:$0xff]
      %v837 = vld [vmem:[%s7 + $0x1f0] sm:$0xff]
      %v838 = vld [vmem:[%s7 + $0x1f8] sm:$0xff]
      %v903 = vunpack.c.l.b16 %v775
      %v904 = vunpack.c.h.b16 %v775
      %v905 = vunpack.c.l.b16 %v776
      %v906 = vunpack.c.h.b16 %v776
      %v907 = vunpack.c.l.b16 %v777
      %v908 = vunpack.c.h.b16 %v777
      %v909 = vunpack.c.l.b16 %v778
      %v910 = vunpack.c.h.b16 %v778
      %v911 = vunpack.c.l.b16 %v779
      %v912 = vunpack.c.h.b16 %v779
      %v913 = vunpack.c.l.b16 %v780
      %v914 = vunpack.c.h.b16 %v780
      %v915 = vunpack.c.l.b16 %v781
      %v916 = vunpack.c.h.b16 %v781
      %v917 = vunpack.c.l.b16 %v782
      %v918 = vunpack.c.h.b16 %v782
      %v919 = vunpack.c.l.b16 %v783
      %v920 = vunpack.c.h.b16 %v783
      %v921 = vunpack.c.l.b16 %v784
      %v922 = vunpack.c.h.b16 %v784
      %v923 = vunpack.c.l.b16 %v785
      %v924 = vunpack.c.h.b16 %v785
      %v925 = vunpack.c.l.b16 %v786
      %v926 = vunpack.c.h.b16 %v786
      %v927 = vunpack.c.l.b16 %v787
      %v928 = vunpack.c.h.b16 %v787
      %v929 = vunpack.c.l.b16 %v788
      %v930 = vunpack.c.h.b16 %v788
      %v931 = vunpack.c.l.b16 %v789
      %v932 = vunpack.c.h.b16 %v789
      %v933 = vunpack.c.l.b16 %v790
      %v934 = vunpack.c.h.b16 %v790
      %v935 = vunpack.c.l.b16 %v791
      %v936 = vunpack.c.h.b16 %v791
      %v937 = vunpack.c.l.b16 %v792
      %v938 = vunpack.c.h.b16 %v792
      %v939 = vunpack.c.l.b16 %v793
      %v940 = vunpack.c.h.b16 %v793
      %v941 = vunpack.c.l.b16 %v794
      %v942 = vunpack.c.h.b16 %v794
      %v943 = vunpack.c.l.b16 %v795
      %v944 = vunpack.c.h.b16 %v795
      %v945 = vunpack.c.l.b16 %v796
      %v946 = vunpack.c.h.b16 %v796
      %v947 = vunpack.c.l.b16 %v797
      %v948 = vunpack.c.h.b16 %v797
      %v949 = vunpack.c.l.b16 %v798
      %v950 = vunpack.c.h.b16 %v798
      %v951 = vunpack.c.l.b16 %v799
      %v952 = vunpack.c.h.b16 %v799
      %v953 = vunpack.c.l.b16 %v800
      %v954 = vunpack.c.h.b16 %v800
      %v955 = vunpack.c.l.b16 %v801
      %v956 = vunpack.c.h.b16 %v801
      %v957 = vunpack.c.l.b16 %v802
      %v958 = vunpack.c.h.b16 %v802
      %v959 = vunpack.c.l.b16 %v803
      %v960 = vunpack.c.h.b16 %v803
      %v961 = vunpack.c.l.b16 %v804
      %v962 = vunpack.c.h.b16 %v804
      %v963 = vunpack.c.l.b16 %v805
      %v964 = vunpack.c.h.b16 %v805
      %v965 = vunpack.c.l.b16 %v806
      %v966 = vunpack.c.h.b16 %v806
      %v967 = vunpack.c.l.b16 %v807
      %v968 = vunpack.c.h.b16 %v807
      %v969 = vunpack.c.l.b16 %v808
      %v970 = vunpack.c.h.b16 %v808
      %v971 = vunpack.c.l.b16 %v809
      %v972 = vunpack.c.h.b16 %v809
      %v973 = vunpack.c.l.b16 %v810
      %v974 = vunpack.c.h.b16 %v810
      %v975 = vunpack.c.l.b16 %v811
      %v976 = vunpack.c.h.b16 %v811
      %v977 = vunpack.c.l.b16 %v812
      %v978 = vunpack.c.h.b16 %v812
      %v979 = vunpack.c.l.b16 %v813
      %v980 = vunpack.c.h.b16 %v813
      %v981 = vunpack.c.l.b16 %v814
      %v982 = vunpack.c.h.b16 %v814
      %v983 = vunpack.c.l.b16 %v815
      %v984 = vunpack.c.h.b16 %v815
      %v985 = vunpack.c.l.b16 %v816
      %v986 = vunpack.c.h.b16 %v816
      %v987 = vunpack.c.l.b16 %v817
      %v988 = vunpack.c.h.b16 %v817
      %v989 = vunpack.c.l.b16 %v818
      %v990 = vunpack.c.h.b16 %v818
      %v991 = vunpack.c.l.b16 %v819
      %v992 = vunpack.c.h.b16 %v819
      %v993 = vunpack.c.l.b16 %v820
      %v994 = vunpack.c.h.b16 %v820
      %v995 = vunpack.c.l.b16 %v821
      %v996 = vunpack.c.h.b16 %v821
      %v997 = vunpack.c.l.b16 %v822
      %v998 = vunpack.c.h.b16 %v822
      %v999 = vunpack.c.l.b16 %v823
      %v1000 = vunpack.c.h.b16 %v823
      %v1001 = vunpack.c.l.b16 %v824
      %v1002 = vunpack.c.h.b16 %v824
      %v1003 = vunpack.c.l.b16 %v825
      %v1004 = vunpack.c.h.b16 %v825
      %v1005 = vunpack.c.l.b16 %v826
      %v1006 = vunpack.c.h.b16 %v826
      %v1007 = vunpack.c.l.b16 %v827
      %v1008 = vunpack.c.h.b16 %v827
      %v1009 = vunpack.c.l.b16 %v828
      %v1010 = vunpack.c.h.b16 %v828
      %v1011 = vunpack.c.l.b16 %v829
      %v1012 = vunpack.c.h.b16 %v829
      %v1013 = vunpack.c.l.b16 %v830
      %v1014 = vunpack.c.h.b16 %v830
      %v1015 = vunpack.c.l.b16 %v831
      %v1016 = vunpack.c.h.b16 %v831
      %v1017 = vunpack.c.l.b16 %v832
      %v1018 = vunpack.c.h.b16 %v832
      %v1019 = vunpack.c.l.b16 %v833
      %v1020 = vunpack.c.h.b16 %v833
      %v1021 = vunpack.c.l.b16 %v834
      %v1022 = vunpack.c.h.b16 %v834
      %v1023 = vunpack.c.l.b16 %v835
      %v1024 = vunpack.c.h.b16 %v835
      %v1025 = vunpack.c.l.b16 %v836
      %v1026 = vunpack.c.h.b16 %v836
      %v1027 = vunpack.c.l.b16 %v837
      %v1028 = vunpack.c.h.b16 %v837
      %v1029 = vunpack.c.l.b16 %v838
      %v1030 = vunpack.c.h.b16 %v838
      %v1031 = vpack.c.b16 %v911, %v903
      %v1032 = vpack.c.b16 %v912, %v904
      %v1033 = vpack.c.b16 %v913, %v905
      %v1034 = vpack.c.b16 %v914, %v906
      %v1035 = vpack.c.b16 %v915, %v907
      %v1036 = vpack.c.b16 %v916, %v908
      %v1037 = vpack.c.b16 %v917, %v909
      %v1038 = vpack.c.b16 %v918, %v910
      %v1039 = vpack.c.b16 %v927, %v919
      %v1040 = vpack.c.b16 %v928, %v920
      %v1041 = vpack.c.b16 %v929, %v921
      %v1042 = vpack.c.b16 %v930, %v922
      %v1043 = vpack.c.b16 %v931, %v923
      %v1044 = vpack.c.b16 %v932, %v924
      %v1045 = vpack.c.b16 %v933, %v925
      %v1046 = vpack.c.b16 %v934, %v926
      %v1047 = vpack.c.b16 %v943, %v935
      %v1048 = vpack.c.b16 %v944, %v936
      %v1049 = vpack.c.b16 %v945, %v937
      %v1050 = vpack.c.b16 %v946, %v938
      %v1051 = vpack.c.b16 %v947, %v939
      %v1052 = vpack.c.b16 %v948, %v940
      %v1053 = vpack.c.b16 %v949, %v941
      %v1054 = vpack.c.b16 %v950, %v942
      %v1055 = vpack.c.b16 %v959, %v951
      %v1056 = vpack.c.b16 %v960, %v952
      %v1057 = vpack.c.b16 %v961, %v953
      %v1058 = vpack.c.b16 %v962, %v954
      %v1059 = vpack.c.b16 %v963, %v955
      %v1060 = vpack.c.b16 %v964, %v956
      %v1061 = vpack.c.b16 %v965, %v957
      %v1062 = vpack.c.b16 %v966, %v958
      %v1063 = vpack.c.b16 %v975, %v967
      %v1064 = vpack.c.b16 %v976, %v968
      %v1065 = vpack.c.b16 %v977, %v969
      %v1066 = vpack.c.b16 %v978, %v970
      %v1067 = vpack.c.b16 %v979, %v971
      %v1068 = vpack.c.b16 %v980, %v972
      %v1069 = vpack.c.b16 %v981, %v973
      %v1070 = vpack.c.b16 %v982, %v974
      %v1071 = vpack.c.b16 %v991, %v983
      %v1072 = vpack.c.b16 %v992, %v984
      %v1073 = vpack.c.b16 %v993, %v985
      %v1074 = vpack.c.b16 %v994, %v986
      %v1075 = vpack.c.b16 %v995, %v987
      %v1076 = vpack.c.b16 %v996, %v988
      %v1077 = vpack.c.b16 %v997, %v989
      %v1078 = vpack.c.b16 %v998, %v990
      %v1079 = vpack.c.b16 %v1007, %v999
      %v1080 = vpack.c.b16 %v1008, %v1000
      %v1081 = vpack.c.b16 %v1009, %v1001
      %v1082 = vpack.c.b16 %v1010, %v1002
      %v1083 = vpack.c.b16 %v1011, %v1003
      %v1084 = vpack.c.b16 %v1012, %v1004
      %v1085 = vpack.c.b16 %v1013, %v1005
      %v1086 = vpack.c.b16 %v1014, %v1006
      %v1087 = vpack.c.b16 %v1023, %v1015
      %v1088 = vpack.c.b16 %v1024, %v1016
      %v1089 = vpack.c.b16 %v1025, %v1017
      %v1090 = vpack.c.b16 %v1026, %v1018
      %v1091 = vpack.c.b16 %v1027, %v1019
      %v1092 = vpack.c.b16 %v1028, %v1020
      %v1093 = vpack.c.b16 %v1029, %v1021
      %v1094 = vpack.c.b16 %v1030, %v1022
      %1159 = vmatprep.subr.bf16.mxu0 %v1088
      %1160 = vmatpush1.bf16.msra.mxu0 %v1087
      %1161 = vmatprep.subr.bf16.mxu0 %v1080
      %1162 = vmatpush1.bf16.msra.mxu0 %v1079
      %1163 = vmatprep.subr.bf16.mxu0 %v1072
      %1164 = vmatpush1.bf16.msra.mxu0 %v1071
      %1165 = vmatprep.subr.bf16.mxu0 %v1064
      %1166 = vmatpush1.bf16.msra.mxu0 %v1063
      %1167 = vmatprep.subr.bf16.mxu0 %v1056
      %1168 = vmatpush1.bf16.msra.mxu0 %v1055
      %1169 = vmatprep.subr.bf16.mxu0 %v1048
      %1170 = vmatpush1.bf16.msra.mxu0 %v1047
      %1171 = vmatprep.subr.bf16.mxu0 %v1040
      %1172 = vmatpush1.bf16.msra.mxu0 %v1039
      %1173 = vmatprep.subr.bf16.mxu0 %v1032
      %1174 = vmatpush1.bf16.msra.mxu0 %v1031
      %1175 = vmatprep.subr.bf16.mxu0 0
      %1176 = vmatpush2.bf16.msra.mxu0 0
      %1177 = vmatprep.subr.bf16.mxu0 0
      %1178 = vmatpush2.bf16.msra.mxu0 0
      %1179 = vmatprep.subr.bf16.mxu0 0
      %1180 = vmatpush2.bf16.msra.mxu0 0
      %1181 = vmatprep.subr.bf16.mxu0 0
      %1182 = vmatpush2.bf16.msra.mxu0 0
      %1183 = vmatprep.subr.bf16.mxu0 0
      %1184 = vmatpush2.bf16.msra.mxu0 0
      %1185 = vmatprep.subr.bf16.mxu0 0
      %1186 = vmatpush2.bf16.msra.mxu0 0
      %1187 = vmatprep.subr.bf16.mxu0 0
      %1188 = vmatpush2.bf16.msra.mxu0 0
      %1189 = vmatprep.subr.bf16.mxu0 0
      %1190 = vmatpush2.bf16.msra.mxu0 0
      %1191 = vmatprep.mubr.bf16.mxu0 0
      %1192 = vmatmul.mubr.bf16.gmra.mxu0 %v771
      %v1193 = vpop.f32.mrf.mxu0
      %v1194 = vadd.f32 0.0, %v1193
      %v1195 = vpop.f32.mrf.mxu0
      %v1196 = vadd.f32 0.0, %v1195
      %v1197 = vpop.f32.mrf.mxu0
      %v1198 = vadd.f32 0.0, %v1197
      %v1199 = vpop.f32.mrf.mxu0
      %v1200 = vadd.f32 0.0, %v1199
      %1201 = vmatprep.mubr.bf16.mxu0 0
      %1202 = vmatmul.mubr.bf16.gmra.mxu0 %v772
      %v1203 = vpop.f32.mrf.mxu0
      %v1204 = vadd.f32 0.0, %v1203
      %v1205 = vpop.f32.mrf.mxu0
      %v1206 = vadd.f32 0.0, %v1205
      %v1207 = vpop.f32.mrf.mxu0
      %v1208 = vadd.f32 0.0, %v1207
      %v1209 = vpop.f32.mrf.mxu0
      %v1210 = vadd.f32 0.0, %v1209
      %1211 = vmatprep.mubr.bf16.mxu0 0
      %1212 = vmatmul.mubr.bf16.gmra.mxu0 %v773
      %v1213 = vpop.f32.mrf.mxu0
      %v1214 = vadd.f32 0.0, %v1213
      %v1215 = vpop.f32.mrf.mxu0
      %v1216 = vadd.f32 0.0, %v1215
      %v1217 = vpop.f32.mrf.mxu0
      %v1218 = vadd.f32 0.0, %v1217
      %v1219 = vpop.f32.mrf.mxu0
      %v1220 = vadd.f32 0.0, %v1219
      %1221 = vmatprep.mubr.bf16.mxu0 0
      %1222 = vmatmul.mubr.bf16.gmra.mxu0 %v774
      %v1223 = vpop.f32.mrf.mxu0
      %v1224 = vadd.f32 0.0, %v1223
      %v1225 = vpop.f32.mrf.mxu0
      %v1226 = vadd.f32 0.0, %v1225
      %v1227 = vpop.f32.mrf.mxu0
      %v1228 = vadd.f32 0.0, %v1227
      %v1229 = vpop.f32.mrf.mxu0
      %v1230 = vadd.f32 0.0, %v1229
      %1231 = vdwg.mxu0
      %1232 = vmatprep.subr.bf16.mxu0 %v1090
      %1233 = vmatpush1.bf16.msra.mxu0 %v1089
      %1234 = vmatprep.subr.bf16.mxu0 %v1082
      %1235 = vmatpush1.bf16.msra.mxu0 %v1081
      %1236 = vmatprep.subr.bf16.mxu0 %v1074
      %1237 = vmatpush1.bf16.msra.mxu0 %v1073
      %1238 = vmatprep.subr.bf16.mxu0 %v1066
      %1239 = vmatpush1.bf16.msra.mxu0 %v1065
      %1240 = vmatprep.subr.bf16.mxu0 %v1058
      %1241 = vmatpush1.bf16.msra.mxu0 %v1057
      %1242 = vmatprep.subr.bf16.mxu0 %v1050
      %1243 = vmatpush1.bf16.msra.mxu0 %v1049
      %1244 = vmatprep.subr.bf16.mxu0 %v1042
      %1245 = vmatpush1.bf16.msra.mxu0 %v1041
      %1246 = vmatprep.subr.bf16.mxu0 %v1034
      %1247 = vmatpush1.bf16.msra.mxu0 %v1033
      %1248 = vmatprep.subr.bf16.mxu0 0
      %1249 = vmatpush2.bf16.msra.mxu0 0
      %1250 = vmatprep.subr.bf16.mxu0 0
      %1251 = vmatpush2.bf16.msra.mxu0 0
      %1252 = vmatprep.subr.bf16.mxu0 0
      %1253 = vmatpush2.bf16.msra.mxu0 0
      %1254 = vmatprep.subr.bf16.mxu0 0
      %1255 = vmatpush2.bf16.msra.mxu0 0
      %1256 = vmatprep.subr.bf16.mxu0 0
      %1257 = vmatpush2.bf16.msra.mxu0 0
      %1258 = vmatprep.subr.bf16.mxu0 0
      %1259 = vmatpush2.bf16.msra.mxu0 0
      %1260 = vmatprep.subr.bf16.mxu0 0
      %1261 = vmatpush2.bf16.msra.mxu0 0
      %1262 = vmatprep.subr.bf16.mxu0 0
      %1263 = vmatpush2.bf16.msra.mxu0 0
      %1264 = vmatprep.mubr.bf16.mxu0 0
      %1265 = vmatmul.mubr.bf16.gmra.mxu0 %v771
      %v1266 = vpop.f32.mrf.mxu0
      %v1267 = vadd.f32 0.0, %v1266
      %v1268 = vpop.f32.mrf.mxu0
      %v1269 = vadd.f32 0.0, %v1268
      %v1270 = vpop.f32.mrf.mxu0
      %v1271 = vadd.f32 0.0, %v1270
      %v1272 = vpop.f32.mrf.mxu0
      %v1273 = vadd.f32 0.0, %v1272
      %1274 = vmatprep.mubr.bf16.mxu0 0
      %1275 = vmatmul.mubr.bf16.gmra.mxu0 %v772
      %v1276 = vpop.f32.mrf.mxu0
      %v1277 = vadd.f32 0.0, %v1276
      %v1278 = vpop.f32.mrf.mxu0
      %v1279 = vadd.f32 0.0, %v1278
      %v1280 = vpop.f32.mrf.mxu0
      %v1281 = vadd.f32 0.0, %v1280
      %v1282 = vpop.f32.mrf.mxu0
      %v1283 = vadd.f32 0.0, %v1282
      %1284 = vmatprep.mubr.bf16.mxu0 0
      %1285 = vmatmul.mubr.bf16.gmra.mxu0 %v773
      %v1286 = vpop.f32.mrf.mxu0
      %v1287 = vadd.f32 0.0, %v1286
      %v1288 = vpop.f32.mrf.mxu0
      %v1289 = vadd.f32 0.0, %v1288
      %v1290 = vpop.f32.mrf.mxu0
      %v1291 = vadd.f32 0.0, %v1290
      %v1292 = vpop.f32.mrf.mxu0
      %v1293 = vadd.f32 0.0, %v1292
      %1294 = vmatprep.mubr.bf16.mxu0 0
      %1295 = vmatmul.mubr.bf16.gmra.mxu0 %v774
      %v1296 = vpop.f32.mrf.mxu0
      %v1297 = vadd.f32 0.0, %v1296
      %v1298 = vpop.f32.mrf.mxu0
      %v1299 = vadd.f32 0.0, %v1298
      %v1300 = vpop.f32.mrf.mxu0
      %v1301 = vadd.f32 0.0, %v1300
      %v1302 = vpop.f32.mrf.mxu0
      %v1303 = vadd.f32 0.0, %v1302
      %1304 = vdwg.mxu0
      %1305 = vmatprep.subr.bf16.mxu0 %v1092
      %1306 = vmatpush1.bf16.msra.mxu0 %v1091
      %1307 = vmatprep.subr.bf16.mxu0 %v1084
      %1308 = vmatpush1.bf16.msra.mxu0 %v1083
      %1309 = vmatprep.subr.bf16.mxu0 %v1076
      %1310 = vmatpush1.bf16.msra.mxu0 %v1075
      %1311 = vmatprep.subr.bf16.mxu0 %v1068
      %1312 = vmatpush1.bf16.msra.mxu0 %v1067
      %1313 = vmatprep.subr.bf16.mxu0 %v1060
      %1314 = vmatpush1.bf16.msra.mxu0 %v1059
      %1315 = vmatprep.subr.bf16.mxu0 %v1052
      %1316 = vmatpush1.bf16.msra.mxu0 %v1051
      %1317 = vmatprep.subr.bf16.mxu0 %v1044
      %1318 = vmatpush1.bf16.msra.mxu0 %v1043
      %1319 = vmatprep.subr.bf16.mxu0 %v1036
      %1320 = vmatpush1.bf16.msra.mxu0 %v1035
      %1321 = vmatprep.subr.bf16.mxu0 0
      %1322 = vmatpush2.bf16.msra.mxu0 0
      %1323 = vmatprep.subr.bf16.mxu0 0
      %1324 = vmatpush2.bf16.msra.mxu0 0
      %1325 = vmatprep.subr.bf16.mxu0 0
      %1326 = vmatpush2.bf16.msra.mxu0 0
      %1327 = vmatprep.subr.bf16.mxu0 0
      %1328 = vmatpush2.bf16.msra.mxu0 0
      %1329 = vmatprep.subr.bf16.mxu0 0
      %1330 = vmatpush2.bf16.msra.mxu0 0
      %1331 = vmatprep.subr.bf16.mxu0 0
      %1332 = vmatpush2.bf16.msra.mxu0 0
      %1333 = vmatprep.subr.bf16.mxu0 0
      %1334 = vmatpush2.bf16.msra.mxu0 0
      %1335 = vmatprep.subr.bf16.mxu0 0
      %1336 = vmatpush2.bf16.msra.mxu0 0
      %1337 = vmatprep.mubr.bf16.mxu0 0
      %1338 = vmatmul.mubr.bf16.gmra.mxu0 %v771
      %v1339 = vpop.f32.mrf.mxu0
      %v1340 = vadd.f32 0.0, %v1339
      %v1341 = vpop.f32.mrf.mxu0
      %v1342 = vadd.f32 0.0, %v1341
      %v1343 = vpop.f32.mrf.mxu0
      %v1344 = vadd.f32 0.0, %v1343
      %v1345 = vpop.f32.mrf.mxu0
      %v1346 = vadd.f32 0.0, %v1345
      %1347 = vmatprep.mubr.bf16.mxu0 0
      %1348 = vmatmul.mubr.bf16.gmra.mxu0 %v772
      %v1349 = vpop.f32.mrf.mxu0
      %v1350 = vadd.f32 0.0, %v1349
      %v1351 = vpop.f32.mrf.mxu0
      %v1352 = vadd.f32 0.0, %v1351
      %v1353 = vpop.f32.mrf.mxu0
      %v1354 = vadd.f32 0.0, %v1353
      %v1355 = vpop.f32.mrf.mxu0
      %v1356 = vadd.f32 0.0, %v1355
      %1357 = vmatprep.mubr.bf16.mxu0 0
      %1358 = vmatmul.mubr.bf16.gmra.mxu0 %v773
      %v1359 = vpop.f32.mrf.mxu0
      %v1360 = vadd.f32 0.0, %v1359
      %v1361 = vpop.f32.mrf.mxu0
      %v1362 = vadd.f32 0.0, %v1361
      %v1363 = vpop.f32.mrf.mxu0
      %v1364 = vadd.f32 0.0, %v1363
      %v1365 = vpop.f32.mrf.mxu0
      %v1366 = vadd.f32 0.0, %v1365
      %1367 = vmatprep.mubr.bf16.mxu0 0
      %1368 = vmatmul.mubr.bf16.gmra.mxu0 %v774
      %v1369 = vpop.f32.mrf.mxu0
      %v1370 = vadd.f32 0.0, %v1369
      %v1371 = vpop.f32.mrf.mxu0
      %v1372 = vadd.f32 0.0, %v1371
      %v1373 = vpop.f32.mrf.mxu0
      %v1374 = vadd.f32 0.0, %v1373
      %v1375 = vpop.f32.mrf.mxu0
      %v1376 = vadd.f32 0.0, %v1375
      %1377 = vdwg.mxu0
      %1378 = vmatprep.subr.bf16.mxu0 %v1094
      %1379 = vmatpush1.bf16.msra.mxu0 %v1093
      %1380 = vmatprep.subr.bf16.mxu0 %v1086
      %1381 = vmatpush1.bf16.msra.mxu0 %v1085
      %1382 = vmatprep.subr.bf16.mxu0 %v1078
      %1383 = vmatpush1.bf16.msra.mxu0 %v1077
      %1384 = vmatprep.subr.bf16.mxu0 %v1070
      %1385 = vmatpush1.bf16.msra.mxu0 %v1069
      %1386 = vmatprep.subr.bf16.mxu0 %v1062
      %1387 = vmatpush1.bf16.msra.mxu0 %v1061
      %1388 = vmatprep.subr.bf16.mxu0 %v1054
      %1389 = vmatpush1.bf16.msra.mxu0 %v1053
      %1390 = vmatprep.subr.bf16.mxu0 %v1046
      %1391 = vmatpush1.bf16.msra.mxu0 %v1045
      %1392 = vmatprep.subr.bf16.mxu0 %v1038
      %1393 = vmatpush1.bf16.msra.mxu0 %v1037
      %1394 = vmatprep.subr.bf16.mxu0 0
      %1395 = vmatpush2.bf16.msra.mxu0 0
      %1396 = vmatprep.subr.bf16.mxu0 0
      %1397 = vmatpush2.bf16.msra.mxu0 0
      %1398 = vmatprep.subr.bf16.mxu0 0
      %1399 = vmatpush2.bf16.msra.mxu0 0
      %1400 = vmatprep.subr.bf16.mxu0 0
      %1401 = vmatpush2.bf16.msra.mxu0 0
      %1402 = vmatprep.subr.bf16.mxu0 0
      %1403 = vmatpush2.bf16.msra.mxu0 0
      %1404 = vmatprep.subr.bf16.mxu0 0
      %1405 = vmatpush2.bf16.msra.mxu0 0
      %1406 = vmatprep.subr.bf16.mxu0 0
      %1407 = vmatpush2.bf16.msra.mxu0 0
      %1408 = vmatprep.subr.bf16.mxu0 0
      %1409 = vmatpush2.bf16.msra.mxu0 0
      %1410 = vmatprep.mubr.bf16.mxu0 0
      %1411 = vmatmul.mubr.bf16.gmra.mxu0 %v771
      %v1412 = vpop.f32.mrf.mxu0
      %v1413 = vadd.f32 0.0, %v1412
      %v1414 = vpop.f32.mrf.mxu0
      %v1415 = vadd.f32 0.0, %v1414
      %v1416 = vpop.f32.mrf.mxu0
      %v1417 = vadd.f32 0.0, %v1416
      %v1418 = vpop.f32.mrf.mxu0
      %v1419 = vadd.f32 0.0, %v1418
      %1420 = vmatprep.mubr.bf16.mxu0 0
      %1421 = vmatmul.mubr.bf16.gmra.mxu0 %v772
      %v1422 = vpop.f32.mrf.mxu0
      %v1423 = vadd.f32 0.0, %v1422
      %v1424 = vpop.f32.mrf.mxu0
      %v1425 = vadd.f32 0.0, %v1424
      %v1426 = vpop.f32.mrf.mxu0
      %v1427 = vadd.f32 0.0, %v1426
      %v1428 = vpop.f32.mrf.mxu0
      %v1429 = vadd.f32 0.0, %v1428
      %1430 = vmatprep.mubr.bf16.mxu0 0
      %1431 = vmatmul.mubr.bf16.gmra.mxu0 %v773
      %v1432 = vpop.f32.mrf.mxu0
      %v1433 = vadd.f32 0.0, %v1432
      %v1434 = vpop.f32.mrf.mxu0
      %v1435 = vadd.f32 0.0, %v1434
      %v1436 = vpop.f32.mrf.mxu0
      %v1437 = vadd.f32 0.0, %v1436
      %v1438 = vpop.f32.mrf.mxu0
      %v1439 = vadd.f32 0.0, %v1438
      %1440 = vmatprep.mubr.bf16.mxu0 0
      %1441 = vmatmul.mubr.bf16.gmra.mxu0 %v774
      %v1442 = vpop.f32.mrf.mxu0
      %v1443 = vadd.f32 0.0, %v1442
      %v1444 = vpop.f32.mrf.mxu0
      %v1445 = vadd.f32 0.0, %v1444
      %v1446 = vpop.f32.mrf.mxu0
      %v1447 = vadd.f32 0.0, %v1446
      %v1448 = vpop.f32.mrf.mxu0
      %v1449 = vadd.f32 0.0, %v1448
      %1450 = vdwg.mxu0
      %v1451 = vld [vmem:[%s422] sm:$0xff]
      %v1452 = vmax.f32 %v1194, %v1198
      %v1453 = vmax.f32 %v1452, %v1204
      %v1454 = vmax.f32 %v1453, %v1208
      %v1455 = vmax.f32 %v1454, %v1214
      %v1456 = vmax.f32 %v1455, %v1218
      %v1457 = vmax.f32 %v1456, %v1224
      %v1458 = vmax.f32 %v1457, %v1228
      %v1459 = vrot.slane %v1458, 4
      %v1460 = vmax.f32 %v1458, %v1459
      %v1461 = vrot.slane %v1460, 2
      %v1462 = vmax.f32 %v1460, %v1461
      %v1463 = vrot.slane %v1462, 1
      %v1464 = vmax.f32 %v1462, %v1463
      %v1465 = vmax.f32 %v1196, %v1200
      %v1466 = vmax.f32 %v1465, %v1206
      %v1467 = vmax.f32 %v1466, %v1210
      %v1468 = vmax.f32 %v1467, %v1216
      %v1469 = vmax.f32 %v1468, %v1220
      %v1470 = vmax.f32 %v1469, %v1226
      %v1471 = vmax.f32 %v1470, %v1230
      %v1472 = vrot.slane %v1471, 4
      %v1473 = vmax.f32 %v1471, %v1472
      %v1474 = vrot.slane %v1473, 2
      %v1475 = vmax.f32 %v1473, %v1474
      %v1476 = vrot.slane %v1475, 1
      %v1477 = vmax.f32 %v1475, %v1476
      %v1478 = vmax.f32 %v1267, %v1271
      %v1479 = vmax.f32 %v1478, %v1277
      %v1480 = vmax.f32 %v1479, %v1281
      %v1481 = vmax.f32 %v1480, %v1287
      %v1482 = vmax.f32 %v1481, %v1291
      %v1483 = vmax.f32 %v1482, %v1297
      %v1484 = vmax.f32 %v1483, %v1301
      %v1485 = vrot.slane %v1484, 4
      %v1486 = vmax.f32 %v1484, %v1485
      %v1487 = vrot.slane %v1486, 2
      %v1488 = vmax.f32 %v1486, %v1487
      %v1489 = vrot.slane %v1488, 1
      %v1490 = vmax.f32 %v1488, %v1489
      %v1491 = vmax.f32 %v1269, %v1273
      %v1492 = vmax.f32 %v1491, %v1279
      %v1493 = vmax.f32 %v1492, %v1283
      %v1494 = vmax.f32 %v1493, %v1289
      %v1495 = vmax.f32 %v1494, %v1293
      %v1496 = vmax.f32 %v1495, %v1299
      %v1497 = vmax.f32 %v1496, %v1303
      %v1498 = vrot.slane %v1497, 4
      %v1499 = vmax.f32 %v1497, %v1498
      %v1500 = vrot.slane %v1499, 2
      %v1501 = vmax.f32 %v1499, %v1500
      %v1502 = vrot.slane %v1501, 1
      %v1503 = vmax.f32 %v1501, %v1502
      %v1504 = vmax.f32 %v1340, %v1344
      %v1505 = vmax.f32 %v1504, %v1350
      %v1506 = vmax.f32 %v1505, %v1354
      %v1507 = vmax.f32 %v1506, %v1360
      %v1508 = vmax.f32 %v1507, %v1364
      %v1509 = vmax.f32 %v1508, %v1370
      %v1510 = vmax.f32 %v1509, %v1374
      %v1511 = vrot.slane %v1510, 4
      %v1512 = vmax.f32 %v1510, %v1511
      %v1513 = vrot.slane %v1512, 2
      %v1514 = vmax.f32 %v1512, %v1513
      %v1515 = vrot.slane %v1514, 1
      %v1516 = vmax.f32 %v1514, %v1515
      %v1517 = vmax.f32 %v1342, %v1346
      %v1518 = vmax.f32 %v1517, %v1352
      %v1519 = vmax.f32 %v1518, %v1356
      %v1520 = vmax.f32 %v1519, %v1362
      %v1521 = vmax.f32 %v1520, %v1366
      %v1522 = vmax.f32 %v1521, %v1372
      %v1523 = vmax.f32 %v1522, %v1376
      %v1524 = vrot.slane %v1523, 4
      %v1525 = vmax.f32 %v1523, %v1524
      %v1526 = vrot.slane %v1525, 2
      %v1527 = vmax.f32 %v1525, %v1526
      %v1528 = vrot.slane %v1527, 1
      %v1529 = vmax.f32 %v1527, %v1528
      %v1530 = vmax.f32 %v1413, %v1417
      %v1531 = vmax.f32 %v1530, %v1423
      %v1532 = vmax.f32 %v1531, %v1427
      %v1533 = vmax.f32 %v1532, %v1433
      %v1534 = vmax.f32 %v1533, %v1437
      %v1535 = vmax.f32 %v1534, %v1443
      %v1536 = vmax.f32 %v1535, %v1447
      %v1537 = vrot.slane %v1536, 4
      %v1538 = vmax.f32 %v1536, %v1537
      %v1539 = vrot.slane %v1538, 2
      %v1540 = vmax.f32 %v1538, %v1539
      %v1541 = vrot.slane %v1540, 1
      %v1542 = vmax.f32 %v1540, %v1541
      %v1543 = vmax.f32 %v1415, %v1419
      %v1544 = vmax.f32 %v1543, %v1425
      %v1545 = vmax.f32 %v1544, %v1429
      %v1546 = vmax.f32 %v1545, %v1435
      %v1547 = vmax.f32 %v1546, %v1439
      %v1548 = vmax.f32 %v1547, %v1445
      %v1549 = vmax.f32 %v1548, %v1449
      %v1550 = vrot.slane %v1549, 4
      %v1551 = vmax.f32 %v1549, %v1550
      %v1552 = vrot.slane %v1551, 2
      %v1553 = vmax.f32 %v1551, %v1552
      %v1554 = vrot.slane %v1553, 1
      %v1555 = vmax.f32 %v1553, %v1554
      %v1564 = vcombine.low %v1464, %v1477
      %v1565 = vcombine.low %v1490, %v1503
      %v1566 = vcombine.low %v1516, %v1529
      %v1567 = vcombine.low %v1542, %v1555
      %v1569 = vunpack.c.l.s4 1966171168
      %v1570 = vunpack.c.0.s8 %v1569
      %v1571 = vlaneseq
      %v1572 = vshrl.u32 %v1571, 7
      %v1573 = vsub.s32 %v1570, %v1572
      %v1574 = vrot.slane %v1564, %v1573
      %v1576 = vunpack.c.l.s4 1966171168
      %v1577 = vunpack.c.0.s8 %v1576
      %v1578 = vlaneseq
      %v1579 = vshrl.u32 %v1578, 7
      %v1580 = vsub.s32 %v1577, %v1579
      %v1581 = vrot.slane %v1565, %v1580
      %v1583 = vunpack.c.l.s4 1966171168
      %v1584 = vunpack.c.0.s8 %v1583
      %v1585 = vlaneseq
      %v1586 = vshrl.u32 %v1585, 7
      %v1587 = vsub.s32 %v1584, %v1586
      %v1588 = vrot.slane %v1566, %v1587
      %v1590 = vunpack.c.l.s4 1966171168
      %v1591 = vunpack.c.0.s8 %v1590
      %v1592 = vlaneseq
      %v1593 = vshrl.u32 %v1592, 7
      %v1594 = vsub.s32 %v1591, %v1593
      %v1595 = vrot.slane %v1567, %v1594
      %v1596 = vcombine.low %v1574, %v1581
      %v1597 = vcombine.low %v1588, %v1595
      %v1599 = vunpack.c.l.s4 1966171168
      %v1600 = vunpack.c.0.s8 %v1599
      %v1601 = vlaneseq
      %v1602 = vshrl.u32 %v1601, 7
      %v1603 = vsub.s32 %v1600, %v1602
      %v1604 = vrot.slane %v1596, %v1603
      %v1606 = vunpack.c.l.s4 1966171168
      %v1607 = vunpack.c.0.s8 %v1606
      %v1608 = vlaneseq
      %v1609 = vshrl.u32 %v1608, 7
      %v1610 = vsub.s32 %v1607, %v1609
      %v1611 = vrot.slane %v1597, %v1610
      %v1612 = vcombine.low %v1604, %v1611
      %v1614 = vmax.f32 %v1451, %v1612
      %1615 = vst [vmem:[%s422] sm:$0xff] %v1614
      %s1616 = sadd.s32 %s27, %s28
      %s1617 = smul.u32 8, %s1616
      %p1618 = scmp.lt.s32.totalorder %s26, 1
      %s1619 = scalar_select %p1618, %s26, 1
      %p1620 = scmp.lt.s32.totalorder %s1617, 7
      %s1621 = scalar_select %p1620, %s1617, 7
      %s1622 = smul.addr %s1619, 8
      %s1623 = sadd.s32 %s1621, %s1622
      %s1624 = smul.addr %s1623, 4
      %s1625 = scalar_lea.vmem %s8, %s1624
      %s1626 = sadd.s32 %s26, %s27
      %p1627 = scmp.lt.s32.totalorder %s1626, 1
      %s1628 = scalar_select %p1627, %s1626, 1
      %s1629 = smul.addr %s1628, 8
      %s1630 = scalar_lea.vmem %s9, %s1629
      // Predicated region
      $region57: #{pointnet_dense_cls_forward.7} parent=51 // pred_check
        %p1631 = pneg %p244
      $region58: #{pointnet_dense_cls_forward.7} parent=51 // pred_check_branch
        %1633 = sbr.rel (%p1631) target = $region60
      $region59: #{pointnet_dense_cls_forward.7} parent=51 // pred_region
        %s1634 = sadd.s32 %s27, %s28
        %s1635 = smul.u32 8, %s1634
      $region60: #{pointnet_dense_cls_forward.7} parent=51 // pred_fallthru
        _
      // Predicated region
      $region61: #{pointnet_dense_cls_forward.7} parent=51 // pred_check
        %p1636 = pneg %p272
      $region62: #{pointnet_dense_cls_forward.7} parent=51 // pred_check_branch
        %1638 = sbr.rel (%p1636) target = $region64
      $region63: #{pointnet_dense_cls_forward.7} parent=51 // pred_region
        %s1639 = sadd.s32 %s26, %s27
      $region64: #{pointnet_dense_cls_forward.7} parent=51 // pred_fallthru
        _
    $region52: #{pointnet_dense_cls_forward.7} parent=5 // pred_fallthru
      _
    %p1640 = scmp.le.s32.totalorder 2, %s16
    // Predicated region
    $region65: #{pointnet_dense_cls_forward.7} parent=5 // pred_check
      %p1641 = pneg %p1640
    $region66: #{pointnet_dense_cls_forward.7} parent=5 // pred_check_branch
      %1643 = sbr.rel (%p1641) target = $region68
    $region67: #{pointnet_dense_cls_forward.7} parent=5 // pred_region
      %s1644 = ssub.s32 %s16, 2
      // Predicated region
      $region69: #{pointnet_dense_cls_forward.7} parent=67 // pred_check
        %p1645 = pneg %p250
      $region70: #{pointnet_dense_cls_forward.7} parent=67 // pred_check_branch
        %1647 = sbr.rel (%p1645) target = $region72
      $region71: #{pointnet_dense_cls_forward.7} parent=67 // pred_region
        %s1648 = sadd.s32 %s30, %s31
        %s1649 = smul.u32 8, %s1648
        %p1650 = scmp.lt.s32.totalorder %s29, 1
        %s1651 = scalar_select %p1650, %s29, 1
        %p1652 = scmp.lt.s32.totalorder %s1649, 7
        %s1653 = scalar_select %p1652, %s1649, 7
        %s1654 = smul.addr %s1651, 8
        %s1655 = sadd.s32 %s1653, %s1654
        %s1656 = smul.addr %s1655, 4
        %s1657 = scalar_lea.vmem %s8, %s1656
      $region72: #{pointnet_dense_cls_forward.7} parent=67 // pred_fallthru
        _
      // Predicated region
      $region73: #{pointnet_dense_cls_forward.7} parent=67 // pred_check
        %p1658 = pneg %p278
      $region74: #{pointnet_dense_cls_forward.7} parent=67 // pred_check_branch
        %1660 = sbr.rel (%p1658) target = $region76
      $region75: #{pointnet_dense_cls_forward.7} parent=67 // pred_region
        %s1661 = sadd.s32 %s29, %s30
        %p1662 = scmp.lt.s32.totalorder %s1661, 1
        %s1663 = scalar_select %p1662, %s1661, 1
        %s1664 = smul.addr %s1663, 8
        %s1665 = scalar_lea.vmem %s9, %s1664
      $region76: #{pointnet_dense_cls_forward.7} parent=67 // pred_fallthru
        _
    $region68: #{pointnet_dense_cls_forward.7} parent=5 // pred_fallthru
      _
  $region6: #{pointnet_dense_cls_forward.7} parent=0 // loop_footer
    %s20 = sadd.s32 1, %s16
  $region7: #{pointnet_dense_cls_forward.7} parent=0 // loop_footer_branch
    %15 = sbr.rel target = $region3
  $region8: #{pointnet_dense_cls_forward.7} parent=0 // loop_exit
    _

// kernel: pointnet_dense_cls_forward.8
$region0: #{pointnet_dense_cls_forward.8}
  #allocation0 [shape = 'u32[]', space=smem, size = 0x4, offset = 0x4, fixed_abs, tag = 'smem constant byte address 0x4 - core index']
  #allocation1 [shape = 'u32[144,128]{1,0:T(1,128)}', space=vmem, size = 0x12000, scoped, tag = 'internal scratch']
  %s0 = inlined_call_operand.vmem [shape: f32[2,1,1024], index: 0, kind: input, shape index: {}]
  %s1 = inlined_call_operand.vmem [shape: f32[1,1024], index: 1, kind: input, shape index: {}]
  %s2 = inlined_call_operand.vmem [shape: f32[1,1024], index: 2, kind: input, shape index: {}]
  %s3 = inlined_call_operand.vmem [shape: bf16[1024,512], index: 3, kind: input, shape index: {}]
  %s4 = inlined_call_operand.vmem [shape: f32[2,512], index: 4, kind: output, shape index: {}]
  %s5 = sld [smem:[#allocation0]]
  $region26: #{pointnet_dense_cls_forward.8} parent=0
    _
  %s7 = ssub.s32 1, %s5
  %s8 = scalar_select 0, %s7, %s5
  // Predicated region
  $region2: #{pointnet_dense_cls_forward.8} parent=0 // pred_check
    _
  $region3: #{pointnet_dense_cls_forward.8} parent=0 // pred_check_branch
    %10 = sbr.rel (0) target = $region5
  $region4: #{pointnet_dense_cls_forward.8} parent=0 // pred_region
    _
  $region5: #{pointnet_dense_cls_forward.8} parent=0 // pred_fallthru
    _
  // Predicated region
  $region6: #{pointnet_dense_cls_forward.8} parent=0 // pred_check
    _
  $region7: #{pointnet_dense_cls_forward.8} parent=0 // pred_check_branch
    %12 = sbr.rel (0) target = $region9
  $region8: #{pointnet_dense_cls_forward.8} parent=0 // pred_region
    _
  $region9: #{pointnet_dense_cls_forward.8} parent=0 // pred_fallthru
    _
  // Predicated region
  $region10: #{pointnet_dense_cls_forward.8} parent=0 // pred_check
    _
  $region11: #{pointnet_dense_cls_forward.8} parent=0 // pred_check_branch
    %14 = sbr.rel (0) target = $region13
  $region12: #{pointnet_dense_cls_forward.8} parent=0 // pred_region
    _
  $region13: #{pointnet_dense_cls_forward.8} parent=0 // pred_fallthru
    _
  // Predicated region
  $region14: #{pointnet_dense_cls_forward.8} parent=0 // pred_check
    _
  $region15: #{pointnet_dense_cls_forward.8} parent=0 // pred_check_branch
    %16 = sbr.rel (0) target = $region17
  $region16: #{pointnet_dense_cls_forward.8} parent=0 // pred_region
    _
  $region17: #{pointnet_dense_cls_forward.8} parent=0 // pred_fallthru
    _
  %v17 = vld [vmem:[%s0] sm:$0xff]
  %v18 = vld [vmem:[%s0 + $0x8] sm:$0xff]
  %v19 = vld [vmem:[%s1] sm:$0xff]
  %v21 = vlaneseq
  %v22 = vshrl.u32 %v21, 7
  %v23 = vsub.s32 0, %v22
  %v24 = vrot.slane %v19, %v23
  %v25 = vlaneseq
  %v26 = vshrl.u32 %v25, 7
  %v27 = vsub.s32 1, %v26
  %v28 = vrot.slane %v19, %v27
  %v29 = vlaneseq
  %v30 = vshrl.u32 %v29, 7
  %v31 = vsub.s32 2, %v30
  %v32 = vrot.slane %v19, %v31
  %v33 = vlaneseq
  %v34 = vshrl.u32 %v33, 7
  %v35 = vsub.s32 3, %v34
  %v36 = vrot.slane %v19, %v35
  %v37 = vlaneseq
  %v38 = vshrl.u32 %v37, 7
  %v39 = vsub.s32 4, %v38
  %v40 = vrot.slane %v19, %v39
  %v41 = vlaneseq
  %v42 = vshrl.u32 %v41, 7
  %v43 = vsub.s32 5, %v42
  %v44 = vrot.slane %v19, %v43
  %v45 = vlaneseq
  %v46 = vshrl.u32 %v45, 7
  %v47 = vsub.s32 6, %v46
  %v48 = vrot.slane %v19, %v47
  %v49 = vlaneseq
  %v50 = vshrl.u32 %v49, 7
  %v51 = vsub.s32 7, %v50
  %v52 = vrot.slane %v19, %v51
  %v53 = vcombine.low %v24, %v28
  %v54 = vcombine.low %v32, %v36
  %v55 = vcombine.low %v40, %v44
  %v56 = vcombine.low %v48, %v52
  %v58 = vunpack.c.l.s4 1966171168
  %v59 = vunpack.c.0.s8 %v58
  %v60 = vlaneseq
  %v61 = vshrl.u32 %v60, 7
  %v62 = vsub.s32 %v59, %v61
  %v63 = vrot.slane %v53, %v62
  %v65 = vunpack.c.l.s4 1966171168
  %v66 = vunpack.c.0.s8 %v65
  %v67 = vlaneseq
  %v68 = vshrl.u32 %v67, 7
  %v69 = vsub.s32 %v66, %v68
  %v70 = vrot.slane %v54, %v69
  %v72 = vunpack.c.l.s4 1966171168
  %v73 = vunpack.c.0.s8 %v72
  %v74 = vlaneseq
  %v75 = vshrl.u32 %v74, 7
  %v76 = vsub.s32 %v73, %v75
  %v77 = vrot.slane %v55, %v76
  %v79 = vunpack.c.l.s4 1966171168
  %v80 = vunpack.c.0.s8 %v79
  %v81 = vlaneseq
  %v82 = vshrl.u32 %v81, 7
  %v83 = vsub.s32 %v80, %v82
  %v84 = vrot.slane %v56, %v83
  %v85 = vcombine.low %v63, %v70
  %v86 = vcombine.high %v63, %v70
  %v87 = vcombine.low %v77, %v84
  %v88 = vcombine.high %v77, %v84
  %v90 = vunpack.c.l.s4 1966171168
  %v91 = vunpack.c.0.s8 %v90
  %v92 = vlaneseq
  %v93 = vshrl.u32 %v92, 7
  %v94 = vsub.s32 %v91, %v93
  %v95 = vrot.slane %v85, %v94
  %v97 = vunpack.c.l.s4 1966171168
  %v98 = vunpack.c.0.s8 %v97
  %v99 = vlaneseq
  %v100 = vshrl.u32 %v99, 7
  %v101 = vsub.s32 %v98, %v100
  %v102 = vrot.slane %v86, %v101
  %v104 = vunpack.c.l.s4 1966171168
  %v105 = vunpack.c.0.s8 %v104
  %v106 = vlaneseq
  %v107 = vshrl.u32 %v106, 7
  %v108 = vsub.s32 %v105, %v107
  %v109 = vrot.slane %v87, %v108
  %v111 = vunpack.c.l.s4 1966171168
  %v112 = vunpack.c.0.s8 %v111
  %v113 = vlaneseq
  %v114 = vshrl.u32 %v113, 7
  %v115 = vsub.s32 %v112, %v114
  %v116 = vrot.slane %v88, %v115
  %v117 = vcombine.low %v95, %v109
  %v118 = vcombine.low %v102, %v116
  %v121 = vmul.f32 %v17, %v117
  %v122 = vmul.f32 %v18, %v118
  %v123 = vld [vmem:[%s2] sm:$0xff]
  %v125 = vlaneseq
  %v126 = vshrl.u32 %v125, 7
  %v127 = vsub.s32 0, %v126
  %v128 = vrot.slane %v123, %v127
  %v129 = vlaneseq
  %v130 = vshrl.u32 %v129, 7
  %v131 = vsub.s32 1, %v130
  %v132 = vrot.slane %v123, %v131
  %v133 = vlaneseq
  %v134 = vshrl.u32 %v133, 7
  %v135 = vsub.s32 2, %v134
  %v136 = vrot.slane %v123, %v135
  %v137 = vlaneseq
  %v138 = vshrl.u32 %v137, 7
  %v139 = vsub.s32 3, %v138
  %v140 = vrot.slane %v123, %v139
  %v141 = vlaneseq
  %v142 = vshrl.u32 %v141, 7
  %v143 = vsub.s32 4, %v142
  %v144 = vrot.slane %v123, %v143
  %v145 = vlaneseq
  %v146 = vshrl.u32 %v145, 7
  %v147 = vsub.s32 5, %v146
  %v148 = vrot.slane %v123, %v147
  %v149 = vlaneseq
  %v150 = vshrl.u32 %v149, 7
  %v151 = vsub.s32 6, %v150
  %v152 = vrot.slane %v123, %v151
  %v153 = vlaneseq
  %v154 = vshrl.u32 %v153, 7
  %v155 = vsub.s32 7, %v154
  %v156 = vrot.slane %v123, %v155
  %v157 = vcombine.low %v128, %v132
  %v158 = vcombine.low %v136, %v140
  %v159 = vcombine.low %v144, %v148
  %v160 = vcombine.low %v152, %v156
  %v162 = vunpack.c.l.s4 1966171168
  %v163 = vunpack.c.0.s8 %v162
  %v164 = vlaneseq
  %v165 = vshrl.u32 %v164, 7
  %v166 = vsub.s32 %v163, %v165
  %v167 = vrot.slane %v157, %v166
  %v169 = vunpack.c.l.s4 1966171168
  %v170 = vunpack.c.0.s8 %v169
  %v171 = vlaneseq
  %v172 = vshrl.u32 %v171, 7
  %v173 = vsub.s32 %v170, %v172
  %v174 = vrot.slane %v158, %v173
  %v176 = vunpack.c.l.s4 1966171168
  %v177 = vunpack.c.0.s8 %v176
  %v178 = vlaneseq
  %v179 = vshrl.u32 %v178, 7
  %v180 = vsub.s32 %v177, %v179
  %v181 = vrot.slane %v159, %v180
  %v183 = vunpack.c.l.s4 1966171168
  %v184 = vunpack.c.0.s8 %v183
  %v185 = vlaneseq
  %v186 = vshrl.u32 %v185, 7
  %v187 = vsub.s32 %v184, %v186
  %v188 = vrot.slane %v160, %v187
  %v189 = vcombine.low %v167, %v174
  %v190 = vcombine.high %v167, %v174
  %v191 = vcombine.low %v181, %v188
  %v192 = vcombine.high %v181, %v188
  %v194 = vunpack.c.l.s4 1966171168
  %v195 = vunpack.c.0.s8 %v194
  %v196 = vlaneseq
  %v197 = vshrl.u32 %v196, 7
  %v198 = vsub.s32 %v195, %v197
  %v199 = vrot.slane %v189, %v198
  %v201 = vunpack.c.l.s4 1966171168
  %v202 = vunpack.c.0.s8 %v201
  %v203 = vlaneseq
  %v204 = vshrl.u32 %v203, 7
  %v205 = vsub.s32 %v202, %v204
  %v206 = vrot.slane %v190, %v205
  %v208 = vunpack.c.l.s4 1966171168
  %v209 = vunpack.c.0.s8 %v208
  %v210 = vlaneseq
  %v211 = vshrl.u32 %v210, 7
  %v212 = vsub.s32 %v209, %v211
  %v213 = vrot.slane %v191, %v212
  %v215 = vunpack.c.l.s4 1966171168
  %v216 = vunpack.c.0.s8 %v215
  %v217 = vlaneseq
  %v218 = vshrl.u32 %v217, 7
  %v219 = vsub.s32 %v216, %v218
  %v220 = vrot.slane %v192, %v219
  %v221 = vcombine.low %v199, %v213
  %v222 = vcombine.low %v206, %v220
  %v225 = vadd.f32 %v121, %v221
  %v226 = vadd.f32 %v122, %v222
  %v229 = vlaneseq
  %v230 = vshrl.u32 %v229, 7
  %v231 = vsub.s32 0, %v230
  %v232 = vrot.slane %v225, %v231
  %v233 = vlaneseq
  %v234 = vshrl.u32 %v233, 7
  %v235 = vsub.s32 1, %v234
  %v236 = vrot.slane %v225, %v235
  %v237 = vlaneseq
  %v238 = vshrl.u32 %v237, 7
  %v239 = vsub.s32 2, %v238
  %v240 = vrot.slane %v225, %v239
  %v241 = vlaneseq
  %v242 = vshrl.u32 %v241, 7
  %v243 = vsub.s32 3, %v242
  %v244 = vrot.slane %v225, %v243
  %v245 = vlaneseq
  %v246 = vshrl.u32 %v245, 7
  %v247 = vsub.s32 4, %v246
  %v248 = vrot.slane %v225, %v247
  %v249 = vlaneseq
  %v250 = vshrl.u32 %v249, 7
  %v251 = vsub.s32 5, %v250
  %v252 = vrot.slane %v225, %v251
  %v253 = vlaneseq
  %v254 = vshrl.u32 %v253, 7
  %v255 = vsub.s32 6, %v254
  %v256 = vrot.slane %v225, %v255
  %v257 = vlaneseq
  %v258 = vshrl.u32 %v257, 7
  %v259 = vsub.s32 7, %v258
  %v260 = vrot.slane %v225, %v259
  %v261 = vlaneseq
  %v262 = vshrl.u32 %v261, 7
  %v263 = vsub.s32 0, %v262
  %v264 = vrot.slane %v226, %v263
  %v265 = vlaneseq
  %v266 = vshrl.u32 %v265, 7
  %v267 = vsub.s32 1, %v266
  %v268 = vrot.slane %v226, %v267
  %v269 = vlaneseq
  %v270 = vshrl.u32 %v269, 7
  %v271 = vsub.s32 2, %v270
  %v272 = vrot.slane %v226, %v271
  %v273 = vlaneseq
  %v274 = vshrl.u32 %v273, 7
  %v275 = vsub.s32 3, %v274
  %v276 = vrot.slane %v226, %v275
  %v277 = vlaneseq
  %v278 = vshrl.u32 %v277, 7
  %v279 = vsub.s32 4, %v278
  %v280 = vrot.slane %v226, %v279
  %v281 = vlaneseq
  %v282 = vshrl.u32 %v281, 7
  %v283 = vsub.s32 5, %v282
  %v284 = vrot.slane %v226, %v283
  %v285 = vlaneseq
  %v286 = vshrl.u32 %v285, 7
  %v287 = vsub.s32 6, %v286
  %v288 = vrot.slane %v226, %v287
  %v289 = vlaneseq
  %v290 = vshrl.u32 %v289, 7
  %v291 = vsub.s32 7, %v290
  %v292 = vrot.slane %v226, %v291
  %v309 = vpack.c.bf16 %v232, %v232
  %v310 = vpack.c.bf16 %v236, %v236
  %v311 = vpack.c.bf16 %v240, %v240
  %v312 = vpack.c.bf16 %v244, %v244
  %v313 = vpack.c.bf16 %v248, %v248
  %v314 = vpack.c.bf16 %v252, %v252
  %v315 = vpack.c.bf16 %v256, %v256
  %v316 = vpack.c.bf16 %v260, %v260
  %v317 = vpack.c.bf16 %v264, %v264
  %v318 = vpack.c.bf16 %v268, %v268
  %v319 = vpack.c.bf16 %v272, %v272
  %v320 = vpack.c.bf16 %v276, %v276
  %v321 = vpack.c.bf16 %v280, %v280
  %v322 = vpack.c.bf16 %v284, %v284
  %v323 = vpack.c.bf16 %v288, %v288
  %v324 = vpack.c.bf16 %v292, %v292
  %v325 = vld [vmem:[%s3] sm:$0xff]
  %v326 = vld [vmem:[%s3 + $0x8] sm:$0xff]
  %v327 = vld [vmem:[%s3 + $0x10] sm:$0xff]
  %v328 = vld [vmem:[%s3 + $0x18] sm:$0xff]
  %v329 = vld [vmem:[%s3 + $0x20] sm:$0xff]
  %v330 = vld [vmem:[%s3 + $0x28] sm:$0xff]
  %v331 = vld [vmem:[%s3 + $0x30] sm:$0xff]
  %v332 = vld [vmem:[%s3 + $0x38] sm:$0xff]
  %v333 = vld [vmem:[%s3 + $0x40] sm:$0xff]
  %v334 = vld [vmem:[%s3 + $0x48] sm:$0xff]
  %v335 = vld [vmem:[%s3 + $0x50] sm:$0xff]
  %v336 = vld [vmem:[%s3 + $0x58] sm:$0xff]
  %v337 = vld [vmem:[%s3 + $0x60] sm:$0xff]
  %v338 = vld [vmem:[%s3 + $0x68] sm:$0xff]
  %v339 = vld [vmem:[%s3 + $0x70] sm:$0xff]
  %v340 = vld [vmem:[%s3 + $0x78] sm:$0xff]
  %v341 = vld [vmem:[%s3 + $0x80] sm:$0xff]
  %v342 = vld [vmem:[%s3 + $0x88] sm:$0xff]
  %v343 = vld [vmem:[%s3 + $0x90] sm:$0xff]
  %v344 = vld [vmem:[%s3 + $0x98] sm:$0xff]
  %v345 = vld [vmem:[%s3 + $0xa0] sm:$0xff]
  %v346 = vld [vmem:[%s3 + $0xa8] sm:$0xff]
  %v347 = vld [vmem:[%s3 + $0xb0] sm:$0xff]
  %v348 = vld [vmem:[%s3 + $0xb8] sm:$0xff]
  %v349 = vld [vmem:[%s3 + $0xc0] sm:$0xff]
  %v350 = vld [vmem:[%s3 + $0xc8] sm:$0xff]
  %v351 = vld [vmem:[%s3 + $0xd0] sm:$0xff]
  %v352 = vld [vmem:[%s3 + $0xd8] sm:$0xff]
  %v353 = vld [vmem:[%s3 + $0xe0] sm:$0xff]
  %v354 = vld [vmem:[%s3 + $0xe8] sm:$0xff]
  %v355 = vld [vmem:[%s3 + $0xf0] sm:$0xff]
  %v356 = vld [vmem:[%s3 + $0xf8] sm:$0xff]
  %v357 = vld [vmem:[%s3 + $0x100] sm:$0xff]
  %v358 = vld [vmem:[%s3 + $0x108] sm:$0xff]
  %v359 = vld [vmem:[%s3 + $0x110] sm:$0xff]
  %v360 = vld [vmem:[%s3 + $0x118] sm:$0xff]
  %v361 = vld [vmem:[%s3 + $0x120] sm:$0xff]
  %v362 = vld [vmem:[%s3 + $0x128] sm:$0xff]
  %v363 = vld [vmem:[%s3 + $0x130] sm:$0xff]
  %v364 = vld [vmem:[%s3 + $0x138] sm:$0xff]
  %v365 = vld [vmem:[%s3 + $0x140] sm:$0xff]
  %v366 = vld [vmem:[%s3 + $0x148] sm:$0xff]
  %v367 = vld [vmem:[%s3 + $0x150] sm:$0xff]
  %v368 = vld [vmem:[%s3 + $0x158] sm:$0xff]
  %v369 = vld [vmem:[%s3 + $0x160] sm:$0xff]
  %v370 = vld [vmem:[%s3 + $0x168] sm:$0xff]
  %v371 = vld [vmem:[%s3 + $0x170] sm:$0xff]
  %v372 = vld [vmem:[%s3 + $0x178] sm:$0xff]
  %v373 = vld [vmem:[%s3 + $0x180] sm:$0xff]
  %v374 = vld [vmem:[%s3 + $0x188] sm:$0xff]
  %v375 = vld [vmem:[%s3 + $0x190] sm:$0xff]
  %v376 = vld [vmem:[%s3 + $0x198] sm:$0xff]
  %v377 = vld [vmem:[%s3 + $0x1a0] sm:$0xff]
  %v378 = vld [vmem:[%s3 + $0x1a8] sm:$0xff]
  %v379 = vld [vmem:[%s3 + $0x1b0] sm:$0xff]
  %v380 = vld [vmem:[%s3 + $0x1b8] sm:$0xff]
  %v381 = vld [vmem:[%s3 + $0x1c0] sm:$0xff]
  %v382 = vld [vmem:[%s3 + $0x1c8] sm:$0xff]
  %v383 = vld [vmem:[%s3 + $0x1d0] sm:$0xff]
  %v384 = vld [vmem:[%s3 + $0x1d8] sm:$0xff]
  %v385 = vld [vmem:[%s3 + $0x1e0] sm:$0xff]
  %v386 = vld [vmem:[%s3 + $0x1e8] sm:$0xff]
  %v387 = vld [vmem:[%s3 + $0x1f0] sm:$0xff]
  %v388 = vld [vmem:[%s3 + $0x1f8] sm:$0xff]
  %v389 = vld [vmem:[%s3 + $0x200] sm:$0xff]
  %v390 = vld [vmem:[%s3 + $0x208] sm:$0xff]
  %v391 = vld [vmem:[%s3 + $0x210] sm:$0xff]
  %v392 = vld [vmem:[%s3 + $0x218] sm:$0xff]
  %v393 = vld [vmem:[%s3 + $0x220] sm:$0xff]
  %v394 = vld [vmem:[%s3 + $0x228] sm:$0xff]
  %v395 = vld [vmem:[%s3 + $0x230] sm:$0xff]
  %v396 = vld [vmem:[%s3 + $0x238] sm:$0xff]
  %v397 = vld [vmem:[%s3 + $0x240] sm:$0xff]
  %v398 = vld [vmem:[%s3 + $0x248] sm:$0xff]
  %v399 = vld [vmem:[%s3 + $0x250] sm:$0xff]
  %v400 = vld [vmem:[%s3 + $0x258] sm:$0xff]
  %v401 = vld [vmem:[%s3 + $0x260] sm:$0xff]
  %v402 = vld [vmem:[%s3 + $0x268] sm:$0xff]
  %v403 = vld [vmem:[%s3 + $0x270] sm:$0xff]
  %v404 = vld [vmem:[%s3 + $0x278] sm:$0xff]
  %v405 = vld [vmem:[%s3 + $0x280] sm:$0xff]
  %v406 = vld [vmem:[%s3 + $0x288] sm:$0xff]
  %v407 = vld [vmem:[%s3 + $0x290] sm:$0xff]
  %v408 = vld [vmem:[%s3 + $0x298] sm:$0xff]
  %v409 = vld [vmem:[%s3 + $0x2a0] sm:$0xff]
  %v410 = vld [vmem:[%s3 + $0x2a8] sm:$0xff]
  %v411 = vld [vmem:[%s3 + $0x2b0] sm:$0xff]
  %v412 = vld [vmem:[%s3 + $0x2b8] sm:$0xff]
  %v413 = vld [vmem:[%s3 + $0x2c0] sm:$0xff]
  %v414 = vld [vmem:[%s3 + $0x2c8] sm:$0xff]
  %v415 = vld [vmem:[%s3 + $0x2d0] sm:$0xff]
  %v416 = vld [vmem:[%s3 + $0x2d8] sm:$0xff]
  %v417 = vld [vmem:[%s3 + $0x2e0] sm:$0xff]
  %v418 = vld [vmem:[%s3 + $0x2e8] sm:$0xff]
  %v419 = vld [vmem:[%s3 + $0x2f0] sm:$0xff]
  %v420 = vld [vmem:[%s3 + $0x2f8] sm:$0xff]
  %v421 = vld [vmem:[%s3 + $0x300] sm:$0xff]
  %v422 = vld [vmem:[%s3 + $0x308] sm:$0xff]
  %v423 = vld [vmem:[%s3 + $0x310] sm:$0xff]
  %v424 = vld [vmem:[%s3 + $0x318] sm:$0xff]
  %v425 = vld [vmem:[%s3 + $0x320] sm:$0xff]
  %v426 = vld [vmem:[%s3 + $0x328] sm:$0xff]
  %v427 = vld [vmem:[%s3 + $0x330] sm:$0xff]
  %v428 = vld [vmem:[%s3 + $0x338] sm:$0xff]
  %v429 = vld [vmem:[%s3 + $0x340] sm:$0xff]
  %v430 = vld [vmem:[%s3 + $0x348] sm:$0xff]
  %v431 = vld [vmem:[%s3 + $0x350] sm:$0xff]
  %v432 = vld [vmem:[%s3 + $0x358] sm:$0xff]
  %v433 = vld [vmem:[%s3 + $0x360] sm:$0xff]
  %v434 = vld [vmem:[%s3 + $0x368] sm:$0xff]
  %v435 = vld [vmem:[%s3 + $0x370] sm:$0xff]
  %v436 = vld [vmem:[%s3 + $0x378] sm:$0xff]
  %v437 = vld [vmem:[%s3 + $0x380] sm:$0xff]
  %v438 = vld [vmem:[%s3 + $0x388] sm:$0xff]
  %v439 = vld [vmem:[%s3 + $0x390] sm:$0xff]
  %v440 = vld [vmem:[%s3 + $0x398] sm:$0xff]
  %v441 = vld [vmem:[%s3 + $0x3a0] sm:$0xff]
  %v442 = vld [vmem:[%s3 + $0x3a8] sm:$0xff]
  %v443 = vld [vmem:[%s3 + $0x3b0] sm:$0xff]
  %v444 = vld [vmem:[%s3 + $0x3b8] sm:$0xff]
  %v445 = vld [vmem:[%s3 + $0x3c0] sm:$0xff]
  %v446 = vld [vmem:[%s3 + $0x3c8] sm:$0xff]
  %v447 = vld [vmem:[%s3 + $0x3d0] sm:$0xff]
  %v448 = vld [vmem:[%s3 + $0x3d8] sm:$0xff]
  %v449 = vld [vmem:[%s3 + $0x3e0] sm:$0xff]
  %v450 = vld [vmem:[%s3 + $0x3e8] sm:$0xff]
  %v451 = vld [vmem:[%s3 + $0x3f0] sm:$0xff]
  %v452 = vld [vmem:[%s3 + $0x3f8] sm:$0xff]
  %v453 = vld [vmem:[%s3 + $0x400] sm:$0xff]
  %v454 = vld [vmem:[%s3 + $0x408] sm:$0xff]
  %v455 = vld [vmem:[%s3 + $0x410] sm:$0xff]
  %v456 = vld [vmem:[%s3 + $0x418] sm:$0xff]
  %v457 = vld [vmem:[%s3 + $0x420] sm:$0xff]
  %v458 = vld [vmem:[%s3 + $0x428] sm:$0xff]
  %v459 = vld [vmem:[%s3 + $0x430] sm:$0xff]
  %v460 = vld [vmem:[%s3 + $0x438] sm:$0xff]
  %v461 = vld [vmem:[%s3 + $0x440] sm:$0xff]
  %v462 = vld [vmem:[%s3 + $0x448] sm:$0xff]
  %v463 = vld [vmem:[%s3 + $0x450] sm:$0xff]
  %v464 = vld [vmem:[%s3 + $0x458] sm:$0xff]
  %v465 = vld [vmem:[%s3 + $0x460] sm:$0xff]
  %v466 = vld [vmem:[%s3 + $0x468] sm:$0xff]
  %v467 = vld [vmem:[%s3 + $0x470] sm:$0xff]
  %v468 = vld [vmem:[%s3 + $0x478] sm:$0xff]
  %v469 = vld [vmem:[%s3 + $0x480] sm:$0xff]
  %v470 = vld [vmem:[%s3 + $0x488] sm:$0xff]
  %v471 = vld [vmem:[%s3 + $0x490] sm:$0xff]
  %v472 = vld [vmem:[%s3 + $0x498] sm:$0xff]
  %v473 = vld [vmem:[%s3 + $0x4a0] sm:$0xff]
  %v474 = vld [vmem:[%s3 + $0x4a8] sm:$0xff]
  %v475 = vld [vmem:[%s3 + $0x4b0] sm:$0xff]
  %v476 = vld [vmem:[%s3 + $0x4b8] sm:$0xff]
  %v477 = vld [vmem:[%s3 + $0x4c0] sm:$0xff]
  %v478 = vld [vmem:[%s3 + $0x4c8] sm:$0xff]
  %v479 = vld [vmem:[%s3 + $0x4d0] sm:$0xff]
  %v480 = vld [vmem:[%s3 + $0x4d8] sm:$0xff]
  %v481 = vld [vmem:[%s3 + $0x4e0] sm:$0xff]
  %v482 = vld [vmem:[%s3 + $0x4e8] sm:$0xff]
  %v483 = vld [vmem:[%s3 + $0x4f0] sm:$0xff]
  %v484 = vld [vmem:[%s3 + $0x4f8] sm:$0xff]
  %v485 = vld [vmem:[%s3 + $0x500] sm:$0xff]
  %v486 = vld [vmem:[%s3 + $0x508] sm:$0xff]
  %v487 = vld [vmem:[%s3 + $0x510] sm:$0xff]
  %v488 = vld [vmem:[%s3 + $0x518] sm:$0xff]
  %v489 = vld [vmem:[%s3 + $0x520] sm:$0xff]
  %v490 = vld [vmem:[%s3 + $0x528] sm:$0xff]
  %v491 = vld [vmem:[%s3 + $0x530] sm:$0xff]
  %v492 = vld [vmem:[%s3 + $0x538] sm:$0xff]
  %v493 = vld [vmem:[%s3 + $0x540] sm:$0xff]
  %v494 = vld [vmem:[%s3 + $0x548] sm:$0xff]
  %v495 = vld [vmem:[%s3 + $0x550] sm:$0xff]
  %v496 = vld [vmem:[%s3 + $0x558] sm:$0xff]
  %v497 = vld [vmem:[%s3 + $0x560] sm:$0xff]
  %v498 = vld [vmem:[%s3 + $0x568] sm:$0xff]
  %v499 = vld [vmem:[%s3 + $0x570] sm:$0xff]
  %v500 = vld [vmem:[%s3 + $0x578] sm:$0xff]
  %v501 = vld [vmem:[%s3 + $0x580] sm:$0xff]
  %v502 = vld [vmem:[%s3 + $0x588] sm:$0xff]
  %v503 = vld [vmem:[%s3 + $0x590] sm:$0xff]
  %v504 = vld [vmem:[%s3 + $0x598] sm:$0xff]
  %v505 = vld [vmem:[%s3 + $0x5a0] sm:$0xff]
  %v506 = vld [vmem:[%s3 + $0x5a8] sm:$0xff]
  %v507 = vld [vmem:[%s3 + $0x5b0] sm:$0xff]
  %v508 = vld [vmem:[%s3 + $0x5b8] sm:$0xff]
  %v509 = vld [vmem:[%s3 + $0x5c0] sm:$0xff]
  %v510 = vld [vmem:[%s3 + $0x5c8] sm:$0xff]
  %v511 = vld [vmem:[%s3 + $0x5d0] sm:$0xff]
  %v512 = vld [vmem:[%s3 + $0x5d8] sm:$0xff]
  %v513 = vld [vmem:[%s3 + $0x5e0] sm:$0xff]
  %v514 = vld [vmem:[%s3 + $0x5e8] sm:$0xff]
  %v515 = vld [vmem:[%s3 + $0x5f0] sm:$0xff]
  %v516 = vld [vmem:[%s3 + $0x5f8] sm:$0xff]
  %v517 = vld [vmem:[%s3 + $0x600] sm:$0xff]
  %v518 = vld [vmem:[%s3 + $0x608] sm:$0xff]
  %v519 = vld [vmem:[%s3 + $0x610] sm:$0xff]
  %v520 = vld [vmem:[%s3 + $0x618] sm:$0xff]
  %v521 = vld [vmem:[%s3 + $0x620] sm:$0xff]
  %v522 = vld [vmem:[%s3 + $0x628] sm:$0xff]
  %v523 = vld [vmem:[%s3 + $0x630] sm:$0xff]
  %v524 = vld [vmem:[%s3 + $0x638] sm:$0xff]
  %v525 = vld [vmem:[%s3 + $0x640] sm:$0xff]
  %v526 = vld [vmem:[%s3 + $0x648] sm:$0xff]
  %v527 = vld [vmem:[%s3 + $0x650] sm:$0xff]
  %v528 = vld [vmem:[%s3 + $0x658] sm:$0xff]
  %v529 = vld [vmem:[%s3 + $0x660] sm:$0xff]
  %v530 = vld [vmem:[%s3 + $0x668] sm:$0xff]
  %v531 = vld [vmem:[%s3 + $0x670] sm:$0xff]
  %v532 = vld [vmem:[%s3 + $0x678] sm:$0xff]
  %v533 = vld [vmem:[%s3 + $0x680] sm:$0xff]
  %v534 = vld [vmem:[%s3 + $0x688] sm:$0xff]
  %v535 = vld [vmem:[%s3 + $0x690] sm:$0xff]
  %v536 = vld [vmem:[%s3 + $0x698] sm:$0xff]
  %v537 = vld [vmem:[%s3 + $0x6a0] sm:$0xff]
  %v538 = vld [vmem:[%s3 + $0x6a8] sm:$0xff]
  %v539 = vld [vmem:[%s3 + $0x6b0] sm:$0xff]
  %v540 = vld [vmem:[%s3 + $0x6b8] sm:$0xff]
  %v541 = vld [vmem:[%s3 + $0x6c0] sm:$0xff]
  %v542 = vld [vmem:[%s3 + $0x6c8] sm:$0xff]
  %v543 = vld [vmem:[%s3 + $0x6d0] sm:$0xff]
  %v544 = vld [vmem:[%s3 + $0x6d8] sm:$0xff]
  %v545 = vld [vmem:[%s3 + $0x6e0] sm:$0xff]
  %v546 = vld [vmem:[%s3 + $0x6e8] sm:$0xff]
  %v547 = vld [vmem:[%s3 + $0x6f0] sm:$0xff]
  %v548 = vld [vmem:[%s3 + $0x6f8] sm:$0xff]
  %v549 = vld [vmem:[%s3 + $0x700] sm:$0xff]
  %v550 = vld [vmem:[%s3 + $0x708] sm:$0xff]
  %v551 = vld [vmem:[%s3 + $0x710] sm:$0xff]
  %v552 = vld [vmem:[%s3 + $0x718] sm:$0xff]
  %v553 = vld [vmem:[%s3 + $0x720] sm:$0xff]
  %v554 = vld [vmem:[%s3 + $0x728] sm:$0xff]
  %v555 = vld [vmem:[%s3 + $0x730] sm:$0xff]
  %v556 = vld [vmem:[%s3 + $0x738] sm:$0xff]
  %v557 = vld [vmem:[%s3 + $0x740] sm:$0xff]
  %v558 = vld [vmem:[%s3 + $0x748] sm:$0xff]
  %v559 = vld [vmem:[%s3 + $0x750] sm:$0xff]
  %v560 = vld [vmem:[%s3 + $0x758] sm:$0xff]
  %v561 = vld [vmem:[%s3 + $0x760] sm:$0xff]
  %v562 = vld [vmem:[%s3 + $0x768] sm:$0xff]
  %v563 = vld [vmem:[%s3 + $0x770] sm:$0xff]
  %v564 = vld [vmem:[%s3 + $0x778] sm:$0xff]
  %v565 = vld [vmem:[%s3 + $0x780] sm:$0xff]
  %v566 = vld [vmem:[%s3 + $0x788] sm:$0xff]
  %v567 = vld [vmem:[%s3 + $0x790] sm:$0xff]
  %v568 = vld [vmem:[%s3 + $0x798] sm:$0xff]
  %v569 = vld [vmem:[%s3 + $0x7a0] sm:$0xff]
  %v570 = vld [vmem:[%s3 + $0x7a8] sm:$0xff]
  %v571 = vld [vmem:[%s3 + $0x7b0] sm:$0xff]
  %v572 = vld [vmem:[%s3 + $0x7b8] sm:$0xff]
  %v573 = vld [vmem:[%s3 + $0x7c0] sm:$0xff]
  %v574 = vld [vmem:[%s3 + $0x7c8] sm:$0xff]
  %v575 = vld [vmem:[%s3 + $0x7d0] sm:$0xff]
  %v576 = vld [vmem:[%s3 + $0x7d8] sm:$0xff]
  %v577 = vld [vmem:[%s3 + $0x7e0] sm:$0xff]
  %v578 = vld [vmem:[%s3 + $0x7e8] sm:$0xff]
  %v579 = vld [vmem:[%s3 + $0x7f0] sm:$0xff]
  %v580 = vld [vmem:[%s3 + $0x7f8] sm:$0xff]
  %v597 = vunpack.c.l.b16 %v309
  %v598 = vunpack.c.l.b16 %v310
  %v599 = vunpack.c.l.b16 %v311
  %v600 = vunpack.c.l.b16 %v312
  %v601 = vunpack.c.l.b16 %v313
  %v602 = vunpack.c.l.b16 %v314
  %v603 = vunpack.c.l.b16 %v315
  %v604 = vunpack.c.l.b16 %v316
  %v605 = vunpack.c.l.b16 %v317
  %v606 = vunpack.c.l.b16 %v318
  %v607 = vunpack.c.l.b16 %v319
  %v608 = vunpack.c.l.b16 %v320
  %v609 = vunpack.c.l.b16 %v321
  %v610 = vunpack.c.l.b16 %v322
  %v611 = vunpack.c.l.b16 %v323
  %v612 = vunpack.c.l.b16 %v324
  %v613 = vrot.slane %v605, 7
  %vm614 = vcmask 1041409
  %v615 = vsel %vm614, %v613, %v597
  %v616 = vrot.slane %v606, 7
  %v617 = vsel %vm614, %v616, %v598
  %v618 = vrot.slane %v607, 7
  %v619 = vsel %vm614, %v618, %v599
  %v620 = vrot.slane %v608, 7
  %v621 = vsel %vm614, %v620, %v600
  %v622 = vrot.slane %v609, 7
  %v623 = vsel %vm614, %v622, %v601
  %v624 = vrot.slane %v610, 7
  %v625 = vsel %vm614, %v624, %v602
  %v626 = vrot.slane %v611, 7
  %v627 = vsel %vm614, %v626, %v603
  %v628 = vrot.slane %v612, 7
  %v629 = vsel %vm614, %v628, %v604
  %v630 = vpack.c.b16 %v615, %v615
  %v631 = vpack.c.b16 %v617, %v617
  %v632 = vpack.c.b16 %v619, %v619
  %v633 = vpack.c.b16 %v621, %v621
  %v634 = vpack.c.b16 %v623, %v623
  %v635 = vpack.c.b16 %v625, %v625
  %v636 = vpack.c.b16 %v627, %v627
  %v637 = vpack.c.b16 %v629, %v629
  %v902 = vunpack.c.l.b16 %v325
  %v903 = vunpack.c.h.b16 %v325
  %v904 = vunpack.c.l.b16 %v326
  %v905 = vunpack.c.h.b16 %v326
  %v906 = vunpack.c.l.b16 %v327
  %v907 = vunpack.c.h.b16 %v327
  %v908 = vunpack.c.l.b16 %v328
  %v909 = vunpack.c.h.b16 %v328
  %v910 = vunpack.c.l.b16 %v329
  %v911 = vunpack.c.h.b16 %v329
  %v912 = vunpack.c.l.b16 %v330
  %v913 = vunpack.c.h.b16 %v330
  %v914 = vunpack.c.l.b16 %v331
  %v915 = vunpack.c.h.b16 %v331
  %v916 = vunpack.c.l.b16 %v332
  %v917 = vunpack.c.h.b16 %v332
  %v918 = vunpack.c.l.b16 %v333
  %v919 = vunpack.c.h.b16 %v333
  %v920 = vunpack.c.l.b16 %v334
  %v921 = vunpack.c.h.b16 %v334
  %v922 = vunpack.c.l.b16 %v335
  %v923 = vunpack.c.h.b16 %v335
  %v924 = vunpack.c.l.b16 %v336
  %v925 = vunpack.c.h.b16 %v336
  %v926 = vunpack.c.l.b16 %v337
  %v927 = vunpack.c.h.b16 %v337
  %v928 = vunpack.c.l.b16 %v338
  %v929 = vunpack.c.h.b16 %v338
  %v930 = vunpack.c.l.b16 %v339
  %v931 = vunpack.c.h.b16 %v339
  %v932 = vunpack.c.l.b16 %v340
  %v933 = vunpack.c.h.b16 %v340
  %v934 = vunpack.c.l.b16 %v341
  %v935 = vunpack.c.h.b16 %v341
  %v936 = vunpack.c.l.b16 %v342
  %v937 = vunpack.c.h.b16 %v342
  %v938 = vunpack.c.l.b16 %v343
  %v939 = vunpack.c.h.b16 %v343
  %v940 = vunpack.c.l.b16 %v344
  %v941 = vunpack.c.h.b16 %v344
  %v942 = vunpack.c.l.b16 %v345
  %v943 = vunpack.c.h.b16 %v345
  %v944 = vunpack.c.l.b16 %v346
  %v945 = vunpack.c.h.b16 %v346
  %v946 = vunpack.c.l.b16 %v347
  %v947 = vunpack.c.h.b16 %v347
  %v948 = vunpack.c.l.b16 %v348
  %v949 = vunpack.c.h.b16 %v348
  %v950 = vunpack.c.l.b16 %v349
  %v951 = vunpack.c.h.b16 %v349
  %v952 = vunpack.c.l.b16 %v350
  %v953 = vunpack.c.h.b16 %v350
  %v954 = vunpack.c.l.b16 %v351
  %v955 = vunpack.c.h.b16 %v351
  %v956 = vunpack.c.l.b16 %v352
  %v957 = vunpack.c.h.b16 %v352
  %v958 = vunpack.c.l.b16 %v353
  %v959 = vunpack.c.h.b16 %v353
  %v960 = vunpack.c.l.b16 %v354
  %v961 = vunpack.c.h.b16 %v354
  %v962 = vunpack.c.l.b16 %v355
  %v963 = vunpack.c.h.b16 %v355
  %v964 = vunpack.c.l.b16 %v356
  %v965 = vunpack.c.h.b16 %v356
  %v966 = vunpack.c.l.b16 %v357
  %v967 = vunpack.c.h.b16 %v357
  %v968 = vunpack.c.l.b16 %v358
  %v969 = vunpack.c.h.b16 %v358
  %v970 = vunpack.c.l.b16 %v359
  %v971 = vunpack.c.h.b16 %v359
  %v972 = vunpack.c.l.b16 %v360
  %v973 = vunpack.c.h.b16 %v360
  %v974 = vunpack.c.l.b16 %v361
  %v975 = vunpack.c.h.b16 %v361
  %v976 = vunpack.c.l.b16 %v362
  %v977 = vunpack.c.h.b16 %v362
  %v978 = vunpack.c.l.b16 %v363
  %v979 = vunpack.c.h.b16 %v363
  %v980 = vunpack.c.l.b16 %v364
  %v981 = vunpack.c.h.b16 %v364
  %v982 = vunpack.c.l.b16 %v365
  %v983 = vunpack.c.h.b16 %v365
  %v984 = vunpack.c.l.b16 %v366
  %v985 = vunpack.c.h.b16 %v366
  %v986 = vunpack.c.l.b16 %v367
  %v987 = vunpack.c.h.b16 %v367
  %v988 = vunpack.c.l.b16 %v368
  %v989 = vunpack.c.h.b16 %v368
  %v990 = vunpack.c.l.b16 %v369
  %v991 = vunpack.c.h.b16 %v369
  %v992 = vunpack.c.l.b16 %v370
  %v993 = vunpack.c.h.b16 %v370
  %v994 = vunpack.c.l.b16 %v371
  %v995 = vunpack.c.h.b16 %v371
  %v996 = vunpack.c.l.b16 %v372
  %v997 = vunpack.c.h.b16 %v372
  %v998 = vunpack.c.l.b16 %v373
  %v999 = vunpack.c.h.b16 %v373
  %v1000 = vunpack.c.l.b16 %v374
  %v1001 = vunpack.c.h.b16 %v374
  %v1002 = vunpack.c.l.b16 %v375
  %v1003 = vunpack.c.h.b16 %v375
  %v1004 = vunpack.c.l.b16 %v376
  %v1005 = vunpack.c.h.b16 %v376
  %v1006 = vunpack.c.l.b16 %v377
  %v1007 = vunpack.c.h.b16 %v377
  %v1008 = vunpack.c.l.b16 %v378
  %v1009 = vunpack.c.h.b16 %v378
  %v1010 = vunpack.c.l.b16 %v379
  %v1011 = vunpack.c.h.b16 %v379
  %v1012 = vunpack.c.l.b16 %v380
  %v1013 = vunpack.c.h.b16 %v380
  %v1014 = vunpack.c.l.b16 %v381
  %v1015 = vunpack.c.h.b16 %v381
  %v1016 = vunpack.c.l.b16 %v382
  %v1017 = vunpack.c.h.b16 %v382
  %v1018 = vunpack.c.l.b16 %v383
  %v1019 = vunpack.c.h.b16 %v383
  %v1020 = vunpack.c.l.b16 %v384
  %v1021 = vunpack.c.h.b16 %v384
  %v1022 = vunpack.c.l.b16 %v385
  %v1023 = vunpack.c.h.b16 %v385
  %v1024 = vunpack.c.l.b16 %v386
  %v1025 = vunpack.c.h.b16 %v386
  %v1026 = vunpack.c.l.b16 %v387
  %v1027 = vunpack.c.h.b16 %v387
  %v1028 = vunpack.c.l.b16 %v388
  %v1029 = vunpack.c.h.b16 %v388
  %v1030 = vunpack.c.l.b16 %v389
  %v1031 = vunpack.c.h.b16 %v389
  %v1032 = vunpack.c.l.b16 %v390
  %v1033 = vunpack.c.h.b16 %v390
  %v1034 = vunpack.c.l.b16 %v391
  %v1035 = vunpack.c.h.b16 %v391
  %v1036 = vunpack.c.l.b16 %v392
  %v1037 = vunpack.c.h.b16 %v392
  %v1038 = vunpack.c.l.b16 %v393
  %v1039 = vunpack.c.h.b16 %v393
  %v1040 = vunpack.c.l.b16 %v394
  %v1041 = vunpack.c.h.b16 %v394
  %v1042 = vunpack.c.l.b16 %v395
  %v1043 = vunpack.c.h.b16 %v395
  %v1044 = vunpack.c.l.b16 %v396
  %v1045 = vunpack.c.h.b16 %v396
  %v1046 = vunpack.c.l.b16 %v397
  %v1047 = vunpack.c.h.b16 %v397
  %v1048 = vunpack.c.l.b16 %v398
  %v1049 = vunpack.c.h.b16 %v398
  %v1050 = vunpack.c.l.b16 %v399
  %v1051 = vunpack.c.h.b16 %v399
  %v1052 = vunpack.c.l.b16 %v400
  %v1053 = vunpack.c.h.b16 %v400
  %v1054 = vunpack.c.l.b16 %v401
  %v1055 = vunpack.c.h.b16 %v401
  %v1056 = vunpack.c.l.b16 %v402
  %v1057 = vunpack.c.h.b16 %v402
  %v1058 = vunpack.c.l.b16 %v403
  %v1059 = vunpack.c.h.b16 %v403
  %v1060 = vunpack.c.l.b16 %v404
  %v1061 = vunpack.c.h.b16 %v404
  %v1062 = vunpack.c.l.b16 %v405
  %v1063 = vunpack.c.h.b16 %v405
  %v1064 = vunpack.c.l.b16 %v406
  %v1065 = vunpack.c.h.b16 %v406
  %v1066 = vunpack.c.l.b16 %v407
  %v1067 = vunpack.c.h.b16 %v407
  %v1068 = vunpack.c.l.b16 %v408
  %v1069 = vunpack.c.h.b16 %v408
  %v1070 = vunpack.c.l.b16 %v409
  %v1071 = vunpack.c.h.b16 %v409
  %v1072 = vunpack.c.l.b16 %v410
  %v1073 = vunpack.c.h.b16 %v410
  %v1074 = vunpack.c.l.b16 %v411
  %v1075 = vunpack.c.h.b16 %v411
  %v1076 = vunpack.c.l.b16 %v412
  %v1077 = vunpack.c.h.b16 %v412
  %v1078 = vunpack.c.l.b16 %v413
  %v1079 = vunpack.c.h.b16 %v413
  %v1080 = vunpack.c.l.b16 %v414
  %v1081 = vunpack.c.h.b16 %v414
  %v1082 = vunpack.c.l.b16 %v415
  %v1083 = vunpack.c.h.b16 %v415
  %v1084 = vunpack.c.l.b16 %v416
  %v1085 = vunpack.c.h.b16 %v416
  %v1086 = vunpack.c.l.b16 %v417
  %v1087 = vunpack.c.h.b16 %v417
  %v1088 = vunpack.c.l.b16 %v418
  %v1089 = vunpack.c.h.b16 %v418
  %v1090 = vunpack.c.l.b16 %v419
  %v1091 = vunpack.c.h.b16 %v419
  %v1092 = vunpack.c.l.b16 %v420
  %v1093 = vunpack.c.h.b16 %v420
  %v1094 = vunpack.c.l.b16 %v421
  %v1095 = vunpack.c.h.b16 %v421
  %v1096 = vunpack.c.l.b16 %v422
  %v1097 = vunpack.c.h.b16 %v422
  %v1098 = vunpack.c.l.b16 %v423
  %v1099 = vunpack.c.h.b16 %v423
  %v1100 = vunpack.c.l.b16 %v424
  %v1101 = vunpack.c.h.b16 %v424
  %v1102 = vunpack.c.l.b16 %v425
  %v1103 = vunpack.c.h.b16 %v425
  %v1104 = vunpack.c.l.b16 %v426
  %v1105 = vunpack.c.h.b16 %v426
  %v1106 = vunpack.c.l.b16 %v427
  %v1107 = vunpack.c.h.b16 %v427
  %v1108 = vunpack.c.l.b16 %v428
  %v1109 = vunpack.c.h.b16 %v428
  %v1110 = vunpack.c.l.b16 %v429
  %v1111 = vunpack.c.h.b16 %v429
  %v1112 = vunpack.c.l.b16 %v430
  %v1113 = vunpack.c.h.b16 %v430
  %v1114 = vunpack.c.l.b16 %v431
  %v1115 = vunpack.c.h.b16 %v431
  %v1116 = vunpack.c.l.b16 %v432
  %v1117 = vunpack.c.h.b16 %v432
  %v1118 = vunpack.c.l.b16 %v433
  %v1119 = vunpack.c.h.b16 %v433
  %v1120 = vunpack.c.l.b16 %v434
  %v1121 = vunpack.c.h.b16 %v434
  %v1122 = vunpack.c.l.b16 %v435
  %v1123 = vunpack.c.h.b16 %v435
  %v1124 = vunpack.c.l.b16 %v436
  %v1125 = vunpack.c.h.b16 %v436
  %v1126 = vunpack.c.l.b16 %v437
  %v1127 = vunpack.c.h.b16 %v437
  %v1128 = vunpack.c.l.b16 %v438
  %v1129 = vunpack.c.h.b16 %v438
  %v1130 = vunpack.c.l.b16 %v439
  %v1131 = vunpack.c.h.b16 %v439
  %v1132 = vunpack.c.l.b16 %v440
  %v1133 = vunpack.c.h.b16 %v440
  %v1134 = vunpack.c.l.b16 %v441
  %v1135 = vunpack.c.h.b16 %v441
  %v1136 = vunpack.c.l.b16 %v442
  %v1137 = vunpack.c.h.b16 %v442
  %v1138 = vunpack.c.l.b16 %v443
  %v1139 = vunpack.c.h.b16 %v443
  %v1140 = vunpack.c.l.b16 %v444
  %v1141 = vunpack.c.h.b16 %v444
  %v1142 = vunpack.c.l.b16 %v445
  %v1143 = vunpack.c.h.b16 %v445
  %v1144 = vunpack.c.l.b16 %v446
  %v1145 = vunpack.c.h.b16 %v446
  %v1146 = vunpack.c.l.b16 %v447
  %v1147 = vunpack.c.h.b16 %v447
  %v1148 = vunpack.c.l.b16 %v448
  %v1149 = vunpack.c.h.b16 %v448
  %v1150 = vunpack.c.l.b16 %v449
  %v1151 = vunpack.c.h.b16 %v449
  %v1152 = vunpack.c.l.b16 %v450
  %v1153 = vunpack.c.h.b16 %v450
  %v1154 = vunpack.c.l.b16 %v451
  %v1155 = vunpack.c.h.b16 %v451
  %v1156 = vunpack.c.l.b16 %v452
  %v1157 = vunpack.c.h.b16 %v452
  %v1158 = vunpack.c.l.b16 %v453
  %v1159 = vunpack.c.h.b16 %v453
  %v1160 = vunpack.c.l.b16 %v454
  %v1161 = vunpack.c.h.b16 %v454
  %v1162 = vunpack.c.l.b16 %v455
  %v1163 = vunpack.c.h.b16 %v455
  %v1164 = vunpack.c.l.b16 %v456
  %v1165 = vunpack.c.h.b16 %v456
  %v1166 = vunpack.c.l.b16 %v457
  %v1167 = vunpack.c.h.b16 %v457
  %v1168 = vunpack.c.l.b16 %v458
  %v1169 = vunpack.c.h.b16 %v458
  %v1170 = vunpack.c.l.b16 %v459
  %v1171 = vunpack.c.h.b16 %v459
  %v1172 = vunpack.c.l.b16 %v460
  %v1173 = vunpack.c.h.b16 %v460
  %v1174 = vunpack.c.l.b16 %v461
  %v1175 = vunpack.c.h.b16 %v461
  %v1176 = vunpack.c.l.b16 %v462
  %v1177 = vunpack.c.h.b16 %v462
  %v1178 = vunpack.c.l.b16 %v463
  %v1179 = vunpack.c.h.b16 %v463
  %v1180 = vunpack.c.l.b16 %v464
  %v1181 = vunpack.c.h.b16 %v464
  %v1182 = vunpack.c.l.b16 %v465
  %v1183 = vunpack.c.h.b16 %v465
  %v1184 = vunpack.c.l.b16 %v466
  %v1185 = vunpack.c.h.b16 %v466
  %v1186 = vunpack.c.l.b16 %v467
  %v1187 = vunpack.c.h.b16 %v467
  %v1188 = vunpack.c.l.b16 %v468
  %v1189 = vunpack.c.h.b16 %v468
  %v1190 = vunpack.c.l.b16 %v469
  %v1191 = vunpack.c.h.b16 %v469
  %v1192 = vunpack.c.l.b16 %v470
  %v1193 = vunpack.c.h.b16 %v470
  %v1194 = vunpack.c.l.b16 %v471
  %v1195 = vunpack.c.h.b16 %v471
  %v1196 = vunpack.c.l.b16 %v472
  %v1197 = vunpack.c.h.b16 %v472
  %v1198 = vunpack.c.l.b16 %v473
  %v1199 = vunpack.c.h.b16 %v473
  %v1200 = vunpack.c.l.b16 %v474
  %v1201 = vunpack.c.h.b16 %v474
  %v1202 = vunpack.c.l.b16 %v475
  %v1203 = vunpack.c.h.b16 %v475
  %v1204 = vunpack.c.l.b16 %v476
  %v1205 = vunpack.c.h.b16 %v476
  %v1206 = vunpack.c.l.b16 %v477
  %v1207 = vunpack.c.h.b16 %v477
  %v1208 = vunpack.c.l.b16 %v478
  %v1209 = vunpack.c.h.b16 %v478
  %v1210 = vunpack.c.l.b16 %v479
  %v1211 = vunpack.c.h.b16 %v479
  %v1212 = vunpack.c.l.b16 %v480
  %v1213 = vunpack.c.h.b16 %v480
  %v1214 = vunpack.c.l.b16 %v481
  %v1215 = vunpack.c.h.b16 %v481
  %v1216 = vunpack.c.l.b16 %v482
  %v1217 = vunpack.c.h.b16 %v482
  %v1218 = vunpack.c.l.b16 %v483
  %v1219 = vunpack.c.h.b16 %v483
  %v1220 = vunpack.c.l.b16 %v484
  %v1221 = vunpack.c.h.b16 %v484
  %v1222 = vunpack.c.l.b16 %v485
  %v1223 = vunpack.c.h.b16 %v485
  %v1224 = vunpack.c.l.b16 %v486
  %v1225 = vunpack.c.h.b16 %v486
  %v1226 = vunpack.c.l.b16 %v487
  %v1227 = vunpack.c.h.b16 %v487
  %v1228 = vunpack.c.l.b16 %v488
  %v1229 = vunpack.c.h.b16 %v488
  %v1230 = vunpack.c.l.b16 %v489
  %v1231 = vunpack.c.h.b16 %v489
  %v1232 = vunpack.c.l.b16 %v490
  %v1233 = vunpack.c.h.b16 %v490
  %v1234 = vunpack.c.l.b16 %v491
  %v1235 = vunpack.c.h.b16 %v491
  %v1236 = vunpack.c.l.b16 %v492
  %v1237 = vunpack.c.h.b16 %v492
  %v1238 = vunpack.c.l.b16 %v493
  %v1239 = vunpack.c.h.b16 %v493
  %v1240 = vunpack.c.l.b16 %v494
  %v1241 = vunpack.c.h.b16 %v494
  %v1242 = vunpack.c.l.b16 %v495
  %v1243 = vunpack.c.h.b16 %v495
  %v1244 = vunpack.c.l.b16 %v496
  %v1245 = vunpack.c.h.b16 %v496
  %v1246 = vunpack.c.l.b16 %v497
  %v1247 = vunpack.c.h.b16 %v497
  %v1248 = vunpack.c.l.b16 %v498
  %v1249 = vunpack.c.h.b16 %v498
  %v1250 = vunpack.c.l.b16 %v499
  %v1251 = vunpack.c.h.b16 %v499
  %v1252 = vunpack.c.l.b16 %v500
  %v1253 = vunpack.c.h.b16 %v500
  %v1254 = vunpack.c.l.b16 %v501
  %v1255 = vunpack.c.h.b16 %v501
  %v1256 = vunpack.c.l.b16 %v502
  %v1257 = vunpack.c.h.b16 %v502
  %v1258 = vunpack.c.l.b16 %v503
  %v1259 = vunpack.c.h.b16 %v503
  %v1260 = vunpack.c.l.b16 %v504
  %v1261 = vunpack.c.h.b16 %v504
  %v1262 = vunpack.c.l.b16 %v505
  %v1263 = vunpack.c.h.b16 %v505
  %v1264 = vunpack.c.l.b16 %v506
  %v1265 = vunpack.c.h.b16 %v506
  %v1266 = vunpack.c.l.b16 %v507
  %v1267 = vunpack.c.h.b16 %v507
  %v1268 = vunpack.c.l.b16 %v508
  %v1269 = vunpack.c.h.b16 %v508
  %v1270 = vunpack.c.l.b16 %v509
  %v1271 = vunpack.c.h.b16 %v509
  %v1272 = vunpack.c.l.b16 %v510
  %v1273 = vunpack.c.h.b16 %v510
  %v1274 = vunpack.c.l.b16 %v511
  %v1275 = vunpack.c.h.b16 %v511
  %v1276 = vunpack.c.l.b16 %v512
  %v1277 = vunpack.c.h.b16 %v512
  %v1278 = vunpack.c.l.b16 %v513
  %v1279 = vunpack.c.h.b16 %v513
  %v1280 = vunpack.c.l.b16 %v514
  %v1281 = vunpack.c.h.b16 %v514
  %v1282 = vunpack.c.l.b16 %v515
  %v1283 = vunpack.c.h.b16 %v515
  %v1284 = vunpack.c.l.b16 %v516
  %v1285 = vunpack.c.h.b16 %v516
  %v1286 = vunpack.c.l.b16 %v517
  %v1287 = vunpack.c.h.b16 %v517
  %v1288 = vunpack.c.l.b16 %v518
  %v1289 = vunpack.c.h.b16 %v518
  %v1290 = vunpack.c.l.b16 %v519
  %v1291 = vunpack.c.h.b16 %v519
  %v1292 = vunpack.c.l.b16 %v520
  %v1293 = vunpack.c.h.b16 %v520
  %v1294 = vunpack.c.l.b16 %v521
  %v1295 = vunpack.c.h.b16 %v521
  %v1296 = vunpack.c.l.b16 %v522
  %v1297 = vunpack.c.h.b16 %v522
  %v1298 = vunpack.c.l.b16 %v523
  %v1299 = vunpack.c.h.b16 %v523
  %v1300 = vunpack.c.l.b16 %v524
  %v1301 = vunpack.c.h.b16 %v524
  %v1302 = vunpack.c.l.b16 %v525
  %v1303 = vunpack.c.h.b16 %v525
  %v1304 = vunpack.c.l.b16 %v526
  %v1305 = vunpack.c.h.b16 %v526
  %v1306 = vunpack.c.l.b16 %v527
  %v1307 = vunpack.c.h.b16 %v527
  %v1308 = vunpack.c.l.b16 %v528
  %v1309 = vunpack.c.h.b16 %v528
  %v1310 = vunpack.c.l.b16 %v529
  %v1311 = vunpack.c.h.b16 %v529
  %v1312 = vunpack.c.l.b16 %v530
  %v1313 = vunpack.c.h.b16 %v530
  %v1314 = vunpack.c.l.b16 %v531
  %v1315 = vunpack.c.h.b16 %v531
  %v1316 = vunpack.c.l.b16 %v532
  %v1317 = vunpack.c.h.b16 %v532
  %v1318 = vunpack.c.l.b16 %v533
  %v1319 = vunpack.c.h.b16 %v533
  %v1320 = vunpack.c.l.b16 %v534
  %v1321 = vunpack.c.h.b16 %v534
  %v1322 = vunpack.c.l.b16 %v535
  %v1323 = vunpack.c.h.b16 %v535
  %v1324 = vunpack.c.l.b16 %v536
  %v1325 = vunpack.c.h.b16 %v536
  %v1326 = vunpack.c.l.b16 %v537
  %v1327 = vunpack.c.h.b16 %v537
  %v1328 = vunpack.c.l.b16 %v538
  %v1329 = vunpack.c.h.b16 %v538
  %v1330 = vunpack.c.l.b16 %v539
  %v1331 = vunpack.c.h.b16 %v539
  %v1332 = vunpack.c.l.b16 %v540
  %v1333 = vunpack.c.h.b16 %v540
  %v1334 = vunpack.c.l.b16 %v541
  %v1335 = vunpack.c.h.b16 %v541
  %v1336 = vunpack.c.l.b16 %v542
  %v1337 = vunpack.c.h.b16 %v542
  %v1338 = vunpack.c.l.b16 %v543
  %v1339 = vunpack.c.h.b16 %v543
  %v1340 = vunpack.c.l.b16 %v544
  %v1341 = vunpack.c.h.b16 %v544
  %v1342 = vunpack.c.l.b16 %v545
  %v1343 = vunpack.c.h.b16 %v545
  %v1344 = vunpack.c.l.b16 %v546
  %v1345 = vunpack.c.h.b16 %v546
  %v1346 = vunpack.c.l.b16 %v547
  %v1347 = vunpack.c.h.b16 %v547
  %v1348 = vunpack.c.l.b16 %v548
  %v1349 = vunpack.c.h.b16 %v548
  %v1350 = vunpack.c.l.b16 %v549
  %v1351 = vunpack.c.h.b16 %v549
  %v1352 = vunpack.c.l.b16 %v550
  %v1353 = vunpack.c.h.b16 %v550
  %v1354 = vunpack.c.l.b16 %v551
  %v1355 = vunpack.c.h.b16 %v551
  %v1356 = vunpack.c.l.b16 %v552
  %v1357 = vunpack.c.h.b16 %v552
  %v1358 = vunpack.c.l.b16 %v553
  %v1359 = vunpack.c.h.b16 %v553
  %v1360 = vunpack.c.l.b16 %v554
  %v1361 = vunpack.c.h.b16 %v554
  %v1362 = vunpack.c.l.b16 %v555
  %v1363 = vunpack.c.h.b16 %v555
  %v1364 = vunpack.c.l.b16 %v556
  %v1365 = vunpack.c.h.b16 %v556
  %v1366 = vunpack.c.l.b16 %v557
  %v1367 = vunpack.c.h.b16 %v557
  %v1368 = vunpack.c.l.b16 %v558
  %v1369 = vunpack.c.h.b16 %v558
  %v1370 = vunpack.c.l.b16 %v559
  %v1371 = vunpack.c.h.b16 %v559
  %v1372 = vunpack.c.l.b16 %v560
  %v1373 = vunpack.c.h.b16 %v560
  %v1374 = vunpack.c.l.b16 %v561
  %v1375 = vunpack.c.h.b16 %v561
  %v1376 = vunpack.c.l.b16 %v562
  %v1377 = vunpack.c.h.b16 %v562
  %v1378 = vunpack.c.l.b16 %v563
  %v1379 = vunpack.c.h.b16 %v563
  %v1380 = vunpack.c.l.b16 %v564
  %v1381 = vunpack.c.h.b16 %v564
  %v1382 = vunpack.c.l.b16 %v565
  %v1383 = vunpack.c.h.b16 %v565
  %v1384 = vunpack.c.l.b16 %v566
  %v1385 = vunpack.c.h.b16 %v566
  %v1386 = vunpack.c.l.b16 %v567
  %v1387 = vunpack.c.h.b16 %v567
  %v1388 = vunpack.c.l.b16 %v568
  %v1389 = vunpack.c.h.b16 %v568
  %v1390 = vunpack.c.l.b16 %v569
  %v1391 = vunpack.c.h.b16 %v569
  %v1392 = vunpack.c.l.b16 %v570
  %v1393 = vunpack.c.h.b16 %v570
  %v1394 = vunpack.c.l.b16 %v571
  %v1395 = vunpack.c.h.b16 %v571
  %v1396 = vunpack.c.l.b16 %v572
  %v1397 = vunpack.c.h.b16 %v572
  %v1398 = vunpack.c.l.b16 %v573
  %v1399 = vunpack.c.h.b16 %v573
  %v1400 = vunpack.c.l.b16 %v574
  %v1401 = vunpack.c.h.b16 %v574
  %v1402 = vunpack.c.l.b16 %v575
  %v1403 = vunpack.c.h.b16 %v575
  %v1404 = vunpack.c.l.b16 %v576
  %v1405 = vunpack.c.h.b16 %v576
  %v1406 = vunpack.c.l.b16 %v577
  %v1407 = vunpack.c.h.b16 %v577
  %v1408 = vunpack.c.l.b16 %v578
  %v1409 = vunpack.c.h.b16 %v578
  %v1410 = vunpack.c.l.b16 %v579
  %v1411 = vunpack.c.h.b16 %v579
  %v1412 = vunpack.c.l.b16 %v580
  %v1413 = vunpack.c.h.b16 %v580
  %v1414 = vpack.c.b16 %v906, %v902
  %v1415 = vpack.c.b16 %v907, %v903
  %v1416 = vpack.c.b16 %v908, %v904
  %v1417 = vpack.c.b16 %v909, %v905
  %v1418 = vpack.c.b16 %v914, %v910
  %v1419 = vpack.c.b16 %v915, %v911
  %v1420 = vpack.c.b16 %v916, %v912
  %v1421 = vpack.c.b16 %v917, %v913
  %v1422 = vpack.c.b16 %v922, %v918
  %v1423 = vpack.c.b16 %v923, %v919
  %v1424 = vpack.c.b16 %v924, %v920
  %v1425 = vpack.c.b16 %v925, %v921
  %v1426 = vpack.c.b16 %v930, %v926
  %v1427 = vpack.c.b16 %v931, %v927
  %v1428 = vpack.c.b16 %v932, %v928
  %v1429 = vpack.c.b16 %v933, %v929
  %v1430 = vpack.c.b16 %v938, %v934
  %v1431 = vpack.c.b16 %v939, %v935
  %v1432 = vpack.c.b16 %v940, %v936
  %v1433 = vpack.c.b16 %v941, %v937
  %v1434 = vpack.c.b16 %v946, %v942
  %v1435 = vpack.c.b16 %v947, %v943
  %v1436 = vpack.c.b16 %v948, %v944
  %v1437 = vpack.c.b16 %v949, %v945
  %v1438 = vpack.c.b16 %v954, %v950
  %v1439 = vpack.c.b16 %v955, %v951
  %v1440 = vpack.c.b16 %v956, %v952
  %v1441 = vpack.c.b16 %v957, %v953
  %v1442 = vpack.c.b16 %v962, %v958
  %v1443 = vpack.c.b16 %v963, %v959
  %v1444 = vpack.c.b16 %v964, %v960
  %v1445 = vpack.c.b16 %v965, %v961
  %v1446 = vpack.c.b16 %v970, %v966
  %v1447 = vpack.c.b16 %v971, %v967
  %v1448 = vpack.c.b16 %v972, %v968
  %v1449 = vpack.c.b16 %v973, %v969
  %v1450 = vpack.c.b16 %v978, %v974
  %v1451 = vpack.c.b16 %v979, %v975
  %v1452 = vpack.c.b16 %v980, %v976
  %v1453 = vpack.c.b16 %v981, %v977
  %v1454 = vpack.c.b16 %v986, %v982
  %v1455 = vpack.c.b16 %v987, %v983
  %v1456 = vpack.c.b16 %v988, %v984
  %v1457 = vpack.c.b16 %v989, %v985
  %v1458 = vpack.c.b16 %v994, %v990
  %v1459 = vpack.c.b16 %v995, %v991
  %v1460 = vpack.c.b16 %v996, %v992
  %v1461 = vpack.c.b16 %v997, %v993
  %v1462 = vpack.c.b16 %v1002, %v998
  %v1463 = vpack.c.b16 %v1003, %v999
  %v1464 = vpack.c.b16 %v1004, %v1000
  %v1465 = vpack.c.b16 %v1005, %v1001
  %v1466 = vpack.c.b16 %v1010, %v1006
  %v1467 = vpack.c.b16 %v1011, %v1007
  %v1468 = vpack.c.b16 %v1012, %v1008
  %v1469 = vpack.c.b16 %v1013, %v1009
  %v1470 = vpack.c.b16 %v1018, %v1014
  %v1471 = vpack.c.b16 %v1019, %v1015
  %v1472 = vpack.c.b16 %v1020, %v1016
  %v1473 = vpack.c.b16 %v1021, %v1017
  %v1474 = vpack.c.b16 %v1026, %v1022
  %v1475 = vpack.c.b16 %v1027, %v1023
  %v1476 = vpack.c.b16 %v1028, %v1024
  %v1477 = vpack.c.b16 %v1029, %v1025
  %v1478 = vpack.c.b16 %v1034, %v1030
  %v1479 = vpack.c.b16 %v1035, %v1031
  %v1480 = vpack.c.b16 %v1036, %v1032
  %v1481 = vpack.c.b16 %v1037, %v1033
  %v1482 = vpack.c.b16 %v1042, %v1038
  %v1483 = vpack.c.b16 %v1043, %v1039
  %v1484 = vpack.c.b16 %v1044, %v1040
  %v1485 = vpack.c.b16 %v1045, %v1041
  %v1486 = vpack.c.b16 %v1050, %v1046
  %v1487 = vpack.c.b16 %v1051, %v1047
  %v1488 = vpack.c.b16 %v1052, %v1048
  %v1489 = vpack.c.b16 %v1053, %v1049
  %v1490 = vpack.c.b16 %v1058, %v1054
  %v1491 = vpack.c.b16 %v1059, %v1055
  %v1492 = vpack.c.b16 %v1060, %v1056
  %v1493 = vpack.c.b16 %v1061, %v1057
  %v1494 = vpack.c.b16 %v1066, %v1062
  %v1495 = vpack.c.b16 %v1067, %v1063
  %v1496 = vpack.c.b16 %v1068, %v1064
  %v1497 = vpack.c.b16 %v1069, %v1065
  %v1498 = vpack.c.b16 %v1074, %v1070
  %v1499 = vpack.c.b16 %v1075, %v1071
  %v1500 = vpack.c.b16 %v1076, %v1072
  %v1501 = vpack.c.b16 %v1077, %v1073
  %v1502 = vpack.c.b16 %v1082, %v1078
  %v1503 = vpack.c.b16 %v1083, %v1079
  %v1504 = vpack.c.b16 %v1084, %v1080
  %v1505 = vpack.c.b16 %v1085, %v1081
  %v1506 = vpack.c.b16 %v1090, %v1086
  %v1507 = vpack.c.b16 %v1091, %v1087
  %v1508 = vpack.c.b16 %v1092, %v1088
  %v1509 = vpack.c.b16 %v1093, %v1089
  %v1510 = vpack.c.b16 %v1098, %v1094
  %v1511 = vpack.c.b16 %v1099, %v1095
  %v1512 = vpack.c.b16 %v1100, %v1096
  %v1513 = vpack.c.b16 %v1101, %v1097
  %v1514 = vpack.c.b16 %v1106, %v1102
  %v1515 = vpack.c.b16 %v1107, %v1103
  %v1516 = vpack.c.b16 %v1108, %v1104
  %v1517 = vpack.c.b16 %v1109, %v1105
  %v1518 = vpack.c.b16 %v1114, %v1110
  %v1519 = vpack.c.b16 %v1115, %v1111
  %v1520 = vpack.c.b16 %v1116, %v1112
  %v1521 = vpack.c.b16 %v1117, %v1113
  %v1522 = vpack.c.b16 %v1122, %v1118
  %v1523 = vpack.c.b16 %v1123, %v1119
  %v1524 = vpack.c.b16 %v1124, %v1120
  %v1525 = vpack.c.b16 %v1125, %v1121
  %v1526 = vpack.c.b16 %v1130, %v1126
  %v1527 = vpack.c.b16 %v1131, %v1127
  %v1528 = vpack.c.b16 %v1132, %v1128
  %v1529 = vpack.c.b16 %v1133, %v1129
  %v1530 = vpack.c.b16 %v1138, %v1134
  %v1531 = vpack.c.b16 %v1139, %v1135
  %v1532 = vpack.c.b16 %v1140, %v1136
  %v1533 = vpack.c.b16 %v1141, %v1137
  %v1534 = vpack.c.b16 %v1146, %v1142
  %v1535 = vpack.c.b16 %v1147, %v1143
  %v1536 = vpack.c.b16 %v1148, %v1144
  %v1537 = vpack.c.b16 %v1149, %v1145
  %v1538 = vpack.c.b16 %v1154, %v1150
  %v1539 = vpack.c.b16 %v1155, %v1151
  %v1540 = vpack.c.b16 %v1156, %v1152
  %v1541 = vpack.c.b16 %v1157, %v1153
  %v1542 = vpack.c.b16 %v1162, %v1158
  %v1543 = vpack.c.b16 %v1163, %v1159
  %v1544 = vpack.c.b16 %v1164, %v1160
  %v1545 = vpack.c.b16 %v1165, %v1161
  %v1546 = vpack.c.b16 %v1170, %v1166
  %v1547 = vpack.c.b16 %v1171, %v1167
  %v1548 = vpack.c.b16 %v1172, %v1168
  %v1549 = vpack.c.b16 %v1173, %v1169
  %v1550 = vpack.c.b16 %v1178, %v1174
  %v1551 = vpack.c.b16 %v1179, %v1175
  %v1552 = vpack.c.b16 %v1180, %v1176
  %v1553 = vpack.c.b16 %v1181, %v1177
  %v1554 = vpack.c.b16 %v1186, %v1182
  %v1555 = vpack.c.b16 %v1187, %v1183
  %v1556 = vpack.c.b16 %v1188, %v1184
  %v1557 = vpack.c.b16 %v1189, %v1185
  %v1558 = vpack.c.b16 %v1194, %v1190
  %v1559 = vpack.c.b16 %v1195, %v1191
  %v1560 = vpack.c.b16 %v1196, %v1192
  %v1561 = vpack.c.b16 %v1197, %v1193
  %v1562 = vpack.c.b16 %v1202, %v1198
  %v1563 = vpack.c.b16 %v1203, %v1199
  %v1564 = vpack.c.b16 %v1204, %v1200
  %v1565 = vpack.c.b16 %v1205, %v1201
  %v1566 = vpack.c.b16 %v1210, %v1206
  %v1567 = vpack.c.b16 %v1211, %v1207
  %v1568 = vpack.c.b16 %v1212, %v1208
  %v1569 = vpack.c.b16 %v1213, %v1209
  %v1570 = vpack.c.b16 %v1218, %v1214
  %v1571 = vpack.c.b16 %v1219, %v1215
  %v1572 = vpack.c.b16 %v1220, %v1216
  %v1573 = vpack.c.b16 %v1221, %v1217
  %v1574 = vpack.c.b16 %v1226, %v1222
  %v1575 = vpack.c.b16 %v1227, %v1223
  %v1576 = vpack.c.b16 %v1228, %v1224
  %v1577 = vpack.c.b16 %v1229, %v1225
  %v1578 = vpack.c.b16 %v1234, %v1230
  %v1579 = vpack.c.b16 %v1235, %v1231
  %v1580 = vpack.c.b16 %v1236, %v1232
  %v1581 = vpack.c.b16 %v1237, %v1233
  %v1582 = vpack.c.b16 %v1242, %v1238
  %v1583 = vpack.c.b16 %v1243, %v1239
  %v1584 = vpack.c.b16 %v1244, %v1240
  %v1585 = vpack.c.b16 %v1245, %v1241
  %v1586 = vpack.c.b16 %v1250, %v1246
  %v1587 = vpack.c.b16 %v1251, %v1247
  %v1588 = vpack.c.b16 %v1252, %v1248
  %v1589 = vpack.c.b16 %v1253, %v1249
  %v1590 = vpack.c.b16 %v1258, %v1254
  %v1591 = vpack.c.b16 %v1259, %v1255
  %v1592 = vpack.c.b16 %v1260, %v1256
  %v1593 = vpack.c.b16 %v1261, %v1257
  %v1594 = vpack.c.b16 %v1266, %v1262
  %v1595 = vpack.c.b16 %v1267, %v1263
  %v1596 = vpack.c.b16 %v1268, %v1264
  %v1597 = vpack.c.b16 %v1269, %v1265
  %v1598 = vpack.c.b16 %v1274, %v1270
  %v1599 = vpack.c.b16 %v1275, %v1271
  %v1600 = vpack.c.b16 %v1276, %v1272
  %v1601 = vpack.c.b16 %v1277, %v1273
  %v1602 = vpack.c.b16 %v1282, %v1278
  %v1603 = vpack.c.b16 %v1283, %v1279
  %v1604 = vpack.c.b16 %v1284, %v1280
  %v1605 = vpack.c.b16 %v1285, %v1281
  %v1606 = vpack.c.b16 %v1290, %v1286
  %v1607 = vpack.c.b16 %v1291, %v1287
  %v1608 = vpack.c.b16 %v1292, %v1288
  %v1609 = vpack.c.b16 %v1293, %v1289
  %v1610 = vpack.c.b16 %v1298, %v1294
  %v1611 = vpack.c.b16 %v1299, %v1295
  %v1612 = vpack.c.b16 %v1300, %v1296
  %v1613 = vpack.c.b16 %v1301, %v1297
  %v1614 = vpack.c.b16 %v1306, %v1302
  %v1615 = vpack.c.b16 %v1307, %v1303
  %v1616 = vpack.c.b16 %v1308, %v1304
  %v1617 = vpack.c.b16 %v1309, %v1305
  %v1618 = vpack.c.b16 %v1314, %v1310
  %v1619 = vpack.c.b16 %v1315, %v1311
  %v1620 = vpack.c.b16 %v1316, %v1312
  %v1621 = vpack.c.b16 %v1317, %v1313
  %v1622 = vpack.c.b16 %v1322, %v1318
  %v1623 = vpack.c.b16 %v1323, %v1319
  %v1624 = vpack.c.b16 %v1324, %v1320
  %v1625 = vpack.c.b16 %v1325, %v1321
  %v1626 = vpack.c.b16 %v1330, %v1326
  %v1627 = vpack.c.b16 %v1331, %v1327
  %v1628 = vpack.c.b16 %v1332, %v1328
  %v1629 = vpack.c.b16 %v1333, %v1329
  %v1630 = vpack.c.b16 %v1338, %v1334
  %v1631 = vpack.c.b16 %v1339, %v1335
  %v1632 = vpack.c.b16 %v1340, %v1336
  %v1633 = vpack.c.b16 %v1341, %v1337
  %v1634 = vpack.c.b16 %v1346, %v1342
  %v1635 = vpack.c.b16 %v1347, %v1343
  %v1636 = vpack.c.b16 %v1348, %v1344
  %v1637 = vpack.c.b16 %v1349, %v1345
  %v1638 = vpack.c.b16 %v1354, %v1350
  %v1639 = vpack.c.b16 %v1355, %v1351
  %v1640 = vpack.c.b16 %v1356, %v1352
  %v1641 = vpack.c.b16 %v1357, %v1353
  %v1642 = vpack.c.b16 %v1362, %v1358
  %v1643 = vpack.c.b16 %v1363, %v1359
  %v1644 = vpack.c.b16 %v1364, %v1360
  %v1645 = vpack.c.b16 %v1365, %v1361
  %v1646 = vpack.c.b16 %v1370, %v1366
  %v1647 = vpack.c.b16 %v1371, %v1367
  %v1648 = vpack.c.b16 %v1372, %v1368
  %v1649 = vpack.c.b16 %v1373, %v1369
  %v1650 = vpack.c.b16 %v1378, %v1374
  %v1651 = vpack.c.b16 %v1379, %v1375
  %v1652 = vpack.c.b16 %v1380, %v1376
  %v1653 = vpack.c.b16 %v1381, %v1377
  %v1654 = vpack.c.b16 %v1386, %v1382
  %v1655 = vpack.c.b16 %v1387, %v1383
  %v1656 = vpack.c.b16 %v1388, %v1384
  %v1657 = vpack.c.b16 %v1389, %v1385
  %v1658 = vpack.c.b16 %v1394, %v1390
  %v1659 = vpack.c.b16 %v1395, %v1391
  %v1660 = vpack.c.b16 %v1396, %v1392
  %v1661 = vpack.c.b16 %v1397, %v1393
  %v1662 = vpack.c.b16 %v1402, %v1398
  %v1663 = vpack.c.b16 %v1403, %v1399
  %v1664 = vpack.c.b16 %v1404, %v1400
  %v1665 = vpack.c.b16 %v1405, %v1401
  %v1666 = vpack.c.b16 %v1410, %v1406
  %v1667 = vpack.c.b16 %v1411, %v1407
  %v1668 = vpack.c.b16 %v1412, %v1408
  %v1669 = vpack.c.b16 %v1413, %v1409
  %1926 = vmatprep.subr.bf16.mxu0 %v1443
  %1927 = vmatpush1.bf16.msra.mxu0 %v1442
  %1928 = vmatprep.subr.bf16.mxu0 %v1439
  %1929 = vmatpush1.bf16.msra.mxu0 %v1438
  %1930 = vmatprep.subr.bf16.mxu0 %v1435
  %1931 = vmatpush1.bf16.msra.mxu0 %v1434
  %1932 = vmatprep.subr.bf16.mxu0 %v1431
  %1933 = vmatpush1.bf16.msra.mxu0 %v1430
  %1934 = vmatprep.subr.bf16.mxu0 %v1427
  %1935 = vmatpush1.bf16.msra.mxu0 %v1426
  %1936 = vmatprep.subr.bf16.mxu0 %v1423
  %1937 = vmatpush1.bf16.msra.mxu0 %v1422
  %1938 = vmatprep.subr.bf16.mxu0 %v1419
  %1939 = vmatpush1.bf16.msra.mxu0 %v1418
  %1940 = vmatprep.subr.bf16.mxu0 %v1415
  %1941 = vmatpush1.bf16.msra.mxu0 %v1414
  %1942 = vmatprep.subr.bf16.mxu0 %v1475
  %1943 = vmatpush2.bf16.msra.mxu0 %v1474
  %1944 = vmatprep.subr.bf16.mxu0 %v1471
  %1945 = vmatpush2.bf16.msra.mxu0 %v1470
  %1946 = vmatprep.subr.bf16.mxu0 %v1467
  %1947 = vmatpush2.bf16.msra.mxu0 %v1466
  %1948 = vmatprep.subr.bf16.mxu0 %v1463
  %1949 = vmatpush2.bf16.msra.mxu0 %v1462
  %1950 = vmatprep.subr.bf16.mxu0 %v1459
  %1951 = vmatpush2.bf16.msra.mxu0 %v1458
  %1952 = vmatprep.subr.bf16.mxu0 %v1455
  %1953 = vmatpush2.bf16.msra.mxu0 %v1454
  %1954 = vmatprep.subr.bf16.mxu0 %v1451
  %1955 = vmatpush2.bf16.msra.mxu0 %v1450
  %1956 = vmatprep.subr.bf16.mxu0 %v1447
  %1957 = vmatpush2.bf16.msra.mxu0 %v1446
  %1958 = vmatprep.mubr.bf16.mxu0 %v631
  %1959 = vmatmul.mubr.bf16.gmra.mxu0 %v630
  %v1960 = vpop.f32.mrf.mxu0
  %v1961 = vadd.f32 0.0, %v1960
  %v1962 = vpop.f32.mrf.mxu0
  %v1963 = vadd.f32 0.0, %v1962
  %v1964 = vpop.f32.mrf.mxu0
  %v1965 = vpop.f32.mrf.mxu0
  %1966 = vdwg.mxu0
  %1967 = vmatprep.subr.bf16.mxu0 %v1507
  %1968 = vmatpush1.bf16.msra.mxu0 %v1506
  %1969 = vmatprep.subr.bf16.mxu0 %v1503
  %1970 = vmatpush1.bf16.msra.mxu0 %v1502
  %1971 = vmatprep.subr.bf16.mxu0 %v1499
  %1972 = vmatpush1.bf16.msra.mxu0 %v1498
  %1973 = vmatprep.subr.bf16.mxu0 %v1495
  %1974 = vmatpush1.bf16.msra.mxu0 %v1494
  %1975 = vmatprep.subr.bf16.mxu0 %v1491
  %1976 = vmatpush1.bf16.msra.mxu0 %v1490
  %1977 = vmatprep.subr.bf16.mxu0 %v1487
  %1978 = vmatpush1.bf16.msra.mxu0 %v1486
  %1979 = vmatprep.subr.bf16.mxu0 %v1483
  %1980 = vmatpush1.bf16.msra.mxu0 %v1482
  %1981 = vmatprep.subr.bf16.mxu0 %v1479
  %1982 = vmatpush1.bf16.msra.mxu0 %v1478
  %1983 = vmatprep.subr.bf16.mxu0 %v1539
  %1984 = vmatpush2.bf16.msra.mxu0 %v1538
  %1985 = vmatprep.subr.bf16.mxu0 %v1535
  %1986 = vmatpush2.bf16.msra.mxu0 %v1534
  %1987 = vmatprep.subr.bf16.mxu0 %v1531
  %1988 = vmatpush2.bf16.msra.mxu0 %v1530
  %1989 = vmatprep.subr.bf16.mxu0 %v1527
  %1990 = vmatpush2.bf16.msra.mxu0 %v1526
  %1991 = vmatprep.subr.bf16.mxu0 %v1523
  %1992 = vmatpush2.bf16.msra.mxu0 %v1522
  %1993 = vmatprep.subr.bf16.mxu0 %v1519
  %1994 = vmatpush2.bf16.msra.mxu0 %v1518
  %1995 = vmatprep.subr.bf16.mxu0 %v1515
  %1996 = vmatpush2.bf16.msra.mxu0 %v1514
  %1997 = vmatprep.subr.bf16.mxu0 %v1511
  %1998 = vmatpush2.bf16.msra.mxu0 %v1510
  %1999 = vmatprep.mubr.bf16.mxu0 %v633
  %2000 = vmatmul.mubr.bf16.gmra.mxu0 %v632
  %v2001 = vpop.f32.mrf.mxu0
  %v2002 = vadd.f32 %v1961, %v2001
  %v2003 = vpop.f32.mrf.mxu0
  %v2004 = vadd.f32 %v1963, %v2003
  %v2005 = vpop.f32.mrf.mxu0
  %v2006 = vpop.f32.mrf.mxu0
  %2007 = vdwg.mxu0
  %2008 = vmatprep.subr.bf16.mxu0 %v1571
  %2009 = vmatpush1.bf16.msra.mxu0 %v1570
  %2010 = vmatprep.subr.bf16.mxu0 %v1567
  %2011 = vmatpush1.bf16.msra.mxu0 %v1566
  %2012 = vmatprep.subr.bf16.mxu0 %v1563
  %2013 = vmatpush1.bf16.msra.mxu0 %v1562
  %2014 = vmatprep.subr.bf16.mxu0 %v1559
  %2015 = vmatpush1.bf16.msra.mxu0 %v1558
  %2016 = vmatprep.subr.bf16.mxu0 %v1555
  %2017 = vmatpush1.bf16.msra.mxu0 %v1554
  %2018 = vmatprep.subr.bf16.mxu0 %v1551
  %2019 = vmatpush1.bf16.msra.mxu0 %v1550
  %2020 = vmatprep.subr.bf16.mxu0 %v1547
  %2021 = vmatpush1.bf16.msra.mxu0 %v1546
  %2022 = vmatprep.subr.bf16.mxu0 %v1543
  %2023 = vmatpush1.bf16.msra.mxu0 %v1542
  %2024 = vmatprep.subr.bf16.mxu0 %v1603
  %2025 = vmatpush2.bf16.msra.mxu0 %v1602
  %2026 = vmatprep.subr.bf16.mxu0 %v1599
  %2027 = vmatpush2.bf16.msra.mxu0 %v1598
  %2028 = vmatprep.subr.bf16.mxu0 %v1595
  %2029 = vmatpush2.bf16.msra.mxu0 %v1594
  %2030 = vmatprep.subr.bf16.mxu0 %v1591
  %2031 = vmatpush2.bf16.msra.mxu0 %v1590
  %2032 = vmatprep.subr.bf16.mxu0 %v1587
  %2033 = vmatpush2.bf16.msra.mxu0 %v1586
  %2034 = vmatprep.subr.bf16.mxu0 %v1583
  %2035 = vmatpush2.bf16.msra.mxu0 %v1582
  %2036 = vmatprep.subr.bf16.mxu0 %v1579
  %2037 = vmatpush2.bf16.msra.mxu0 %v1578
  %2038 = vmatprep.subr.bf16.mxu0 %v1575
  %2039 = vmatpush2.bf16.msra.mxu0 %v1574
  %2040 = vmatprep.mubr.bf16.mxu0 %v635
  %2041 = vmatmul.mubr.bf16.gmra.mxu0 %v634
  %v2042 = vpop.f32.mrf.mxu0
  %v2043 = vadd.f32 %v2002, %v2042
  %v2044 = vpop.f32.mrf.mxu0
  %v2045 = vadd.f32 %v2004, %v2044
  %v2046 = vpop.f32.mrf.mxu0
  %v2047 = vpop.f32.mrf.mxu0
  %2048 = vdwg.mxu0
  %2049 = vmatprep.subr.bf16.mxu0 %v1635
  %2050 = vmatpush1.bf16.msra.mxu0 %v1634
  %2051 = vmatprep.subr.bf16.mxu0 %v1631
  %2052 = vmatpush1.bf16.msra.mxu0 %v1630
  %2053 = vmatprep.subr.bf16.mxu0 %v1627
  %2054 = vmatpush1.bf16.msra.mxu0 %v1626
  %2055 = vmatprep.subr.bf16.mxu0 %v1623
  %2056 = vmatpush1.bf16.msra.mxu0 %v1622
  %2057 = vmatprep.subr.bf16.mxu0 %v1619
  %2058 = vmatpush1.bf16.msra.mxu0 %v1618
  %2059 = vmatprep.subr.bf16.mxu0 %v1615
  %2060 = vmatpush1.bf16.msra.mxu0 %v1614
  %2061 = vmatprep.subr.bf16.mxu0 %v1611
  %2062 = vmatpush1.bf16.msra.mxu0 %v1610
  %2063 = vmatprep.subr.bf16.mxu0 %v1607
  %2064 = vmatpush1.bf16.msra.mxu0 %v1606
  %2065 = vmatprep.subr.bf16.mxu0 %v1667
  %2066 = vmatpush2.bf16.msra.mxu0 %v1666
  %2067 = vmatprep.subr.bf16.mxu0 %v1663
  %2068 = vmatpush2.bf16.msra.mxu0 %v1662
  %2069 = vmatprep.subr.bf16.mxu0 %v1659
  %2070 = vmatpush2.bf16.msra.mxu0 %v1658
  %2071 = vmatprep.subr.bf16.mxu0 %v1655
  %2072 = vmatpush2.bf16.msra.mxu0 %v1654
  %2073 = vmatprep.subr.bf16.mxu0 %v1651
  %2074 = vmatpush2.bf16.msra.mxu0 %v1650
  %2075 = vmatprep.subr.bf16.mxu0 %v1647
  %2076 = vmatpush2.bf16.msra.mxu0 %v1646
  %2077 = vmatprep.subr.bf16.mxu0 %v1643
  %2078 = vmatpush2.bf16.msra.mxu0 %v1642
  %2079 = vmatprep.subr.bf16.mxu0 %v1639
  %2080 = vmatpush2.bf16.msra.mxu0 %v1638
  %2081 = vmatprep.mubr.bf16.mxu0 %v637
  %2082 = vmatmul.mubr.bf16.gmra.mxu0 %v636
  %v2083 = vpop.f32.mrf.mxu0
  %v2084 = vadd.f32 %v2043, %v2083
  %v2085 = vpop.f32.mrf.mxu0
  %v2086 = vadd.f32 %v2045, %v2085
  %v2087 = vpop.f32.mrf.mxu0
  %v2088 = vpop.f32.mrf.mxu0
  %2089 = vdwg.mxu0
  %2090 = vmatprep.subr.bf16.mxu0 %v1445
  %2091 = vmatpush1.bf16.msra.mxu0 %v1444
  %2092 = vmatprep.subr.bf16.mxu0 %v1441
  %2093 = vmatpush1.bf16.msra.mxu0 %v1440
  %2094 = vmatprep.subr.bf16.mxu0 %v1437
  %2095 = vmatpush1.bf16.msra.mxu0 %v1436
  %2096 = vmatprep.subr.bf16.mxu0 %v1433
  %2097 = vmatpush1.bf16.msra.mxu0 %v1432
  %2098 = vmatprep.subr.bf16.mxu0 %v1429
  %2099 = vmatpush1.bf16.msra.mxu0 %v1428
  %2100 = vmatprep.subr.bf16.mxu0 %v1425
  %2101 = vmatpush1.bf16.msra.mxu0 %v1424
  %2102 = vmatprep.subr.bf16.mxu0 %v1421
  %2103 = vmatpush1.bf16.msra.mxu0 %v1420
  %2104 = vmatprep.subr.bf16.mxu0 %v1417
  %2105 = vmatpush1.bf16.msra.mxu0 %v1416
  %2106 = vmatprep.subr.bf16.mxu0 %v1477
  %2107 = vmatpush2.bf16.msra.mxu0 %v1476
  %2108 = vmatprep.subr.bf16.mxu0 %v1473
  %2109 = vmatpush2.bf16.msra.mxu0 %v1472
  %2110 = vmatprep.subr.bf16.mxu0 %v1469
  %2111 = vmatpush2.bf16.msra.mxu0 %v1468
  %2112 = vmatprep.subr.bf16.mxu0 %v1465
  %2113 = vmatpush2.bf16.msra.mxu0 %v1464
  %2114 = vmatprep.subr.bf16.mxu0 %v1461
  %2115 = vmatpush2.bf16.msra.mxu0 %v1460
  %2116 = vmatprep.subr.bf16.mxu0 %v1457
  %2117 = vmatpush2.bf16.msra.mxu0 %v1456
  %2118 = vmatprep.subr.bf16.mxu0 %v1453
  %2119 = vmatpush2.bf16.msra.mxu0 %v1452
  %2120 = vmatprep.subr.bf16.mxu0 %v1449
  %2121 = vmatpush2.bf16.msra.mxu0 %v1448
  %2122 = vmatprep.mubr.bf16.mxu0 %v631
  %2123 = vmatmul.mubr.bf16.gmra.mxu0 %v630
  %v2124 = vpop.f32.mrf.mxu0
  %v2125 = vadd.f32 0.0, %v2124
  %v2126 = vpop.f32.mrf.mxu0
  %v2127 = vadd.f32 0.0, %v2126
  %v2128 = vpop.f32.mrf.mxu0
  %v2129 = vpop.f32.mrf.mxu0
  %2130 = vdwg.mxu0
  %2131 = vmatprep.subr.bf16.mxu0 %v1509
  %2132 = vmatpush1.bf16.msra.mxu0 %v1508
  %2133 = vmatprep.subr.bf16.mxu0 %v1505
  %2134 = vmatpush1.bf16.msra.mxu0 %v1504
  %2135 = vmatprep.subr.bf16.mxu0 %v1501
  %2136 = vmatpush1.bf16.msra.mxu0 %v1500
  %2137 = vmatprep.subr.bf16.mxu0 %v1497
  %2138 = vmatpush1.bf16.msra.mxu0 %v1496
  %2139 = vmatprep.subr.bf16.mxu0 %v1493
  %2140 = vmatpush1.bf16.msra.mxu0 %v1492
  %2141 = vmatprep.subr.bf16.mxu0 %v1489
  %2142 = vmatpush1.bf16.msra.mxu0 %v1488
  %2143 = vmatprep.subr.bf16.mxu0 %v1485
  %2144 = vmatpush1.bf16.msra.mxu0 %v1484
  %2145 = vmatprep.subr.bf16.mxu0 %v1481
  %2146 = vmatpush1.bf16.msra.mxu0 %v1480
  %2147 = vmatprep.subr.bf16.mxu0 %v1541
  %2148 = vmatpush2.bf16.msra.mxu0 %v1540
  %2149 = vmatprep.subr.bf16.mxu0 %v1537
  %2150 = vmatpush2.bf16.msra.mxu0 %v1536
  %2151 = vmatprep.subr.bf16.mxu0 %v1533
  %2152 = vmatpush2.bf16.msra.mxu0 %v1532
  %2153 = vmatprep.subr.bf16.mxu0 %v1529
  %2154 = vmatpush2.bf16.msra.mxu0 %v1528
  %2155 = vmatprep.subr.bf16.mxu0 %v1525
  %2156 = vmatpush2.bf16.msra.mxu0 %v1524
  %2157 = vmatprep.subr.bf16.mxu0 %v1521
  %2158 = vmatpush2.bf16.msra.mxu0 %v1520
  %2159 = vmatprep.subr.bf16.mxu0 %v1517
  %2160 = vmatpush2.bf16.msra.mxu0 %v1516
  %2161 = vmatprep.subr.bf16.mxu0 %v1513
  %2162 = vmatpush2.bf16.msra.mxu0 %v1512
  %2163 = vmatprep.mubr.bf16.mxu0 %v633
  %2164 = vmatmul.mubr.bf16.gmra.mxu0 %v632
  %v2165 = vpop.f32.mrf.mxu0
  %v2166 = vadd.f32 %v2125, %v2165
  %v2167 = vpop.f32.mrf.mxu0
  %v2168 = vadd.f32 %v2127, %v2167
  %v2169 = vpop.f32.mrf.mxu0
  %v2170 = vpop.f32.mrf.mxu0
  %2171 = vdwg.mxu0
  %2172 = vmatprep.subr.bf16.mxu0 %v1573
  %2173 = vmatpush1.bf16.msra.mxu0 %v1572
  %2174 = vmatprep.subr.bf16.mxu0 %v1569
  %2175 = vmatpush1.bf16.msra.mxu0 %v1568
  %2176 = vmatprep.subr.bf16.mxu0 %v1565
  %2177 = vmatpush1.bf16.msra.mxu0 %v1564
  %2178 = vmatprep.subr.bf16.mxu0 %v1561
  %2179 = vmatpush1.bf16.msra.mxu0 %v1560
  %2180 = vmatprep.subr.bf16.mxu0 %v1557
  %2181 = vmatpush1.bf16.msra.mxu0 %v1556
  %2182 = vmatprep.subr.bf16.mxu0 %v1553
  %2183 = vmatpush1.bf16.msra.mxu0 %v1552
  %2184 = vmatprep.subr.bf16.mxu0 %v1549
  %2185 = vmatpush1.bf16.msra.mxu0 %v1548
  %2186 = vmatprep.subr.bf16.mxu0 %v1545
  %2187 = vmatpush1.bf16.msra.mxu0 %v1544
  %2188 = vmatprep.subr.bf16.mxu0 %v1605
  %2189 = vmatpush2.bf16.msra.mxu0 %v1604
  %2190 = vmatprep.subr.bf16.mxu0 %v1601
  %2191 = vmatpush2.bf16.msra.mxu0 %v1600
  %2192 = vmatprep.subr.bf16.mxu0 %v1597
  %2193 = vmatpush2.bf16.msra.mxu0 %v1596
  %2194 = vmatprep.subr.bf16.mxu0 %v1593
  %2195 = vmatpush2.bf16.msra.mxu0 %v1592
  %2196 = vmatprep.subr.bf16.mxu0 %v1589
  %2197 = vmatpush2.bf16.msra.mxu0 %v1588
  %2198 = vmatprep.subr.bf16.mxu0 %v1585
  %2199 = vmatpush2.bf16.msra.mxu0 %v1584
  %2200 = vmatprep.subr.bf16.mxu0 %v1581
  %2201 = vmatpush2.bf16.msra.mxu0 %v1580
  %2202 = vmatprep.subr.bf16.mxu0 %v1577
  %2203 = vmatpush2.bf16.msra.mxu0 %v1576
  %2204 = vmatprep.mubr.bf16.mxu0 %v635
  %2205 = vmatmul.mubr.bf16.gmra.mxu0 %v634
  %v2206 = vpop.f32.mrf.mxu0
  %v2207 = vadd.f32 %v2166, %v2206
  %v2208 = vpop.f32.mrf.mxu0
  %v2209 = vadd.f32 %v2168, %v2208
  %v2210 = vpop.f32.mrf.mxu0
  %v2211 = vpop.f32.mrf.mxu0
  %2212 = vdwg.mxu0
  %2213 = vmatprep.subr.bf16.mxu0 %v1637
  %2214 = vmatpush1.bf16.msra.mxu0 %v1636
  %2215 = vmatprep.subr.bf16.mxu0 %v1633
  %2216 = vmatpush1.bf16.msra.mxu0 %v1632
  %2217 = vmatprep.subr.bf16.mxu0 %v1629
  %2218 = vmatpush1.bf16.msra.mxu0 %v1628
  %2219 = vmatprep.subr.bf16.mxu0 %v1625
  %2220 = vmatpush1.bf16.msra.mxu0 %v1624
  %2221 = vmatprep.subr.bf16.mxu0 %v1621
  %2222 = vmatpush1.bf16.msra.mxu0 %v1620
  %2223 = vmatprep.subr.bf16.mxu0 %v1617
  %2224 = vmatpush1.bf16.msra.mxu0 %v1616
  %2225 = vmatprep.subr.bf16.mxu0 %v1613
  %2226 = vmatpush1.bf16.msra.mxu0 %v1612
  %2227 = vmatprep.subr.bf16.mxu0 %v1609
  %2228 = vmatpush1.bf16.msra.mxu0 %v1608
  %2229 = vmatprep.subr.bf16.mxu0 %v1669
  %2230 = vmatpush2.bf16.msra.mxu0 %v1668
  %2231 = vmatprep.subr.bf16.mxu0 %v1665
  %2232 = vmatpush2.bf16.msra.mxu0 %v1664
  %2233 = vmatprep.subr.bf16.mxu0 %v1661
  %2234 = vmatpush2.bf16.msra.mxu0 %v1660
  %2235 = vmatprep.subr.bf16.mxu0 %v1657
  %2236 = vmatpush2.bf16.msra.mxu0 %v1656
  %2237 = vmatprep.subr.bf16.mxu0 %v1653
  %2238 = vmatpush2.bf16.msra.mxu0 %v1652
  %2239 = vmatprep.subr.bf16.mxu0 %v1649
  %2240 = vmatpush2.bf16.msra.mxu0 %v1648
  %2241 = vmatprep.subr.bf16.mxu0 %v1645
  %2242 = vmatpush2.bf16.msra.mxu0 %v1644
  %2243 = vmatprep.subr.bf16.mxu0 %v1641
  %2244 = vmatpush2.bf16.msra.mxu0 %v1640
  %2245 = vmatprep.mubr.bf16.mxu0 %v637
  %2246 = vmatmul.mubr.bf16.gmra.mxu0 %v636
  %v2247 = vpop.f32.mrf.mxu0
  %v2248 = vadd.f32 %v2207, %v2247
  %v2249 = vpop.f32.mrf.mxu0
  %v2250 = vadd.f32 %v2209, %v2249
  %v2251 = vpop.f32.mrf.mxu0
  %v2252 = vpop.f32.mrf.mxu0
  %2253 = vdwg.mxu0
  %v2258 = vcombine.low %v2084, %v2086
  %v2259 = vcombine.low %v2248, %v2250
  %v2261 = vunpack.c.l.s4 1983009808
  %v2262 = vunpack.c.0.s8 %v2261
  %v2263 = vlaneseq
  %v2264 = vshrl.u32 %v2263, 7
  %v2265 = vsub.s32 %v2262, %v2264
  %v2266 = vrot.slane %v2258, %v2265
  %v2268 = vunpack.c.l.s4 1983009808
  %v2269 = vunpack.c.0.s8 %v2268
  %v2270 = vlaneseq
  %v2271 = vshrl.u32 %v2270, 7
  %v2272 = vsub.s32 %v2269, %v2271
  %v2273 = vrot.slane %v2259, %v2272
  %v2274 = vcombine.low %v2266, %v2273
  %2276 = vst [vmem:[%s4] sm:$0xff] %v2274
  // Predicated region
  $region18: #{pointnet_dense_cls_forward.8} parent=0 // pred_check
    _
  $region19: #{pointnet_dense_cls_forward.8} parent=0 // pred_check_branch
    %2278 = sbr.rel (0) target = $region21
  $region20: #{pointnet_dense_cls_forward.8} parent=0 // pred_region
    _
  $region21: #{pointnet_dense_cls_forward.8} parent=0 // pred_fallthru
    _
  // Predicated region
  $region22: #{pointnet_dense_cls_forward.8} parent=0 // pred_check
    _
  $region23: #{pointnet_dense_cls_forward.8} parent=0 // pred_check_branch
    %2280 = sbr.rel (0) target = $region25
  $region24: #{pointnet_dense_cls_forward.8} parent=0 // pred_region
    _
  $region25: #{pointnet_dense_cls_forward.8} parent=0 // pred_fallthru
    _

// kernel: pointnet_dense_cls_forward.6
$region0: #{pointnet_dense_cls_forward.6}
  #allocation0 [shape = 'u32[]', space=smem, size = 0x4, offset = 0x4, fixed_abs, tag = 'smem constant byte address 0x4 - core index']
  #allocation1 [shape = 'u32[144,128]{1,0:T(1,128)}', space=vmem, size = 0x12000, scoped, tag = 'internal scratch']
  %s0 = inlined_call_operand.vmem [shape: f32[2,1,1024], index: 0, kind: input, shape index: {}]
  %s1 = inlined_call_operand.vmem [shape: f32[1,1024], index: 1, kind: input, shape index: {}]
  %s2 = inlined_call_operand.vmem [shape: f32[1,1024], index: 2, kind: input, shape index: {}]
  %s3 = inlined_call_operand.hbm [shape: bf16[1024,512], index: 3, kind: input, shape index: {}]
  %s4 = inlined_call_operand.vmem [shape: f32[1,512], index: 4, kind: input, shape index: {}]
  %s5 = inlined_call_operand.vmem [shape: f32[1,512], index: 5, kind: input, shape index: {}]
  %s6 = inlined_call_operand.vmem [shape: bf16[512,256], index: 6, kind: input, shape index: {}]
  %s7 = inlined_call_operand.vmem [shape: f32[1,256], index: 7, kind: input, shape index: {}]
  %s8 = inlined_call_operand.vmem [shape: f32[1,256], index: 8, kind: input, shape index: {}]
  %s9 = inlined_call_operand.vmem [shape: bf16[256,9], index: 9, kind: input, shape index: {}]
  %s10 = inlined_call_operand.vmem [shape: f32[1,9], index: 10, kind: input, shape index: {}]
  %s11 = inlined_call_operand.vmem [shape: f32[2,9], index: 11, kind: output, shape index: {}]
  %s12 = sld [smem:[#allocation0]]
  $region58: #{pointnet_dense_cls_forward.6} parent=0
    _
  %s14 = ssub.s32 1, %s12
  %s15 = scalar_select 0, %s14, %s12
  $region1: #{pointnet_dense_cls_forward.6} parent=0
    #allocation2 [shape = 'u8[1048576]{0}', space=vmem, size = 0x100000, scoped, tag = 'input window, operand 3, single buffered']
    #allocation3 [shape = 's32[1]{0}', space=sflag, size = 0x4, scoped, tag = 'scoped memory for pointnet_dense_cls_forward.6']
    %16 = vsyncpa [#allocation3], 0
    // Predicated region
    $region2: #{pointnet_dense_cls_forward.6} parent=1 // pred_check
      _
    $region3: #{pointnet_dense_cls_forward.6} parent=1 // pred_check_branch
      %18 = sbr.rel (0) target = $region5
    $region4: #{pointnet_dense_cls_forward.6} parent=1 // pred_region
      _
    $region5: #{pointnet_dense_cls_forward.6} parent=1 // pred_fallthru
      _
    // Predicated region
    $region6: #{pointnet_dense_cls_forward.6} parent=1 // pred_check
      _
    $region7: #{pointnet_dense_cls_forward.6} parent=1 // pred_check_branch
      %20 = sbr.rel (0) target = $region9
    $region8: #{pointnet_dense_cls_forward.6} parent=1 // pred_region
      _
    $region9: #{pointnet_dense_cls_forward.6} parent=1 // pred_fallthru
      _
    // Predicated region
    $region10: #{pointnet_dense_cls_forward.6} parent=1 // pred_check
      _
    $region11: #{pointnet_dense_cls_forward.6} parent=1 // pred_check_branch
      %22 = sbr.rel (0) target = $region13
    $region12: #{pointnet_dense_cls_forward.6} parent=1 // pred_region
      _
    $region13: #{pointnet_dense_cls_forward.6} parent=1 // pred_fallthru
      _
    // Predicated region
    $region14: #{pointnet_dense_cls_forward.6} parent=1 // pred_check
      _
    $region15: #{pointnet_dense_cls_forward.6} parent=1 // pred_check_branch
      %24 = sbr.rel (0) target = $region17
    $region16: #{pointnet_dense_cls_forward.6} parent=1 // pred_region
      %s26 = ssub.s32 32768, 32768
      %27 = vsyncadd [#allocation3], %s26
      %s28 = sshll.u32 [#allocation2], 4
      %s29 = int_to_ptr.vmem [resolvable:$true] %s28
      %34 = dma.hbm_to_vmem [thread:$0]  %s3, 32768, %s29, [#allocation3], 256, 256, 16
    $region17: #{pointnet_dense_cls_forward.6} parent=1 // pred_fallthru
      _
    // Predicated region
    $region18: #{pointnet_dense_cls_forward.6} parent=1 // pred_check
      _
    $region19: #{pointnet_dense_cls_forward.6} parent=1 // pred_check_branch
      %36 = sbr.rel (0) target = $region21
    $region20: #{pointnet_dense_cls_forward.6} parent=1 // pred_region
      _
    $region21: #{pointnet_dense_cls_forward.6} parent=1 // pred_fallthru
      _
    // Predicated region
    $region22: #{pointnet_dense_cls_forward.6} parent=1 // pred_check
      _
    $region23: #{pointnet_dense_cls_forward.6} parent=1 // pred_check_branch
      %38 = sbr.rel (0) target = $region25
    $region24: #{pointnet_dense_cls_forward.6} parent=1 // pred_region
      _
    $region25: #{pointnet_dense_cls_forward.6} parent=1 // pred_fallthru
      _
    // Predicated region
    $region26: #{pointnet_dense_cls_forward.6} parent=1 // pred_check
      _
    $region27: #{pointnet_dense_cls_forward.6} parent=1 // pred_check_branch
      %40 = sbr.rel (0) target = $region29
    $region28: #{pointnet_dense_cls_forward.6} parent=1 // pred_region
      _
    $region29: #{pointnet_dense_cls_forward.6} parent=1 // pred_fallthru
      _
    // Predicated region
    $region30: #{pointnet_dense_cls_forward.6} parent=1 // pred_check
      _
    $region31: #{pointnet_dense_cls_forward.6} parent=1 // pred_check_branch
      %42 = sbr.rel (0) target = $region33
    $region32: #{pointnet_dense_cls_forward.6} parent=1 // pred_region
      _
    $region33: #{pointnet_dense_cls_forward.6} parent=1 // pred_fallthru
      _
    // Predicated region
    $region34: #{pointnet_dense_cls_forward.6} parent=1 // pred_check
      _
    $region35: #{pointnet_dense_cls_forward.6} parent=1 // pred_check_branch
      %44 = sbr.rel (0) target = $region37
    $region36: #{pointnet_dense_cls_forward.6} parent=1 // pred_region
      _
    $region37: #{pointnet_dense_cls_forward.6} parent=1 // pred_fallthru
      _
    // Predicated region
    $region38: #{pointnet_dense_cls_forward.6} parent=1 // pred_check
      _
    $region39: #{pointnet_dense_cls_forward.6} parent=1 // pred_check_branch
      %46 = sbr.rel (0) target = $region41
    $region40: #{pointnet_dense_cls_forward.6} parent=1 // pred_region
      _
    $region41: #{pointnet_dense_cls_forward.6} parent=1 // pred_fallthru
      _
    // Predicated region
    $region42: #{pointnet_dense_cls_forward.6} parent=1 // pred_check
      _
    $region43: #{pointnet_dense_cls_forward.6} parent=1 // pred_check_branch
      %48 = sbr.rel (0) target = $region45
    $region44: #{pointnet_dense_cls_forward.6} parent=1 // pred_region
      _
    $region45: #{pointnet_dense_cls_forward.6} parent=1 // pred_fallthru
      _
    // Predicated region
    $region46: #{pointnet_dense_cls_forward.6} parent=1 // pred_check
      _
    $region47: #{pointnet_dense_cls_forward.6} parent=1 // pred_check_branch
      %50 = sbr.rel (0) target = $region49
    $region48: #{pointnet_dense_cls_forward.6} parent=1 // pred_region
      %51 = dma.done [#allocation3], 32768
    $region49: #{pointnet_dense_cls_forward.6} parent=1 // pred_fallthru
      _
    %v53 = vld [vmem:[%s0] sm:$0xff]
    %v54 = vld [vmem:[%s0 + $0x8] sm:$0xff]
    %v55 = vld [vmem:[%s1] sm:$0xff]
    %v57 = vlaneseq
    %v58 = vshrl.u32 %v57, 7
    %v59 = vsub.s32 0, %v58
    %v60 = vrot.slane %v55, %v59
    %v61 = vlaneseq
    %v62 = vshrl.u32 %v61, 7
    %v63 = vsub.s32 1, %v62
    %v64 = vrot.slane %v55, %v63
    %v65 = vlaneseq
    %v66 = vshrl.u32 %v65, 7
    %v67 = vsub.s32 2, %v66
    %v68 = vrot.slane %v55, %v67
    %v69 = vlaneseq
    %v70 = vshrl.u32 %v69, 7
    %v71 = vsub.s32 3, %v70
    %v72 = vrot.slane %v55, %v71
    %v73 = vlaneseq
    %v74 = vshrl.u32 %v73, 7
    %v75 = vsub.s32 4, %v74
    %v76 = vrot.slane %v55, %v75
    %v77 = vlaneseq
    %v78 = vshrl.u32 %v77, 7
    %v79 = vsub.s32 5, %v78
    %v80 = vrot.slane %v55, %v79
    %v81 = vlaneseq
    %v82 = vshrl.u32 %v81, 7
    %v83 = vsub.s32 6, %v82
    %v84 = vrot.slane %v55, %v83
    %v85 = vlaneseq
    %v86 = vshrl.u32 %v85, 7
    %v87 = vsub.s32 7, %v86
    %v88 = vrot.slane %v55, %v87
    %v89 = vcombine.low %v60, %v64
    %v90 = vcombine.low %v68, %v72
    %v91 = vcombine.low %v76, %v80
    %v92 = vcombine.low %v84, %v88
    %v94 = vunpack.c.l.s4 1966171168
    %v95 = vunpack.c.0.s8 %v94
    %v96 = vlaneseq
    %v97 = vshrl.u32 %v96, 7
    %v98 = vsub.s32 %v95, %v97
    %v99 = vrot.slane %v89, %v98
    %v101 = vunpack.c.l.s4 1966171168
    %v102 = vunpack.c.0.s8 %v101
    %v103 = vlaneseq
    %v104 = vshrl.u32 %v103, 7
    %v105 = vsub.s32 %v102, %v104
    %v106 = vrot.slane %v90, %v105
    %v108 = vunpack.c.l.s4 1966171168
    %v109 = vunpack.c.0.s8 %v108
    %v110 = vlaneseq
    %v111 = vshrl.u32 %v110, 7
    %v112 = vsub.s32 %v109, %v111
    %v113 = vrot.slane %v91, %v112
    %v115 = vunpack.c.l.s4 1966171168
    %v116 = vunpack.c.0.s8 %v115
    %v117 = vlaneseq
    %v118 = vshrl.u32 %v117, 7
    %v119 = vsub.s32 %v116, %v118
    %v120 = vrot.slane %v92, %v119
    %v121 = vcombine.low %v99, %v106
    %v122 = vcombine.high %v99, %v106
    %v123 = vcombine.low %v113, %v120
    %v124 = vcombine.high %v113, %v120
    %v126 = vunpack.c.l.s4 1966171168
    %v127 = vunpack.c.0.s8 %v126
    %v128 = vlaneseq
    %v129 = vshrl.u32 %v128, 7
    %v130 = vsub.s32 %v127, %v129
    %v131 = vrot.slane %v121, %v130
    %v133 = vunpack.c.l.s4 1966171168
    %v134 = vunpack.c.0.s8 %v133
    %v135 = vlaneseq
    %v136 = vshrl.u32 %v135, 7
    %v137 = vsub.s32 %v134, %v136
    %v138 = vrot.slane %v122, %v137
    %v140 = vunpack.c.l.s4 1966171168
    %v141 = vunpack.c.0.s8 %v140
    %v142 = vlaneseq
    %v143 = vshrl.u32 %v142, 7
    %v144 = vsub.s32 %v141, %v143
    %v145 = vrot.slane %v123, %v144
    %v147 = vunpack.c.l.s4 1966171168
    %v148 = vunpack.c.0.s8 %v147
    %v149 = vlaneseq
    %v150 = vshrl.u32 %v149, 7
    %v151 = vsub.s32 %v148, %v150
    %v152 = vrot.slane %v124, %v151
    %v153 = vcombine.low %v131, %v145
    %v154 = vcombine.low %v138, %v152
    %v157 = vmul.f32 %v53, %v153
    %v158 = vmul.f32 %v54, %v154
    %v159 = vld [vmem:[%s2] sm:$0xff]
    %v161 = vlaneseq
    %v162 = vshrl.u32 %v161, 7
    %v163 = vsub.s32 0, %v162
    %v164 = vrot.slane %v159, %v163
    %v165 = vlaneseq
    %v166 = vshrl.u32 %v165, 7
    %v167 = vsub.s32 1, %v166
    %v168 = vrot.slane %v159, %v167
    %v169 = vlaneseq
    %v170 = vshrl.u32 %v169, 7
    %v171 = vsub.s32 2, %v170
    %v172 = vrot.slane %v159, %v171
    %v173 = vlaneseq
    %v174 = vshrl.u32 %v173, 7
    %v175 = vsub.s32 3, %v174
    %v176 = vrot.slane %v159, %v175
    %v177 = vlaneseq
    %v178 = vshrl.u32 %v177, 7
    %v179 = vsub.s32 4, %v178
    %v180 = vrot.slane %v159, %v179
    %v181 = vlaneseq
    %v182 = vshrl.u32 %v181, 7
    %v183 = vsub.s32 5, %v182
    %v184 = vrot.slane %v159, %v183
    %v185 = vlaneseq
    %v186 = vshrl.u32 %v185, 7
    %v187 = vsub.s32 6, %v186
    %v188 = vrot.slane %v159, %v187
    %v189 = vlaneseq
    %v190 = vshrl.u32 %v189, 7
    %v191 = vsub.s32 7, %v190
    %v192 = vrot.slane %v159, %v191
    %v193 = vcombine.low %v164, %v168
    %v194 = vcombine.low %v172, %v176
    %v195 = vcombine.low %v180, %v184
    %v196 = vcombine.low %v188, %v192
    %v198 = vunpack.c.l.s4 1966171168
    %v199 = vunpack.c.0.s8 %v198
    %v200 = vlaneseq
    %v201 = vshrl.u32 %v200, 7
    %v202 = vsub.s32 %v199, %v201
    %v203 = vrot.slane %v193, %v202
    %v205 = vunpack.c.l.s4 1966171168
    %v206 = vunpack.c.0.s8 %v205
    %v207 = vlaneseq
    %v208 = vshrl.u32 %v207, 7
    %v209 = vsub.s32 %v206, %v208
    %v210 = vrot.slane %v194, %v209
    %v212 = vunpack.c.l.s4 1966171168
    %v213 = vunpack.c.0.s8 %v212
    %v214 = vlaneseq
    %v215 = vshrl.u32 %v214, 7
    %v216 = vsub.s32 %v213, %v215
    %v217 = vrot.slane %v195, %v216
    %v219 = vunpack.c.l.s4 1966171168
    %v220 = vunpack.c.0.s8 %v219
    %v221 = vlaneseq
    %v222 = vshrl.u32 %v221, 7
    %v223 = vsub.s32 %v220, %v222
    %v224 = vrot.slane %v196, %v223
    %v225 = vcombine.low %v203, %v210
    %v226 = vcombine.high %v203, %v210
    %v227 = vcombine.low %v217, %v224
    %v228 = vcombine.high %v217, %v224
    %v230 = vunpack.c.l.s4 1966171168
    %v231 = vunpack.c.0.s8 %v230
    %v232 = vlaneseq
    %v233 = vshrl.u32 %v232, 7
    %v234 = vsub.s32 %v231, %v233
    %v235 = vrot.slane %v225, %v234
    %v237 = vunpack.c.l.s4 1966171168
    %v238 = vunpack.c.0.s8 %v237
    %v239 = vlaneseq
    %v240 = vshrl.u32 %v239, 7
    %v241 = vsub.s32 %v238, %v240
    %v242 = vrot.slane %v226, %v241
    %v244 = vunpack.c.l.s4 1966171168
    %v245 = vunpack.c.0.s8 %v244
    %v246 = vlaneseq
    %v247 = vshrl.u32 %v246, 7
    %v248 = vsub.s32 %v245, %v247
    %v249 = vrot.slane %v227, %v248
    %v251 = vunpack.c.l.s4 1966171168
    %v252 = vunpack.c.0.s8 %v251
    %v253 = vlaneseq
    %v254 = vshrl.u32 %v253, 7
    %v255 = vsub.s32 %v252, %v254
    %v256 = vrot.slane %v228, %v255
    %v257 = vcombine.low %v235, %v249
    %v258 = vcombine.low %v242, %v256
    %v261 = vadd.f32 %v157, %v257
    %v262 = vadd.f32 %v158, %v258
    %v263 = vmax.f32 %v261, 0.0
    %v264 = vmax.f32 %v262, 0.0
    %v267 = vlaneseq
    %v268 = vshrl.u32 %v267, 7
    %v269 = vsub.s32 0, %v268
    %v270 = vrot.slane %v263, %v269
    %v271 = vlaneseq
    %v272 = vshrl.u32 %v271, 7
    %v273 = vsub.s32 1, %v272
    %v274 = vrot.slane %v263, %v273
    %v275 = vlaneseq
    %v276 = vshrl.u32 %v275, 7
    %v277 = vsub.s32 2, %v276
    %v278 = vrot.slane %v263, %v277
    %v279 = vlaneseq
    %v280 = vshrl.u32 %v279, 7
    %v281 = vsub.s32 3, %v280
    %v282 = vrot.slane %v263, %v281
    %v283 = vlaneseq
    %v284 = vshrl.u32 %v283, 7
    %v285 = vsub.s32 4, %v284
    %v286 = vrot.slane %v263, %v285
    %v287 = vlaneseq
    %v288 = vshrl.u32 %v287, 7
    %v289 = vsub.s32 5, %v288
    %v290 = vrot.slane %v263, %v289
    %v291 = vlaneseq
    %v292 = vshrl.u32 %v291, 7
    %v293 = vsub.s32 6, %v292
    %v294 = vrot.slane %v263, %v293
    %v295 = vlaneseq
    %v296 = vshrl.u32 %v295, 7
    %v297 = vsub.s32 7, %v296
    %v298 = vrot.slane %v263, %v297
    %v299 = vlaneseq
    %v300 = vshrl.u32 %v299, 7
    %v301 = vsub.s32 0, %v300
    %v302 = vrot.slane %v264, %v301
    %v303 = vlaneseq
    %v304 = vshrl.u32 %v303, 7
    %v305 = vsub.s32 1, %v304
    %v306 = vrot.slane %v264, %v305
    %v307 = vlaneseq
    %v308 = vshrl.u32 %v307, 7
    %v309 = vsub.s32 2, %v308
    %v310 = vrot.slane %v264, %v309
    %v311 = vlaneseq
    %v312 = vshrl.u32 %v311, 7
    %v313 = vsub.s32 3, %v312
    %v314 = vrot.slane %v264, %v313
    %v315 = vlaneseq
    %v316 = vshrl.u32 %v315, 7
    %v317 = vsub.s32 4, %v316
    %v318 = vrot.slane %v264, %v317
    %v319 = vlaneseq
    %v320 = vshrl.u32 %v319, 7
    %v321 = vsub.s32 5, %v320
    %v322 = vrot.slane %v264, %v321
    %v323 = vlaneseq
    %v324 = vshrl.u32 %v323, 7
    %v325 = vsub.s32 6, %v324
    %v326 = vrot.slane %v264, %v325
    %v327 = vlaneseq
    %v328 = vshrl.u32 %v327, 7
    %v329 = vsub.s32 7, %v328
    %v330 = vrot.slane %v264, %v329
    %v347 = vpack.c.bf16 %v270, %v270
    %v348 = vpack.c.bf16 %v274, %v274
    %v349 = vpack.c.bf16 %v278, %v278
    %v350 = vpack.c.bf16 %v282, %v282
    %v351 = vpack.c.bf16 %v286, %v286
    %v352 = vpack.c.bf16 %v290, %v290
    %v353 = vpack.c.bf16 %v294, %v294
    %v354 = vpack.c.bf16 %v298, %v298
    %v355 = vpack.c.bf16 %v302, %v302
    %v356 = vpack.c.bf16 %v306, %v306
    %v357 = vpack.c.bf16 %v310, %v310
    %v358 = vpack.c.bf16 %v314, %v314
    %v359 = vpack.c.bf16 %v318, %v318
    %v360 = vpack.c.bf16 %v322, %v322
    %v361 = vpack.c.bf16 %v326, %v326
    %v362 = vpack.c.bf16 %v330, %v330
    %v363 = vld [vmem:[#allocation2] sm:$0xff]
    %v364 = vld [vmem:[#allocation2 + $0x8] sm:$0xff]
    %v365 = vld [vmem:[#allocation2 + $0x10] sm:$0xff]
    %v366 = vld [vmem:[#allocation2 + $0x18] sm:$0xff]
    %v367 = vld [vmem:[#allocation2 + $0x20] sm:$0xff]
    %v368 = vld [vmem:[#allocation2 + $0x28] sm:$0xff]
    %v369 = vld [vmem:[#allocation2 + $0x30] sm:$0xff]
    %v370 = vld [vmem:[#allocation2 + $0x38] sm:$0xff]
    %v371 = vld [vmem:[#allocation2 + $0x40] sm:$0xff]
    %v372 = vld [vmem:[#allocation2 + $0x48] sm:$0xff]
    %v373 = vld [vmem:[#allocation2 + $0x50] sm:$0xff]
    %v374 = vld [vmem:[#allocation2 + $0x58] sm:$0xff]
    %v375 = vld [vmem:[#allocation2 + $0x60] sm:$0xff]
    %v376 = vld [vmem:[#allocation2 + $0x68] sm:$0xff]
    %v377 = vld [vmem:[#allocation2 + $0x70] sm:$0xff]
    %v378 = vld [vmem:[#allocation2 + $0x78] sm:$0xff]
    %v379 = vld [vmem:[#allocation2 + $0x80] sm:$0xff]
    %v380 = vld [vmem:[#allocation2 + $0x88] sm:$0xff]
    %v381 = vld [vmem:[#allocation2 + $0x90] sm:$0xff]
    %v382 = vld [vmem:[#allocation2 + $0x98] sm:$0xff]
    %v383 = vld [vmem:[#allocation2 + $0xa0] sm:$0xff]
    %v384 = vld [vmem:[#allocation2 + $0xa8] sm:$0xff]
    %v385 = vld [vmem:[#allocation2 + $0xb0] sm:$0xff]
    %v386 = vld [vmem:[#allocation2 + $0xb8] sm:$0xff]
    %v387 = vld [vmem:[#allocation2 + $0xc0] sm:$0xff]
    %v388 = vld [vmem:[#allocation2 + $0xc8] sm:$0xff]
    %v389 = vld [vmem:[#allocation2 + $0xd0] sm:$0xff]
    %v390 = vld [vmem:[#allocation2 + $0xd8] sm:$0xff]
    %v391 = vld [vmem:[#allocation2 + $0xe0] sm:$0xff]
    %v392 = vld [vmem:[#allocation2 + $0xe8] sm:$0xff]
    %v393 = vld [vmem:[#allocation2 + $0xf0] sm:$0xff]
    %v394 = vld [vmem:[#allocation2 + $0xf8] sm:$0xff]
    %v395 = vld [vmem:[#allocation2 + $0x100] sm:$0xff]
    %v396 = vld [vmem:[#allocation2 + $0x108] sm:$0xff]
    %v397 = vld [vmem:[#allocation2 + $0x110] sm:$0xff]
    %v398 = vld [vmem:[#allocation2 + $0x118] sm:$0xff]
    %v399 = vld [vmem:[#allocation2 + $0x120] sm:$0xff]
    %v400 = vld [vmem:[#allocation2 + $0x128] sm:$0xff]
    %v401 = vld [vmem:[#allocation2 + $0x130] sm:$0xff]
    %v402 = vld [vmem:[#allocation2 + $0x138] sm:$0xff]
    %v403 = vld [vmem:[#allocation2 + $0x140] sm:$0xff]
    %v404 = vld [vmem:[#allocation2 + $0x148] sm:$0xff]
    %v405 = vld [vmem:[#allocation2 + $0x150] sm:$0xff]
    %v406 = vld [vmem:[#allocation2 + $0x158] sm:$0xff]
    %v407 = vld [vmem:[#allocation2 + $0x160] sm:$0xff]
    %v408 = vld [vmem:[#allocation2 + $0x168] sm:$0xff]
    %v409 = vld [vmem:[#allocation2 + $0x170] sm:$0xff]
    %v410 = vld [vmem:[#allocation2 + $0x178] sm:$0xff]
    %v411 = vld [vmem:[#allocation2 + $0x180] sm:$0xff]
    %v412 = vld [vmem:[#allocation2 + $0x188] sm:$0xff]
    %v413 = vld [vmem:[#allocation2 + $0x190] sm:$0xff]
    %v414 = vld [vmem:[#allocation2 + $0x198] sm:$0xff]
    %v415 = vld [vmem:[#allocation2 + $0x1a0] sm:$0xff]
    %v416 = vld [vmem:[#allocation2 + $0x1a8] sm:$0xff]
    %v417 = vld [vmem:[#allocation2 + $0x1b0] sm:$0xff]
    %v418 = vld [vmem:[#allocation2 + $0x1b8] sm:$0xff]
    %v419 = vld [vmem:[#allocation2 + $0x1c0] sm:$0xff]
    %v420 = vld [vmem:[#allocation2 + $0x1c8] sm:$0xff]
    %v421 = vld [vmem:[#allocation2 + $0x1d0] sm:$0xff]
    %v422 = vld [vmem:[#allocation2 + $0x1d8] sm:$0xff]
    %v423 = vld [vmem:[#allocation2 + $0x1e0] sm:$0xff]
    %v424 = vld [vmem:[#allocation2 + $0x1e8] sm:$0xff]
    %v425 = vld [vmem:[#allocation2 + $0x1f0] sm:$0xff]
    %v426 = vld [vmem:[#allocation2 + $0x1f8] sm:$0xff]
    %v427 = vld [vmem:[#allocation2 + $0x200] sm:$0xff]
    %v428 = vld [vmem:[#allocation2 + $0x208] sm:$0xff]
    %v429 = vld [vmem:[#allocation2 + $0x210] sm:$0xff]
    %v430 = vld [vmem:[#allocation2 + $0x218] sm:$0xff]
    %v431 = vld [vmem:[#allocation2 + $0x220] sm:$0xff]
    %v432 = vld [vmem:[#allocation2 + $0x228] sm:$0xff]
    %v433 = vld [vmem:[#allocation2 + $0x230] sm:$0xff]
    %v434 = vld [vmem:[#allocation2 + $0x238] sm:$0xff]
    %v435 = vld [vmem:[#allocation2 + $0x240] sm:$0xff]
    %v436 = vld [vmem:[#allocation2 + $0x248] sm:$0xff]
    %v437 = vld [vmem:[#allocation2 + $0x250] sm:$0xff]
    %v438 = vld [vmem:[#allocation2 + $0x258] sm:$0xff]
    %v439 = vld [vmem:[#allocation2 + $0x260] sm:$0xff]
    %v440 = vld [vmem:[#allocation2 + $0x268] sm:$0xff]
    %v441 = vld [vmem:[#allocation2 + $0x270] sm:$0xff]
    %v442 = vld [vmem:[#allocation2 + $0x278] sm:$0xff]
    %v443 = vld [vmem:[#allocation2 + $0x280] sm:$0xff]
    %v444 = vld [vmem:[#allocation2 + $0x288] sm:$0xff]
    %v445 = vld [vmem:[#allocation2 + $0x290] sm:$0xff]
    %v446 = vld [vmem:[#allocation2 + $0x298] sm:$0xff]
    %v447 = vld [vmem:[#allocation2 + $0x2a0] sm:$0xff]
    %v448 = vld [vmem:[#allocation2 + $0x2a8] sm:$0xff]
    %v449 = vld [vmem:[#allocation2 + $0x2b0] sm:$0xff]
    %v450 = vld [vmem:[#allocation2 + $0x2b8] sm:$0xff]
    %v451 = vld [vmem:[#allocation2 + $0x2c0] sm:$0xff]
    %v452 = vld [vmem:[#allocation2 + $0x2c8] sm:$0xff]
    %v453 = vld [vmem:[#allocation2 + $0x2d0] sm:$0xff]
    %v454 = vld [vmem:[#allocation2 + $0x2d8] sm:$0xff]
    %v455 = vld [vmem:[#allocation2 + $0x2e0] sm:$0xff]
    %v456 = vld [vmem:[#allocation2 + $0x2e8] sm:$0xff]
    %v457 = vld [vmem:[#allocation2 + $0x2f0] sm:$0xff]
    %v458 = vld [vmem:[#allocation2 + $0x2f8] sm:$0xff]
    %v459 = vld [vmem:[#allocation2 + $0x300] sm:$0xff]
    %v460 = vld [vmem:[#allocation2 + $0x308] sm:$0xff]
    %v461 = vld [vmem:[#allocation2 + $0x310] sm:$0xff]
    %v462 = vld [vmem:[#allocation2 + $0x318] sm:$0xff]
    %v463 = vld [vmem:[#allocation2 + $0x320] sm:$0xff]
    %v464 = vld [vmem:[#allocation2 + $0x328] sm:$0xff]
    %v465 = vld [vmem:[#allocation2 + $0x330] sm:$0xff]
    %v466 = vld [vmem:[#allocation2 + $0x338] sm:$0xff]
    %v467 = vld [vmem:[#allocation2 + $0x340] sm:$0xff]
    %v468 = vld [vmem:[#allocation2 + $0x348] sm:$0xff]
    %v469 = vld [vmem:[#allocation2 + $0x350] sm:$0xff]
    %v470 = vld [vmem:[#allocation2 + $0x358] sm:$0xff]
    %v471 = vld [vmem:[#allocation2 + $0x360] sm:$0xff]
    %v472 = vld [vmem:[#allocation2 + $0x368] sm:$0xff]
    %v473 = vld [vmem:[#allocation2 + $0x370] sm:$0xff]
    %v474 = vld [vmem:[#allocation2 + $0x378] sm:$0xff]
    %v475 = vld [vmem:[#allocation2 + $0x380] sm:$0xff]
    %v476 = vld [vmem:[#allocation2 + $0x388] sm:$0xff]
    %v477 = vld [vmem:[#allocation2 + $0x390] sm:$0xff]
    %v478 = vld [vmem:[#allocation2 + $0x398] sm:$0xff]
    %v479 = vld [vmem:[#allocation2 + $0x3a0] sm:$0xff]
    %v480 = vld [vmem:[#allocation2 + $0x3a8] sm:$0xff]
    %v481 = vld [vmem:[#allocation2 + $0x3b0] sm:$0xff]
    %v482 = vld [vmem:[#allocation2 + $0x3b8] sm:$0xff]
    %v483 = vld [vmem:[#allocation2 + $0x3c0] sm:$0xff]
    %v484 = vld [vmem:[#allocation2 + $0x3c8] sm:$0xff]
    %v485 = vld [vmem:[#allocation2 + $0x3d0] sm:$0xff]
    %v486 = vld [vmem:[#allocation2 + $0x3d8] sm:$0xff]
    %v487 = vld [vmem:[#allocation2 + $0x3e0] sm:$0xff]
    %v488 = vld [vmem:[#allocation2 + $0x3e8] sm:$0xff]
    %v489 = vld [vmem:[#allocation2 + $0x3f0] sm:$0xff]
    %v490 = vld [vmem:[#allocation2 + $0x3f8] sm:$0xff]
    %v491 = vld [vmem:[#allocation2 + $0x400] sm:$0xff]
    %v492 = vld [vmem:[#allocation2 + $0x408] sm:$0xff]
    %v493 = vld [vmem:[#allocation2 + $0x410] sm:$0xff]
    %v494 = vld [vmem:[#allocation2 + $0x418] sm:$0xff]
    %v495 = vld [vmem:[#allocation2 + $0x420] sm:$0xff]
    %v496 = vld [vmem:[#allocation2 + $0x428] sm:$0xff]
    %v497 = vld [vmem:[#allocation2 + $0x430] sm:$0xff]
    %v498 = vld [vmem:[#allocation2 + $0x438] sm:$0xff]
    %v499 = vld [vmem:[#allocation2 + $0x440] sm:$0xff]
    %v500 = vld [vmem:[#allocation2 + $0x448] sm:$0xff]
    %v501 = vld [vmem:[#allocation2 + $0x450] sm:$0xff]
    %v502 = vld [vmem:[#allocation2 + $0x458] sm:$0xff]
    %v503 = vld [vmem:[#allocation2 + $0x460] sm:$0xff]
    %v504 = vld [vmem:[#allocation2 + $0x468] sm:$0xff]
    %v505 = vld [vmem:[#allocation2 + $0x470] sm:$0xff]
    %v506 = vld [vmem:[#allocation2 + $0x478] sm:$0xff]
    %v507 = vld [vmem:[#allocation2 + $0x480] sm:$0xff]
    %v508 = vld [vmem:[#allocation2 + $0x488] sm:$0xff]
    %v509 = vld [vmem:[#allocation2 + $0x490] sm:$0xff]
    %v510 = vld [vmem:[#allocation2 + $0x498] sm:$0xff]
    %v511 = vld [vmem:[#allocation2 + $0x4a0] sm:$0xff]
    %v512 = vld [vmem:[#allocation2 + $0x4a8] sm:$0xff]
    %v513 = vld [vmem:[#allocation2 + $0x4b0] sm:$0xff]
    %v514 = vld [vmem:[#allocation2 + $0x4b8] sm:$0xff]
    %v515 = vld [vmem:[#allocation2 + $0x4c0] sm:$0xff]
    %v516 = vld [vmem:[#allocation2 + $0x4c8] sm:$0xff]
    %v517 = vld [vmem:[#allocation2 + $0x4d0] sm:$0xff]
    %v518 = vld [vmem:[#allocation2 + $0x4d8] sm:$0xff]
    %v519 = vld [vmem:[#allocation2 + $0x4e0] sm:$0xff]
    %v520 = vld [vmem:[#allocation2 + $0x4e8] sm:$0xff]
    %v521 = vld [vmem:[#allocation2 + $0x4f0] sm:$0xff]
    %v522 = vld [vmem:[#allocation2 + $0x4f8] sm:$0xff]
    %v523 = vld [vmem:[#allocation2 + $0x500] sm:$0xff]
    %v524 = vld [vmem:[#allocation2 + $0x508] sm:$0xff]
    %v525 = vld [vmem:[#allocation2 + $0x510] sm:$0xff]
    %v526 = vld [vmem:[#allocation2 + $0x518] sm:$0xff]
    %v527 = vld [vmem:[#allocation2 + $0x520] sm:$0xff]
    %v528 = vld [vmem:[#allocation2 + $0x528] sm:$0xff]
    %v529 = vld [vmem:[#allocation2 + $0x530] sm:$0xff]
    %v530 = vld [vmem:[#allocation2 + $0x538] sm:$0xff]
    %v531 = vld [vmem:[#allocation2 + $0x540] sm:$0xff]
    %v532 = vld [vmem:[#allocation2 + $0x548] sm:$0xff]
    %v533 = vld [vmem:[#allocation2 + $0x550] sm:$0xff]
    %v534 = vld [vmem:[#allocation2 + $0x558] sm:$0xff]
    %v535 = vld [vmem:[#allocation2 + $0x560] sm:$0xff]
    %v536 = vld [vmem:[#allocation2 + $0x568] sm:$0xff]
    %v537 = vld [vmem:[#allocation2 + $0x570] sm:$0xff]
    %v538 = vld [vmem:[#allocation2 + $0x578] sm:$0xff]
    %v539 = vld [vmem:[#allocation2 + $0x580] sm:$0xff]
    %v540 = vld [vmem:[#allocation2 + $0x588] sm:$0xff]
    %v541 = vld [vmem:[#allocation2 + $0x590] sm:$0xff]
    %v542 = vld [vmem:[#allocation2 + $0x598] sm:$0xff]
    %v543 = vld [vmem:[#allocation2 + $0x5a0] sm:$0xff]
    %v544 = vld [vmem:[#allocation2 + $0x5a8] sm:$0xff]
    %v545 = vld [vmem:[#allocation2 + $0x5b0] sm:$0xff]
    %v546 = vld [vmem:[#allocation2 + $0x5b8] sm:$0xff]
    %v547 = vld [vmem:[#allocation2 + $0x5c0] sm:$0xff]
    %v548 = vld [vmem:[#allocation2 + $0x5c8] sm:$0xff]
    %v549 = vld [vmem:[#allocation2 + $0x5d0] sm:$0xff]
    %v550 = vld [vmem:[#allocation2 + $0x5d8] sm:$0xff]
    %v551 = vld [vmem:[#allocation2 + $0x5e0] sm:$0xff]
    %v552 = vld [vmem:[#allocation2 + $0x5e8] sm:$0xff]
    %v553 = vld [vmem:[#allocation2 + $0x5f0] sm:$0xff]
    %v554 = vld [vmem:[#allocation2 + $0x5f8] sm:$0xff]
    %v555 = vld [vmem:[#allocation2 + $0x600] sm:$0xff]
    %v556 = vld [vmem:[#allocation2 + $0x608] sm:$0xff]
    %v557 = vld [vmem:[#allocation2 + $0x610] sm:$0xff]
    %v558 = vld [vmem:[#allocation2 + $0x618] sm:$0xff]
    %v559 = vld [vmem:[#allocation2 + $0x620] sm:$0xff]
    %v560 = vld [vmem:[#allocation2 + $0x628] sm:$0xff]
    %v561 = vld [vmem:[#allocation2 + $0x630] sm:$0xff]
    %v562 = vld [vmem:[#allocation2 + $0x638] sm:$0xff]
    %v563 = vld [vmem:[#allocation2 + $0x640] sm:$0xff]
    %v564 = vld [vmem:[#allocation2 + $0x648] sm:$0xff]
    %v565 = vld [vmem:[#allocation2 + $0x650] sm:$0xff]
    %v566 = vld [vmem:[#allocation2 + $0x658] sm:$0xff]
    %v567 = vld [vmem:[#allocation2 + $0x660] sm:$0xff]
    %v568 = vld [vmem:[#allocation2 + $0x668] sm:$0xff]
    %v569 = vld [vmem:[#allocation2 + $0x670] sm:$0xff]
    %v570 = vld [vmem:[#allocation2 + $0x678] sm:$0xff]
    %v571 = vld [vmem:[#allocation2 + $0x680] sm:$0xff]
    %v572 = vld [vmem:[#allocation2 + $0x688] sm:$0xff]
    %v573 = vld [vmem:[#allocation2 + $0x690] sm:$0xff]
    %v574 = vld [vmem:[#allocation2 + $0x698] sm:$0xff]
    %v575 = vld [vmem:[#allocation2 + $0x6a0] sm:$0xff]
    %v576 = vld [vmem:[#allocation2 + $0x6a8] sm:$0xff]
    %v577 = vld [vmem:[#allocation2 + $0x6b0] sm:$0xff]
    %v578 = vld [vmem:[#allocation2 + $0x6b8] sm:$0xff]
    %v579 = vld [vmem:[#allocation2 + $0x6c0] sm:$0xff]
    %v580 = vld [vmem:[#allocation2 + $0x6c8] sm:$0xff]
    %v581 = vld [vmem:[#allocation2 + $0x6d0] sm:$0xff]
    %v582 = vld [vmem:[#allocation2 + $0x6d8] sm:$0xff]
    %v583 = vld [vmem:[#allocation2 + $0x6e0] sm:$0xff]
    %v584 = vld [vmem:[#allocation2 + $0x6e8] sm:$0xff]
    %v585 = vld [vmem:[#allocation2 + $0x6f0] sm:$0xff]
    %v586 = vld [vmem:[#allocation2 + $0x6f8] sm:$0xff]
    %v587 = vld [vmem:[#allocation2 + $0x700] sm:$0xff]
    %v588 = vld [vmem:[#allocation2 + $0x708] sm:$0xff]
    %v589 = vld [vmem:[#allocation2 + $0x710] sm:$0xff]
    %v590 = vld [vmem:[#allocation2 + $0x718] sm:$0xff]
    %v591 = vld [vmem:[#allocation2 + $0x720] sm:$0xff]
    %v592 = vld [vmem:[#allocation2 + $0x728] sm:$0xff]
    %v593 = vld [vmem:[#allocation2 + $0x730] sm:$0xff]
    %v594 = vld [vmem:[#allocation2 + $0x738] sm:$0xff]
    %v595 = vld [vmem:[#allocation2 + $0x740] sm:$0xff]
    %v596 = vld [vmem:[#allocation2 + $0x748] sm:$0xff]
    %v597 = vld [vmem:[#allocation2 + $0x750] sm:$0xff]
    %v598 = vld [vmem:[#allocation2 + $0x758] sm:$0xff]
    %v599 = vld [vmem:[#allocation2 + $0x760] sm:$0xff]
    %v600 = vld [vmem:[#allocation2 + $0x768] sm:$0xff]
    %v601 = vld [vmem:[#allocation2 + $0x770] sm:$0xff]
    %v602 = vld [vmem:[#allocation2 + $0x778] sm:$0xff]
    %v603 = vld [vmem:[#allocation2 + $0x780] sm:$0xff]
    %v604 = vld [vmem:[#allocation2 + $0x788] sm:$0xff]
    %v605 = vld [vmem:[#allocation2 + $0x790] sm:$0xff]
    %v606 = vld [vmem:[#allocation2 + $0x798] sm:$0xff]
    %v607 = vld [vmem:[#allocation2 + $0x7a0] sm:$0xff]
    %v608 = vld [vmem:[#allocation2 + $0x7a8] sm:$0xff]
    %v609 = vld [vmem:[#allocation2 + $0x7b0] sm:$0xff]
    %v610 = vld [vmem:[#allocation2 + $0x7b8] sm:$0xff]
    %v611 = vld [vmem:[#allocation2 + $0x7c0] sm:$0xff]
    %v612 = vld [vmem:[#allocation2 + $0x7c8] sm:$0xff]
    %v613 = vld [vmem:[#allocation2 + $0x7d0] sm:$0xff]
    %v614 = vld [vmem:[#allocation2 + $0x7d8] sm:$0xff]
    %v615 = vld [vmem:[#allocation2 + $0x7e0] sm:$0xff]
    %v616 = vld [vmem:[#allocation2 + $0x7e8] sm:$0xff]
    %v617 = vld [vmem:[#allocation2 + $0x7f0] sm:$0xff]
    %v618 = vld [vmem:[#allocation2 + $0x7f8] sm:$0xff]
    %v635 = vunpack.c.l.b16 %v347
    %v636 = vunpack.c.l.b16 %v348
    %v637 = vunpack.c.l.b16 %v349
    %v638 = vunpack.c.l.b16 %v350
    %v639 = vunpack.c.l.b16 %v351
    %v640 = vunpack.c.l.b16 %v352
    %v641 = vunpack.c.l.b16 %v353
    %v642 = vunpack.c.l.b16 %v354
    %v643 = vunpack.c.l.b16 %v355
    %v644 = vunpack.c.l.b16 %v356
    %v645 = vunpack.c.l.b16 %v357
    %v646 = vunpack.c.l.b16 %v358
    %v647 = vunpack.c.l.b16 %v359
    %v648 = vunpack.c.l.b16 %v360
    %v649 = vunpack.c.l.b16 %v361
    %v650 = vunpack.c.l.b16 %v362
    %v651 = vrot.slane %v643, 7
    %vm652 = vcmask 1041409
    %v653 = vsel %vm652, %v651, %v635
    %v654 = vrot.slane %v644, 7
    %v655 = vsel %vm652, %v654, %v636
    %v656 = vrot.slane %v645, 7
    %v657 = vsel %vm652, %v656, %v637
    %v658 = vrot.slane %v646, 7
    %v659 = vsel %vm652, %v658, %v638
    %v660 = vrot.slane %v647, 7
    %v661 = vsel %vm652, %v660, %v639
    %v662 = vrot.slane %v648, 7
    %v663 = vsel %vm652, %v662, %v640
    %v664 = vrot.slane %v649, 7
    %v665 = vsel %vm652, %v664, %v641
    %v666 = vrot.slane %v650, 7
    %v667 = vsel %vm652, %v666, %v642
    %v668 = vpack.c.b16 %v653, %v653
    %v669 = vpack.c.b16 %v655, %v655
    %v670 = vpack.c.b16 %v657, %v657
    %v671 = vpack.c.b16 %v659, %v659
    %v672 = vpack.c.b16 %v661, %v661
    %v673 = vpack.c.b16 %v663, %v663
    %v674 = vpack.c.b16 %v665, %v665
    %v675 = vpack.c.b16 %v667, %v667
    %v940 = vunpack.c.l.b16 %v363
    %v941 = vunpack.c.h.b16 %v363
    %v942 = vunpack.c.l.b16 %v364
    %v943 = vunpack.c.h.b16 %v364
    %v944 = vunpack.c.l.b16 %v365
    %v945 = vunpack.c.h.b16 %v365
    %v946 = vunpack.c.l.b16 %v366
    %v947 = vunpack.c.h.b16 %v366
    %v948 = vunpack.c.l.b16 %v367
    %v949 = vunpack.c.h.b16 %v367
    %v950 = vunpack.c.l.b16 %v368
    %v951 = vunpack.c.h.b16 %v368
    %v952 = vunpack.c.l.b16 %v369
    %v953 = vunpack.c.h.b16 %v369
    %v954 = vunpack.c.l.b16 %v370
    %v955 = vunpack.c.h.b16 %v370
    %v956 = vunpack.c.l.b16 %v371
    %v957 = vunpack.c.h.b16 %v371
    %v958 = vunpack.c.l.b16 %v372
    %v959 = vunpack.c.h.b16 %v372
    %v960 = vunpack.c.l.b16 %v373
    %v961 = vunpack.c.h.b16 %v373
    %v962 = vunpack.c.l.b16 %v374
    %v963 = vunpack.c.h.b16 %v374
    %v964 = vunpack.c.l.b16 %v375
    %v965 = vunpack.c.h.b16 %v375
    %v966 = vunpack.c.l.b16 %v376
    %v967 = vunpack.c.h.b16 %v376
    %v968 = vunpack.c.l.b16 %v377
    %v969 = vunpack.c.h.b16 %v377
    %v970 = vunpack.c.l.b16 %v378
    %v971 = vunpack.c.h.b16 %v378
    %v972 = vunpack.c.l.b16 %v379
    %v973 = vunpack.c.h.b16 %v379
    %v974 = vunpack.c.l.b16 %v380
    %v975 = vunpack.c.h.b16 %v380
    %v976 = vunpack.c.l.b16 %v381
    %v977 = vunpack.c.h.b16 %v381
    %v978 = vunpack.c.l.b16 %v382
    %v979 = vunpack.c.h.b16 %v382
    %v980 = vunpack.c.l.b16 %v383
    %v981 = vunpack.c.h.b16 %v383
    %v982 = vunpack.c.l.b16 %v384
    %v983 = vunpack.c.h.b16 %v384
    %v984 = vunpack.c.l.b16 %v385
    %v985 = vunpack.c.h.b16 %v385
    %v986 = vunpack.c.l.b16 %v386
    %v987 = vunpack.c.h.b16 %v386
    %v988 = vunpack.c.l.b16 %v387
    %v989 = vunpack.c.h.b16 %v387
    %v990 = vunpack.c.l.b16 %v388
    %v991 = vunpack.c.h.b16 %v388
    %v992 = vunpack.c.l.b16 %v389
    %v993 = vunpack.c.h.b16 %v389
    %v994 = vunpack.c.l.b16 %v390
    %v995 = vunpack.c.h.b16 %v390
    %v996 = vunpack.c.l.b16 %v391
    %v997 = vunpack.c.h.b16 %v391
    %v998 = vunpack.c.l.b16 %v392
    %v999 = vunpack.c.h.b16 %v392
    %v1000 = vunpack.c.l.b16 %v393
    %v1001 = vunpack.c.h.b16 %v393
    %v1002 = vunpack.c.l.b16 %v394
    %v1003 = vunpack.c.h.b16 %v394
    %v1004 = vunpack.c.l.b16 %v395
    %v1005 = vunpack.c.h.b16 %v395
    %v1006 = vunpack.c.l.b16 %v396
    %v1007 = vunpack.c.h.b16 %v396
    %v1008 = vunpack.c.l.b16 %v397
    %v1009 = vunpack.c.h.b16 %v397
    %v1010 = vunpack.c.l.b16 %v398
    %v1011 = vunpack.c.h.b16 %v398
    %v1012 = vunpack.c.l.b16 %v399
    %v1013 = vunpack.c.h.b16 %v399
    %v1014 = vunpack.c.l.b16 %v400
    %v1015 = vunpack.c.h.b16 %v400
    %v1016 = vunpack.c.l.b16 %v401
    %v1017 = vunpack.c.h.b16 %v401
    %v1018 = vunpack.c.l.b16 %v402
    %v1019 = vunpack.c.h.b16 %v402
    %v1020 = vunpack.c.l.b16 %v403
    %v1021 = vunpack.c.h.b16 %v403
    %v1022 = vunpack.c.l.b16 %v404
    %v1023 = vunpack.c.h.b16 %v404
    %v1024 = vunpack.c.l.b16 %v405
    %v1025 = vunpack.c.h.b16 %v405
    %v1026 = vunpack.c.l.b16 %v406
    %v1027 = vunpack.c.h.b16 %v406
    %v1028 = vunpack.c.l.b16 %v407
    %v1029 = vunpack.c.h.b16 %v407
    %v1030 = vunpack.c.l.b16 %v408
    %v1031 = vunpack.c.h.b16 %v408
    %v1032 = vunpack.c.l.b16 %v409
    %v1033 = vunpack.c.h.b16 %v409
    %v1034 = vunpack.c.l.b16 %v410
    %v1035 = vunpack.c.h.b16 %v410
    %v1036 = vunpack.c.l.b16 %v411
    %v1037 = vunpack.c.h.b16 %v411
    %v1038 = vunpack.c.l.b16 %v412
    %v1039 = vunpack.c.h.b16 %v412
    %v1040 = vunpack.c.l.b16 %v413
    %v1041 = vunpack.c.h.b16 %v413
    %v1042 = vunpack.c.l.b16 %v414
    %v1043 = vunpack.c.h.b16 %v414
    %v1044 = vunpack.c.l.b16 %v415
    %v1045 = vunpack.c.h.b16 %v415
    %v1046 = vunpack.c.l.b16 %v416
    %v1047 = vunpack.c.h.b16 %v416
    %v1048 = vunpack.c.l.b16 %v417
    %v1049 = vunpack.c.h.b16 %v417
    %v1050 = vunpack.c.l.b16 %v418
    %v1051 = vunpack.c.h.b16 %v418
    %v1052 = vunpack.c.l.b16 %v419
    %v1053 = vunpack.c.h.b16 %v419
    %v1054 = vunpack.c.l.b16 %v420
    %v1055 = vunpack.c.h.b16 %v420
    %v1056 = vunpack.c.l.b16 %v421
    %v1057 = vunpack.c.h.b16 %v421
    %v1058 = vunpack.c.l.b16 %v422
    %v1059 = vunpack.c.h.b16 %v422
    %v1060 = vunpack.c.l.b16 %v423
    %v1061 = vunpack.c.h.b16 %v423
    %v1062 = vunpack.c.l.b16 %v424
    %v1063 = vunpack.c.h.b16 %v424
    %v1064 = vunpack.c.l.b16 %v425
    %v1065 = vunpack.c.h.b16 %v425
    %v1066 = vunpack.c.l.b16 %v426
    %v1067 = vunpack.c.h.b16 %v426
    %v1068 = vunpack.c.l.b16 %v427
    %v1069 = vunpack.c.h.b16 %v427
    %v1070 = vunpack.c.l.b16 %v428
    %v1071 = vunpack.c.h.b16 %v428
    %v1072 = vunpack.c.l.b16 %v429
    %v1073 = vunpack.c.h.b16 %v429
    %v1074 = vunpack.c.l.b16 %v430
    %v1075 = vunpack.c.h.b16 %v430
    %v1076 = vunpack.c.l.b16 %v431
    %v1077 = vunpack.c.h.b16 %v431
    %v1078 = vunpack.c.l.b16 %v432
    %v1079 = vunpack.c.h.b16 %v432
    %v1080 = vunpack.c.l.b16 %v433
    %v1081 = vunpack.c.h.b16 %v433
    %v1082 = vunpack.c.l.b16 %v434
    %v1083 = vunpack.c.h.b16 %v434
    %v1084 = vunpack.c.l.b16 %v435
    %v1085 = vunpack.c.h.b16 %v435
    %v1086 = vunpack.c.l.b16 %v436
    %v1087 = vunpack.c.h.b16 %v436
    %v1088 = vunpack.c.l.b16 %v437
    %v1089 = vunpack.c.h.b16 %v437
    %v1090 = vunpack.c.l.b16 %v438
    %v1091 = vunpack.c.h.b16 %v438
    %v1092 = vunpack.c.l.b16 %v439
    %v1093 = vunpack.c.h.b16 %v439
    %v1094 = vunpack.c.l.b16 %v440
    %v1095 = vunpack.c.h.b16 %v440
    %v1096 = vunpack.c.l.b16 %v441
    %v1097 = vunpack.c.h.b16 %v441
    %v1098 = vunpack.c.l.b16 %v442
    %v1099 = vunpack.c.h.b16 %v442
    %v1100 = vunpack.c.l.b16 %v443
    %v1101 = vunpack.c.h.b16 %v443
    %v1102 = vunpack.c.l.b16 %v444
    %v1103 = vunpack.c.h.b16 %v444
    %v1104 = vunpack.c.l.b16 %v445
    %v1105 = vunpack.c.h.b16 %v445
    %v1106 = vunpack.c.l.b16 %v446
    %v1107 = vunpack.c.h.b16 %v446
    %v1108 = vunpack.c.l.b16 %v447
    %v1109 = vunpack.c.h.b16 %v447
    %v1110 = vunpack.c.l.b16 %v448
    %v1111 = vunpack.c.h.b16 %v448
    %v1112 = vunpack.c.l.b16 %v449
    %v1113 = vunpack.c.h.b16 %v449
    %v1114 = vunpack.c.l.b16 %v450
    %v1115 = vunpack.c.h.b16 %v450
    %v1116 = vunpack.c.l.b16 %v451
    %v1117 = vunpack.c.h.b16 %v451
    %v1118 = vunpack.c.l.b16 %v452
    %v1119 = vunpack.c.h.b16 %v452
    %v1120 = vunpack.c.l.b16 %v453
    %v1121 = vunpack.c.h.b16 %v453
    %v1122 = vunpack.c.l.b16 %v454
    %v1123 = vunpack.c.h.b16 %v454
    %v1124 = vunpack.c.l.b16 %v455
    %v1125 = vunpack.c.h.b16 %v455
    %v1126 = vunpack.c.l.b16 %v456
    %v1127 = vunpack.c.h.b16 %v456
    %v1128 = vunpack.c.l.b16 %v457
    %v1129 = vunpack.c.h.b16 %v457
    %v1130 = vunpack.c.l.b16 %v458
    %v1131 = vunpack.c.h.b16 %v458
    %v1132 = vunpack.c.l.b16 %v459
    %v1133 = vunpack.c.h.b16 %v459
    %v1134 = vunpack.c.l.b16 %v460
    %v1135 = vunpack.c.h.b16 %v460
    %v1136 = vunpack.c.l.b16 %v461
    %v1137 = vunpack.c.h.b16 %v461
    %v1138 = vunpack.c.l.b16 %v462
    %v1139 = vunpack.c.h.b16 %v462
    %v1140 = vunpack.c.l.b16 %v463
    %v1141 = vunpack.c.h.b16 %v463
    %v1142 = vunpack.c.l.b16 %v464
    %v1143 = vunpack.c.h.b16 %v464
    %v1144 = vunpack.c.l.b16 %v465
    %v1145 = vunpack.c.h.b16 %v465
    %v1146 = vunpack.c.l.b16 %v466
    %v1147 = vunpack.c.h.b16 %v466
    %v1148 = vunpack.c.l.b16 %v467
    %v1149 = vunpack.c.h.b16 %v467
    %v1150 = vunpack.c.l.b16 %v468
    %v1151 = vunpack.c.h.b16 %v468
    %v1152 = vunpack.c.l.b16 %v469
    %v1153 = vunpack.c.h.b16 %v469
    %v1154 = vunpack.c.l.b16 %v470
    %v1155 = vunpack.c.h.b16 %v470
    %v1156 = vunpack.c.l.b16 %v471
    %v1157 = vunpack.c.h.b16 %v471
    %v1158 = vunpack.c.l.b16 %v472
    %v1159 = vunpack.c.h.b16 %v472
    %v1160 = vunpack.c.l.b16 %v473
    %v1161 = vunpack.c.h.b16 %v473
    %v1162 = vunpack.c.l.b16 %v474
    %v1163 = vunpack.c.h.b16 %v474
    %v1164 = vunpack.c.l.b16 %v475
    %v1165 = vunpack.c.h.b16 %v475
    %v1166 = vunpack.c.l.b16 %v476
    %v1167 = vunpack.c.h.b16 %v476
    %v1168 = vunpack.c.l.b16 %v477
    %v1169 = vunpack.c.h.b16 %v477
    %v1170 = vunpack.c.l.b16 %v478
    %v1171 = vunpack.c.h.b16 %v478
    %v1172 = vunpack.c.l.b16 %v479
    %v1173 = vunpack.c.h.b16 %v479
    %v1174 = vunpack.c.l.b16 %v480
    %v1175 = vunpack.c.h.b16 %v480
    %v1176 = vunpack.c.l.b16 %v481
    %v1177 = vunpack.c.h.b16 %v481
    %v1178 = vunpack.c.l.b16 %v482
    %v1179 = vunpack.c.h.b16 %v482
    %v1180 = vunpack.c.l.b16 %v483
    %v1181 = vunpack.c.h.b16 %v483
    %v1182 = vunpack.c.l.b16 %v484
    %v1183 = vunpack.c.h.b16 %v484
    %v1184 = vunpack.c.l.b16 %v485
    %v1185 = vunpack.c.h.b16 %v485
    %v1186 = vunpack.c.l.b16 %v486
    %v1187 = vunpack.c.h.b16 %v486
    %v1188 = vunpack.c.l.b16 %v487
    %v1189 = vunpack.c.h.b16 %v487
    %v1190 = vunpack.c.l.b16 %v488
    %v1191 = vunpack.c.h.b16 %v488
    %v1192 = vunpack.c.l.b16 %v489
    %v1193 = vunpack.c.h.b16 %v489
    %v1194 = vunpack.c.l.b16 %v490
    %v1195 = vunpack.c.h.b16 %v490
    %v1196 = vunpack.c.l.b16 %v491
    %v1197 = vunpack.c.h.b16 %v491
    %v1198 = vunpack.c.l.b16 %v492
    %v1199 = vunpack.c.h.b16 %v492
    %v1200 = vunpack.c.l.b16 %v493
    %v1201 = vunpack.c.h.b16 %v493
    %v1202 = vunpack.c.l.b16 %v494
    %v1203 = vunpack.c.h.b16 %v494
    %v1204 = vunpack.c.l.b16 %v495
    %v1205 = vunpack.c.h.b16 %v495
    %v1206 = vunpack.c.l.b16 %v496
    %v1207 = vunpack.c.h.b16 %v496
    %v1208 = vunpack.c.l.b16 %v497
    %v1209 = vunpack.c.h.b16 %v497
    %v1210 = vunpack.c.l.b16 %v498
    %v1211 = vunpack.c.h.b16 %v498
    %v1212 = vunpack.c.l.b16 %v499
    %v1213 = vunpack.c.h.b16 %v499
    %v1214 = vunpack.c.l.b16 %v500
    %v1215 = vunpack.c.h.b16 %v500
    %v1216 = vunpack.c.l.b16 %v501
    %v1217 = vunpack.c.h.b16 %v501
    %v1218 = vunpack.c.l.b16 %v502
    %v1219 = vunpack.c.h.b16 %v502
    %v1220 = vunpack.c.l.b16 %v503
    %v1221 = vunpack.c.h.b16 %v503
    %v1222 = vunpack.c.l.b16 %v504
    %v1223 = vunpack.c.h.b16 %v504
    %v1224 = vunpack.c.l.b16 %v505
    %v1225 = vunpack.c.h.b16 %v505
    %v1226 = vunpack.c.l.b16 %v506
    %v1227 = vunpack.c.h.b16 %v506
    %v1228 = vunpack.c.l.b16 %v507
    %v1229 = vunpack.c.h.b16 %v507
    %v1230 = vunpack.c.l.b16 %v508
    %v1231 = vunpack.c.h.b16 %v508
    %v1232 = vunpack.c.l.b16 %v509
    %v1233 = vunpack.c.h.b16 %v509
    %v1234 = vunpack.c.l.b16 %v510
    %v1235 = vunpack.c.h.b16 %v510
    %v1236 = vunpack.c.l.b16 %v511
    %v1237 = vunpack.c.h.b16 %v511
    %v1238 = vunpack.c.l.b16 %v512
    %v1239 = vunpack.c.h.b16 %v512
    %v1240 = vunpack.c.l.b16 %v513
    %v1241 = vunpack.c.h.b16 %v513
    %v1242 = vunpack.c.l.b16 %v514
    %v1243 = vunpack.c.h.b16 %v514
    %v1244 = vunpack.c.l.b16 %v515
    %v1245 = vunpack.c.h.b16 %v515
    %v1246 = vunpack.c.l.b16 %v516
    %v1247 = vunpack.c.h.b16 %v516
    %v1248 = vunpack.c.l.b16 %v517
    %v1249 = vunpack.c.h.b16 %v517
    %v1250 = vunpack.c.l.b16 %v518
    %v1251 = vunpack.c.h.b16 %v518
    %v1252 = vunpack.c.l.b16 %v519
    %v1253 = vunpack.c.h.b16 %v519
    %v1254 = vunpack.c.l.b16 %v520
    %v1255 = vunpack.c.h.b16 %v520
    %v1256 = vunpack.c.l.b16 %v521
    %v1257 = vunpack.c.h.b16 %v521
    %v1258 = vunpack.c.l.b16 %v522
    %v1259 = vunpack.c.h.b16 %v522
    %v1260 = vunpack.c.l.b16 %v523
    %v1261 = vunpack.c.h.b16 %v523
    %v1262 = vunpack.c.l.b16 %v524
    %v1263 = vunpack.c.h.b16 %v524
    %v1264 = vunpack.c.l.b16 %v525
    %v1265 = vunpack.c.h.b16 %v525
    %v1266 = vunpack.c.l.b16 %v526
    %v1267 = vunpack.c.h.b16 %v526
    %v1268 = vunpack.c.l.b16 %v527
    %v1269 = vunpack.c.h.b16 %v527
    %v1270 = vunpack.c.l.b16 %v528
    %v1271 = vunpack.c.h.b16 %v528
    %v1272 = vunpack.c.l.b16 %v529
    %v1273 = vunpack.c.h.b16 %v529
    %v1274 = vunpack.c.l.b16 %v530
    %v1275 = vunpack.c.h.b16 %v530
    %v1276 = vunpack.c.l.b16 %v531
    %v1277 = vunpack.c.h.b16 %v531
    %v1278 = vunpack.c.l.b16 %v532
    %v1279 = vunpack.c.h.b16 %v532
    %v1280 = vunpack.c.l.b16 %v533
    %v1281 = vunpack.c.h.b16 %v533
    %v1282 = vunpack.c.l.b16 %v534
    %v1283 = vunpack.c.h.b16 %v534
    %v1284 = vunpack.c.l.b16 %v535
    %v1285 = vunpack.c.h.b16 %v535
    %v1286 = vunpack.c.l.b16 %v536
    %v1287 = vunpack.c.h.b16 %v536
    %v1288 = vunpack.c.l.b16 %v537
    %v1289 = vunpack.c.h.b16 %v537
    %v1290 = vunpack.c.l.b16 %v538
    %v1291 = vunpack.c.h.b16 %v538
    %v1292 = vunpack.c.l.b16 %v539
    %v1293 = vunpack.c.h.b16 %v539
    %v1294 = vunpack.c.l.b16 %v540
    %v1295 = vunpack.c.h.b16 %v540
    %v1296 = vunpack.c.l.b16 %v541
    %v1297 = vunpack.c.h.b16 %v541
    %v1298 = vunpack.c.l.b16 %v542
    %v1299 = vunpack.c.h.b16 %v542
    %v1300 = vunpack.c.l.b16 %v543
    %v1301 = vunpack.c.h.b16 %v543
    %v1302 = vunpack.c.l.b16 %v544
    %v1303 = vunpack.c.h.b16 %v544
    %v1304 = vunpack.c.l.b16 %v545
    %v1305 = vunpack.c.h.b16 %v545
    %v1306 = vunpack.c.l.b16 %v546
    %v1307 = vunpack.c.h.b16 %v546
    %v1308 = vunpack.c.l.b16 %v547
    %v1309 = vunpack.c.h.b16 %v547
    %v1310 = vunpack.c.l.b16 %v548
    %v1311 = vunpack.c.h.b16 %v548
    %v1312 = vunpack.c.l.b16 %v549
    %v1313 = vunpack.c.h.b16 %v549
    %v1314 = vunpack.c.l.b16 %v550
    %v1315 = vunpack.c.h.b16 %v550
    %v1316 = vunpack.c.l.b16 %v551
    %v1317 = vunpack.c.h.b16 %v551
    %v1318 = vunpack.c.l.b16 %v552
    %v1319 = vunpack.c.h.b16 %v552
    %v1320 = vunpack.c.l.b16 %v553
    %v1321 = vunpack.c.h.b16 %v553
    %v1322 = vunpack.c.l.b16 %v554
    %v1323 = vunpack.c.h.b16 %v554
    %v1324 = vunpack.c.l.b16 %v555
    %v1325 = vunpack.c.h.b16 %v555
    %v1326 = vunpack.c.l.b16 %v556
    %v1327 = vunpack.c.h.b16 %v556
    %v1328 = vunpack.c.l.b16 %v557
    %v1329 = vunpack.c.h.b16 %v557
    %v1330 = vunpack.c.l.b16 %v558
    %v1331 = vunpack.c.h.b16 %v558
    %v1332 = vunpack.c.l.b16 %v559
    %v1333 = vunpack.c.h.b16 %v559
    %v1334 = vunpack.c.l.b16 %v560
    %v1335 = vunpack.c.h.b16 %v560
    %v1336 = vunpack.c.l.b16 %v561
    %v1337 = vunpack.c.h.b16 %v561
    %v1338 = vunpack.c.l.b16 %v562
    %v1339 = vunpack.c.h.b16 %v562
    %v1340 = vunpack.c.l.b16 %v563
    %v1341 = vunpack.c.h.b16 %v563
    %v1342 = vunpack.c.l.b16 %v564
    %v1343 = vunpack.c.h.b16 %v564
    %v1344 = vunpack.c.l.b16 %v565
    %v1345 = vunpack.c.h.b16 %v565
    %v1346 = vunpack.c.l.b16 %v566
    %v1347 = vunpack.c.h.b16 %v566
    %v1348 = vunpack.c.l.b16 %v567
    %v1349 = vunpack.c.h.b16 %v567
    %v1350 = vunpack.c.l.b16 %v568
    %v1351 = vunpack.c.h.b16 %v568
    %v1352 = vunpack.c.l.b16 %v569
    %v1353 = vunpack.c.h.b16 %v569
    %v1354 = vunpack.c.l.b16 %v570
    %v1355 = vunpack.c.h.b16 %v570
    %v1356 = vunpack.c.l.b16 %v571
    %v1357 = vunpack.c.h.b16 %v571
    %v1358 = vunpack.c.l.b16 %v572
    %v1359 = vunpack.c.h.b16 %v572
    %v1360 = vunpack.c.l.b16 %v573
    %v1361 = vunpack.c.h.b16 %v573
    %v1362 = vunpack.c.l.b16 %v574
    %v1363 = vunpack.c.h.b16 %v574
    %v1364 = vunpack.c.l.b16 %v575
    %v1365 = vunpack.c.h.b16 %v575
    %v1366 = vunpack.c.l.b16 %v576
    %v1367 = vunpack.c.h.b16 %v576
    %v1368 = vunpack.c.l.b16 %v577
    %v1369 = vunpack.c.h.b16 %v577
    %v1370 = vunpack.c.l.b16 %v578
    %v1371 = vunpack.c.h.b16 %v578
    %v1372 = vunpack.c.l.b16 %v579
    %v1373 = vunpack.c.h.b16 %v579
    %v1374 = vunpack.c.l.b16 %v580
    %v1375 = vunpack.c.h.b16 %v580
    %v1376 = vunpack.c.l.b16 %v581
    %v1377 = vunpack.c.h.b16 %v581
    %v1378 = vunpack.c.l.b16 %v582
    %v1379 = vunpack.c.h.b16 %v582
    %v1380 = vunpack.c.l.b16 %v583
    %v1381 = vunpack.c.h.b16 %v583
    %v1382 = vunpack.c.l.b16 %v584
    %v1383 = vunpack.c.h.b16 %v584
    %v1384 = vunpack.c.l.b16 %v585
    %v1385 = vunpack.c.h.b16 %v585
    %v1386 = vunpack.c.l.b16 %v586
    %v1387 = vunpack.c.h.b16 %v586
    %v1388 = vunpack.c.l.b16 %v587
    %v1389 = vunpack.c.h.b16 %v587
    %v1390 = vunpack.c.l.b16 %v588
    %v1391 = vunpack.c.h.b16 %v588
    %v1392 = vunpack.c.l.b16 %v589
    %v1393 = vunpack.c.h.b16 %v589
    %v1394 = vunpack.c.l.b16 %v590
    %v1395 = vunpack.c.h.b16 %v590
    %v1396 = vunpack.c.l.b16 %v591
    %v1397 = vunpack.c.h.b16 %v591
    %v1398 = vunpack.c.l.b16 %v592
    %v1399 = vunpack.c.h.b16 %v592
    %v1400 = vunpack.c.l.b16 %v593
    %v1401 = vunpack.c.h.b16 %v593
    %v1402 = vunpack.c.l.b16 %v594
    %v1403 = vunpack.c.h.b16 %v594
    %v1404 = vunpack.c.l.b16 %v595
    %v1405 = vunpack.c.h.b16 %v595
    %v1406 = vunpack.c.l.b16 %v596
    %v1407 = vunpack.c.h.b16 %v596
    %v1408 = vunpack.c.l.b16 %v597
    %v1409 = vunpack.c.h.b16 %v597
    %v1410 = vunpack.c.l.b16 %v598
    %v1411 = vunpack.c.h.b16 %v598
    %v1412 = vunpack.c.l.b16 %v599
    %v1413 = vunpack.c.h.b16 %v599
    %v1414 = vunpack.c.l.b16 %v600
    %v1415 = vunpack.c.h.b16 %v600
    %v1416 = vunpack.c.l.b16 %v601
    %v1417 = vunpack.c.h.b16 %v601
    %v1418 = vunpack.c.l.b16 %v602
    %v1419 = vunpack.c.h.b16 %v602
    %v1420 = vunpack.c.l.b16 %v603
    %v1421 = vunpack.c.h.b16 %v603
    %v1422 = vunpack.c.l.b16 %v604
    %v1423 = vunpack.c.h.b16 %v604
    %v1424 = vunpack.c.l.b16 %v605
    %v1425 = vunpack.c.h.b16 %v605
    %v1426 = vunpack.c.l.b16 %v606
    %v1427 = vunpack.c.h.b16 %v606
    %v1428 = vunpack.c.l.b16 %v607
    %v1429 = vunpack.c.h.b16 %v607
    %v1430 = vunpack.c.l.b16 %v608
    %v1431 = vunpack.c.h.b16 %v608
    %v1432 = vunpack.c.l.b16 %v609
    %v1433 = vunpack.c.h.b16 %v609
    %v1434 = vunpack.c.l.b16 %v610
    %v1435 = vunpack.c.h.b16 %v610
    %v1436 = vunpack.c.l.b16 %v611
    %v1437 = vunpack.c.h.b16 %v611
    %v1438 = vunpack.c.l.b16 %v612
    %v1439 = vunpack.c.h.b16 %v612
    %v1440 = vunpack.c.l.b16 %v613
    %v1441 = vunpack.c.h.b16 %v613
    %v1442 = vunpack.c.l.b16 %v614
    %v1443 = vunpack.c.h.b16 %v614
    %v1444 = vunpack.c.l.b16 %v615
    %v1445 = vunpack.c.h.b16 %v615
    %v1446 = vunpack.c.l.b16 %v616
    %v1447 = vunpack.c.h.b16 %v616
    %v1448 = vunpack.c.l.b16 %v617
    %v1449 = vunpack.c.h.b16 %v617
    %v1450 = vunpack.c.l.b16 %v618
    %v1451 = vunpack.c.h.b16 %v618
    %v1452 = vpack.c.b16 %v944, %v940
    %v1453 = vpack.c.b16 %v945, %v941
    %v1454 = vpack.c.b16 %v946, %v942
    %v1455 = vpack.c.b16 %v947, %v943
    %v1456 = vpack.c.b16 %v952, %v948
    %v1457 = vpack.c.b16 %v953, %v949
    %v1458 = vpack.c.b16 %v954, %v950
    %v1459 = vpack.c.b16 %v955, %v951
    %v1460 = vpack.c.b16 %v960, %v956
    %v1461 = vpack.c.b16 %v961, %v957
    %v1462 = vpack.c.b16 %v962, %v958
    %v1463 = vpack.c.b16 %v963, %v959
    %v1464 = vpack.c.b16 %v968, %v964
    %v1465 = vpack.c.b16 %v969, %v965
    %v1466 = vpack.c.b16 %v970, %v966
    %v1467 = vpack.c.b16 %v971, %v967
    %v1468 = vpack.c.b16 %v976, %v972
    %v1469 = vpack.c.b16 %v977, %v973
    %v1470 = vpack.c.b16 %v978, %v974
    %v1471 = vpack.c.b16 %v979, %v975
    %v1472 = vpack.c.b16 %v984, %v980
    %v1473 = vpack.c.b16 %v985, %v981
    %v1474 = vpack.c.b16 %v986, %v982
    %v1475 = vpack.c.b16 %v987, %v983
    %v1476 = vpack.c.b16 %v992, %v988
    %v1477 = vpack.c.b16 %v993, %v989
    %v1478 = vpack.c.b16 %v994, %v990
    %v1479 = vpack.c.b16 %v995, %v991
    %v1480 = vpack.c.b16 %v1000, %v996
    %v1481 = vpack.c.b16 %v1001, %v997
    %v1482 = vpack.c.b16 %v1002, %v998
    %v1483 = vpack.c.b16 %v1003, %v999
    %v1484 = vpack.c.b16 %v1008, %v1004
    %v1485 = vpack.c.b16 %v1009, %v1005
    %v1486 = vpack.c.b16 %v1010, %v1006
    %v1487 = vpack.c.b16 %v1011, %v1007
    %v1488 = vpack.c.b16 %v1016, %v1012
    %v1489 = vpack.c.b16 %v1017, %v1013
    %v1490 = vpack.c.b16 %v1018, %v1014
    %v1491 = vpack.c.b16 %v1019, %v1015
    %v1492 = vpack.c.b16 %v1024, %v1020
    %v1493 = vpack.c.b16 %v1025, %v1021
    %v1494 = vpack.c.b16 %v1026, %v1022
    %v1495 = vpack.c.b16 %v1027, %v1023
    %v1496 = vpack.c.b16 %v1032, %v1028
    %v1497 = vpack.c.b16 %v1033, %v1029
    %v1498 = vpack.c.b16 %v1034, %v1030
    %v1499 = vpack.c.b16 %v1035, %v1031
    %v1500 = vpack.c.b16 %v1040, %v1036
    %v1501 = vpack.c.b16 %v1041, %v1037
    %v1502 = vpack.c.b16 %v1042, %v1038
    %v1503 = vpack.c.b16 %v1043, %v1039
    %v1504 = vpack.c.b16 %v1048, %v1044
    %v1505 = vpack.c.b16 %v1049, %v1045
    %v1506 = vpack.c.b16 %v1050, %v1046
    %v1507 = vpack.c.b16 %v1051, %v1047
    %v1508 = vpack.c.b16 %v1056, %v1052
    %v1509 = vpack.c.b16 %v1057, %v1053
    %v1510 = vpack.c.b16 %v1058, %v1054
    %v1511 = vpack.c.b16 %v1059, %v1055
    %v1512 = vpack.c.b16 %v1064, %v1060
    %v1513 = vpack.c.b16 %v1065, %v1061
    %v1514 = vpack.c.b16 %v1066, %v1062
    %v1515 = vpack.c.b16 %v1067, %v1063
    %v1516 = vpack.c.b16 %v1072, %v1068
    %v1517 = vpack.c.b16 %v1073, %v1069
    %v1518 = vpack.c.b16 %v1074, %v1070
    %v1519 = vpack.c.b16 %v1075, %v1071
    %v1520 = vpack.c.b16 %v1080, %v1076
    %v1521 = vpack.c.b16 %v1081, %v1077
    %v1522 = vpack.c.b16 %v1082, %v1078
    %v1523 = vpack.c.b16 %v1083, %v1079
    %v1524 = vpack.c.b16 %v1088, %v1084
    %v1525 = vpack.c.b16 %v1089, %v1085
    %v1526 = vpack.c.b16 %v1090, %v1086
    %v1527 = vpack.c.b16 %v1091, %v1087
    %v1528 = vpack.c.b16 %v1096, %v1092
    %v1529 = vpack.c.b16 %v1097, %v1093
    %v1530 = vpack.c.b16 %v1098, %v1094
    %v1531 = vpack.c.b16 %v1099, %v1095
    %v1532 = vpack.c.b16 %v1104, %v1100
    %v1533 = vpack.c.b16 %v1105, %v1101
    %v1534 = vpack.c.b16 %v1106, %v1102
    %v1535 = vpack.c.b16 %v1107, %v1103
    %v1536 = vpack.c.b16 %v1112, %v1108
    %v1537 = vpack.c.b16 %v1113, %v1109
    %v1538 = vpack.c.b16 %v1114, %v1110
    %v1539 = vpack.c.b16 %v1115, %v1111
    %v1540 = vpack.c.b16 %v1120, %v1116
    %v1541 = vpack.c.b16 %v1121, %v1117
    %v1542 = vpack.c.b16 %v1122, %v1118
    %v1543 = vpack.c.b16 %v1123, %v1119
    %v1544 = vpack.c.b16 %v1128, %v1124
    %v1545 = vpack.c.b16 %v1129, %v1125
    %v1546 = vpack.c.b16 %v1130, %v1126
    %v1547 = vpack.c.b16 %v1131, %v1127
    %v1548 = vpack.c.b16 %v1136, %v1132
    %v1549 = vpack.c.b16 %v1137, %v1133
    %v1550 = vpack.c.b16 %v1138, %v1134
    %v1551 = vpack.c.b16 %v1139, %v1135
    %v1552 = vpack.c.b16 %v1144, %v1140
    %v1553 = vpack.c.b16 %v1145, %v1141
    %v1554 = vpack.c.b16 %v1146, %v1142
    %v1555 = vpack.c.b16 %v1147, %v1143
    %v1556 = vpack.c.b16 %v1152, %v1148
    %v1557 = vpack.c.b16 %v1153, %v1149
    %v1558 = vpack.c.b16 %v1154, %v1150
    %v1559 = vpack.c.b16 %v1155, %v1151
    %v1560 = vpack.c.b16 %v1160, %v1156
    %v1561 = vpack.c.b16 %v1161, %v1157
    %v1562 = vpack.c.b16 %v1162, %v1158
    %v1563 = vpack.c.b16 %v1163, %v1159
    %v1564 = vpack.c.b16 %v1168, %v1164
    %v1565 = vpack.c.b16 %v1169, %v1165
    %v1566 = vpack.c.b16 %v1170, %v1166
    %v1567 = vpack.c.b16 %v1171, %v1167
    %v1568 = vpack.c.b16 %v1176, %v1172
    %v1569 = vpack.c.b16 %v1177, %v1173
    %v1570 = vpack.c.b16 %v1178, %v1174
    %v1571 = vpack.c.b16 %v1179, %v1175
    %v1572 = vpack.c.b16 %v1184, %v1180
    %v1573 = vpack.c.b16 %v1185, %v1181
    %v1574 = vpack.c.b16 %v1186, %v1182
    %v1575 = vpack.c.b16 %v1187, %v1183
    %v1576 = vpack.c.b16 %v1192, %v1188
    %v1577 = vpack.c.b16 %v1193, %v1189
    %v1578 = vpack.c.b16 %v1194, %v1190
    %v1579 = vpack.c.b16 %v1195, %v1191
    %v1580 = vpack.c.b16 %v1200, %v1196
    %v1581 = vpack.c.b16 %v1201, %v1197
    %v1582 = vpack.c.b16 %v1202, %v1198
    %v1583 = vpack.c.b16 %v1203, %v1199
    %v1584 = vpack.c.b16 %v1208, %v1204
    %v1585 = vpack.c.b16 %v1209, %v1205
    %v1586 = vpack.c.b16 %v1210, %v1206
    %v1587 = vpack.c.b16 %v1211, %v1207
    %v1588 = vpack.c.b16 %v1216, %v1212
    %v1589 = vpack.c.b16 %v1217, %v1213
    %v1590 = vpack.c.b16 %v1218, %v1214
    %v1591 = vpack.c.b16 %v1219, %v1215
    %v1592 = vpack.c.b16 %v1224, %v1220
    %v1593 = vpack.c.b16 %v1225, %v1221
    %v1594 = vpack.c.b16 %v1226, %v1222
    %v1595 = vpack.c.b16 %v1227, %v1223
    %v1596 = vpack.c.b16 %v1232, %v1228
    %v1597 = vpack.c.b16 %v1233, %v1229
    %v1598 = vpack.c.b16 %v1234, %v1230
    %v1599 = vpack.c.b16 %v1235, %v1231
    %v1600 = vpack.c.b16 %v1240, %v1236
    %v1601 = vpack.c.b16 %v1241, %v1237
    %v1602 = vpack.c.b16 %v1242, %v1238
    %v1603 = vpack.c.b16 %v1243, %v1239
    %v1604 = vpack.c.b16 %v1248, %v1244
    %v1605 = vpack.c.b16 %v1249, %v1245
    %v1606 = vpack.c.b16 %v1250, %v1246
    %v1607 = vpack.c.b16 %v1251, %v1247
    %v1608 = vpack.c.b16 %v1256, %v1252
    %v1609 = vpack.c.b16 %v1257, %v1253
    %v1610 = vpack.c.b16 %v1258, %v1254
    %v1611 = vpack.c.b16 %v1259, %v1255
    %v1612 = vpack.c.b16 %v1264, %v1260
    %v1613 = vpack.c.b16 %v1265, %v1261
    %v1614 = vpack.c.b16 %v1266, %v1262
    %v1615 = vpack.c.b16 %v1267, %v1263
    %v1616 = vpack.c.b16 %v1272, %v1268
    %v1617 = vpack.c.b16 %v1273, %v1269
    %v1618 = vpack.c.b16 %v1274, %v1270
    %v1619 = vpack.c.b16 %v1275, %v1271
    %v1620 = vpack.c.b16 %v1280, %v1276
    %v1621 = vpack.c.b16 %v1281, %v1277
    %v1622 = vpack.c.b16 %v1282, %v1278
    %v1623 = vpack.c.b16 %v1283, %v1279
    %v1624 = vpack.c.b16 %v1288, %v1284
    %v1625 = vpack.c.b16 %v1289, %v1285
    %v1626 = vpack.c.b16 %v1290, %v1286
    %v1627 = vpack.c.b16 %v1291, %v1287
    %v1628 = vpack.c.b16 %v1296, %v1292
    %v1629 = vpack.c.b16 %v1297, %v1293
    %v1630 = vpack.c.b16 %v1298, %v1294
    %v1631 = vpack.c.b16 %v1299, %v1295
    %v1632 = vpack.c.b16 %v1304, %v1300
    %v1633 = vpack.c.b16 %v1305, %v1301
    %v1634 = vpack.c.b16 %v1306, %v1302
    %v1635 = vpack.c.b16 %v1307, %v1303
    %v1636 = vpack.c.b16 %v1312, %v1308
    %v1637 = vpack.c.b16 %v1313, %v1309
    %v1638 = vpack.c.b16 %v1314, %v1310
    %v1639 = vpack.c.b16 %v1315, %v1311
    %v1640 = vpack.c.b16 %v1320, %v1316
    %v1641 = vpack.c.b16 %v1321, %v1317
    %v1642 = vpack.c.b16 %v1322, %v1318
    %v1643 = vpack.c.b16 %v1323, %v1319
    %v1644 = vpack.c.b16 %v1328, %v1324
    %v1645 = vpack.c.b16 %v1329, %v1325
    %v1646 = vpack.c.b16 %v1330, %v1326
    %v1647 = vpack.c.b16 %v1331, %v1327
    %v1648 = vpack.c.b16 %v1336, %v1332
    %v1649 = vpack.c.b16 %v1337, %v1333
    %v1650 = vpack.c.b16 %v1338, %v1334
    %v1651 = vpack.c.b16 %v1339, %v1335
    %v1652 = vpack.c.b16 %v1344, %v1340
    %v1653 = vpack.c.b16 %v1345, %v1341
    %v1654 = vpack.c.b16 %v1346, %v1342
    %v1655 = vpack.c.b16 %v1347, %v1343
    %v1656 = vpack.c.b16 %v1352, %v1348
    %v1657 = vpack.c.b16 %v1353, %v1349
    %v1658 = vpack.c.b16 %v1354, %v1350
    %v1659 = vpack.c.b16 %v1355, %v1351
    %v1660 = vpack.c.b16 %v1360, %v1356
    %v1661 = vpack.c.b16 %v1361, %v1357
    %v1662 = vpack.c.b16 %v1362, %v1358
    %v1663 = vpack.c.b16 %v1363, %v1359
    %v1664 = vpack.c.b16 %v1368, %v1364
    %v1665 = vpack.c.b16 %v1369, %v1365
    %v1666 = vpack.c.b16 %v1370, %v1366
    %v1667 = vpack.c.b16 %v1371, %v1367
    %v1668 = vpack.c.b16 %v1376, %v1372
    %v1669 = vpack.c.b16 %v1377, %v1373
    %v1670 = vpack.c.b16 %v1378, %v1374
    %v1671 = vpack.c.b16 %v1379, %v1375
    %v1672 = vpack.c.b16 %v1384, %v1380
    %v1673 = vpack.c.b16 %v1385, %v1381
    %v1674 = vpack.c.b16 %v1386, %v1382
    %v1675 = vpack.c.b16 %v1387, %v1383
    %v1676 = vpack.c.b16 %v1392, %v1388
    %v1677 = vpack.c.b16 %v1393, %v1389
    %v1678 = vpack.c.b16 %v1394, %v1390
    %v1679 = vpack.c.b16 %v1395, %v1391
    %v1680 = vpack.c.b16 %v1400, %v1396
    %v1681 = vpack.c.b16 %v1401, %v1397
    %v1682 = vpack.c.b16 %v1402, %v1398
    %v1683 = vpack.c.b16 %v1403, %v1399
    %v1684 = vpack.c.b16 %v1408, %v1404
    %v1685 = vpack.c.b16 %v1409, %v1405
    %v1686 = vpack.c.b16 %v1410, %v1406
    %v1687 = vpack.c.b16 %v1411, %v1407
    %v1688 = vpack.c.b16 %v1416, %v1412
    %v1689 = vpack.c.b16 %v1417, %v1413
    %v1690 = vpack.c.b16 %v1418, %v1414
    %v1691 = vpack.c.b16 %v1419, %v1415
    %v1692 = vpack.c.b16 %v1424, %v1420
    %v1693 = vpack.c.b16 %v1425, %v1421
    %v1694 = vpack.c.b16 %v1426, %v1422
    %v1695 = vpack.c.b16 %v1427, %v1423
    %v1696 = vpack.c.b16 %v1432, %v1428
    %v1697 = vpack.c.b16 %v1433, %v1429
    %v1698 = vpack.c.b16 %v1434, %v1430
    %v1699 = vpack.c.b16 %v1435, %v1431
    %v1700 = vpack.c.b16 %v1440, %v1436
    %v1701 = vpack.c.b16 %v1441, %v1437
    %v1702 = vpack.c.b16 %v1442, %v1438
    %v1703 = vpack.c.b16 %v1443, %v1439
    %v1704 = vpack.c.b16 %v1448, %v1444
    %v1705 = vpack.c.b16 %v1449, %v1445
    %v1706 = vpack.c.b16 %v1450, %v1446
    %v1707 = vpack.c.b16 %v1451, %v1447
    %1964 = vmatprep.subr.bf16.mxu0 %v1481
    %1965 = vmatpush1.bf16.msra.mxu0 %v1480
    %1966 = vmatprep.subr.bf16.mxu0 %v1477
    %1967 = vmatpush1.bf16.msra.mxu0 %v1476
    %1968 = vmatprep.subr.bf16.mxu0 %v1473
    %1969 = vmatpush1.bf16.msra.mxu0 %v1472
    %1970 = vmatprep.subr.bf16.mxu0 %v1469
    %1971 = vmatpush1.bf16.msra.mxu0 %v1468
    %1972 = vmatprep.subr.bf16.mxu0 %v1465
    %1973 = vmatpush1.bf16.msra.mxu0 %v1464
    %1974 = vmatprep.subr.bf16.mxu0 %v1461
    %1975 = vmatpush1.bf16.msra.mxu0 %v1460
    %1976 = vmatprep.subr.bf16.mxu0 %v1457
    %1977 = vmatpush1.bf16.msra.mxu0 %v1456
    %1978 = vmatprep.subr.bf16.mxu0 %v1453
    %1979 = vmatpush1.bf16.msra.mxu0 %v1452
    %1980 = vmatprep.subr.bf16.mxu0 %v1513
    %1981 = vmatpush2.bf16.msra.mxu0 %v1512
    %1982 = vmatprep.subr.bf16.mxu0 %v1509
    %1983 = vmatpush2.bf16.msra.mxu0 %v1508
    %1984 = vmatprep.subr.bf16.mxu0 %v1505
    %1985 = vmatpush2.bf16.msra.mxu0 %v1504
    %1986 = vmatprep.subr.bf16.mxu0 %v1501
    %1987 = vmatpush2.bf16.msra.mxu0 %v1500
    %1988 = vmatprep.subr.bf16.mxu0 %v1497
    %1989 = vmatpush2.bf16.msra.mxu0 %v1496
    %1990 = vmatprep.subr.bf16.mxu0 %v1493
    %1991 = vmatpush2.bf16.msra.mxu0 %v1492
    %1992 = vmatprep.subr.bf16.mxu0 %v1489
    %1993 = vmatpush2.bf16.msra.mxu0 %v1488
    %1994 = vmatprep.subr.bf16.mxu0 %v1485
    %1995 = vmatpush2.bf16.msra.mxu0 %v1484
    %1996 = vmatprep.mubr.bf16.mxu0 %v669
    %1997 = vmatmul.mubr.bf16.gmra.mxu0 %v668
    %v1998 = vpop.f32.mrf.mxu0
    %v1999 = vadd.f32 0.0, %v1998
    %v2000 = vpop.f32.mrf.mxu0
    %v2001 = vadd.f32 0.0, %v2000
    %v2002 = vpop.f32.mrf.mxu0
    %v2003 = vpop.f32.mrf.mxu0
    %2004 = vdwg.mxu0
    %2005 = vmatprep.subr.bf16.mxu0 %v1545
    %2006 = vmatpush1.bf16.msra.mxu0 %v1544
    %2007 = vmatprep.subr.bf16.mxu0 %v1541
    %2008 = vmatpush1.bf16.msra.mxu0 %v1540
    %2009 = vmatprep.subr.bf16.mxu0 %v1537
    %2010 = vmatpush1.bf16.msra.mxu0 %v1536
    %2011 = vmatprep.subr.bf16.mxu0 %v1533
    %2012 = vmatpush1.bf16.msra.mxu0 %v1532
    %2013 = vmatprep.subr.bf16.mxu0 %v1529
    %2014 = vmatpush1.bf16.msra.mxu0 %v1528
    %2015 = vmatprep.subr.bf16.mxu0 %v1525
    %2016 = vmatpush1.bf16.msra.mxu0 %v1524
    %2017 = vmatprep.subr.bf16.mxu0 %v1521
    %2018 = vmatpush1.bf16.msra.mxu0 %v1520
    %2019 = vmatprep.subr.bf16.mxu0 %v1517
    %2020 = vmatpush1.bf16.msra.mxu0 %v1516
    %2021 = vmatprep.subr.bf16.mxu0 %v1577
    %2022 = vmatpush2.bf16.msra.mxu0 %v1576
    %2023 = vmatprep.subr.bf16.mxu0 %v1573
    %2024 = vmatpush2.bf16.msra.mxu0 %v1572
    %2025 = vmatprep.subr.bf16.mxu0 %v1569
    %2026 = vmatpush2.bf16.msra.mxu0 %v1568
    %2027 = vmatprep.subr.bf16.mxu0 %v1565
    %2028 = vmatpush2.bf16.msra.mxu0 %v1564
    %2029 = vmatprep.subr.bf16.mxu0 %v1561
    %2030 = vmatpush2.bf16.msra.mxu0 %v1560
    %2031 = vmatprep.subr.bf16.mxu0 %v1557
    %2032 = vmatpush2.bf16.msra.mxu0 %v1556
    %2033 = vmatprep.subr.bf16.mxu0 %v1553
    %2034 = vmatpush2.bf16.msra.mxu0 %v1552
    %2035 = vmatprep.subr.bf16.mxu0 %v1549
    %2036 = vmatpush2.bf16.msra.mxu0 %v1548
    %2037 = vmatprep.mubr.bf16.mxu0 %v671
    %2038 = vmatmul.mubr.bf16.gmra.mxu0 %v670
    %v2039 = vpop.f32.mrf.mxu0
    %v2040 = vadd.f32 %v1999, %v2039
    %v2041 = vpop.f32.mrf.mxu0
    %v2042 = vadd.f32 %v2001, %v2041
    %v2043 = vpop.f32.mrf.mxu0
    %v2044 = vpop.f32.mrf.mxu0
    %2045 = vdwg.mxu0
    %2046 = vmatprep.subr.bf16.mxu0 %v1609
    %2047 = vmatpush1.bf16.msra.mxu0 %v1608
    %2048 = vmatprep.subr.bf16.mxu0 %v1605
    %2049 = vmatpush1.bf16.msra.mxu0 %v1604
    %2050 = vmatprep.subr.bf16.mxu0 %v1601
    %2051 = vmatpush1.bf16.msra.mxu0 %v1600
    %2052 = vmatprep.subr.bf16.mxu0 %v1597
    %2053 = vmatpush1.bf16.msra.mxu0 %v1596
    %2054 = vmatprep.subr.bf16.mxu0 %v1593
    %2055 = vmatpush1.bf16.msra.mxu0 %v1592
    %2056 = vmatprep.subr.bf16.mxu0 %v1589
    %2057 = vmatpush1.bf16.msra.mxu0 %v1588
    %2058 = vmatprep.subr.bf16.mxu0 %v1585
    %2059 = vmatpush1.bf16.msra.mxu0 %v1584
    %2060 = vmatprep.subr.bf16.mxu0 %v1581
    %2061 = vmatpush1.bf16.msra.mxu0 %v1580
    %2062 = vmatprep.subr.bf16.mxu0 %v1641
    %2063 = vmatpush2.bf16.msra.mxu0 %v1640
    %2064 = vmatprep.subr.bf16.mxu0 %v1637
    %2065 = vmatpush2.bf16.msra.mxu0 %v1636
    %2066 = vmatprep.subr.bf16.mxu0 %v1633
    %2067 = vmatpush2.bf16.msra.mxu0 %v1632
    %2068 = vmatprep.subr.bf16.mxu0 %v1629
    %2069 = vmatpush2.bf16.msra.mxu0 %v1628
    %2070 = vmatprep.subr.bf16.mxu0 %v1625
    %2071 = vmatpush2.bf16.msra.mxu0 %v1624
    %2072 = vmatprep.subr.bf16.mxu0 %v1621
    %2073 = vmatpush2.bf16.msra.mxu0 %v1620
    %2074 = vmatprep.subr.bf16.mxu0 %v1617
    %2075 = vmatpush2.bf16.msra.mxu0 %v1616
    %2076 = vmatprep.subr.bf16.mxu0 %v1613
    %2077 = vmatpush2.bf16.msra.mxu0 %v1612
    %2078 = vmatprep.mubr.bf16.mxu0 %v673
    %2079 = vmatmul.mubr.bf16.gmra.mxu0 %v672
    %v2080 = vpop.f32.mrf.mxu0
    %v2081 = vadd.f32 %v2040, %v2080
    %v2082 = vpop.f32.mrf.mxu0
    %v2083 = vadd.f32 %v2042, %v2082
    %v2084 = vpop.f32.mrf.mxu0
    %v2085 = vpop.f32.mrf.mxu0
    %2086 = vdwg.mxu0
    %2087 = vmatprep.subr.bf16.mxu0 %v1673
    %2088 = vmatpush1.bf16.msra.mxu0 %v1672
    %2089 = vmatprep.subr.bf16.mxu0 %v1669
    %2090 = vmatpush1.bf16.msra.mxu0 %v1668
    %2091 = vmatprep.subr.bf16.mxu0 %v1665
    %2092 = vmatpush1.bf16.msra.mxu0 %v1664
    %2093 = vmatprep.subr.bf16.mxu0 %v1661
    %2094 = vmatpush1.bf16.msra.mxu0 %v1660
    %2095 = vmatprep.subr.bf16.mxu0 %v1657
    %2096 = vmatpush1.bf16.msra.mxu0 %v1656
    %2097 = vmatprep.subr.bf16.mxu0 %v1653
    %2098 = vmatpush1.bf16.msra.mxu0 %v1652
    %2099 = vmatprep.subr.bf16.mxu0 %v1649
    %2100 = vmatpush1.bf16.msra.mxu0 %v1648
    %2101 = vmatprep.subr.bf16.mxu0 %v1645
    %2102 = vmatpush1.bf16.msra.mxu0 %v1644
    %2103 = vmatprep.subr.bf16.mxu0 %v1705
    %2104 = vmatpush2.bf16.msra.mxu0 %v1704
    %2105 = vmatprep.subr.bf16.mxu0 %v1701
    %2106 = vmatpush2.bf16.msra.mxu0 %v1700
    %2107 = vmatprep.subr.bf16.mxu0 %v1697
    %2108 = vmatpush2.bf16.msra.mxu0 %v1696
    %2109 = vmatprep.subr.bf16.mxu0 %v1693
    %2110 = vmatpush2.bf16.msra.mxu0 %v1692
    %2111 = vmatprep.subr.bf16.mxu0 %v1689
    %2112 = vmatpush2.bf16.msra.mxu0 %v1688
    %2113 = vmatprep.subr.bf16.mxu0 %v1685
    %2114 = vmatpush2.bf16.msra.mxu0 %v1684
    %2115 = vmatprep.subr.bf16.mxu0 %v1681
    %2116 = vmatpush2.bf16.msra.mxu0 %v1680
    %2117 = vmatprep.subr.bf16.mxu0 %v1677
    %2118 = vmatpush2.bf16.msra.mxu0 %v1676
    %2119 = vmatprep.mubr.bf16.mxu0 %v675
    %2120 = vmatmul.mubr.bf16.gmra.mxu0 %v674
    %v2121 = vpop.f32.mrf.mxu0
    %v2122 = vadd.f32 %v2081, %v2121
    %v2123 = vpop.f32.mrf.mxu0
    %v2124 = vadd.f32 %v2083, %v2123
    %v2125 = vpop.f32.mrf.mxu0
    %v2126 = vpop.f32.mrf.mxu0
    %2127 = vdwg.mxu0
    %2128 = vmatprep.subr.bf16.mxu0 %v1483
    %2129 = vmatpush1.bf16.msra.mxu0 %v1482
    %2130 = vmatprep.subr.bf16.mxu0 %v1479
    %2131 = vmatpush1.bf16.msra.mxu0 %v1478
    %2132 = vmatprep.subr.bf16.mxu0 %v1475
    %2133 = vmatpush1.bf16.msra.mxu0 %v1474
    %2134 = vmatprep.subr.bf16.mxu0 %v1471
    %2135 = vmatpush1.bf16.msra.mxu0 %v1470
    %2136 = vmatprep.subr.bf16.mxu0 %v1467
    %2137 = vmatpush1.bf16.msra.mxu0 %v1466
    %2138 = vmatprep.subr.bf16.mxu0 %v1463
    %2139 = vmatpush1.bf16.msra.mxu0 %v1462
    %2140 = vmatprep.subr.bf16.mxu0 %v1459
    %2141 = vmatpush1.bf16.msra.mxu0 %v1458
    %2142 = vmatprep.subr.bf16.mxu0 %v1455
    %2143 = vmatpush1.bf16.msra.mxu0 %v1454
    %2144 = vmatprep.subr.bf16.mxu0 %v1515
    %2145 = vmatpush2.bf16.msra.mxu0 %v1514
    %2146 = vmatprep.subr.bf16.mxu0 %v1511
    %2147 = vmatpush2.bf16.msra.mxu0 %v1510
    %2148 = vmatprep.subr.bf16.mxu0 %v1507
    %2149 = vmatpush2.bf16.msra.mxu0 %v1506
    %2150 = vmatprep.subr.bf16.mxu0 %v1503
    %2151 = vmatpush2.bf16.msra.mxu0 %v1502
    %2152 = vmatprep.subr.bf16.mxu0 %v1499
    %2153 = vmatpush2.bf16.msra.mxu0 %v1498
    %2154 = vmatprep.subr.bf16.mxu0 %v1495
    %2155 = vmatpush2.bf16.msra.mxu0 %v1494
    %2156 = vmatprep.subr.bf16.mxu0 %v1491
    %2157 = vmatpush2.bf16.msra.mxu0 %v1490
    %2158 = vmatprep.subr.bf16.mxu0 %v1487
    %2159 = vmatpush2.bf16.msra.mxu0 %v1486
    %2160 = vmatprep.mubr.bf16.mxu0 %v669
    %2161 = vmatmul.mubr.bf16.gmra.mxu0 %v668
    %v2162 = vpop.f32.mrf.mxu0
    %v2163 = vadd.f32 0.0, %v2162
    %v2164 = vpop.f32.mrf.mxu0
    %v2165 = vadd.f32 0.0, %v2164
    %v2166 = vpop.f32.mrf.mxu0
    %v2167 = vpop.f32.mrf.mxu0
    %2168 = vdwg.mxu0
    %2169 = vmatprep.subr.bf16.mxu0 %v1547
    %2170 = vmatpush1.bf16.msra.mxu0 %v1546
    %2171 = vmatprep.subr.bf16.mxu0 %v1543
    %2172 = vmatpush1.bf16.msra.mxu0 %v1542
    %2173 = vmatprep.subr.bf16.mxu0 %v1539
    %2174 = vmatpush1.bf16.msra.mxu0 %v1538
    %2175 = vmatprep.subr.bf16.mxu0 %v1535
    %2176 = vmatpush1.bf16.msra.mxu0 %v1534
    %2177 = vmatprep.subr.bf16.mxu0 %v1531
    %2178 = vmatpush1.bf16.msra.mxu0 %v1530
    %2179 = vmatprep.subr.bf16.mxu0 %v1527
    %2180 = vmatpush1.bf16.msra.mxu0 %v1526
    %2181 = vmatprep.subr.bf16.mxu0 %v1523
    %2182 = vmatpush1.bf16.msra.mxu0 %v1522
    %2183 = vmatprep.subr.bf16.mxu0 %v1519
    %2184 = vmatpush1.bf16.msra.mxu0 %v1518
    %2185 = vmatprep.subr.bf16.mxu0 %v1579
    %2186 = vmatpush2.bf16.msra.mxu0 %v1578
    %2187 = vmatprep.subr.bf16.mxu0 %v1575
    %2188 = vmatpush2.bf16.msra.mxu0 %v1574
    %2189 = vmatprep.subr.bf16.mxu0 %v1571
    %2190 = vmatpush2.bf16.msra.mxu0 %v1570
    %2191 = vmatprep.subr.bf16.mxu0 %v1567
    %2192 = vmatpush2.bf16.msra.mxu0 %v1566
    %2193 = vmatprep.subr.bf16.mxu0 %v1563
    %2194 = vmatpush2.bf16.msra.mxu0 %v1562
    %2195 = vmatprep.subr.bf16.mxu0 %v1559
    %2196 = vmatpush2.bf16.msra.mxu0 %v1558
    %2197 = vmatprep.subr.bf16.mxu0 %v1555
    %2198 = vmatpush2.bf16.msra.mxu0 %v1554
    %2199 = vmatprep.subr.bf16.mxu0 %v1551
    %2200 = vmatpush2.bf16.msra.mxu0 %v1550
    %2201 = vmatprep.mubr.bf16.mxu0 %v671
    %2202 = vmatmul.mubr.bf16.gmra.mxu0 %v670
    %v2203 = vpop.f32.mrf.mxu0
    %v2204 = vadd.f32 %v2163, %v2203
    %v2205 = vpop.f32.mrf.mxu0
    %v2206 = vadd.f32 %v2165, %v2205
    %v2207 = vpop.f32.mrf.mxu0
    %v2208 = vpop.f32.mrf.mxu0
    %2209 = vdwg.mxu0
    %2210 = vmatprep.subr.bf16.mxu0 %v1611
    %2211 = vmatpush1.bf16.msra.mxu0 %v1610
    %2212 = vmatprep.subr.bf16.mxu0 %v1607
    %2213 = vmatpush1.bf16.msra.mxu0 %v1606
    %2214 = vmatprep.subr.bf16.mxu0 %v1603
    %2215 = vmatpush1.bf16.msra.mxu0 %v1602
    %2216 = vmatprep.subr.bf16.mxu0 %v1599
    %2217 = vmatpush1.bf16.msra.mxu0 %v1598
    %2218 = vmatprep.subr.bf16.mxu0 %v1595
    %2219 = vmatpush1.bf16.msra.mxu0 %v1594
    %2220 = vmatprep.subr.bf16.mxu0 %v1591
    %2221 = vmatpush1.bf16.msra.mxu0 %v1590
    %2222 = vmatprep.subr.bf16.mxu0 %v1587
    %2223 = vmatpush1.bf16.msra.mxu0 %v1586
    %2224 = vmatprep.subr.bf16.mxu0 %v1583
    %2225 = vmatpush1.bf16.msra.mxu0 %v1582
    %2226 = vmatprep.subr.bf16.mxu0 %v1643
    %2227 = vmatpush2.bf16.msra.mxu0 %v1642
    %2228 = vmatprep.subr.bf16.mxu0 %v1639
    %2229 = vmatpush2.bf16.msra.mxu0 %v1638
    %2230 = vmatprep.subr.bf16.mxu0 %v1635
    %2231 = vmatpush2.bf16.msra.mxu0 %v1634
    %2232 = vmatprep.subr.bf16.mxu0 %v1631
    %2233 = vmatpush2.bf16.msra.mxu0 %v1630
    %2234 = vmatprep.subr.bf16.mxu0 %v1627
    %2235 = vmatpush2.bf16.msra.mxu0 %v1626
    %2236 = vmatprep.subr.bf16.mxu0 %v1623
    %2237 = vmatpush2.bf16.msra.mxu0 %v1622
    %2238 = vmatprep.subr.bf16.mxu0 %v1619
    %2239 = vmatpush2.bf16.msra.mxu0 %v1618
    %2240 = vmatprep.subr.bf16.mxu0 %v1615
    %2241 = vmatpush2.bf16.msra.mxu0 %v1614
    %2242 = vmatprep.mubr.bf16.mxu0 %v673
    %2243 = vmatmul.mubr.bf16.gmra.mxu0 %v672
    %v2244 = vpop.f32.mrf.mxu0
    %v2245 = vadd.f32 %v2204, %v2244
    %v2246 = vpop.f32.mrf.mxu0
    %v2247 = vadd.f32 %v2206, %v2246
    %v2248 = vpop.f32.mrf.mxu0
    %v2249 = vpop.f32.mrf.mxu0
    %2250 = vdwg.mxu0
    %2251 = vmatprep.subr.bf16.mxu0 %v1675
    %2252 = vmatpush1.bf16.msra.mxu0 %v1674
    %2253 = vmatprep.subr.bf16.mxu0 %v1671
    %2254 = vmatpush1.bf16.msra.mxu0 %v1670
    %2255 = vmatprep.subr.bf16.mxu0 %v1667
    %2256 = vmatpush1.bf16.msra.mxu0 %v1666
    %2257 = vmatprep.subr.bf16.mxu0 %v1663
    %2258 = vmatpush1.bf16.msra.mxu0 %v1662
    %2259 = vmatprep.subr.bf16.mxu0 %v1659
    %2260 = vmatpush1.bf16.msra.mxu0 %v1658
    %2261 = vmatprep.subr.bf16.mxu0 %v1655
    %2262 = vmatpush1.bf16.msra.mxu0 %v1654
    %2263 = vmatprep.subr.bf16.mxu0 %v1651
    %2264 = vmatpush1.bf16.msra.mxu0 %v1650
    %2265 = vmatprep.subr.bf16.mxu0 %v1647
    %2266 = vmatpush1.bf16.msra.mxu0 %v1646
    %2267 = vmatprep.subr.bf16.mxu0 %v1707
    %2268 = vmatpush2.bf16.msra.mxu0 %v1706
    %2269 = vmatprep.subr.bf16.mxu0 %v1703
    %2270 = vmatpush2.bf16.msra.mxu0 %v1702
    %2271 = vmatprep.subr.bf16.mxu0 %v1699
    %2272 = vmatpush2.bf16.msra.mxu0 %v1698
    %2273 = vmatprep.subr.bf16.mxu0 %v1695
    %2274 = vmatpush2.bf16.msra.mxu0 %v1694
    %2275 = vmatprep.subr.bf16.mxu0 %v1691
    %2276 = vmatpush2.bf16.msra.mxu0 %v1690
    %2277 = vmatprep.subr.bf16.mxu0 %v1687
    %2278 = vmatpush2.bf16.msra.mxu0 %v1686
    %2279 = vmatprep.subr.bf16.mxu0 %v1683
    %2280 = vmatpush2.bf16.msra.mxu0 %v1682
    %2281 = vmatprep.subr.bf16.mxu0 %v1679
    %2282 = vmatpush2.bf16.msra.mxu0 %v1678
    %2283 = vmatprep.mubr.bf16.mxu0 %v675
    %2284 = vmatmul.mubr.bf16.gmra.mxu0 %v674
    %v2285 = vpop.f32.mrf.mxu0
    %v2286 = vadd.f32 %v2245, %v2285
    %v2287 = vpop.f32.mrf.mxu0
    %v2288 = vadd.f32 %v2247, %v2287
    %v2289 = vpop.f32.mrf.mxu0
    %v2290 = vpop.f32.mrf.mxu0
    %2291 = vdwg.mxu0
    %v2292 = vld [vmem:[%s4] sm:$0xf]
    %v2294 = vlaneseq
    %v2295 = vshrl.u32 %v2294, 7
    %v2296 = vsub.s32 0, %v2295
    %v2297 = vrot.slane %v2292, %v2296
    %v2298 = vlaneseq
    %v2299 = vshrl.u32 %v2298, 7
    %v2300 = vsub.s32 1, %v2299
    %v2301 = vrot.slane %v2292, %v2300
    %v2302 = vlaneseq
    %v2303 = vshrl.u32 %v2302, 7
    %v2304 = vsub.s32 2, %v2303
    %v2305 = vrot.slane %v2292, %v2304
    %v2306 = vlaneseq
    %v2307 = vshrl.u32 %v2306, 7
    %v2308 = vsub.s32 3, %v2307
    %v2309 = vrot.slane %v2292, %v2308
    %v2314 = vmul.f32 %v2122, %v2297
    %v2315 = vmul.f32 %v2124, %v2301
    %v2316 = vmul.f32 %v2286, %v2305
    %v2317 = vmul.f32 %v2288, %v2309
    %v2318 = vld [vmem:[%s5] sm:$0xf]
    %v2320 = vlaneseq
    %v2321 = vshrl.u32 %v2320, 7
    %v2322 = vsub.s32 0, %v2321
    %v2323 = vrot.slane %v2318, %v2322
    %v2324 = vlaneseq
    %v2325 = vshrl.u32 %v2324, 7
    %v2326 = vsub.s32 1, %v2325
    %v2327 = vrot.slane %v2318, %v2326
    %v2328 = vlaneseq
    %v2329 = vshrl.u32 %v2328, 7
    %v2330 = vsub.s32 2, %v2329
    %v2331 = vrot.slane %v2318, %v2330
    %v2332 = vlaneseq
    %v2333 = vshrl.u32 %v2332, 7
    %v2334 = vsub.s32 3, %v2333
    %v2335 = vrot.slane %v2318, %v2334
    %v2340 = vadd.f32 %v2314, %v2323
    %v2341 = vadd.f32 %v2315, %v2327
    %v2342 = vadd.f32 %v2316, %v2331
    %v2343 = vadd.f32 %v2317, %v2335
    %v2344 = vmax.f32 %v2340, 0.0
    %v2345 = vmax.f32 %v2341, 0.0
    %v2346 = vmax.f32 %v2342, 0.0
    %v2347 = vmax.f32 %v2343, 0.0
    %v2348 = vpack.c.bf16 %v2344, %v2344
    %v2349 = vpack.c.bf16 %v2345, %v2345
    %v2350 = vpack.c.bf16 %v2346, %v2346
    %v2351 = vpack.c.bf16 %v2347, %v2347
    %v2352 = vld [vmem:[%s6] sm:$0xff]
    %v2353 = vld [vmem:[%s6 + $0x8] sm:$0xff]
    %v2354 = vld [vmem:[%s6 + $0x10] sm:$0xff]
    %v2355 = vld [vmem:[%s6 + $0x18] sm:$0xff]
    %v2356 = vld [vmem:[%s6 + $0x20] sm:$0xff]
    %v2357 = vld [vmem:[%s6 + $0x28] sm:$0xff]
    %v2358 = vld [vmem:[%s6 + $0x30] sm:$0xff]
    %v2359 = vld [vmem:[%s6 + $0x38] sm:$0xff]
    %v2360 = vld [vmem:[%s6 + $0x40] sm:$0xff]
    %v2361 = vld [vmem:[%s6 + $0x48] sm:$0xff]
    %v2362 = vld [vmem:[%s6 + $0x50] sm:$0xff]
    %v2363 = vld [vmem:[%s6 + $0x58] sm:$0xff]
    %v2364 = vld [vmem:[%s6 + $0x60] sm:$0xff]
    %v2365 = vld [vmem:[%s6 + $0x68] sm:$0xff]
    %v2366 = vld [vmem:[%s6 + $0x70] sm:$0xff]
    %v2367 = vld [vmem:[%s6 + $0x78] sm:$0xff]
    %v2368 = vld [vmem:[%s6 + $0x80] sm:$0xff]
    %v2369 = vld [vmem:[%s6 + $0x88] sm:$0xff]
    %v2370 = vld [vmem:[%s6 + $0x90] sm:$0xff]
    %v2371 = vld [vmem:[%s6 + $0x98] sm:$0xff]
    %v2372 = vld [vmem:[%s6 + $0xa0] sm:$0xff]
    %v2373 = vld [vmem:[%s6 + $0xa8] sm:$0xff]
    %v2374 = vld [vmem:[%s6 + $0xb0] sm:$0xff]
    %v2375 = vld [vmem:[%s6 + $0xb8] sm:$0xff]
    %v2376 = vld [vmem:[%s6 + $0xc0] sm:$0xff]
    %v2377 = vld [vmem:[%s6 + $0xc8] sm:$0xff]
    %v2378 = vld [vmem:[%s6 + $0xd0] sm:$0xff]
    %v2379 = vld [vmem:[%s6 + $0xd8] sm:$0xff]
    %v2380 = vld [vmem:[%s6 + $0xe0] sm:$0xff]
    %v2381 = vld [vmem:[%s6 + $0xe8] sm:$0xff]
    %v2382 = vld [vmem:[%s6 + $0xf0] sm:$0xff]
    %v2383 = vld [vmem:[%s6 + $0xf8] sm:$0xff]
    %v2384 = vld [vmem:[%s6 + $0x100] sm:$0xff]
    %v2385 = vld [vmem:[%s6 + $0x108] sm:$0xff]
    %v2386 = vld [vmem:[%s6 + $0x110] sm:$0xff]
    %v2387 = vld [vmem:[%s6 + $0x118] sm:$0xff]
    %v2388 = vld [vmem:[%s6 + $0x120] sm:$0xff]
    %v2389 = vld [vmem:[%s6 + $0x128] sm:$0xff]
    %v2390 = vld [vmem:[%s6 + $0x130] sm:$0xff]
    %v2391 = vld [vmem:[%s6 + $0x138] sm:$0xff]
    %v2392 = vld [vmem:[%s6 + $0x140] sm:$0xff]
    %v2393 = vld [vmem:[%s6 + $0x148] sm:$0xff]
    %v2394 = vld [vmem:[%s6 + $0x150] sm:$0xff]
    %v2395 = vld [vmem:[%s6 + $0x158] sm:$0xff]
    %v2396 = vld [vmem:[%s6 + $0x160] sm:$0xff]
    %v2397 = vld [vmem:[%s6 + $0x168] sm:$0xff]
    %v2398 = vld [vmem:[%s6 + $0x170] sm:$0xff]
    %v2399 = vld [vmem:[%s6 + $0x178] sm:$0xff]
    %v2400 = vld [vmem:[%s6 + $0x180] sm:$0xff]
    %v2401 = vld [vmem:[%s6 + $0x188] sm:$0xff]
    %v2402 = vld [vmem:[%s6 + $0x190] sm:$0xff]
    %v2403 = vld [vmem:[%s6 + $0x198] sm:$0xff]
    %v2404 = vld [vmem:[%s6 + $0x1a0] sm:$0xff]
    %v2405 = vld [vmem:[%s6 + $0x1a8] sm:$0xff]
    %v2406 = vld [vmem:[%s6 + $0x1b0] sm:$0xff]
    %v2407 = vld [vmem:[%s6 + $0x1b8] sm:$0xff]
    %v2408 = vld [vmem:[%s6 + $0x1c0] sm:$0xff]
    %v2409 = vld [vmem:[%s6 + $0x1c8] sm:$0xff]
    %v2410 = vld [vmem:[%s6 + $0x1d0] sm:$0xff]
    %v2411 = vld [vmem:[%s6 + $0x1d8] sm:$0xff]
    %v2412 = vld [vmem:[%s6 + $0x1e0] sm:$0xff]
    %v2413 = vld [vmem:[%s6 + $0x1e8] sm:$0xff]
    %v2414 = vld [vmem:[%s6 + $0x1f0] sm:$0xff]
    %v2415 = vld [vmem:[%s6 + $0x1f8] sm:$0xff]
    %v2480 = vunpack.c.l.b16 %v2352
    %v2481 = vunpack.c.h.b16 %v2352
    %v2482 = vunpack.c.l.b16 %v2353
    %v2483 = vunpack.c.h.b16 %v2353
    %v2484 = vunpack.c.l.b16 %v2354
    %v2485 = vunpack.c.h.b16 %v2354
    %v2486 = vunpack.c.l.b16 %v2355
    %v2487 = vunpack.c.h.b16 %v2355
    %v2488 = vunpack.c.l.b16 %v2356
    %v2489 = vunpack.c.h.b16 %v2356
    %v2490 = vunpack.c.l.b16 %v2357
    %v2491 = vunpack.c.h.b16 %v2357
    %v2492 = vunpack.c.l.b16 %v2358
    %v2493 = vunpack.c.h.b16 %v2358
    %v2494 = vunpack.c.l.b16 %v2359
    %v2495 = vunpack.c.h.b16 %v2359
    %v2496 = vunpack.c.l.b16 %v2360
    %v2497 = vunpack.c.h.b16 %v2360
    %v2498 = vunpack.c.l.b16 %v2361
    %v2499 = vunpack.c.h.b16 %v2361
    %v2500 = vunpack.c.l.b16 %v2362
    %v2501 = vunpack.c.h.b16 %v2362
    %v2502 = vunpack.c.l.b16 %v2363
    %v2503 = vunpack.c.h.b16 %v2363
    %v2504 = vunpack.c.l.b16 %v2364
    %v2505 = vunpack.c.h.b16 %v2364
    %v2506 = vunpack.c.l.b16 %v2365
    %v2507 = vunpack.c.h.b16 %v2365
    %v2508 = vunpack.c.l.b16 %v2366
    %v2509 = vunpack.c.h.b16 %v2366
    %v2510 = vunpack.c.l.b16 %v2367
    %v2511 = vunpack.c.h.b16 %v2367
    %v2512 = vunpack.c.l.b16 %v2368
    %v2513 = vunpack.c.h.b16 %v2368
    %v2514 = vunpack.c.l.b16 %v2369
    %v2515 = vunpack.c.h.b16 %v2369
    %v2516 = vunpack.c.l.b16 %v2370
    %v2517 = vunpack.c.h.b16 %v2370
    %v2518 = vunpack.c.l.b16 %v2371
    %v2519 = vunpack.c.h.b16 %v2371
    %v2520 = vunpack.c.l.b16 %v2372
    %v2521 = vunpack.c.h.b16 %v2372
    %v2522 = vunpack.c.l.b16 %v2373
    %v2523 = vunpack.c.h.b16 %v2373
    %v2524 = vunpack.c.l.b16 %v2374
    %v2525 = vunpack.c.h.b16 %v2374
    %v2526 = vunpack.c.l.b16 %v2375
    %v2527 = vunpack.c.h.b16 %v2375
    %v2528 = vunpack.c.l.b16 %v2376
    %v2529 = vunpack.c.h.b16 %v2376
    %v2530 = vunpack.c.l.b16 %v2377
    %v2531 = vunpack.c.h.b16 %v2377
    %v2532 = vunpack.c.l.b16 %v2378
    %v2533 = vunpack.c.h.b16 %v2378
    %v2534 = vunpack.c.l.b16 %v2379
    %v2535 = vunpack.c.h.b16 %v2379
    %v2536 = vunpack.c.l.b16 %v2380
    %v2537 = vunpack.c.h.b16 %v2380
    %v2538 = vunpack.c.l.b16 %v2381
    %v2539 = vunpack.c.h.b16 %v2381
    %v2540 = vunpack.c.l.b16 %v2382
    %v2541 = vunpack.c.h.b16 %v2382
    %v2542 = vunpack.c.l.b16 %v2383
    %v2543 = vunpack.c.h.b16 %v2383
    %v2544 = vunpack.c.l.b16 %v2384
    %v2545 = vunpack.c.h.b16 %v2384
    %v2546 = vunpack.c.l.b16 %v2385
    %v2547 = vunpack.c.h.b16 %v2385
    %v2548 = vunpack.c.l.b16 %v2386
    %v2549 = vunpack.c.h.b16 %v2386
    %v2550 = vunpack.c.l.b16 %v2387
    %v2551 = vunpack.c.h.b16 %v2387
    %v2552 = vunpack.c.l.b16 %v2388
    %v2553 = vunpack.c.h.b16 %v2388
    %v2554 = vunpack.c.l.b16 %v2389
    %v2555 = vunpack.c.h.b16 %v2389
    %v2556 = vunpack.c.l.b16 %v2390
    %v2557 = vunpack.c.h.b16 %v2390
    %v2558 = vunpack.c.l.b16 %v2391
    %v2559 = vunpack.c.h.b16 %v2391
    %v2560 = vunpack.c.l.b16 %v2392
    %v2561 = vunpack.c.h.b16 %v2392
    %v2562 = vunpack.c.l.b16 %v2393
    %v2563 = vunpack.c.h.b16 %v2393
    %v2564 = vunpack.c.l.b16 %v2394
    %v2565 = vunpack.c.h.b16 %v2394
    %v2566 = vunpack.c.l.b16 %v2395
    %v2567 = vunpack.c.h.b16 %v2395
    %v2568 = vunpack.c.l.b16 %v2396
    %v2569 = vunpack.c.h.b16 %v2396
    %v2570 = vunpack.c.l.b16 %v2397
    %v2571 = vunpack.c.h.b16 %v2397
    %v2572 = vunpack.c.l.b16 %v2398
    %v2573 = vunpack.c.h.b16 %v2398
    %v2574 = vunpack.c.l.b16 %v2399
    %v2575 = vunpack.c.h.b16 %v2399
    %v2576 = vunpack.c.l.b16 %v2400
    %v2577 = vunpack.c.h.b16 %v2400
    %v2578 = vunpack.c.l.b16 %v2401
    %v2579 = vunpack.c.h.b16 %v2401
    %v2580 = vunpack.c.l.b16 %v2402
    %v2581 = vunpack.c.h.b16 %v2402
    %v2582 = vunpack.c.l.b16 %v2403
    %v2583 = vunpack.c.h.b16 %v2403
    %v2584 = vunpack.c.l.b16 %v2404
    %v2585 = vunpack.c.h.b16 %v2404
    %v2586 = vunpack.c.l.b16 %v2405
    %v2587 = vunpack.c.h.b16 %v2405
    %v2588 = vunpack.c.l.b16 %v2406
    %v2589 = vunpack.c.h.b16 %v2406
    %v2590 = vunpack.c.l.b16 %v2407
    %v2591 = vunpack.c.h.b16 %v2407
    %v2592 = vunpack.c.l.b16 %v2408
    %v2593 = vunpack.c.h.b16 %v2408
    %v2594 = vunpack.c.l.b16 %v2409
    %v2595 = vunpack.c.h.b16 %v2409
    %v2596 = vunpack.c.l.b16 %v2410
    %v2597 = vunpack.c.h.b16 %v2410
    %v2598 = vunpack.c.l.b16 %v2411
    %v2599 = vunpack.c.h.b16 %v2411
    %v2600 = vunpack.c.l.b16 %v2412
    %v2601 = vunpack.c.h.b16 %v2412
    %v2602 = vunpack.c.l.b16 %v2413
    %v2603 = vunpack.c.h.b16 %v2413
    %v2604 = vunpack.c.l.b16 %v2414
    %v2605 = vunpack.c.h.b16 %v2414
    %v2606 = vunpack.c.l.b16 %v2415
    %v2607 = vunpack.c.h.b16 %v2415
    %v2608 = vpack.c.b16 %v2482, %v2480
    %v2609 = vpack.c.b16 %v2483, %v2481
    %v2610 = vpack.c.b16 %v2486, %v2484
    %v2611 = vpack.c.b16 %v2487, %v2485
    %v2612 = vpack.c.b16 %v2490, %v2488
    %v2613 = vpack.c.b16 %v2491, %v2489
    %v2614 = vpack.c.b16 %v2494, %v2492
    %v2615 = vpack.c.b16 %v2495, %v2493
    %v2616 = vpack.c.b16 %v2498, %v2496
    %v2617 = vpack.c.b16 %v2499, %v2497
    %v2618 = vpack.c.b16 %v2502, %v2500
    %v2619 = vpack.c.b16 %v2503, %v2501
    %v2620 = vpack.c.b16 %v2506, %v2504
    %v2621 = vpack.c.b16 %v2507, %v2505
    %v2622 = vpack.c.b16 %v2510, %v2508
    %v2623 = vpack.c.b16 %v2511, %v2509
    %v2624 = vpack.c.b16 %v2514, %v2512
    %v2625 = vpack.c.b16 %v2515, %v2513
    %v2626 = vpack.c.b16 %v2518, %v2516
    %v2627 = vpack.c.b16 %v2519, %v2517
    %v2628 = vpack.c.b16 %v2522, %v2520
    %v2629 = vpack.c.b16 %v2523, %v2521
    %v2630 = vpack.c.b16 %v2526, %v2524
    %v2631 = vpack.c.b16 %v2527, %v2525
    %v2632 = vpack.c.b16 %v2530, %v2528
    %v2633 = vpack.c.b16 %v2531, %v2529
    %v2634 = vpack.c.b16 %v2534, %v2532
    %v2635 = vpack.c.b16 %v2535, %v2533
    %v2636 = vpack.c.b16 %v2538, %v2536
    %v2637 = vpack.c.b16 %v2539, %v2537
    %v2638 = vpack.c.b16 %v2542, %v2540
    %v2639 = vpack.c.b16 %v2543, %v2541
    %v2640 = vpack.c.b16 %v2546, %v2544
    %v2641 = vpack.c.b16 %v2547, %v2545
    %v2642 = vpack.c.b16 %v2550, %v2548
    %v2643 = vpack.c.b16 %v2551, %v2549
    %v2644 = vpack.c.b16 %v2554, %v2552
    %v2645 = vpack.c.b16 %v2555, %v2553
    %v2646 = vpack.c.b16 %v2558, %v2556
    %v2647 = vpack.c.b16 %v2559, %v2557
    %v2648 = vpack.c.b16 %v2562, %v2560
    %v2649 = vpack.c.b16 %v2563, %v2561
    %v2650 = vpack.c.b16 %v2566, %v2564
    %v2651 = vpack.c.b16 %v2567, %v2565
    %v2652 = vpack.c.b16 %v2570, %v2568
    %v2653 = vpack.c.b16 %v2571, %v2569
    %v2654 = vpack.c.b16 %v2574, %v2572
    %v2655 = vpack.c.b16 %v2575, %v2573
    %v2656 = vpack.c.b16 %v2578, %v2576
    %v2657 = vpack.c.b16 %v2579, %v2577
    %v2658 = vpack.c.b16 %v2582, %v2580
    %v2659 = vpack.c.b16 %v2583, %v2581
    %v2660 = vpack.c.b16 %v2586, %v2584
    %v2661 = vpack.c.b16 %v2587, %v2585
    %v2662 = vpack.c.b16 %v2590, %v2588
    %v2663 = vpack.c.b16 %v2591, %v2589
    %v2664 = vpack.c.b16 %v2594, %v2592
    %v2665 = vpack.c.b16 %v2595, %v2593
    %v2666 = vpack.c.b16 %v2598, %v2596
    %v2667 = vpack.c.b16 %v2599, %v2597
    %v2668 = vpack.c.b16 %v2602, %v2600
    %v2669 = vpack.c.b16 %v2603, %v2601
    %v2670 = vpack.c.b16 %v2606, %v2604
    %v2671 = vpack.c.b16 %v2607, %v2605
    %2736 = vmatprep.subr.bf16.mxu0 %v2623
    %2737 = vmatpush1.bf16.msra.mxu0 %v2622
    %2738 = vmatprep.subr.bf16.mxu0 %v2621
    %2739 = vmatpush1.bf16.msra.mxu0 %v2620
    %2740 = vmatprep.subr.bf16.mxu0 %v2619
    %2741 = vmatpush1.bf16.msra.mxu0 %v2618
    %2742 = vmatprep.subr.bf16.mxu0 %v2617
    %2743 = vmatpush1.bf16.msra.mxu0 %v2616
    %2744 = vmatprep.subr.bf16.mxu0 %v2615
    %2745 = vmatpush1.bf16.msra.mxu0 %v2614
    %2746 = vmatprep.subr.bf16.mxu0 %v2613
    %2747 = vmatpush1.bf16.msra.mxu0 %v2612
    %2748 = vmatprep.subr.bf16.mxu0 %v2611
    %2749 = vmatpush1.bf16.msra.mxu0 %v2610
    %2750 = vmatprep.subr.bf16.mxu0 %v2609
    %2751 = vmatpush1.bf16.msra.mxu0 %v2608
    %2752 = vmatprep.subr.bf16.mxu0 %v2639
    %2753 = vmatpush2.bf16.msra.mxu0 %v2638
    %2754 = vmatprep.subr.bf16.mxu0 %v2637
    %2755 = vmatpush2.bf16.msra.mxu0 %v2636
    %2756 = vmatprep.subr.bf16.mxu0 %v2635
    %2757 = vmatpush2.bf16.msra.mxu0 %v2634
    %2758 = vmatprep.subr.bf16.mxu0 %v2633
    %2759 = vmatpush2.bf16.msra.mxu0 %v2632
    %2760 = vmatprep.subr.bf16.mxu0 %v2631
    %2761 = vmatpush2.bf16.msra.mxu0 %v2630
    %2762 = vmatprep.subr.bf16.mxu0 %v2629
    %2763 = vmatpush2.bf16.msra.mxu0 %v2628
    %2764 = vmatprep.subr.bf16.mxu0 %v2627
    %2765 = vmatpush2.bf16.msra.mxu0 %v2626
    %2766 = vmatprep.subr.bf16.mxu0 %v2625
    %2767 = vmatpush2.bf16.msra.mxu0 %v2624
    %2768 = vmatprep.mubr.bf16.mxu0 %v2349
    %2769 = vmatmul.mubr.bf16.gmra.mxu0 %v2348
    %v2770 = vpop.f32.mrf.mxu0
    %v2771 = vadd.f32 0.0, %v2770
    %v2772 = vpop.f32.mrf.mxu0
    %v2773 = vadd.f32 0.0, %v2772
    %v2774 = vpop.f32.mrf.mxu0
    %v2775 = vpop.f32.mrf.mxu0
    %2776 = vdwg.mxu0
    %2777 = vmatprep.subr.bf16.mxu0 %v2655
    %2778 = vmatpush1.bf16.msra.mxu0 %v2654
    %2779 = vmatprep.subr.bf16.mxu0 %v2653
    %2780 = vmatpush1.bf16.msra.mxu0 %v2652
    %2781 = vmatprep.subr.bf16.mxu0 %v2651
    %2782 = vmatpush1.bf16.msra.mxu0 %v2650
    %2783 = vmatprep.subr.bf16.mxu0 %v2649
    %2784 = vmatpush1.bf16.msra.mxu0 %v2648
    %2785 = vmatprep.subr.bf16.mxu0 %v2647
    %2786 = vmatpush1.bf16.msra.mxu0 %v2646
    %2787 = vmatprep.subr.bf16.mxu0 %v2645
    %2788 = vmatpush1.bf16.msra.mxu0 %v2644
    %2789 = vmatprep.subr.bf16.mxu0 %v2643
    %2790 = vmatpush1.bf16.msra.mxu0 %v2642
    %2791 = vmatprep.subr.bf16.mxu0 %v2641
    %2792 = vmatpush1.bf16.msra.mxu0 %v2640
    %2793 = vmatprep.subr.bf16.mxu0 %v2671
    %2794 = vmatpush2.bf16.msra.mxu0 %v2670
    %2795 = vmatprep.subr.bf16.mxu0 %v2669
    %2796 = vmatpush2.bf16.msra.mxu0 %v2668
    %2797 = vmatprep.subr.bf16.mxu0 %v2667
    %2798 = vmatpush2.bf16.msra.mxu0 %v2666
    %2799 = vmatprep.subr.bf16.mxu0 %v2665
    %2800 = vmatpush2.bf16.msra.mxu0 %v2664
    %2801 = vmatprep.subr.bf16.mxu0 %v2663
    %2802 = vmatpush2.bf16.msra.mxu0 %v2662
    %2803 = vmatprep.subr.bf16.mxu0 %v2661
    %2804 = vmatpush2.bf16.msra.mxu0 %v2660
    %2805 = vmatprep.subr.bf16.mxu0 %v2659
    %2806 = vmatpush2.bf16.msra.mxu0 %v2658
    %2807 = vmatprep.subr.bf16.mxu0 %v2657
    %2808 = vmatpush2.bf16.msra.mxu0 %v2656
    %2809 = vmatprep.mubr.bf16.mxu0 %v2351
    %2810 = vmatmul.mubr.bf16.gmra.mxu0 %v2350
    %v2811 = vpop.f32.mrf.mxu0
    %v2812 = vadd.f32 %v2771, %v2811
    %v2813 = vpop.f32.mrf.mxu0
    %v2814 = vadd.f32 %v2773, %v2813
    %v2815 = vpop.f32.mrf.mxu0
    %v2816 = vpop.f32.mrf.mxu0
    %2817 = vdwg.mxu0
    %v2818 = vld [vmem:[%s7] sm:$0x3]
    %v2820 = vlaneseq
    %v2821 = vshrl.u32 %v2820, 7
    %v2822 = vsub.s32 0, %v2821
    %v2823 = vrot.slane %v2818, %v2822
    %v2824 = vlaneseq
    %v2825 = vshrl.u32 %v2824, 7
    %v2826 = vsub.s32 1, %v2825
    %v2827 = vrot.slane %v2818, %v2826
    %v2830 = vmul.f32 %v2812, %v2823
    %v2831 = vmul.f32 %v2814, %v2827
    %v2832 = vld [vmem:[%s8] sm:$0x3]
    %v2834 = vlaneseq
    %v2835 = vshrl.u32 %v2834, 7
    %v2836 = vsub.s32 0, %v2835
    %v2837 = vrot.slane %v2832, %v2836
    %v2838 = vlaneseq
    %v2839 = vshrl.u32 %v2838, 7
    %v2840 = vsub.s32 1, %v2839
    %v2841 = vrot.slane %v2832, %v2840
    %v2844 = vadd.f32 %v2830, %v2837
    %v2845 = vadd.f32 %v2831, %v2841
    %v2846 = vmax.f32 %v2844, 0.0
    %v2847 = vmax.f32 %v2845, 0.0
    %v2848 = vpack.c.bf16 %v2846, %v2846
    %v2849 = vpack.c.bf16 %v2847, %v2847
    %v2850 = vld [vmem:[%s9] sm:$0xf]
    %v2851 = vld [vmem:[%s9 + $0x4] sm:$0xf]
    %v2852 = vld [vmem:[%s9 + $0x8] sm:$0xf]
    %v2853 = vld [vmem:[%s9 + $0xc] sm:$0xf]
    %v2854 = vld [vmem:[%s9 + $0x10] sm:$0xf]
    %v2855 = vld [vmem:[%s9 + $0x14] sm:$0xf]
    %v2856 = vld [vmem:[%s9 + $0x18] sm:$0xf]
    %v2857 = vld [vmem:[%s9 + $0x1c] sm:$0xf]
    %v2858 = vld [vmem:[%s9 + $0x20] sm:$0xf]
    %v2859 = vld [vmem:[%s9 + $0x24] sm:$0xf]
    %v2860 = vld [vmem:[%s9 + $0x28] sm:$0xf]
    %v2861 = vld [vmem:[%s9 + $0x2c] sm:$0xf]
    %v2862 = vld [vmem:[%s9 + $0x30] sm:$0xf]
    %v2863 = vld [vmem:[%s9 + $0x34] sm:$0xf]
    %v2864 = vld [vmem:[%s9 + $0x38] sm:$0xf]
    %v2865 = vld [vmem:[%s9 + $0x3c] sm:$0xf]
    %v2866 = vld [vmem:[%s9 + $0x40] sm:$0xf]
    %v2867 = vld [vmem:[%s9 + $0x44] sm:$0xf]
    %v2868 = vld [vmem:[%s9 + $0x48] sm:$0xf]
    %v2869 = vld [vmem:[%s9 + $0x4c] sm:$0xf]
    %v2870 = vld [vmem:[%s9 + $0x50] sm:$0xf]
    %v2871 = vld [vmem:[%s9 + $0x54] sm:$0xf]
    %v2872 = vld [vmem:[%s9 + $0x58] sm:$0xf]
    %v2873 = vld [vmem:[%s9 + $0x5c] sm:$0xf]
    %v2874 = vld [vmem:[%s9 + $0x60] sm:$0xf]
    %v2875 = vld [vmem:[%s9 + $0x64] sm:$0xf]
    %v2876 = vld [vmem:[%s9 + $0x68] sm:$0xf]
    %v2877 = vld [vmem:[%s9 + $0x6c] sm:$0xf]
    %v2878 = vld [vmem:[%s9 + $0x70] sm:$0xf]
    %v2879 = vld [vmem:[%s9 + $0x74] sm:$0xf]
    %v2880 = vld [vmem:[%s9 + $0x78] sm:$0xf]
    %v2881 = vld [vmem:[%s9 + $0x7c] sm:$0xf]
    %v2882 = vld [vmem:[%s10] sm:$0x1]
    %v2884 = vlaneseq
    %v2885 = vshrl.u32 %v2884, 7
    %v2886 = vsub.s32 0, %v2885
    %v2887 = vrot.slane %v2882, %v2886
    %v2921 = vunpack.c.l.b16 %v2850
    %v2922 = vunpack.c.l.b16 %v2851
    %v2923 = vunpack.c.l.b16 %v2852
    %v2924 = vunpack.c.l.b16 %v2853
    %v2925 = vunpack.c.l.b16 %v2854
    %v2926 = vunpack.c.l.b16 %v2855
    %v2927 = vunpack.c.l.b16 %v2856
    %v2928 = vunpack.c.l.b16 %v2857
    %v2929 = vunpack.c.l.b16 %v2858
    %v2930 = vunpack.c.l.b16 %v2859
    %v2931 = vunpack.c.l.b16 %v2860
    %v2932 = vunpack.c.l.b16 %v2861
    %v2933 = vunpack.c.l.b16 %v2862
    %v2934 = vunpack.c.l.b16 %v2863
    %v2935 = vunpack.c.l.b16 %v2864
    %v2936 = vunpack.c.l.b16 %v2865
    %v2937 = vunpack.c.l.b16 %v2866
    %v2938 = vunpack.c.l.b16 %v2867
    %v2939 = vunpack.c.l.b16 %v2868
    %v2940 = vunpack.c.l.b16 %v2869
    %v2941 = vunpack.c.l.b16 %v2870
    %v2942 = vunpack.c.l.b16 %v2871
    %v2943 = vunpack.c.l.b16 %v2872
    %v2944 = vunpack.c.l.b16 %v2873
    %v2945 = vunpack.c.l.b16 %v2874
    %v2946 = vunpack.c.l.b16 %v2875
    %v2947 = vunpack.c.l.b16 %v2876
    %v2948 = vunpack.c.l.b16 %v2877
    %v2949 = vunpack.c.l.b16 %v2878
    %v2950 = vunpack.c.l.b16 %v2879
    %v2951 = vunpack.c.l.b16 %v2880
    %v2952 = vunpack.c.l.b16 %v2881
    %v2953 = vpack.c.b16 %v2922, %v2921
    %v2954 = vpack.c.b16 %v2924, %v2923
    %v2955 = vpack.c.b16 %v2926, %v2925
    %v2956 = vpack.c.b16 %v2928, %v2927
    %v2957 = vpack.c.b16 %v2930, %v2929
    %v2958 = vpack.c.b16 %v2932, %v2931
    %v2959 = vpack.c.b16 %v2934, %v2933
    %v2960 = vpack.c.b16 %v2936, %v2935
    %v2961 = vpack.c.b16 %v2938, %v2937
    %v2962 = vpack.c.b16 %v2940, %v2939
    %v2963 = vpack.c.b16 %v2942, %v2941
    %v2964 = vpack.c.b16 %v2944, %v2943
    %v2965 = vpack.c.b16 %v2946, %v2945
    %v2966 = vpack.c.b16 %v2948, %v2947
    %v2967 = vpack.c.b16 %v2950, %v2949
    %v2968 = vpack.c.b16 %v2952, %v2951
    %2985 = vmatprep.subr.bf16.mxu0 0
    %2986 = vmatpush1.bf16.msra.mxu0 %v2960
    %2987 = vmatprep.subr.bf16.mxu0 0
    %2988 = vmatpush1.bf16.msra.mxu0 %v2959
    %2989 = vmatprep.subr.bf16.mxu0 0
    %2990 = vmatpush1.bf16.msra.mxu0 %v2958
    %2991 = vmatprep.subr.bf16.mxu0 0
    %2992 = vmatpush1.bf16.msra.mxu0 %v2957
    %2993 = vmatprep.subr.bf16.mxu0 0
    %2994 = vmatpush1.bf16.msra.mxu0 %v2956
    %2995 = vmatprep.subr.bf16.mxu0 0
    %2996 = vmatpush1.bf16.msra.mxu0 %v2955
    %2997 = vmatprep.subr.bf16.mxu0 0
    %2998 = vmatpush1.bf16.msra.mxu0 %v2954
    %2999 = vmatprep.subr.bf16.mxu0 0
    %3000 = vmatpush1.bf16.msra.mxu0 %v2953
    %3001 = vmatprep.subr.bf16.mxu0 0
    %3002 = vmatpush2.bf16.msra.mxu0 %v2968
    %3003 = vmatprep.subr.bf16.mxu0 0
    %3004 = vmatpush2.bf16.msra.mxu0 %v2967
    %3005 = vmatprep.subr.bf16.mxu0 0
    %3006 = vmatpush2.bf16.msra.mxu0 %v2966
    %3007 = vmatprep.subr.bf16.mxu0 0
    %3008 = vmatpush2.bf16.msra.mxu0 %v2965
    %3009 = vmatprep.subr.bf16.mxu0 0
    %3010 = vmatpush2.bf16.msra.mxu0 %v2964
    %3011 = vmatprep.subr.bf16.mxu0 0
    %3012 = vmatpush2.bf16.msra.mxu0 %v2963
    %3013 = vmatprep.subr.bf16.mxu0 0
    %3014 = vmatpush2.bf16.msra.mxu0 %v2962
    %3015 = vmatprep.subr.bf16.mxu0 0
    %3016 = vmatpush2.bf16.msra.mxu0 %v2961
    %3017 = vmatprep.mubr.bf16.mxu0 %v2849
    %3018 = vmatmul.mubr.bf16.gmra.mxu0 %v2848
    %v3019 = vpop.f32.mrf.mxu0
    %v3020 = vadd.f32 %v2887, %v3019
    %v3021 = vpop.f32.mrf.mxu0
    %v3022 = vpop.f32.mrf.mxu0
    %v3023 = vpop.f32.mrf.mxu0
    %3024 = vdwg.mxu0
    %vm3025 = vcmask 66560
    %3026 = vst.msk [vmem:[%s11] sm:$0x3] %vm3025, %v3020
    // Predicated region
    $region50: #{pointnet_dense_cls_forward.6} parent=1 // pred_check
      _
    $region51: #{pointnet_dense_cls_forward.6} parent=1 // pred_check_branch
      %3028 = sbr.rel (0) target = $region53
    $region52: #{pointnet_dense_cls_forward.6} parent=1 // pred_region
      _
    $region53: #{pointnet_dense_cls_forward.6} parent=1 // pred_fallthru
      _
    // Predicated region
    $region54: #{pointnet_dense_cls_forward.6} parent=1 // pred_check
      _
    $region55: #{pointnet_dense_cls_forward.6} parent=1 // pred_check_branch
      %3030 = sbr.rel (0) target = $region57
    $region56: #{pointnet_dense_cls_forward.6} parent=1 // pred_region
      _
    $region57: #{pointnet_dense_cls_forward.6} parent=1 // pred_fallthru
      _
    %3031 = vsyncpa [#allocation3], 1

// kernel: pointnet_dense_cls_forward.9
$region0: #{pointnet_dense_cls_forward.9}
  #allocation0 [shape = 'u32[]', space=smem, size = 0x4, offset = 0x4, fixed_abs, tag = 'smem constant byte address 0x4 - core index']
  #allocation1 [shape = 'u32[144,128]{1,0:T(1,128)}', space=vmem, size = 0x12000, scoped, tag = 'internal scratch']
  %s0 = inlined_call_operand.vmem [shape: bf16[2,64,64], index: 0, kind: input, shape index: {}]
  %s1 = inlined_call_operand.vmem [shape: f32[2,1,512], index: 1, kind: input, shape index: {}]
  %s2 = inlined_call_operand.vmem [shape: bf16[64,512], index: 2, kind: input, shape index: {}]
  %s3 = inlined_call_operand.vmem [shape: f32[1,512], index: 3, kind: input, shape index: {}]
  %s4 = inlined_call_operand.vmem [shape: f32[1,512], index: 4, kind: input, shape index: {}]
  %s5 = inlined_call_operand.vmem [shape: bf16[512,256], index: 5, kind: input, shape index: {}]
  %s6 = inlined_call_operand.vmem [shape: f32[1,256], index: 6, kind: input, shape index: {}]
  %s7 = inlined_call_operand.vmem [shape: f32[1,256], index: 7, kind: input, shape index: {}]
  %s8 = inlined_call_operand.vmem [shape: bf16[256,128], index: 8, kind: input, shape index: {}]
  %s9 = inlined_call_operand.vmem [shape: f32[1,128], index: 9, kind: input, shape index: {}]
  %s10 = inlined_call_operand.vmem [shape: f32[1,128], index: 10, kind: input, shape index: {}]
  %s11 = inlined_call_operand.vmem [shape: bf16[128,128], index: 11, kind: input, shape index: {}]
  %s12 = inlined_call_operand.vmem [shape: f32[1,128], index: 12, kind: input, shape index: {}]
  %s13 = inlined_call_operand.vmem [shape: f32[2,64,128], index: 13, kind: output, shape index: {}]
  %s14 = sld [smem:[#allocation0]]
  $region85: #{pointnet_dense_cls_forward.9} parent=0
    _
  %s16 = ssub.s32 1, %s14
  %s17 = scalar_select 0, %s16, %s14
  loop: start=0, step=1, limit=4
  $region2: #{pointnet_dense_cls_forward.9} parent=0 // loop_pre_header
    _
  $region3: #{pointnet_dense_cls_forward.9} parent=0 // loop_header
    %s19 = sphi 0, %s23
    %p20 = scmp.ge.s32.totalorder %s19, 4
    %s26 = sphi 0, %s38
    %s27 = sphi 0, %s34
    %s28 = sphi 0, %s26
    %s29 = sphi 0, %s27
    %s30 = sphi 0, %s28
    %s31 = sphi 0, %s29
    %s43 = sphi 0, %s45
    %s46 = sphi 0, %s43
    %s47 = sphi 0, %s46
    %s63 = sphi 0, %s47
    %s69 = sphi 0, %s71
    %s72 = sphi 0, %s69
    %s73 = sphi 0, %s72
    %s89 = sphi 0, %s73
    %s93 = sphi 0, %s93
    %s95 = sphi 0, %s93
    %s96 = sphi 0, %s95
    %s110 = sphi 0, %s96
    %s114 = sphi 0, %s114
    %s116 = sphi 0, %s114
    %s117 = sphi 0, %s116
    %s131 = sphi 0, %s117
    %s135 = sphi 0, %s135
    %s137 = sphi 0, %s135
    %s138 = sphi 0, %s137
    %s152 = sphi 0, %s138
    %s156 = sphi 0, %s156
    %s158 = sphi 0, %s156
    %s159 = sphi 0, %s158
    %s173 = sphi 0, %s159
    %s177 = sphi 0, %s177
    %s179 = sphi 0, %s177
    %s180 = sphi 0, %s179
    %s194 = sphi 0, %s180
    %s198 = sphi 0, %s198
    %s200 = sphi 0, %s198
    %s201 = sphi 0, %s200
    %s215 = sphi 0, %s201
    %s219 = sphi 0, %s219
    %s221 = sphi 0, %s219
    %s222 = sphi 0, %s221
    %s236 = sphi 0, %s222
    %s240 = sphi 0, %s240
    %s242 = sphi 0, %s240
    %s243 = sphi 0, %s242
    %s257 = sphi 0, %s243
    %s261 = sphi 0, %s261
    %s263 = sphi 0, %s261
    %s264 = sphi 0, %s263
    %s278 = sphi 0, %s264
    %s282 = sphi 0, %s282
    %s284 = sphi 0, %s282
    %s285 = sphi 0, %s284
    %s299 = sphi 0, %s285
    %s303 = sphi 0, %s303
    %s305 = sphi 0, %s303
    %s306 = sphi 0, %s305
    %s320 = sphi 0, %s306
    %s328 = sphi 0, %s330
    %s331 = sphi 0, %s328
    %s332 = sphi 0, %s331
    %s348 = sphi 0, %s332
  $region4: #{pointnet_dense_cls_forward.9} parent=0 // loop_header_branch
    %22 = sbr.rel (%p20) target = $region8
  $region5: #{pointnet_dense_cls_forward.9} parent=0 // loop_body
    %s24 = ssub.s32 %s19, 1
    %s25 = ssub.s32 %s19, 2
    %s32 = sadd.s32 1, %s27
    %p33 = scmp.ge.s32.totalorder %s32, 1
    %s34 = scalar_select %p33, 0, %s32
    %s35 = sadd.s32 1, %s26
    %s36 = scalar_select %p33, %s35, %s26
    %p37 = scmp.ge.s32.totalorder %s36, 2
    %s38 = scalar_select %p37, 0, %s36
    %s39 = ssub.s32 %s26, %s38
    %s40 = ssub.s32 %s27, %s34
    %s41 = sor.u32 %s39, %s40
    %p42 = scmp.eq.s32.totalorder %s41, 0
    %s44 = sadd.s32 %s43, 1
    %s45 = scalar_select %p42, %s43, %s44
    %p48 = pneg %p42
    %p49 = scmp.eq.s32.totalorder %s19, 1
    %p50 = por %p48, %p49
    %p51 = scmp.ne.s32.totalorder %s43, %s46
    %p52 = scmp.eq.s32.totalorder %s19, 0
    %p53 = por %p51, %p52
    %p54 = scmp.ne.s32.totalorder %s43, %s46
    %p55 = scmp.eq.s32.totalorder %s24, 1
    %p56 = por %p54, %p55
    %p57 = scmp.ne.s32.totalorder %s46, %s47
    %p58 = scmp.eq.s32.totalorder %s24, 0
    %p59 = por %p57, %p58
    %p60 = scmp.ne.s32.totalorder %s46, %s47
    %p61 = scmp.eq.s32.totalorder %s25, 1
    %p62 = por %p60, %p61
    %p64 = scmp.ne.s32.totalorder %s47, %s63
    %p65 = scmp.eq.s32.totalorder %s25, 0
    %p66 = por %p64, %p65
    %s67 = ssub.s32 %s26, %s38
    %p68 = scmp.eq.s32.totalorder %s67, 0
    %s70 = sadd.s32 %s69, 1
    %s71 = scalar_select %p68, %s69, %s70
    %p74 = pneg %p68
    %p75 = scmp.eq.s32.totalorder %s19, 1
    %p76 = por %p74, %p75
    %p77 = scmp.ne.s32.totalorder %s69, %s72
    %p78 = scmp.eq.s32.totalorder %s19, 0
    %p79 = por %p77, %p78
    %p80 = scmp.ne.s32.totalorder %s69, %s72
    %p81 = scmp.eq.s32.totalorder %s24, 1
    %p82 = por %p80, %p81
    %p83 = scmp.ne.s32.totalorder %s72, %s73
    %p84 = scmp.eq.s32.totalorder %s24, 0
    %p85 = por %p83, %p84
    %p86 = scmp.ne.s32.totalorder %s72, %s73
    %p87 = scmp.eq.s32.totalorder %s25, 1
    %p88 = por %p86, %p87
    %p90 = scmp.ne.s32.totalorder %s73, %s89
    %p91 = scmp.eq.s32.totalorder %s25, 0
    %p92 = por %p90, %p91
    %s94 = sadd.s32 %s93, 1
    %p97 = scmp.eq.s32.totalorder %s19, 1
    %p98 = scmp.ne.s32.totalorder %s93, %s95
    %p99 = scmp.eq.s32.totalorder %s19, 0
    %p100 = por %p98, %p99
    %p101 = scmp.ne.s32.totalorder %s93, %s95
    %p102 = scmp.eq.s32.totalorder %s24, 1
    %p103 = por %p101, %p102
    %p104 = scmp.ne.s32.totalorder %s95, %s96
    %p105 = scmp.eq.s32.totalorder %s24, 0
    %p106 = por %p104, %p105
    %p107 = scmp.ne.s32.totalorder %s95, %s96
    %p108 = scmp.eq.s32.totalorder %s25, 1
    %p109 = por %p107, %p108
    %p111 = scmp.ne.s32.totalorder %s96, %s110
    %p112 = scmp.eq.s32.totalorder %s25, 0
    %p113 = por %p111, %p112
    %s115 = sadd.s32 %s114, 1
    %p118 = scmp.eq.s32.totalorder %s19, 1
    %p119 = scmp.ne.s32.totalorder %s114, %s116
    %p120 = scmp.eq.s32.totalorder %s19, 0
    %p121 = por %p119, %p120
    %p122 = scmp.ne.s32.totalorder %s114, %s116
    %p123 = scmp.eq.s32.totalorder %s24, 1
    %p124 = por %p122, %p123
    %p125 = scmp.ne.s32.totalorder %s116, %s117
    %p126 = scmp.eq.s32.totalorder %s24, 0
    %p127 = por %p125, %p126
    %p128 = scmp.ne.s32.totalorder %s116, %s117
    %p129 = scmp.eq.s32.totalorder %s25, 1
    %p130 = por %p128, %p129
    %p132 = scmp.ne.s32.totalorder %s117, %s131
    %p133 = scmp.eq.s32.totalorder %s25, 0
    %p134 = por %p132, %p133
    %s136 = sadd.s32 %s135, 1
    %p139 = scmp.eq.s32.totalorder %s19, 1
    %p140 = scmp.ne.s32.totalorder %s135, %s137
    %p141 = scmp.eq.s32.totalorder %s19, 0
    %p142 = por %p140, %p141
    %p143 = scmp.ne.s32.totalorder %s135, %s137
    %p144 = scmp.eq.s32.totalorder %s24, 1
    %p145 = por %p143, %p144
    %p146 = scmp.ne.s32.totalorder %s137, %s138
    %p147 = scmp.eq.s32.totalorder %s24, 0
    %p148 = por %p146, %p147
    %p149 = scmp.ne.s32.totalorder %s137, %s138
    %p150 = scmp.eq.s32.totalorder %s25, 1
    %p151 = por %p149, %p150
    %p153 = scmp.ne.s32.totalorder %s138, %s152
    %p154 = scmp.eq.s32.totalorder %s25, 0
    %p155 = por %p153, %p154
    %s157 = sadd.s32 %s156, 1
    %p160 = scmp.eq.s32.totalorder %s19, 1
    %p161 = scmp.ne.s32.totalorder %s156, %s158
    %p162 = scmp.eq.s32.totalorder %s19, 0
    %p163 = por %p161, %p162
    %p164 = scmp.ne.s32.totalorder %s156, %s158
    %p165 = scmp.eq.s32.totalorder %s24, 1
    %p166 = por %p164, %p165
    %p167 = scmp.ne.s32.totalorder %s158, %s159
    %p168 = scmp.eq.s32.totalorder %s24, 0
    %p169 = por %p167, %p168
    %p170 = scmp.ne.s32.totalorder %s158, %s159
    %p171 = scmp.eq.s32.totalorder %s25, 1
    %p172 = por %p170, %p171
    %p174 = scmp.ne.s32.totalorder %s159, %s173
    %p175 = scmp.eq.s32.totalorder %s25, 0
    %p176 = por %p174, %p175
    %s178 = sadd.s32 %s177, 1
    %p181 = scmp.eq.s32.totalorder %s19, 1
    %p182 = scmp.ne.s32.totalorder %s177, %s179
    %p183 = scmp.eq.s32.totalorder %s19, 0
    %p184 = por %p182, %p183
    %p185 = scmp.ne.s32.totalorder %s177, %s179
    %p186 = scmp.eq.s32.totalorder %s24, 1
    %p187 = por %p185, %p186
    %p188 = scmp.ne.s32.totalorder %s179, %s180
    %p189 = scmp.eq.s32.totalorder %s24, 0
    %p190 = por %p188, %p189
    %p191 = scmp.ne.s32.totalorder %s179, %s180
    %p192 = scmp.eq.s32.totalorder %s25, 1
    %p193 = por %p191, %p192
    %p195 = scmp.ne.s32.totalorder %s180, %s194
    %p196 = scmp.eq.s32.totalorder %s25, 0
    %p197 = por %p195, %p196
    %s199 = sadd.s32 %s198, 1
    %p202 = scmp.eq.s32.totalorder %s19, 1
    %p203 = scmp.ne.s32.totalorder %s198, %s200
    %p204 = scmp.eq.s32.totalorder %s19, 0
    %p205 = por %p203, %p204
    %p206 = scmp.ne.s32.totalorder %s198, %s200
    %p207 = scmp.eq.s32.totalorder %s24, 1
    %p208 = por %p206, %p207
    %p209 = scmp.ne.s32.totalorder %s200, %s201
    %p210 = scmp.eq.s32.totalorder %s24, 0
    %p211 = por %p209, %p210
    %p212 = scmp.ne.s32.totalorder %s200, %s201
    %p213 = scmp.eq.s32.totalorder %s25, 1
    %p214 = por %p212, %p213
    %p216 = scmp.ne.s32.totalorder %s201, %s215
    %p217 = scmp.eq.s32.totalorder %s25, 0
    %p218 = por %p216, %p217
    %s220 = sadd.s32 %s219, 1
    %p223 = scmp.eq.s32.totalorder %s19, 1
    %p224 = scmp.ne.s32.totalorder %s219, %s221
    %p225 = scmp.eq.s32.totalorder %s19, 0
    %p226 = por %p224, %p225
    %p227 = scmp.ne.s32.totalorder %s219, %s221
    %p228 = scmp.eq.s32.totalorder %s24, 1
    %p229 = por %p227, %p228
    %p230 = scmp.ne.s32.totalorder %s221, %s222
    %p231 = scmp.eq.s32.totalorder %s24, 0
    %p232 = por %p230, %p231
    %p233 = scmp.ne.s32.totalorder %s221, %s222
    %p234 = scmp.eq.s32.totalorder %s25, 1
    %p235 = por %p233, %p234
    %p237 = scmp.ne.s32.totalorder %s222, %s236
    %p238 = scmp.eq.s32.totalorder %s25, 0
    %p239 = por %p237, %p238
    %s241 = sadd.s32 %s240, 1
    %p244 = scmp.eq.s32.totalorder %s19, 1
    %p245 = scmp.ne.s32.totalorder %s240, %s242
    %p246 = scmp.eq.s32.totalorder %s19, 0
    %p247 = por %p245, %p246
    %p248 = scmp.ne.s32.totalorder %s240, %s242
    %p249 = scmp.eq.s32.totalorder %s24, 1
    %p250 = por %p248, %p249
    %p251 = scmp.ne.s32.totalorder %s242, %s243
    %p252 = scmp.eq.s32.totalorder %s24, 0
    %p253 = por %p251, %p252
    %p254 = scmp.ne.s32.totalorder %s242, %s243
    %p255 = scmp.eq.s32.totalorder %s25, 1
    %p256 = por %p254, %p255
    %p258 = scmp.ne.s32.totalorder %s243, %s257
    %p259 = scmp.eq.s32.totalorder %s25, 0
    %p260 = por %p258, %p259
    %s262 = sadd.s32 %s261, 1
    %p265 = scmp.eq.s32.totalorder %s19, 1
    %p266 = scmp.ne.s32.totalorder %s261, %s263
    %p267 = scmp.eq.s32.totalorder %s19, 0
    %p268 = por %p266, %p267
    %p269 = scmp.ne.s32.totalorder %s261, %s263
    %p270 = scmp.eq.s32.totalorder %s24, 1
    %p271 = por %p269, %p270
    %p272 = scmp.ne.s32.totalorder %s263, %s264
    %p273 = scmp.eq.s32.totalorder %s24, 0
    %p274 = por %p272, %p273
    %p275 = scmp.ne.s32.totalorder %s263, %s264
    %p276 = scmp.eq.s32.totalorder %s25, 1
    %p277 = por %p275, %p276
    %p279 = scmp.ne.s32.totalorder %s264, %s278
    %p280 = scmp.eq.s32.totalorder %s25, 0
    %p281 = por %p279, %p280
    %s283 = sadd.s32 %s282, 1
    %p286 = scmp.eq.s32.totalorder %s19, 1
    %p287 = scmp.ne.s32.totalorder %s282, %s284
    %p288 = scmp.eq.s32.totalorder %s19, 0
    %p289 = por %p287, %p288
    %p290 = scmp.ne.s32.totalorder %s282, %s284
    %p291 = scmp.eq.s32.totalorder %s24, 1
    %p292 = por %p290, %p291
    %p293 = scmp.ne.s32.totalorder %s284, %s285
    %p294 = scmp.eq.s32.totalorder %s24, 0
    %p295 = por %p293, %p294
    %p296 = scmp.ne.s32.totalorder %s284, %s285
    %p297 = scmp.eq.s32.totalorder %s25, 1
    %p298 = por %p296, %p297
    %p300 = scmp.ne.s32.totalorder %s285, %s299
    %p301 = scmp.eq.s32.totalorder %s25, 0
    %p302 = por %p300, %p301
    %s304 = sadd.s32 %s303, 1
    %p307 = scmp.eq.s32.totalorder %s19, 1
    %p308 = scmp.ne.s32.totalorder %s303, %s305
    %p309 = scmp.eq.s32.totalorder %s19, 0
    %p310 = por %p308, %p309
    %p311 = scmp.ne.s32.totalorder %s303, %s305
    %p312 = scmp.eq.s32.totalorder %s24, 1
    %p313 = por %p311, %p312
    %p314 = scmp.ne.s32.totalorder %s305, %s306
    %p315 = scmp.eq.s32.totalorder %s24, 0
    %p316 = por %p314, %p315
    %p317 = scmp.ne.s32.totalorder %s305, %s306
    %p318 = scmp.eq.s32.totalorder %s25, 1
    %p319 = por %p317, %p318
    %p321 = scmp.ne.s32.totalorder %s306, %s320
    %p322 = scmp.eq.s32.totalorder %s25, 0
    %p323 = por %p321, %p322
    %s324 = ssub.s32 %s26, %s38
    %s325 = ssub.s32 %s27, %s34
    %s326 = sor.u32 %s324, %s325
    %p327 = scmp.eq.s32.totalorder %s326, 0
    %s329 = sadd.s32 %s328, 1
    %s330 = scalar_select %p327, %s328, %s329
    %p333 = pneg %p327
    %p334 = scmp.eq.s32.totalorder %s19, 1
    %p335 = por %p333, %p334
    %p336 = scmp.ne.s32.totalorder %s328, %s331
    %p337 = scmp.eq.s32.totalorder %s19, 0
    %p338 = por %p336, %p337
    %p339 = scmp.ne.s32.totalorder %s328, %s331
    %p340 = scmp.eq.s32.totalorder %s24, 1
    %p341 = por %p339, %p340
    %p342 = scmp.ne.s32.totalorder %s331, %s332
    %p343 = scmp.eq.s32.totalorder %s24, 0
    %p344 = por %p342, %p343
    %p345 = scmp.ne.s32.totalorder %s331, %s332
    %p346 = scmp.eq.s32.totalorder %s25, 1
    %p347 = por %p345, %p346
    %p349 = scmp.ne.s32.totalorder %s332, %s348
    %p350 = scmp.eq.s32.totalorder %s25, 0
    %p351 = por %p349, %p350
    %p352 = scmp.le.s32.totalorder 1, %s19
    %p353 = scmp.lt.s32.totalorder %s19, 3
    %p354 = pnand %p352, %p353
    %p355 = pneg %p354
    // Predicated region
    $region9: #{pointnet_dense_cls_forward.9} parent=5 // pred_check
      _
    $region10: #{pointnet_dense_cls_forward.9} parent=5 // pred_check_branch
      %357 = sbr.rel (%p354) target = $region12
    $region11: #{pointnet_dense_cls_forward.9} parent=5 // pred_region
      %s358 = ssub.s32 %s19, 1
      // Predicated region
      $region13: #{pointnet_dense_cls_forward.9} parent=11 // pred_check
        %p359 = pneg %p106
      $region14: #{pointnet_dense_cls_forward.9} parent=11 // pred_check_branch
        %361 = sbr.rel (%p359) target = $region16
      $region15: #{pointnet_dense_cls_forward.9} parent=11 // pred_region
        _
      $region16: #{pointnet_dense_cls_forward.9} parent=11 // pred_fallthru
        _
      // Predicated region
      $region17: #{pointnet_dense_cls_forward.9} parent=11 // pred_check
        %p362 = pneg %p127
      $region18: #{pointnet_dense_cls_forward.9} parent=11 // pred_check_branch
        %364 = sbr.rel (%p362) target = $region20
      $region19: #{pointnet_dense_cls_forward.9} parent=11 // pred_region
        _
      $region20: #{pointnet_dense_cls_forward.9} parent=11 // pred_fallthru
        _
      // Predicated region
      $region21: #{pointnet_dense_cls_forward.9} parent=11 // pred_check
        %p365 = pneg %p148
      $region22: #{pointnet_dense_cls_forward.9} parent=11 // pred_check_branch
        %367 = sbr.rel (%p365) target = $region24
      $region23: #{pointnet_dense_cls_forward.9} parent=11 // pred_region
        _
      $region24: #{pointnet_dense_cls_forward.9} parent=11 // pred_fallthru
        _
      // Predicated region
      $region25: #{pointnet_dense_cls_forward.9} parent=11 // pred_check
        %p368 = pneg %p169
      $region26: #{pointnet_dense_cls_forward.9} parent=11 // pred_check_branch
        %370 = sbr.rel (%p368) target = $region28
      $region27: #{pointnet_dense_cls_forward.9} parent=11 // pred_region
        _
      $region28: #{pointnet_dense_cls_forward.9} parent=11 // pred_fallthru
        _
      // Predicated region
      $region29: #{pointnet_dense_cls_forward.9} parent=11 // pred_check
        %p371 = pneg %p190
      $region30: #{pointnet_dense_cls_forward.9} parent=11 // pred_check_branch
        %373 = sbr.rel (%p371) target = $region32
      $region31: #{pointnet_dense_cls_forward.9} parent=11 // pred_region
        _
      $region32: #{pointnet_dense_cls_forward.9} parent=11 // pred_fallthru
        _
      // Predicated region
      $region33: #{pointnet_dense_cls_forward.9} parent=11 // pred_check
        %p374 = pneg %p211
      $region34: #{pointnet_dense_cls_forward.9} parent=11 // pred_check_branch
        %376 = sbr.rel (%p374) target = $region36
      $region35: #{pointnet_dense_cls_forward.9} parent=11 // pred_region
        _
      $region36: #{pointnet_dense_cls_forward.9} parent=11 // pred_fallthru
        _
      // Predicated region
      $region37: #{pointnet_dense_cls_forward.9} parent=11 // pred_check
        %p377 = pneg %p232
      $region38: #{pointnet_dense_cls_forward.9} parent=11 // pred_check_branch
        %379 = sbr.rel (%p377) target = $region40
      $region39: #{pointnet_dense_cls_forward.9} parent=11 // pred_region
        _
      $region40: #{pointnet_dense_cls_forward.9} parent=11 // pred_fallthru
        _
      // Predicated region
      $region41: #{pointnet_dense_cls_forward.9} parent=11 // pred_check
        %p380 = pneg %p253
      $region42: #{pointnet_dense_cls_forward.9} parent=11 // pred_check_branch
        %382 = sbr.rel (%p380) target = $region44
      $region43: #{pointnet_dense_cls_forward.9} parent=11 // pred_region
        _
      $region44: #{pointnet_dense_cls_forward.9} parent=11 // pred_fallthru
        _
      // Predicated region
      $region45: #{pointnet_dense_cls_forward.9} parent=11 // pred_check
        %p383 = pneg %p274
      $region46: #{pointnet_dense_cls_forward.9} parent=11 // pred_check_branch
        %385 = sbr.rel (%p383) target = $region48
      $region47: #{pointnet_dense_cls_forward.9} parent=11 // pred_region
        _
      $region48: #{pointnet_dense_cls_forward.9} parent=11 // pred_fallthru
        _
      // Predicated region
      $region49: #{pointnet_dense_cls_forward.9} parent=11 // pred_check
        %p386 = pneg %p295
      $region50: #{pointnet_dense_cls_forward.9} parent=11 // pred_check_branch
        %388 = sbr.rel (%p386) target = $region52
      $region51: #{pointnet_dense_cls_forward.9} parent=11 // pred_region
        _
      $region52: #{pointnet_dense_cls_forward.9} parent=11 // pred_fallthru
        _
      // Predicated region
      $region53: #{pointnet_dense_cls_forward.9} parent=11 // pred_check
        %p389 = pneg %p316
      $region54: #{pointnet_dense_cls_forward.9} parent=11 // pred_check_branch
        %391 = sbr.rel (%p389) target = $region56
      $region55: #{pointnet_dense_cls_forward.9} parent=11 // pred_region
        _
      $region56: #{pointnet_dense_cls_forward.9} parent=11 // pred_fallthru
        _
    $region12: #{pointnet_dense_cls_forward.9} parent=5 // pred_fallthru
      _
    %p392 = scmp.lt.s32.totalorder %s19, 2
    // Predicated region
    $region57: #{pointnet_dense_cls_forward.9} parent=5 // pred_check
      %p393 = pneg %p392
    $region58: #{pointnet_dense_cls_forward.9} parent=5 // pred_check_branch
      %395 = sbr.rel (%p393) target = $region60
    $region59: #{pointnet_dense_cls_forward.9} parent=5 // pred_region
      // Predicated region
      $region61: #{pointnet_dense_cls_forward.9} parent=59 // pred_check
        %p396 = pneg %p53
      $region62: #{pointnet_dense_cls_forward.9} parent=59 // pred_check_branch
        %398 = sbr.rel (%p396) target = $region64
      $region63: #{pointnet_dense_cls_forward.9} parent=59 // pred_region
        %s399 = smul.u32 8, %s27
        %p400 = scmp.lt.s32.totalorder %s26, 1
        %s401 = scalar_select %p400, %s26, 1
        %p402 = scmp.lt.s32.totalorder %s399, 7
        %s403 = scalar_select %p402, %s399, 7
        %s404 = smul.addr %s401, 8
        %s405 = sadd.s32 %s403, %s404
        %s406 = smul.addr %s405, 4
        %s407 = scalar_lea.vmem %s0, %s406
        %s408 = smul.u32 8, %s27
      $region64: #{pointnet_dense_cls_forward.9} parent=59 // pred_fallthru
        _
      // Predicated region
      $region65: #{pointnet_dense_cls_forward.9} parent=59 // pred_check
        %p409 = pneg %p79
      $region66: #{pointnet_dense_cls_forward.9} parent=59 // pred_check_branch
        %411 = sbr.rel (%p409) target = $region68
      $region67: #{pointnet_dense_cls_forward.9} parent=59 // pred_region
        %p412 = scmp.lt.s32.totalorder %s26, 1
        %s413 = scalar_select %p412, %s26, 1
        %s414 = smul.addr %s413, 4
        %s415 = scalar_lea.vmem %s1, %s414
      $region68: #{pointnet_dense_cls_forward.9} parent=59 // pred_fallthru
        _
    $region60: #{pointnet_dense_cls_forward.9} parent=5 // pred_fallthru
      _
    %p416 = scmp.le.s32.totalorder 1, %s19
    %p417 = scmp.lt.s32.totalorder %s19, 3
    %p418 = pnand %p416, %p417
    %p419 = pneg %p418
    // Predicated region
    $region69: #{pointnet_dense_cls_forward.9} parent=5 // pred_check
      _
    $region70: #{pointnet_dense_cls_forward.9} parent=5 // pred_check_branch
      %421 = sbr.rel (%p418) target = $region72
    $region71: #{pointnet_dense_cls_forward.9} parent=5 // pred_region
      %s422 = ssub.s32 %s19, 1
      %s423 = smul.u32 8, %s29
      %p424 = scmp.lt.s32.totalorder %s28, 1
      %s425 = scalar_select %p424, %s28, 1
      %p426 = scmp.lt.s32.totalorder %s423, 7
      %s427 = scalar_select %p426, %s423, 7
      %s428 = smul.addr %s425, 8
      %s429 = sadd.s32 %s427, %s428
      %s430 = smul.addr %s429, 4
      %s431 = scalar_lea.vmem %s0, %s430
      %p432 = pneg %p59
      %p433 = pneg %p56
      %p434 = scmp.lt.s32.totalorder %s28, 1
      %s435 = scalar_select %p434, %s28, 1
      %s436 = smul.addr %s435, 4
      %s437 = scalar_lea.vmem %s1, %s436
      %p438 = pneg %p85
      %p439 = pneg %p82
      %p440 = pneg %p106
      %p441 = pneg %p103
      %p442 = pneg %p127
      %p443 = pneg %p124
      %p444 = pneg %p148
      %p445 = pneg %p145
      %p446 = pneg %p169
      %p447 = pneg %p166
      %p448 = pneg %p190
      %p449 = pneg %p187
      %p450 = pneg %p211
      %p451 = pneg %p208
      %p452 = pneg %p232
      %p453 = pneg %p229
      %p454 = pneg %p253
      %p455 = pneg %p250
      %p456 = pneg %p274
      %p457 = pneg %p271
      %p458 = pneg %p295
      %p459 = pneg %p292
      %p460 = pneg %p316
      %p461 = pneg %p313
      %p462 = pneg %p344
      %p463 = pneg %p341
      %s464 = smul.u32 8, %s29
      %p465 = scmp.lt.s32.totalorder %s28, 1
      %s466 = scalar_select %p465, %s28, 1
      %p467 = scmp.lt.s32.totalorder %s464, 7
      %s468 = scalar_select %p467, %s464, 7
      %s469 = smul.addr %s466, 8
      %s470 = sadd.s32 %s468, %s469
      %s471 = smul.addr %s470, 8
      %s472 = scalar_lea.vmem %s13, %s471
      %s473 = smul.u32 8, %s29
      %p474 = scmp.lt.s32.totalorder %s28, 1
      %s475 = scalar_select %p474, %s28, 1
      %p476 = scmp.lt.s32.totalorder %s473, 7
      %s477 = scalar_select %p476, %s473, 7
      %s478 = smul.addr %s475, 8
      %s479 = sadd.s32 %s477, %s478
      %s480 = smul.addr %s479, 4
      %s481 = scalar_lea.vmem %s0, %s480
      %s482 = smul.u32 8, %s29
      %p483 = scmp.lt.s32.totalorder %s28, 1
      %s484 = scalar_select %p483, %s28, 1
      %s485 = smul.addr %s484, 4
      %s486 = scalar_lea.vmem %s1, %s485
      %s487 = smul.u32 8, %s29
      %p488 = scmp.lt.s32.totalorder %s28, 1
      %s489 = scalar_select %p488, %s28, 1
      %p490 = scmp.lt.s32.totalorder %s487, 7
      %s491 = scalar_select %p490, %s487, 7
      %s492 = smul.addr %s489, 8
      %s493 = sadd.s32 %s491, %s492
      %s494 = smul.addr %s493, 8
      %s495 = scalar_lea.vmem %s13, %s494
      %s496 = smul.u32 8, %s29
      %v498 = vld [vmem:[%s481] sm:$0xf]
      %v499 = vld [vmem:[%s481 + $0x4] sm:$0xf]
      %v500 = vld [vmem:[%s481 + $0x8] sm:$0xf]
      %v501 = vld [vmem:[%s481 + $0xc] sm:$0xf]
      %v502 = vld [vmem:[%s481 + $0x10] sm:$0xf]
      %v503 = vld [vmem:[%s481 + $0x14] sm:$0xf]
      %v504 = vld [vmem:[%s481 + $0x18] sm:$0xf]
      %v505 = vld [vmem:[%s481 + $0x1c] sm:$0xf]
      %v506 = vld [vmem:[%s2] sm:$0xff]
      %v507 = vld [vmem:[%s2 + $0x8] sm:$0xff]
      %v508 = vld [vmem:[%s2 + $0x10] sm:$0xff]
      %v509 = vld [vmem:[%s2 + $0x18] sm:$0xff]
      %v510 = vld [vmem:[%s2 + $0x20] sm:$0xff]
      %v511 = vld [vmem:[%s2 + $0x28] sm:$0xff]
      %v512 = vld [vmem:[%s2 + $0x30] sm:$0xff]
      %v513 = vld [vmem:[%s2 + $0x38] sm:$0xff]
      %v514 = vld [vmem:[%s2 + $0x40] sm:$0xff]
      %v515 = vld [vmem:[%s2 + $0x48] sm:$0xff]
      %v516 = vld [vmem:[%s2 + $0x50] sm:$0xff]
      %v517 = vld [vmem:[%s2 + $0x58] sm:$0xff]
      %v518 = vld [vmem:[%s2 + $0x60] sm:$0xff]
      %v519 = vld [vmem:[%s2 + $0x68] sm:$0xff]
      %v520 = vld [vmem:[%s2 + $0x70] sm:$0xff]
      %v521 = vld [vmem:[%s2 + $0x78] sm:$0xff]
      %v522 = vld [vmem:[%s486] sm:$0xf]
      %v524 = vlaneseq
      %v525 = vshrl.u32 %v524, 7
      %v526 = vsub.s32 0, %v525
      %v527 = vrot.slane %v522, %v526
      %v528 = vlaneseq
      %v529 = vshrl.u32 %v528, 7
      %v530 = vsub.s32 1, %v529
      %v531 = vrot.slane %v522, %v530
      %v532 = vlaneseq
      %v533 = vshrl.u32 %v532, 7
      %v534 = vsub.s32 2, %v533
      %v535 = vrot.slane %v522, %v534
      %v536 = vlaneseq
      %v537 = vshrl.u32 %v536, 7
      %v538 = vsub.s32 3, %v537
      %v539 = vrot.slane %v522, %v538
      %v552 = vunpack.c.l.b16 %v498
      %v553 = vunpack.c.l.b16 %v499
      %v554 = vunpack.c.l.b16 %v500
      %v555 = vunpack.c.l.b16 %v501
      %v556 = vunpack.c.l.b16 %v502
      %v557 = vunpack.c.l.b16 %v503
      %v558 = vunpack.c.l.b16 %v504
      %v559 = vunpack.c.l.b16 %v505
      %v560 = vpack.c.b16 %v553, %v552
      %v561 = vpack.c.b16 %v555, %v554
      %v562 = vpack.c.b16 %v557, %v556
      %v563 = vpack.c.b16 %v559, %v558
      %v580 = vunpack.c.l.b16 %v506
      %v581 = vunpack.c.h.b16 %v506
      %v582 = vunpack.c.l.b16 %v507
      %v583 = vunpack.c.h.b16 %v507
      %v584 = vunpack.c.l.b16 %v508
      %v585 = vunpack.c.h.b16 %v508
      %v586 = vunpack.c.l.b16 %v509
      %v587 = vunpack.c.h.b16 %v509
      %v588 = vunpack.c.l.b16 %v510
      %v589 = vunpack.c.h.b16 %v510
      %v590 = vunpack.c.l.b16 %v511
      %v591 = vunpack.c.h.b16 %v511
      %v592 = vunpack.c.l.b16 %v512
      %v593 = vunpack.c.h.b16 %v512
      %v594 = vunpack.c.l.b16 %v513
      %v595 = vunpack.c.h.b16 %v513
      %v596 = vunpack.c.l.b16 %v514
      %v597 = vunpack.c.h.b16 %v514
      %v598 = vunpack.c.l.b16 %v515
      %v599 = vunpack.c.h.b16 %v515
      %v600 = vunpack.c.l.b16 %v516
      %v601 = vunpack.c.h.b16 %v516
      %v602 = vunpack.c.l.b16 %v517
      %v603 = vunpack.c.h.b16 %v517
      %v604 = vunpack.c.l.b16 %v518
      %v605 = vunpack.c.h.b16 %v518
      %v606 = vunpack.c.l.b16 %v519
      %v607 = vunpack.c.h.b16 %v519
      %v608 = vunpack.c.l.b16 %v520
      %v609 = vunpack.c.h.b16 %v520
      %v610 = vunpack.c.l.b16 %v521
      %v611 = vunpack.c.h.b16 %v521
      %v612 = vpack.c.b16 %v584, %v580
      %v613 = vpack.c.b16 %v585, %v581
      %v614 = vpack.c.b16 %v586, %v582
      %v615 = vpack.c.b16 %v587, %v583
      %v616 = vpack.c.b16 %v592, %v588
      %v617 = vpack.c.b16 %v593, %v589
      %v618 = vpack.c.b16 %v594, %v590
      %v619 = vpack.c.b16 %v595, %v591
      %v620 = vpack.c.b16 %v600, %v596
      %v621 = vpack.c.b16 %v601, %v597
      %v622 = vpack.c.b16 %v602, %v598
      %v623 = vpack.c.b16 %v603, %v599
      %v624 = vpack.c.b16 %v608, %v604
      %v625 = vpack.c.b16 %v609, %v605
      %v626 = vpack.c.b16 %v610, %v606
      %v627 = vpack.c.b16 %v611, %v607
      %vm644 = vcmask 523264
      %v646 = vsel %vm644, %v560, 0
      %v649 = vsel %vm644, %v561, 0
      %v652 = vsel %vm644, %v562, 0
      %v655 = vsel %vm644, %v563, 0
      %657 = vmatprep.subr.bf16.mxu0 0
      %658 = vmatpush1.bf16.msra.mxu0 0
      %659 = vmatprep.subr.bf16.mxu0 0
      %660 = vmatpush1.bf16.msra.mxu0 0
      %661 = vmatprep.subr.bf16.mxu0 0
      %662 = vmatpush1.bf16.msra.mxu0 0
      %663 = vmatprep.subr.bf16.mxu0 0
      %664 = vmatpush1.bf16.msra.mxu0 0
      %665 = vmatprep.subr.bf16.mxu0 %v625
      %666 = vmatpush1.bf16.msra.mxu0 %v624
      %667 = vmatprep.subr.bf16.mxu0 %v621
      %668 = vmatpush1.bf16.msra.mxu0 %v620
      %669 = vmatprep.subr.bf16.mxu0 %v617
      %670 = vmatpush1.bf16.msra.mxu0 %v616
      %671 = vmatprep.subr.bf16.mxu0 %v613
      %672 = vmatpush1.bf16.msra.mxu0 %v612
      %673 = vmatprep.subr.bf16.mxu0 0
      %674 = vmatpush2.bf16.msra.mxu0 0
      %675 = vmatprep.subr.bf16.mxu0 0
      %676 = vmatpush2.bf16.msra.mxu0 0
      %677 = vmatprep.subr.bf16.mxu0 0
      %678 = vmatpush2.bf16.msra.mxu0 0
      %679 = vmatprep.subr.bf16.mxu0 0
      %680 = vmatpush2.bf16.msra.mxu0 0
      %681 = vmatprep.subr.bf16.mxu0 0
      %682 = vmatpush2.bf16.msra.mxu0 0
      %683 = vmatprep.subr.bf16.mxu0 0
      %684 = vmatpush2.bf16.msra.mxu0 0
      %685 = vmatprep.subr.bf16.mxu0 0
      %686 = vmatpush2.bf16.msra.mxu0 0
      %687 = vmatprep.subr.bf16.mxu0 0
      %688 = vmatpush2.bf16.msra.mxu0 0
      %689 = vmatprep.mubr.bf16.mxu0 0
      %690 = vmatmul.mubr.bf16.gmra.mxu0 %v646
      %v691 = vpop.f32.mrf.mxu0
      %v692 = vadd.f32 %v527, %v691
      %v693 = vpop.f32.mrf.mxu0
      %v694 = vadd.f32 %v531, %v693
      %v695 = vpop.f32.mrf.mxu0
      %v696 = vadd.f32 %v527, %v695
      %v697 = vpop.f32.mrf.mxu0
      %v698 = vadd.f32 %v531, %v697
      %699 = vmatprep.mubr.bf16.mxu0 0
      %700 = vmatmul.mubr.bf16.gmra.mxu0 %v649
      %v701 = vpop.f32.mrf.mxu0
      %v702 = vadd.f32 %v527, %v701
      %v703 = vpop.f32.mrf.mxu0
      %v704 = vadd.f32 %v531, %v703
      %v705 = vpop.f32.mrf.mxu0
      %v706 = vadd.f32 %v527, %v705
      %v707 = vpop.f32.mrf.mxu0
      %v708 = vadd.f32 %v531, %v707
      %709 = vmatprep.mubr.bf16.mxu0 0
      %710 = vmatmul.mubr.bf16.gmra.mxu0 %v652
      %v711 = vpop.f32.mrf.mxu0
      %v712 = vadd.f32 %v527, %v711
      %v713 = vpop.f32.mrf.mxu0
      %v714 = vadd.f32 %v531, %v713
      %v715 = vpop.f32.mrf.mxu0
      %v716 = vadd.f32 %v527, %v715
      %v717 = vpop.f32.mrf.mxu0
      %v718 = vadd.f32 %v531, %v717
      %719 = vmatprep.mubr.bf16.mxu0 0
      %720 = vmatmul.mubr.bf16.gmra.mxu0 %v655
      %v721 = vpop.f32.mrf.mxu0
      %v722 = vadd.f32 %v527, %v721
      %v723 = vpop.f32.mrf.mxu0
      %v724 = vadd.f32 %v531, %v723
      %v725 = vpop.f32.mrf.mxu0
      %v726 = vadd.f32 %v527, %v725
      %v727 = vpop.f32.mrf.mxu0
      %v728 = vadd.f32 %v531, %v727
      %729 = vdwg.mxu0
      %730 = vmatprep.subr.bf16.mxu0 0
      %731 = vmatpush1.bf16.msra.mxu0 0
      %732 = vmatprep.subr.bf16.mxu0 0
      %733 = vmatpush1.bf16.msra.mxu0 0
      %734 = vmatprep.subr.bf16.mxu0 0
      %735 = vmatpush1.bf16.msra.mxu0 0
      %736 = vmatprep.subr.bf16.mxu0 0
      %737 = vmatpush1.bf16.msra.mxu0 0
      %738 = vmatprep.subr.bf16.mxu0 %v627
      %739 = vmatpush1.bf16.msra.mxu0 %v626
      %740 = vmatprep.subr.bf16.mxu0 %v623
      %741 = vmatpush1.bf16.msra.mxu0 %v622
      %742 = vmatprep.subr.bf16.mxu0 %v619
      %743 = vmatpush1.bf16.msra.mxu0 %v618
      %744 = vmatprep.subr.bf16.mxu0 %v615
      %745 = vmatpush1.bf16.msra.mxu0 %v614
      %746 = vmatprep.subr.bf16.mxu0 0
      %747 = vmatpush2.bf16.msra.mxu0 0
      %748 = vmatprep.subr.bf16.mxu0 0
      %749 = vmatpush2.bf16.msra.mxu0 0
      %750 = vmatprep.subr.bf16.mxu0 0
      %751 = vmatpush2.bf16.msra.mxu0 0
      %752 = vmatprep.subr.bf16.mxu0 0
      %753 = vmatpush2.bf16.msra.mxu0 0
      %754 = vmatprep.subr.bf16.mxu0 0
      %755 = vmatpush2.bf16.msra.mxu0 0
      %756 = vmatprep.subr.bf16.mxu0 0
      %757 = vmatpush2.bf16.msra.mxu0 0
      %758 = vmatprep.subr.bf16.mxu0 0
      %759 = vmatpush2.bf16.msra.mxu0 0
      %760 = vmatprep.subr.bf16.mxu0 0
      %761 = vmatpush2.bf16.msra.mxu0 0
      %762 = vmatprep.mubr.bf16.mxu0 0
      %763 = vmatmul.mubr.bf16.gmra.mxu0 %v646
      %v764 = vpop.f32.mrf.mxu0
      %v765 = vadd.f32 %v535, %v764
      %v766 = vpop.f32.mrf.mxu0
      %v767 = vadd.f32 %v539, %v766
      %v768 = vpop.f32.mrf.mxu0
      %v769 = vadd.f32 %v535, %v768
      %v770 = vpop.f32.mrf.mxu0
      %v771 = vadd.f32 %v539, %v770
      %772 = vmatprep.mubr.bf16.mxu0 0
      %773 = vmatmul.mubr.bf16.gmra.mxu0 %v649
      %v774 = vpop.f32.mrf.mxu0
      %v775 = vadd.f32 %v535, %v774
      %v776 = vpop.f32.mrf.mxu0
      %v777 = vadd.f32 %v539, %v776
      %v778 = vpop.f32.mrf.mxu0
      %v779 = vadd.f32 %v535, %v778
      %v780 = vpop.f32.mrf.mxu0
      %v781 = vadd.f32 %v539, %v780
      %782 = vmatprep.mubr.bf16.mxu0 0
      %783 = vmatmul.mubr.bf16.gmra.mxu0 %v652
      %v784 = vpop.f32.mrf.mxu0
      %v785 = vadd.f32 %v535, %v784
      %v786 = vpop.f32.mrf.mxu0
      %v787 = vadd.f32 %v539, %v786
      %v788 = vpop.f32.mrf.mxu0
      %v789 = vadd.f32 %v535, %v788
      %v790 = vpop.f32.mrf.mxu0
      %v791 = vadd.f32 %v539, %v790
      %792 = vmatprep.mubr.bf16.mxu0 0
      %793 = vmatmul.mubr.bf16.gmra.mxu0 %v655
      %v794 = vpop.f32.mrf.mxu0
      %v795 = vadd.f32 %v535, %v794
      %v796 = vpop.f32.mrf.mxu0
      %v797 = vadd.f32 %v539, %v796
      %v798 = vpop.f32.mrf.mxu0
      %v799 = vadd.f32 %v535, %v798
      %v800 = vpop.f32.mrf.mxu0
      %v801 = vadd.f32 %v539, %v800
      %802 = vdwg.mxu0
      %v803 = vld [vmem:[%s3] sm:$0xf]
      %v805 = vlaneseq
      %v806 = vshrl.u32 %v805, 7
      %v807 = vsub.s32 0, %v806
      %v808 = vrot.slane %v803, %v807
      %v809 = vlaneseq
      %v810 = vshrl.u32 %v809, 7
      %v811 = vsub.s32 1, %v810
      %v812 = vrot.slane %v803, %v811
      %v813 = vlaneseq
      %v814 = vshrl.u32 %v813, 7
      %v815 = vsub.s32 2, %v814
      %v816 = vrot.slane %v803, %v815
      %v817 = vlaneseq
      %v818 = vshrl.u32 %v817, 7
      %v819 = vsub.s32 3, %v818
      %v820 = vrot.slane %v803, %v819
      %v825 = vmul.f32 %v692, %v808
      %v826 = vmul.f32 %v694, %v812
      %v827 = vmul.f32 %v765, %v816
      %v828 = vmul.f32 %v767, %v820
      %v829 = vmul.f32 %v696, %v808
      %v830 = vmul.f32 %v698, %v812
      %v831 = vmul.f32 %v769, %v816
      %v832 = vmul.f32 %v771, %v820
      %v833 = vmul.f32 %v702, %v808
      %v834 = vmul.f32 %v704, %v812
      %v835 = vmul.f32 %v775, %v816
      %v836 = vmul.f32 %v777, %v820
      %v837 = vmul.f32 %v706, %v808
      %v838 = vmul.f32 %v708, %v812
      %v839 = vmul.f32 %v779, %v816
      %v840 = vmul.f32 %v781, %v820
      %v841 = vmul.f32 %v712, %v808
      %v842 = vmul.f32 %v714, %v812
      %v843 = vmul.f32 %v785, %v816
      %v844 = vmul.f32 %v787, %v820
      %v845 = vmul.f32 %v716, %v808
      %v846 = vmul.f32 %v718, %v812
      %v847 = vmul.f32 %v789, %v816
      %v848 = vmul.f32 %v791, %v820
      %v849 = vmul.f32 %v722, %v808
      %v850 = vmul.f32 %v724, %v812
      %v851 = vmul.f32 %v795, %v816
      %v852 = vmul.f32 %v797, %v820
      %v853 = vmul.f32 %v726, %v808
      %v854 = vmul.f32 %v728, %v812
      %v855 = vmul.f32 %v799, %v816
      %v856 = vmul.f32 %v801, %v820
      %v857 = vld [vmem:[%s4] sm:$0xf]
      %v859 = vlaneseq
      %v860 = vshrl.u32 %v859, 7
      %v861 = vsub.s32 0, %v860
      %v862 = vrot.slane %v857, %v861
      %v863 = vlaneseq
      %v864 = vshrl.u32 %v863, 7
      %v865 = vsub.s32 1, %v864
      %v866 = vrot.slane %v857, %v865
      %v867 = vlaneseq
      %v868 = vshrl.u32 %v867, 7
      %v869 = vsub.s32 2, %v868
      %v870 = vrot.slane %v857, %v869
      %v871 = vlaneseq
      %v872 = vshrl.u32 %v871, 7
      %v873 = vsub.s32 3, %v872
      %v874 = vrot.slane %v857, %v873
      %v879 = vadd.f32 %v825, %v862
      %v880 = vadd.f32 %v826, %v866
      %v881 = vadd.f32 %v827, %v870
      %v882 = vadd.f32 %v828, %v874
      %v883 = vadd.f32 %v829, %v862
      %v884 = vadd.f32 %v830, %v866
      %v885 = vadd.f32 %v831, %v870
      %v886 = vadd.f32 %v832, %v874
      %v887 = vadd.f32 %v833, %v862
      %v888 = vadd.f32 %v834, %v866
      %v889 = vadd.f32 %v835, %v870
      %v890 = vadd.f32 %v836, %v874
      %v891 = vadd.f32 %v837, %v862
      %v892 = vadd.f32 %v838, %v866
      %v893 = vadd.f32 %v839, %v870
      %v894 = vadd.f32 %v840, %v874
      %v895 = vadd.f32 %v841, %v862
      %v896 = vadd.f32 %v842, %v866
      %v897 = vadd.f32 %v843, %v870
      %v898 = vadd.f32 %v844, %v874
      %v899 = vadd.f32 %v845, %v862
      %v900 = vadd.f32 %v846, %v866
      %v901 = vadd.f32 %v847, %v870
      %v902 = vadd.f32 %v848, %v874
      %v903 = vadd.f32 %v849, %v862
      %v904 = vadd.f32 %v850, %v866
      %v905 = vadd.f32 %v851, %v870
      %v906 = vadd.f32 %v852, %v874
      %v907 = vadd.f32 %v853, %v862
      %v908 = vadd.f32 %v854, %v866
      %v909 = vadd.f32 %v855, %v870
      %v910 = vadd.f32 %v856, %v874
      %v911 = vmax.f32 %v879, 0.0
      %v912 = vmax.f32 %v880, 0.0
      %v913 = vmax.f32 %v881, 0.0
      %v914 = vmax.f32 %v882, 0.0
      %v915 = vmax.f32 %v883, 0.0
      %v916 = vmax.f32 %v884, 0.0
      %v917 = vmax.f32 %v885, 0.0
      %v918 = vmax.f32 %v886, 0.0
      %v919 = vmax.f32 %v887, 0.0
      %v920 = vmax.f32 %v888, 0.0
      %v921 = vmax.f32 %v889, 0.0
      %v922 = vmax.f32 %v890, 0.0
      %v923 = vmax.f32 %v891, 0.0
      %v924 = vmax.f32 %v892, 0.0
      %v925 = vmax.f32 %v893, 0.0
      %v926 = vmax.f32 %v894, 0.0
      %v927 = vmax.f32 %v895, 0.0
      %v928 = vmax.f32 %v896, 0.0
      %v929 = vmax.f32 %v897, 0.0
      %v930 = vmax.f32 %v898, 0.0
      %v931 = vmax.f32 %v899, 0.0
      %v932 = vmax.f32 %v900, 0.0
      %v933 = vmax.f32 %v901, 0.0
      %v934 = vmax.f32 %v902, 0.0
      %v935 = vmax.f32 %v903, 0.0
      %v936 = vmax.f32 %v904, 0.0
      %v937 = vmax.f32 %v905, 0.0
      %v938 = vmax.f32 %v906, 0.0
      %v939 = vmax.f32 %v907, 0.0
      %v940 = vmax.f32 %v908, 0.0
      %v941 = vmax.f32 %v909, 0.0
      %v942 = vmax.f32 %v910, 0.0
      %v943 = vpack.c.bf16 %v915, %v911
      %v944 = vpack.c.bf16 %v916, %v912
      %v945 = vpack.c.bf16 %v917, %v913
      %v946 = vpack.c.bf16 %v918, %v914
      %v947 = vpack.c.bf16 %v923, %v919
      %v948 = vpack.c.bf16 %v924, %v920
      %v949 = vpack.c.bf16 %v925, %v921
      %v950 = vpack.c.bf16 %v926, %v922
      %v951 = vpack.c.bf16 %v931, %v927
      %v952 = vpack.c.bf16 %v932, %v928
      %v953 = vpack.c.bf16 %v933, %v929
      %v954 = vpack.c.bf16 %v934, %v930
      %v955 = vpack.c.bf16 %v939, %v935
      %v956 = vpack.c.bf16 %v940, %v936
      %v957 = vpack.c.bf16 %v941, %v937
      %v958 = vpack.c.bf16 %v942, %v938
      %v959 = vld [vmem:[%s5] sm:$0xff]
      %v960 = vld [vmem:[%s5 + $0x8] sm:$0xff]
      %v961 = vld [vmem:[%s5 + $0x10] sm:$0xff]
      %v962 = vld [vmem:[%s5 + $0x18] sm:$0xff]
      %v963 = vld [vmem:[%s5 + $0x20] sm:$0xff]
      %v964 = vld [vmem:[%s5 + $0x28] sm:$0xff]
      %v965 = vld [vmem:[%s5 + $0x30] sm:$0xff]
      %v966 = vld [vmem:[%s5 + $0x38] sm:$0xff]
      %v967 = vld [vmem:[%s5 + $0x40] sm:$0xff]
      %v968 = vld [vmem:[%s5 + $0x48] sm:$0xff]
      %v969 = vld [vmem:[%s5 + $0x50] sm:$0xff]
      %v970 = vld [vmem:[%s5 + $0x58] sm:$0xff]
      %v971 = vld [vmem:[%s5 + $0x60] sm:$0xff]
      %v972 = vld [vmem:[%s5 + $0x68] sm:$0xff]
      %v973 = vld [vmem:[%s5 + $0x70] sm:$0xff]
      %v974 = vld [vmem:[%s5 + $0x78] sm:$0xff]
      %v975 = vld [vmem:[%s5 + $0x80] sm:$0xff]
      %v976 = vld [vmem:[%s5 + $0x88] sm:$0xff]
      %v977 = vld [vmem:[%s5 + $0x90] sm:$0xff]
      %v978 = vld [vmem:[%s5 + $0x98] sm:$0xff]
      %v979 = vld [vmem:[%s5 + $0xa0] sm:$0xff]
      %v980 = vld [vmem:[%s5 + $0xa8] sm:$0xff]
      %v981 = vld [vmem:[%s5 + $0xb0] sm:$0xff]
      %v982 = vld [vmem:[%s5 + $0xb8] sm:$0xff]
      %v983 = vld [vmem:[%s5 + $0xc0] sm:$0xff]
      %v984 = vld [vmem:[%s5 + $0xc8] sm:$0xff]
      %v985 = vld [vmem:[%s5 + $0xd0] sm:$0xff]
      %v986 = vld [vmem:[%s5 + $0xd8] sm:$0xff]
      %v987 = vld [vmem:[%s5 + $0xe0] sm:$0xff]
      %v988 = vld [vmem:[%s5 + $0xe8] sm:$0xff]
      %v989 = vld [vmem:[%s5 + $0xf0] sm:$0xff]
      %v990 = vld [vmem:[%s5 + $0xf8] sm:$0xff]
      %v991 = vld [vmem:[%s5 + $0x100] sm:$0xff]
      %v992 = vld [vmem:[%s5 + $0x108] sm:$0xff]
      %v993 = vld [vmem:[%s5 + $0x110] sm:$0xff]
      %v994 = vld [vmem:[%s5 + $0x118] sm:$0xff]
      %v995 = vld [vmem:[%s5 + $0x120] sm:$0xff]
      %v996 = vld [vmem:[%s5 + $0x128] sm:$0xff]
      %v997 = vld [vmem:[%s5 + $0x130] sm:$0xff]
      %v998 = vld [vmem:[%s5 + $0x138] sm:$0xff]
      %v999 = vld [vmem:[%s5 + $0x140] sm:$0xff]
      %v1000 = vld [vmem:[%s5 + $0x148] sm:$0xff]
      %v1001 = vld [vmem:[%s5 + $0x150] sm:$0xff]
      %v1002 = vld [vmem:[%s5 + $0x158] sm:$0xff]
      %v1003 = vld [vmem:[%s5 + $0x160] sm:$0xff]
      %v1004 = vld [vmem:[%s5 + $0x168] sm:$0xff]
      %v1005 = vld [vmem:[%s5 + $0x170] sm:$0xff]
      %v1006 = vld [vmem:[%s5 + $0x178] sm:$0xff]
      %v1007 = vld [vmem:[%s5 + $0x180] sm:$0xff]
      %v1008 = vld [vmem:[%s5 + $0x188] sm:$0xff]
      %v1009 = vld [vmem:[%s5 + $0x190] sm:$0xff]
      %v1010 = vld [vmem:[%s5 + $0x198] sm:$0xff]
      %v1011 = vld [vmem:[%s5 + $0x1a0] sm:$0xff]
      %v1012 = vld [vmem:[%s5 + $0x1a8] sm:$0xff]
      %v1013 = vld [vmem:[%s5 + $0x1b0] sm:$0xff]
      %v1014 = vld [vmem:[%s5 + $0x1b8] sm:$0xff]
      %v1015 = vld [vmem:[%s5 + $0x1c0] sm:$0xff]
      %v1016 = vld [vmem:[%s5 + $0x1c8] sm:$0xff]
      %v1017 = vld [vmem:[%s5 + $0x1d0] sm:$0xff]
      %v1018 = vld [vmem:[%s5 + $0x1d8] sm:$0xff]
      %v1019 = vld [vmem:[%s5 + $0x1e0] sm:$0xff]
      %v1020 = vld [vmem:[%s5 + $0x1e8] sm:$0xff]
      %v1021 = vld [vmem:[%s5 + $0x1f0] sm:$0xff]
      %v1022 = vld [vmem:[%s5 + $0x1f8] sm:$0xff]
      %v1087 = vunpack.c.l.b16 %v959
      %v1088 = vunpack.c.h.b16 %v959
      %v1089 = vunpack.c.l.b16 %v960
      %v1090 = vunpack.c.h.b16 %v960
      %v1091 = vunpack.c.l.b16 %v961
      %v1092 = vunpack.c.h.b16 %v961
      %v1093 = vunpack.c.l.b16 %v962
      %v1094 = vunpack.c.h.b16 %v962
      %v1095 = vunpack.c.l.b16 %v963
      %v1096 = vunpack.c.h.b16 %v963
      %v1097 = vunpack.c.l.b16 %v964
      %v1098 = vunpack.c.h.b16 %v964
      %v1099 = vunpack.c.l.b16 %v965
      %v1100 = vunpack.c.h.b16 %v965
      %v1101 = vunpack.c.l.b16 %v966
      %v1102 = vunpack.c.h.b16 %v966
      %v1103 = vunpack.c.l.b16 %v967
      %v1104 = vunpack.c.h.b16 %v967
      %v1105 = vunpack.c.l.b16 %v968
      %v1106 = vunpack.c.h.b16 %v968
      %v1107 = vunpack.c.l.b16 %v969
      %v1108 = vunpack.c.h.b16 %v969
      %v1109 = vunpack.c.l.b16 %v970
      %v1110 = vunpack.c.h.b16 %v970
      %v1111 = vunpack.c.l.b16 %v971
      %v1112 = vunpack.c.h.b16 %v971
      %v1113 = vunpack.c.l.b16 %v972
      %v1114 = vunpack.c.h.b16 %v972
      %v1115 = vunpack.c.l.b16 %v973
      %v1116 = vunpack.c.h.b16 %v973
      %v1117 = vunpack.c.l.b16 %v974
      %v1118 = vunpack.c.h.b16 %v974
      %v1119 = vunpack.c.l.b16 %v975
      %v1120 = vunpack.c.h.b16 %v975
      %v1121 = vunpack.c.l.b16 %v976
      %v1122 = vunpack.c.h.b16 %v976
      %v1123 = vunpack.c.l.b16 %v977
      %v1124 = vunpack.c.h.b16 %v977
      %v1125 = vunpack.c.l.b16 %v978
      %v1126 = vunpack.c.h.b16 %v978
      %v1127 = vunpack.c.l.b16 %v979
      %v1128 = vunpack.c.h.b16 %v979
      %v1129 = vunpack.c.l.b16 %v980
      %v1130 = vunpack.c.h.b16 %v980
      %v1131 = vunpack.c.l.b16 %v981
      %v1132 = vunpack.c.h.b16 %v981
      %v1133 = vunpack.c.l.b16 %v982
      %v1134 = vunpack.c.h.b16 %v982
      %v1135 = vunpack.c.l.b16 %v983
      %v1136 = vunpack.c.h.b16 %v983
      %v1137 = vunpack.c.l.b16 %v984
      %v1138 = vunpack.c.h.b16 %v984
      %v1139 = vunpack.c.l.b16 %v985
      %v1140 = vunpack.c.h.b16 %v985
      %v1141 = vunpack.c.l.b16 %v986
      %v1142 = vunpack.c.h.b16 %v986
      %v1143 = vunpack.c.l.b16 %v987
      %v1144 = vunpack.c.h.b16 %v987
      %v1145 = vunpack.c.l.b16 %v988
      %v1146 = vunpack.c.h.b16 %v988
      %v1147 = vunpack.c.l.b16 %v989
      %v1148 = vunpack.c.h.b16 %v989
      %v1149 = vunpack.c.l.b16 %v990
      %v1150 = vunpack.c.h.b16 %v990
      %v1151 = vunpack.c.l.b16 %v991
      %v1152 = vunpack.c.h.b16 %v991
      %v1153 = vunpack.c.l.b16 %v992
      %v1154 = vunpack.c.h.b16 %v992
      %v1155 = vunpack.c.l.b16 %v993
      %v1156 = vunpack.c.h.b16 %v993
      %v1157 = vunpack.c.l.b16 %v994
      %v1158 = vunpack.c.h.b16 %v994
      %v1159 = vunpack.c.l.b16 %v995
      %v1160 = vunpack.c.h.b16 %v995
      %v1161 = vunpack.c.l.b16 %v996
      %v1162 = vunpack.c.h.b16 %v996
      %v1163 = vunpack.c.l.b16 %v997
      %v1164 = vunpack.c.h.b16 %v997
      %v1165 = vunpack.c.l.b16 %v998
      %v1166 = vunpack.c.h.b16 %v998
      %v1167 = vunpack.c.l.b16 %v999
      %v1168 = vunpack.c.h.b16 %v999
      %v1169 = vunpack.c.l.b16 %v1000
      %v1170 = vunpack.c.h.b16 %v1000
      %v1171 = vunpack.c.l.b16 %v1001
      %v1172 = vunpack.c.h.b16 %v1001
      %v1173 = vunpack.c.l.b16 %v1002
      %v1174 = vunpack.c.h.b16 %v1002
      %v1175 = vunpack.c.l.b16 %v1003
      %v1176 = vunpack.c.h.b16 %v1003
      %v1177 = vunpack.c.l.b16 %v1004
      %v1178 = vunpack.c.h.b16 %v1004
      %v1179 = vunpack.c.l.b16 %v1005
      %v1180 = vunpack.c.h.b16 %v1005
      %v1181 = vunpack.c.l.b16 %v1006
      %v1182 = vunpack.c.h.b16 %v1006
      %v1183 = vunpack.c.l.b16 %v1007
      %v1184 = vunpack.c.h.b16 %v1007
      %v1185 = vunpack.c.l.b16 %v1008
      %v1186 = vunpack.c.h.b16 %v1008
      %v1187 = vunpack.c.l.b16 %v1009
      %v1188 = vunpack.c.h.b16 %v1009
      %v1189 = vunpack.c.l.b16 %v1010
      %v1190 = vunpack.c.h.b16 %v1010
      %v1191 = vunpack.c.l.b16 %v1011
      %v1192 = vunpack.c.h.b16 %v1011
      %v1193 = vunpack.c.l.b16 %v1012
      %v1194 = vunpack.c.h.b16 %v1012
      %v1195 = vunpack.c.l.b16 %v1013
      %v1196 = vunpack.c.h.b16 %v1013
      %v1197 = vunpack.c.l.b16 %v1014
      %v1198 = vunpack.c.h.b16 %v1014
      %v1199 = vunpack.c.l.b16 %v1015
      %v1200 = vunpack.c.h.b16 %v1015
      %v1201 = vunpack.c.l.b16 %v1016
      %v1202 = vunpack.c.h.b16 %v1016
      %v1203 = vunpack.c.l.b16 %v1017
      %v1204 = vunpack.c.h.b16 %v1017
      %v1205 = vunpack.c.l.b16 %v1018
      %v1206 = vunpack.c.h.b16 %v1018
      %v1207 = vunpack.c.l.b16 %v1019
      %v1208 = vunpack.c.h.b16 %v1019
      %v1209 = vunpack.c.l.b16 %v1020
      %v1210 = vunpack.c.h.b16 %v1020
      %v1211 = vunpack.c.l.b16 %v1021
      %v1212 = vunpack.c.h.b16 %v1021
      %v1213 = vunpack.c.l.b16 %v1022
      %v1214 = vunpack.c.h.b16 %v1022
      %v1215 = vpack.c.b16 %v1089, %v1087
      %v1216 = vpack.c.b16 %v1090, %v1088
      %v1217 = vpack.c.b16 %v1093, %v1091
      %v1218 = vpack.c.b16 %v1094, %v1092
      %v1219 = vpack.c.b16 %v1097, %v1095
      %v1220 = vpack.c.b16 %v1098, %v1096
      %v1221 = vpack.c.b16 %v1101, %v1099
      %v1222 = vpack.c.b16 %v1102, %v1100
      %v1223 = vpack.c.b16 %v1105, %v1103
      %v1224 = vpack.c.b16 %v1106, %v1104
      %v1225 = vpack.c.b16 %v1109, %v1107
      %v1226 = vpack.c.b16 %v1110, %v1108
      %v1227 = vpack.c.b16 %v1113, %v1111
      %v1228 = vpack.c.b16 %v1114, %v1112
      %v1229 = vpack.c.b16 %v1117, %v1115
      %v1230 = vpack.c.b16 %v1118, %v1116
      %v1231 = vpack.c.b16 %v1121, %v1119
      %v1232 = vpack.c.b16 %v1122, %v1120
      %v1233 = vpack.c.b16 %v1125, %v1123
      %v1234 = vpack.c.b16 %v1126, %v1124
      %v1235 = vpack.c.b16 %v1129, %v1127
      %v1236 = vpack.c.b16 %v1130, %v1128
      %v1237 = vpack.c.b16 %v1133, %v1131
      %v1238 = vpack.c.b16 %v1134, %v1132
      %v1239 = vpack.c.b16 %v1137, %v1135
      %v1240 = vpack.c.b16 %v1138, %v1136
      %v1241 = vpack.c.b16 %v1141, %v1139
      %v1242 = vpack.c.b16 %v1142, %v1140
      %v1243 = vpack.c.b16 %v1145, %v1143
      %v1244 = vpack.c.b16 %v1146, %v1144
      %v1245 = vpack.c.b16 %v1149, %v1147
      %v1246 = vpack.c.b16 %v1150, %v1148
      %v1247 = vpack.c.b16 %v1153, %v1151
      %v1248 = vpack.c.b16 %v1154, %v1152
      %v1249 = vpack.c.b16 %v1157, %v1155
      %v1250 = vpack.c.b16 %v1158, %v1156
      %v1251 = vpack.c.b16 %v1161, %v1159
      %v1252 = vpack.c.b16 %v1162, %v1160
      %v1253 = vpack.c.b16 %v1165, %v1163
      %v1254 = vpack.c.b16 %v1166, %v1164
      %v1255 = vpack.c.b16 %v1169, %v1167
      %v1256 = vpack.c.b16 %v1170, %v1168
      %v1257 = vpack.c.b16 %v1173, %v1171
      %v1258 = vpack.c.b16 %v1174, %v1172
      %v1259 = vpack.c.b16 %v1177, %v1175
      %v1260 = vpack.c.b16 %v1178, %v1176
      %v1261 = vpack.c.b16 %v1181, %v1179
      %v1262 = vpack.c.b16 %v1182, %v1180
      %v1263 = vpack.c.b16 %v1185, %v1183
      %v1264 = vpack.c.b16 %v1186, %v1184
      %v1265 = vpack.c.b16 %v1189, %v1187
      %v1266 = vpack.c.b16 %v1190, %v1188
      %v1267 = vpack.c.b16 %v1193, %v1191
      %v1268 = vpack.c.b16 %v1194, %v1192
      %v1269 = vpack.c.b16 %v1197, %v1195
      %v1270 = vpack.c.b16 %v1198, %v1196
      %v1271 = vpack.c.b16 %v1201, %v1199
      %v1272 = vpack.c.b16 %v1202, %v1200
      %v1273 = vpack.c.b16 %v1205, %v1203
      %v1274 = vpack.c.b16 %v1206, %v1204
      %v1275 = vpack.c.b16 %v1209, %v1207
      %v1276 = vpack.c.b16 %v1210, %v1208
      %v1277 = vpack.c.b16 %v1213, %v1211
      %v1278 = vpack.c.b16 %v1214, %v1212
      %1343 = vmatprep.subr.bf16.mxu0 %v1230
      %1344 = vmatpush1.bf16.msra.mxu0 %v1229
      %1345 = vmatprep.subr.bf16.mxu0 %v1228
      %1346 = vmatpush1.bf16.msra.mxu0 %v1227
      %1347 = vmatprep.subr.bf16.mxu0 %v1226
      %1348 = vmatpush1.bf16.msra.mxu0 %v1225
      %1349 = vmatprep.subr.bf16.mxu0 %v1224
      %1350 = vmatpush1.bf16.msra.mxu0 %v1223
      %1351 = vmatprep.subr.bf16.mxu0 %v1222
      %1352 = vmatpush1.bf16.msra.mxu0 %v1221
      %1353 = vmatprep.subr.bf16.mxu0 %v1220
      %1354 = vmatpush1.bf16.msra.mxu0 %v1219
      %1355 = vmatprep.subr.bf16.mxu0 %v1218
      %1356 = vmatpush1.bf16.msra.mxu0 %v1217
      %1357 = vmatprep.subr.bf16.mxu0 %v1216
      %1358 = vmatpush1.bf16.msra.mxu0 %v1215
      %1359 = vmatprep.subr.bf16.mxu0 %v1246
      %1360 = vmatpush2.bf16.msra.mxu0 %v1245
      %1361 = vmatprep.subr.bf16.mxu0 %v1244
      %1362 = vmatpush2.bf16.msra.mxu0 %v1243
      %1363 = vmatprep.subr.bf16.mxu0 %v1242
      %1364 = vmatpush2.bf16.msra.mxu0 %v1241
      %1365 = vmatprep.subr.bf16.mxu0 %v1240
      %1366 = vmatpush2.bf16.msra.mxu0 %v1239
      %1367 = vmatprep.subr.bf16.mxu0 %v1238
      %1368 = vmatpush2.bf16.msra.mxu0 %v1237
      %1369 = vmatprep.subr.bf16.mxu0 %v1236
      %1370 = vmatpush2.bf16.msra.mxu0 %v1235
      %1371 = vmatprep.subr.bf16.mxu0 %v1234
      %1372 = vmatpush2.bf16.msra.mxu0 %v1233
      %1373 = vmatprep.subr.bf16.mxu0 %v1232
      %1374 = vmatpush2.bf16.msra.mxu0 %v1231
      %1375 = vmatprep.mubr.bf16.mxu0 %v944
      %1376 = vmatmul.mubr.bf16.gmra.mxu0 %v943
      %v1377 = vpop.f32.mrf.mxu0
      %v1378 = vadd.f32 0.0, %v1377
      %v1379 = vpop.f32.mrf.mxu0
      %v1380 = vadd.f32 0.0, %v1379
      %v1381 = vpop.f32.mrf.mxu0
      %v1382 = vadd.f32 0.0, %v1381
      %v1383 = vpop.f32.mrf.mxu0
      %v1384 = vadd.f32 0.0, %v1383
      %1385 = vmatprep.mubr.bf16.mxu0 %v948
      %1386 = vmatmul.mubr.bf16.gmra.mxu0 %v947
      %v1387 = vpop.f32.mrf.mxu0
      %v1388 = vadd.f32 0.0, %v1387
      %v1389 = vpop.f32.mrf.mxu0
      %v1390 = vadd.f32 0.0, %v1389
      %v1391 = vpop.f32.mrf.mxu0
      %v1392 = vadd.f32 0.0, %v1391
      %v1393 = vpop.f32.mrf.mxu0
      %v1394 = vadd.f32 0.0, %v1393
      %1395 = vmatprep.mubr.bf16.mxu0 %v952
      %1396 = vmatmul.mubr.bf16.gmra.mxu0 %v951
      %v1397 = vpop.f32.mrf.mxu0
      %v1398 = vadd.f32 0.0, %v1397
      %v1399 = vpop.f32.mrf.mxu0
      %v1400 = vadd.f32 0.0, %v1399
      %v1401 = vpop.f32.mrf.mxu0
      %v1402 = vadd.f32 0.0, %v1401
      %v1403 = vpop.f32.mrf.mxu0
      %v1404 = vadd.f32 0.0, %v1403
      %1405 = vmatprep.mubr.bf16.mxu0 %v956
      %1406 = vmatmul.mubr.bf16.gmra.mxu0 %v955
      %v1407 = vpop.f32.mrf.mxu0
      %v1408 = vadd.f32 0.0, %v1407
      %v1409 = vpop.f32.mrf.mxu0
      %v1410 = vadd.f32 0.0, %v1409
      %v1411 = vpop.f32.mrf.mxu0
      %v1412 = vadd.f32 0.0, %v1411
      %v1413 = vpop.f32.mrf.mxu0
      %v1414 = vadd.f32 0.0, %v1413
      %1415 = vdwg.mxu0
      %1416 = vmatprep.subr.bf16.mxu0 %v1262
      %1417 = vmatpush1.bf16.msra.mxu0 %v1261
      %1418 = vmatprep.subr.bf16.mxu0 %v1260
      %1419 = vmatpush1.bf16.msra.mxu0 %v1259
      %1420 = vmatprep.subr.bf16.mxu0 %v1258
      %1421 = vmatpush1.bf16.msra.mxu0 %v1257
      %1422 = vmatprep.subr.bf16.mxu0 %v1256
      %1423 = vmatpush1.bf16.msra.mxu0 %v1255
      %1424 = vmatprep.subr.bf16.mxu0 %v1254
      %1425 = vmatpush1.bf16.msra.mxu0 %v1253
      %1426 = vmatprep.subr.bf16.mxu0 %v1252
      %1427 = vmatpush1.bf16.msra.mxu0 %v1251
      %1428 = vmatprep.subr.bf16.mxu0 %v1250
      %1429 = vmatpush1.bf16.msra.mxu0 %v1249
      %1430 = vmatprep.subr.bf16.mxu0 %v1248
      %1431 = vmatpush1.bf16.msra.mxu0 %v1247
      %1432 = vmatprep.subr.bf16.mxu0 %v1278
      %1433 = vmatpush2.bf16.msra.mxu0 %v1277
      %1434 = vmatprep.subr.bf16.mxu0 %v1276
      %1435 = vmatpush2.bf16.msra.mxu0 %v1275
      %1436 = vmatprep.subr.bf16.mxu0 %v1274
      %1437 = vmatpush2.bf16.msra.mxu0 %v1273
      %1438 = vmatprep.subr.bf16.mxu0 %v1272
      %1439 = vmatpush2.bf16.msra.mxu0 %v1271
      %1440 = vmatprep.subr.bf16.mxu0 %v1270
      %1441 = vmatpush2.bf16.msra.mxu0 %v1269
      %1442 = vmatprep.subr.bf16.mxu0 %v1268
      %1443 = vmatpush2.bf16.msra.mxu0 %v1267
      %1444 = vmatprep.subr.bf16.mxu0 %v1266
      %1445 = vmatpush2.bf16.msra.mxu0 %v1265
      %1446 = vmatprep.subr.bf16.mxu0 %v1264
      %1447 = vmatpush2.bf16.msra.mxu0 %v1263
      %1448 = vmatprep.mubr.bf16.mxu0 %v946
      %1449 = vmatmul.mubr.bf16.gmra.mxu0 %v945
      %v1450 = vpop.f32.mrf.mxu0
      %v1451 = vadd.f32 %v1378, %v1450
      %v1452 = vpop.f32.mrf.mxu0
      %v1453 = vadd.f32 %v1380, %v1452
      %v1454 = vpop.f32.mrf.mxu0
      %v1455 = vadd.f32 %v1382, %v1454
      %v1456 = vpop.f32.mrf.mxu0
      %v1457 = vadd.f32 %v1384, %v1456
      %1458 = vmatprep.mubr.bf16.mxu0 %v950
      %1459 = vmatmul.mubr.bf16.gmra.mxu0 %v949
      %v1460 = vpop.f32.mrf.mxu0
      %v1461 = vadd.f32 %v1388, %v1460
      %v1462 = vpop.f32.mrf.mxu0
      %v1463 = vadd.f32 %v1390, %v1462
      %v1464 = vpop.f32.mrf.mxu0
      %v1465 = vadd.f32 %v1392, %v1464
      %v1466 = vpop.f32.mrf.mxu0
      %v1467 = vadd.f32 %v1394, %v1466
      %1468 = vmatprep.mubr.bf16.mxu0 %v954
      %1469 = vmatmul.mubr.bf16.gmra.mxu0 %v953
      %v1470 = vpop.f32.mrf.mxu0
      %v1471 = vadd.f32 %v1398, %v1470
      %v1472 = vpop.f32.mrf.mxu0
      %v1473 = vadd.f32 %v1400, %v1472
      %v1474 = vpop.f32.mrf.mxu0
      %v1475 = vadd.f32 %v1402, %v1474
      %v1476 = vpop.f32.mrf.mxu0
      %v1477 = vadd.f32 %v1404, %v1476
      %1478 = vmatprep.mubr.bf16.mxu0 %v958
      %1479 = vmatmul.mubr.bf16.gmra.mxu0 %v957
      %v1480 = vpop.f32.mrf.mxu0
      %v1481 = vadd.f32 %v1408, %v1480
      %v1482 = vpop.f32.mrf.mxu0
      %v1483 = vadd.f32 %v1410, %v1482
      %v1484 = vpop.f32.mrf.mxu0
      %v1485 = vadd.f32 %v1412, %v1484
      %v1486 = vpop.f32.mrf.mxu0
      %v1487 = vadd.f32 %v1414, %v1486
      %1488 = vdwg.mxu0
      %v1489 = vld [vmem:[%s6] sm:$0x3]
      %v1491 = vlaneseq
      %v1492 = vshrl.u32 %v1491, 7
      %v1493 = vsub.s32 0, %v1492
      %v1494 = vrot.slane %v1489, %v1493
      %v1495 = vlaneseq
      %v1496 = vshrl.u32 %v1495, 7
      %v1497 = vsub.s32 1, %v1496
      %v1498 = vrot.slane %v1489, %v1497
      %v1501 = vmul.f32 %v1451, %v1494
      %v1502 = vmul.f32 %v1453, %v1498
      %v1503 = vmul.f32 %v1455, %v1494
      %v1504 = vmul.f32 %v1457, %v1498
      %v1505 = vmul.f32 %v1461, %v1494
      %v1506 = vmul.f32 %v1463, %v1498
      %v1507 = vmul.f32 %v1465, %v1494
      %v1508 = vmul.f32 %v1467, %v1498
      %v1509 = vmul.f32 %v1471, %v1494
      %v1510 = vmul.f32 %v1473, %v1498
      %v1511 = vmul.f32 %v1475, %v1494
      %v1512 = vmul.f32 %v1477, %v1498
      %v1513 = vmul.f32 %v1481, %v1494
      %v1514 = vmul.f32 %v1483, %v1498
      %v1515 = vmul.f32 %v1485, %v1494
      %v1516 = vmul.f32 %v1487, %v1498
      %v1517 = vld [vmem:[%s7] sm:$0x3]
      %v1519 = vlaneseq
      %v1520 = vshrl.u32 %v1519, 7
      %v1521 = vsub.s32 0, %v1520
      %v1522 = vrot.slane %v1517, %v1521
      %v1523 = vlaneseq
      %v1524 = vshrl.u32 %v1523, 7
      %v1525 = vsub.s32 1, %v1524
      %v1526 = vrot.slane %v1517, %v1525
      %v1529 = vadd.f32 %v1501, %v1522
      %v1530 = vadd.f32 %v1502, %v1526
      %v1531 = vadd.f32 %v1503, %v1522
      %v1532 = vadd.f32 %v1504, %v1526
      %v1533 = vadd.f32 %v1505, %v1522
      %v1534 = vadd.f32 %v1506, %v1526
      %v1535 = vadd.f32 %v1507, %v1522
      %v1536 = vadd.f32 %v1508, %v1526
      %v1537 = vadd.f32 %v1509, %v1522
      %v1538 = vadd.f32 %v1510, %v1526
      %v1539 = vadd.f32 %v1511, %v1522
      %v1540 = vadd.f32 %v1512, %v1526
      %v1541 = vadd.f32 %v1513, %v1522
      %v1542 = vadd.f32 %v1514, %v1526
      %v1543 = vadd.f32 %v1515, %v1522
      %v1544 = vadd.f32 %v1516, %v1526
      %v1545 = vmax.f32 %v1529, 0.0
      %v1546 = vmax.f32 %v1530, 0.0
      %v1547 = vmax.f32 %v1531, 0.0
      %v1548 = vmax.f32 %v1532, 0.0
      %v1549 = vmax.f32 %v1533, 0.0
      %v1550 = vmax.f32 %v1534, 0.0
      %v1551 = vmax.f32 %v1535, 0.0
      %v1552 = vmax.f32 %v1536, 0.0
      %v1553 = vmax.f32 %v1537, 0.0
      %v1554 = vmax.f32 %v1538, 0.0
      %v1555 = vmax.f32 %v1539, 0.0
      %v1556 = vmax.f32 %v1540, 0.0
      %v1557 = vmax.f32 %v1541, 0.0
      %v1558 = vmax.f32 %v1542, 0.0
      %v1559 = vmax.f32 %v1543, 0.0
      %v1560 = vmax.f32 %v1544, 0.0
      %v1561 = vpack.c.bf16 %v1547, %v1545
      %v1562 = vpack.c.bf16 %v1548, %v1546
      %v1563 = vpack.c.bf16 %v1551, %v1549
      %v1564 = vpack.c.bf16 %v1552, %v1550
      %v1565 = vpack.c.bf16 %v1555, %v1553
      %v1566 = vpack.c.bf16 %v1556, %v1554
      %v1567 = vpack.c.bf16 %v1559, %v1557
      %v1568 = vpack.c.bf16 %v1560, %v1558
      %v1569 = vld [vmem:[%s8] sm:$0xf]
      %v1570 = vld [vmem:[%s8 + $0x4] sm:$0xf]
      %v1571 = vld [vmem:[%s8 + $0x8] sm:$0xf]
      %v1572 = vld [vmem:[%s8 + $0xc] sm:$0xf]
      %v1573 = vld [vmem:[%s8 + $0x10] sm:$0xf]
      %v1574 = vld [vmem:[%s8 + $0x14] sm:$0xf]
      %v1575 = vld [vmem:[%s8 + $0x18] sm:$0xf]
      %v1576 = vld [vmem:[%s8 + $0x1c] sm:$0xf]
      %v1577 = vld [vmem:[%s8 + $0x20] sm:$0xf]
      %v1578 = vld [vmem:[%s8 + $0x24] sm:$0xf]
      %v1579 = vld [vmem:[%s8 + $0x28] sm:$0xf]
      %v1580 = vld [vmem:[%s8 + $0x2c] sm:$0xf]
      %v1581 = vld [vmem:[%s8 + $0x30] sm:$0xf]
      %v1582 = vld [vmem:[%s8 + $0x34] sm:$0xf]
      %v1583 = vld [vmem:[%s8 + $0x38] sm:$0xf]
      %v1584 = vld [vmem:[%s8 + $0x3c] sm:$0xf]
      %v1585 = vld [vmem:[%s8 + $0x40] sm:$0xf]
      %v1586 = vld [vmem:[%s8 + $0x44] sm:$0xf]
      %v1587 = vld [vmem:[%s8 + $0x48] sm:$0xf]
      %v1588 = vld [vmem:[%s8 + $0x4c] sm:$0xf]
      %v1589 = vld [vmem:[%s8 + $0x50] sm:$0xf]
      %v1590 = vld [vmem:[%s8 + $0x54] sm:$0xf]
      %v1591 = vld [vmem:[%s8 + $0x58] sm:$0xf]
      %v1592 = vld [vmem:[%s8 + $0x5c] sm:$0xf]
      %v1593 = vld [vmem:[%s8 + $0x60] sm:$0xf]
      %v1594 = vld [vmem:[%s8 + $0x64] sm:$0xf]
      %v1595 = vld [vmem:[%s8 + $0x68] sm:$0xf]
      %v1596 = vld [vmem:[%s8 + $0x6c] sm:$0xf]
      %v1597 = vld [vmem:[%s8 + $0x70] sm:$0xf]
      %v1598 = vld [vmem:[%s8 + $0x74] sm:$0xf]
      %v1599 = vld [vmem:[%s8 + $0x78] sm:$0xf]
      %v1600 = vld [vmem:[%s8 + $0x7c] sm:$0xf]
      %v1633 = vunpack.c.l.b16 %v1569
      %v1634 = vunpack.c.l.b16 %v1570
      %v1635 = vunpack.c.l.b16 %v1571
      %v1636 = vunpack.c.l.b16 %v1572
      %v1637 = vunpack.c.l.b16 %v1573
      %v1638 = vunpack.c.l.b16 %v1574
      %v1639 = vunpack.c.l.b16 %v1575
      %v1640 = vunpack.c.l.b16 %v1576
      %v1641 = vunpack.c.l.b16 %v1577
      %v1642 = vunpack.c.l.b16 %v1578
      %v1643 = vunpack.c.l.b16 %v1579
      %v1644 = vunpack.c.l.b16 %v1580
      %v1645 = vunpack.c.l.b16 %v1581
      %v1646 = vunpack.c.l.b16 %v1582
      %v1647 = vunpack.c.l.b16 %v1583
      %v1648 = vunpack.c.l.b16 %v1584
      %v1649 = vunpack.c.l.b16 %v1585
      %v1650 = vunpack.c.l.b16 %v1586
      %v1651 = vunpack.c.l.b16 %v1587
      %v1652 = vunpack.c.l.b16 %v1588
      %v1653 = vunpack.c.l.b16 %v1589
      %v1654 = vunpack.c.l.b16 %v1590
      %v1655 = vunpack.c.l.b16 %v1591
      %v1656 = vunpack.c.l.b16 %v1592
      %v1657 = vunpack.c.l.b16 %v1593
      %v1658 = vunpack.c.l.b16 %v1594
      %v1659 = vunpack.c.l.b16 %v1595
      %v1660 = vunpack.c.l.b16 %v1596
      %v1661 = vunpack.c.l.b16 %v1597
      %v1662 = vunpack.c.l.b16 %v1598
      %v1663 = vunpack.c.l.b16 %v1599
      %v1664 = vunpack.c.l.b16 %v1600
      %v1665 = vpack.c.b16 %v1634, %v1633
      %v1666 = vpack.c.b16 %v1636, %v1635
      %v1667 = vpack.c.b16 %v1638, %v1637
      %v1668 = vpack.c.b16 %v1640, %v1639
      %v1669 = vpack.c.b16 %v1642, %v1641
      %v1670 = vpack.c.b16 %v1644, %v1643
      %v1671 = vpack.c.b16 %v1646, %v1645
      %v1672 = vpack.c.b16 %v1648, %v1647
      %v1673 = vpack.c.b16 %v1650, %v1649
      %v1674 = vpack.c.b16 %v1652, %v1651
      %v1675 = vpack.c.b16 %v1654, %v1653
      %v1676 = vpack.c.b16 %v1656, %v1655
      %v1677 = vpack.c.b16 %v1658, %v1657
      %v1678 = vpack.c.b16 %v1660, %v1659
      %v1679 = vpack.c.b16 %v1662, %v1661
      %v1680 = vpack.c.b16 %v1664, %v1663
      %1697 = vmatprep.subr.bf16.mxu0 0
      %1698 = vmatpush1.bf16.msra.mxu0 %v1672
      %1699 = vmatprep.subr.bf16.mxu0 0
      %1700 = vmatpush1.bf16.msra.mxu0 %v1671
      %1701 = vmatprep.subr.bf16.mxu0 0
      %1702 = vmatpush1.bf16.msra.mxu0 %v1670
      %1703 = vmatprep.subr.bf16.mxu0 0
      %1704 = vmatpush1.bf16.msra.mxu0 %v1669
      %1705 = vmatprep.subr.bf16.mxu0 0
      %1706 = vmatpush1.bf16.msra.mxu0 %v1668
      %1707 = vmatprep.subr.bf16.mxu0 0
      %1708 = vmatpush1.bf16.msra.mxu0 %v1667
      %1709 = vmatprep.subr.bf16.mxu0 0
      %1710 = vmatpush1.bf16.msra.mxu0 %v1666
      %1711 = vmatprep.subr.bf16.mxu0 0
      %1712 = vmatpush1.bf16.msra.mxu0 %v1665
      %1713 = vmatprep.subr.bf16.mxu0 0
      %1714 = vmatpush2.bf16.msra.mxu0 %v1680
      %1715 = vmatprep.subr.bf16.mxu0 0
      %1716 = vmatpush2.bf16.msra.mxu0 %v1679
      %1717 = vmatprep.subr.bf16.mxu0 0
      %1718 = vmatpush2.bf16.msra.mxu0 %v1678
      %1719 = vmatprep.subr.bf16.mxu0 0
      %1720 = vmatpush2.bf16.msra.mxu0 %v1677
      %1721 = vmatprep.subr.bf16.mxu0 0
      %1722 = vmatpush2.bf16.msra.mxu0 %v1676
      %1723 = vmatprep.subr.bf16.mxu0 0
      %1724 = vmatpush2.bf16.msra.mxu0 %v1675
      %1725 = vmatprep.subr.bf16.mxu0 0
      %1726 = vmatpush2.bf16.msra.mxu0 %v1674
      %1727 = vmatprep.subr.bf16.mxu0 0
      %1728 = vmatpush2.bf16.msra.mxu0 %v1673
      %1729 = vmatprep.mubr.bf16.mxu0 %v1562
      %1730 = vmatmul.mubr.bf16.gmra.mxu0 %v1561
      %v1731 = vpop.f32.mrf.mxu0
      %v1732 = vadd.f32 0.0, %v1731
      %v1733 = vpop.f32.mrf.mxu0
      %v1734 = vpop.f32.mrf.mxu0
      %v1735 = vadd.f32 0.0, %v1734
      %v1736 = vpop.f32.mrf.mxu0
      %1737 = vmatprep.mubr.bf16.mxu0 %v1564
      %1738 = vmatmul.mubr.bf16.gmra.mxu0 %v1563
      %v1739 = vpop.f32.mrf.mxu0
      %v1740 = vadd.f32 0.0, %v1739
      %v1741 = vpop.f32.mrf.mxu0
      %v1742 = vpop.f32.mrf.mxu0
      %v1743 = vadd.f32 0.0, %v1742
      %v1744 = vpop.f32.mrf.mxu0
      %1745 = vmatprep.mubr.bf16.mxu0 %v1566
      %1746 = vmatmul.mubr.bf16.gmra.mxu0 %v1565
      %v1747 = vpop.f32.mrf.mxu0
      %v1748 = vadd.f32 0.0, %v1747
      %v1749 = vpop.f32.mrf.mxu0
      %v1750 = vpop.f32.mrf.mxu0
      %v1751 = vadd.f32 0.0, %v1750
      %v1752 = vpop.f32.mrf.mxu0
      %1753 = vmatprep.mubr.bf16.mxu0 %v1568
      %1754 = vmatmul.mubr.bf16.gmra.mxu0 %v1567
      %v1755 = vpop.f32.mrf.mxu0
      %v1756 = vadd.f32 0.0, %v1755
      %v1757 = vpop.f32.mrf.mxu0
      %v1758 = vpop.f32.mrf.mxu0
      %v1759 = vadd.f32 0.0, %v1758
      %v1760 = vpop.f32.mrf.mxu0
      %1761 = vdwg.mxu0
      %v1762 = vld [vmem:[%s9] sm:$0x1]
      %v1764 = vlaneseq
      %v1765 = vshrl.u32 %v1764, 7
      %v1766 = vsub.s32 0, %v1765
      %v1767 = vrot.slane %v1762, %v1766
      %v1769 = vmul.f32 %v1732, %v1767
      %v1770 = vmul.f32 %v1735, %v1767
      %v1771 = vmul.f32 %v1740, %v1767
      %v1772 = vmul.f32 %v1743, %v1767
      %v1773 = vmul.f32 %v1748, %v1767
      %v1774 = vmul.f32 %v1751, %v1767
      %v1775 = vmul.f32 %v1756, %v1767
      %v1776 = vmul.f32 %v1759, %v1767
      %v1777 = vld [vmem:[%s10] sm:$0x1]
      %v1779 = vlaneseq
      %v1780 = vshrl.u32 %v1779, 7
      %v1781 = vsub.s32 0, %v1780
      %v1782 = vrot.slane %v1777, %v1781
      %v1784 = vadd.f32 %v1769, %v1782
      %v1785 = vadd.f32 %v1770, %v1782
      %v1786 = vadd.f32 %v1771, %v1782
      %v1787 = vadd.f32 %v1772, %v1782
      %v1788 = vadd.f32 %v1773, %v1782
      %v1789 = vadd.f32 %v1774, %v1782
      %v1790 = vadd.f32 %v1775, %v1782
      %v1791 = vadd.f32 %v1776, %v1782
      %v1792 = vmax.f32 %v1784, 0.0
      %v1793 = vmax.f32 %v1785, 0.0
      %v1794 = vmax.f32 %v1786, 0.0
      %v1795 = vmax.f32 %v1787, 0.0
      %v1796 = vmax.f32 %v1788, 0.0
      %v1797 = vmax.f32 %v1789, 0.0
      %v1798 = vmax.f32 %v1790, 0.0
      %v1799 = vmax.f32 %v1791, 0.0
      %v1800 = vpack.c.bf16 %v1793, %v1792
      %v1801 = vpack.c.bf16 %v1795, %v1794
      %v1802 = vpack.c.bf16 %v1797, %v1796
      %v1803 = vpack.c.bf16 %v1799, %v1798
      %v1804 = vld [vmem:[%s11] sm:$0xf]
      %v1805 = vld [vmem:[%s11 + $0x4] sm:$0xf]
      %v1806 = vld [vmem:[%s11 + $0x8] sm:$0xf]
      %v1807 = vld [vmem:[%s11 + $0xc] sm:$0xf]
      %v1808 = vld [vmem:[%s11 + $0x10] sm:$0xf]
      %v1809 = vld [vmem:[%s11 + $0x14] sm:$0xf]
      %v1810 = vld [vmem:[%s11 + $0x18] sm:$0xf]
      %v1811 = vld [vmem:[%s11 + $0x1c] sm:$0xf]
      %v1812 = vld [vmem:[%s11 + $0x20] sm:$0xf]
      %v1813 = vld [vmem:[%s11 + $0x24] sm:$0xf]
      %v1814 = vld [vmem:[%s11 + $0x28] sm:$0xf]
      %v1815 = vld [vmem:[%s11 + $0x2c] sm:$0xf]
      %v1816 = vld [vmem:[%s11 + $0x30] sm:$0xf]
      %v1817 = vld [vmem:[%s11 + $0x34] sm:$0xf]
      %v1818 = vld [vmem:[%s11 + $0x38] sm:$0xf]
      %v1819 = vld [vmem:[%s11 + $0x3c] sm:$0xf]
      %v1820 = vld [vmem:[%s12] sm:$0x1]
      %v1822 = vlaneseq
      %v1823 = vshrl.u32 %v1822, 7
      %v1824 = vsub.s32 0, %v1823
      %v1825 = vrot.slane %v1820, %v1824
      %v1843 = vunpack.c.l.b16 %v1804
      %v1844 = vunpack.c.l.b16 %v1805
      %v1845 = vunpack.c.l.b16 %v1806
      %v1846 = vunpack.c.l.b16 %v1807
      %v1847 = vunpack.c.l.b16 %v1808
      %v1848 = vunpack.c.l.b16 %v1809
      %v1849 = vunpack.c.l.b16 %v1810
      %v1850 = vunpack.c.l.b16 %v1811
      %v1851 = vunpack.c.l.b16 %v1812
      %v1852 = vunpack.c.l.b16 %v1813
      %v1853 = vunpack.c.l.b16 %v1814
      %v1854 = vunpack.c.l.b16 %v1815
      %v1855 = vunpack.c.l.b16 %v1816
      %v1856 = vunpack.c.l.b16 %v1817
      %v1857 = vunpack.c.l.b16 %v1818
      %v1858 = vunpack.c.l.b16 %v1819
      %v1859 = vpack.c.b16 %v1844, %v1843
      %v1860 = vpack.c.b16 %v1846, %v1845
      %v1861 = vpack.c.b16 %v1848, %v1847
      %v1862 = vpack.c.b16 %v1850, %v1849
      %v1863 = vpack.c.b16 %v1852, %v1851
      %v1864 = vpack.c.b16 %v1854, %v1853
      %v1865 = vpack.c.b16 %v1856, %v1855
      %v1866 = vpack.c.b16 %v1858, %v1857
      %1875 = vmatprep.subr.bf16.mxu0 0
      %1876 = vmatpush1.bf16.msra.mxu0 %v1866
      %1877 = vmatprep.subr.bf16.mxu0 0
      %1878 = vmatpush1.bf16.msra.mxu0 %v1865
      %1879 = vmatprep.subr.bf16.mxu0 0
      %1880 = vmatpush1.bf16.msra.mxu0 %v1864
      %1881 = vmatprep.subr.bf16.mxu0 0
      %1882 = vmatpush1.bf16.msra.mxu0 %v1863
      %1883 = vmatprep.subr.bf16.mxu0 0
      %1884 = vmatpush1.bf16.msra.mxu0 %v1862
      %1885 = vmatprep.subr.bf16.mxu0 0
      %1886 = vmatpush1.bf16.msra.mxu0 %v1861
      %1887 = vmatprep.subr.bf16.mxu0 0
      %1888 = vmatpush1.bf16.msra.mxu0 %v1860
      %1889 = vmatprep.subr.bf16.mxu0 0
      %1890 = vmatpush1.bf16.msra.mxu0 %v1859
      %1891 = vmatprep.subr.bf16.mxu0 0
      %1892 = vmatpush2.bf16.msra.mxu0 0
      %1893 = vmatprep.subr.bf16.mxu0 0
      %1894 = vmatpush2.bf16.msra.mxu0 0
      %1895 = vmatprep.subr.bf16.mxu0 0
      %1896 = vmatpush2.bf16.msra.mxu0 0
      %1897 = vmatprep.subr.bf16.mxu0 0
      %1898 = vmatpush2.bf16.msra.mxu0 0
      %1899 = vmatprep.subr.bf16.mxu0 0
      %1900 = vmatpush2.bf16.msra.mxu0 0
      %1901 = vmatprep.subr.bf16.mxu0 0
      %1902 = vmatpush2.bf16.msra.mxu0 0
      %1903 = vmatprep.subr.bf16.mxu0 0
      %1904 = vmatpush2.bf16.msra.mxu0 0
      %1905 = vmatprep.subr.bf16.mxu0 0
      %1906 = vmatpush2.bf16.msra.mxu0 0
      %1907 = vmatprep.mubr.bf16.mxu0 0
      %1908 = vmatmul.mubr.bf16.gmra.mxu0 %v1800
      %v1909 = vpop.f32.mrf.mxu0
      %v1910 = vadd.f32 %v1825, %v1909
      %v1911 = vpop.f32.mrf.mxu0
      %v1912 = vpop.f32.mrf.mxu0
      %v1913 = vadd.f32 %v1825, %v1912
      %v1914 = vpop.f32.mrf.mxu0
      %1915 = vmatprep.mubr.bf16.mxu0 0
      %1916 = vmatmul.mubr.bf16.gmra.mxu0 %v1801
      %v1917 = vpop.f32.mrf.mxu0
      %v1918 = vadd.f32 %v1825, %v1917
      %v1919 = vpop.f32.mrf.mxu0
      %v1920 = vpop.f32.mrf.mxu0
      %v1921 = vadd.f32 %v1825, %v1920
      %v1922 = vpop.f32.mrf.mxu0
      %1923 = vmatprep.mubr.bf16.mxu0 0
      %1924 = vmatmul.mubr.bf16.gmra.mxu0 %v1802
      %v1925 = vpop.f32.mrf.mxu0
      %v1926 = vadd.f32 %v1825, %v1925
      %v1927 = vpop.f32.mrf.mxu0
      %v1928 = vpop.f32.mrf.mxu0
      %v1929 = vadd.f32 %v1825, %v1928
      %v1930 = vpop.f32.mrf.mxu0
      %1931 = vmatprep.mubr.bf16.mxu0 0
      %1932 = vmatmul.mubr.bf16.gmra.mxu0 %v1803
      %v1933 = vpop.f32.mrf.mxu0
      %v1934 = vadd.f32 %v1825, %v1933
      %v1935 = vpop.f32.mrf.mxu0
      %v1936 = vpop.f32.mrf.mxu0
      %v1937 = vadd.f32 %v1825, %v1936
      %v1938 = vpop.f32.mrf.mxu0
      %1939 = vdwg.mxu0
      %1940 = vmax.xlane.f32.xlu0 %v1910
      %v1941 = vpop.xlane.xlu0 %1940
      %1942 = vmax.xlane.f32.xlu0 %v1913
      %v1943 = vpop.xlane.xlu0 %1942
      %1944 = vmax.xlane.f32.xlu0 %v1918
      %v1945 = vpop.xlane.xlu0 %1944
      %1946 = vmax.xlane.f32.xlu0 %v1921
      %v1947 = vpop.xlane.xlu0 %1946
      %1948 = vmax.xlane.f32.xlu0 %v1926
      %v1949 = vpop.xlane.xlu0 %1948
      %1950 = vmax.xlane.f32.xlu0 %v1929
      %v1951 = vpop.xlane.xlu0 %1950
      %1952 = vmax.xlane.f32.xlu0 %v1934
      %v1953 = vpop.xlane.xlu0 %1952
      %1954 = vmax.xlane.f32.xlu0 %v1937
      %v1955 = vpop.xlane.xlu0 %1954
      %v1956 = vsub.f32 %v1910, %v1941
      %v1957 = vsub.f32 %v1913, %v1943
      %v1958 = vsub.f32 %v1918, %v1945
      %v1959 = vsub.f32 %v1921, %v1947
      %v1960 = vsub.f32 %v1926, %v1949
      %v1961 = vsub.f32 %v1929, %v1951
      %v1962 = vsub.f32 %v1934, %v1953
      %v1963 = vsub.f32 %v1937, %v1955
      %v1964 = vmul.f32 %v1956, 1.442695
      %v1965 = vpow.pop %v1964
      %v1966 = vmul.f32 %v1957, 1.442695
      %v1967 = vpow.pop %v1966
      %v1968 = vmul.f32 %v1958, 1.442695
      %v1969 = vpow.pop %v1968
      %v1970 = vmul.f32 %v1959, 1.442695
      %v1971 = vpow.pop %v1970
      %v1972 = vmul.f32 %v1960, 1.442695
      %v1973 = vpow.pop %v1972
      %v1974 = vmul.f32 %v1961, 1.442695
      %v1975 = vpow.pop %v1974
      %v1976 = vmul.f32 %v1962, 1.442695
      %v1977 = vpow.pop %v1976
      %v1978 = vmul.f32 %v1963, 1.442695
      %v1979 = vpow.pop %v1978
      %1980 = vadd.xlane.f32.xlu0 %v1965
      %v1981 = vpop.xlane.xlu0 %1980
      %1982 = vadd.xlane.f32.xlu0 %v1967
      %v1983 = vpop.xlane.xlu0 %1982
      %1984 = vadd.xlane.f32.xlu0 %v1969
      %v1985 = vpop.xlane.xlu0 %1984
      %1986 = vadd.xlane.f32.xlu0 %v1971
      %v1987 = vpop.xlane.xlu0 %1986
      %1988 = vadd.xlane.f32.xlu0 %v1973
      %v1989 = vpop.xlane.xlu0 %1988
      %1990 = vadd.xlane.f32.xlu0 %v1975
      %v1991 = vpop.xlane.xlu0 %1990
      %1992 = vadd.xlane.f32.xlu0 %v1977
      %v1993 = vpop.xlane.xlu0 %1992
      %1994 = vadd.xlane.f32.xlu0 %v1979
      %v1995 = vpop.xlane.xlu0 %1994
      %v1996 = vlog2.pop %v1981
      %v1997 = vmul.f32 %v1996, 0.6931472
      %v1998 = vlog2.pop %v1983
      %v1999 = vmul.f32 %v1998, 0.6931472
      %v2000 = vlog2.pop %v1985
      %v2001 = vmul.f32 %v2000, 0.6931472
      %v2002 = vlog2.pop %v1987
      %v2003 = vmul.f32 %v2002, 0.6931472
      %v2004 = vlog2.pop %v1989
      %v2005 = vmul.f32 %v2004, 0.6931472
      %v2006 = vlog2.pop %v1991
      %v2007 = vmul.f32 %v2006, 0.6931472
      %v2008 = vlog2.pop %v1993
      %v2009 = vmul.f32 %v2008, 0.6931472
      %v2010 = vlog2.pop %v1995
      %v2011 = vmul.f32 %v2010, 0.6931472
      %v2012 = vsub.f32 %v1956, %v1997
      %v2013 = vsub.f32 %v1957, %v1999
      %v2014 = vsub.f32 %v1958, %v2001
      %v2015 = vsub.f32 %v1959, %v2003
      %v2016 = vsub.f32 %v1960, %v2005
      %v2017 = vsub.f32 %v1961, %v2007
      %v2018 = vsub.f32 %v1962, %v2009
      %v2019 = vsub.f32 %v1963, %v2011
      %2020 = vst [vmem:[%s495] sm:$0xff] %v2012
      %2021 = vst [vmem:[%s495 + $0x8] sm:$0xff] %v2013
      %2022 = vst [vmem:[%s495 + $0x10] sm:$0xff] %v2014
      %2023 = vst [vmem:[%s495 + $0x18] sm:$0xff] %v2015
      %2024 = vst [vmem:[%s495 + $0x20] sm:$0xff] %v2016
      %2025 = vst [vmem:[%s495 + $0x28] sm:$0xff] %v2017
      %2026 = vst [vmem:[%s495 + $0x30] sm:$0xff] %v2018
      %2027 = vst [vmem:[%s495 + $0x38] sm:$0xff] %v2019
      %s2028 = smul.u32 8, %s29
      %p2029 = scmp.lt.s32.totalorder %s28, 1
      %s2030 = scalar_select %p2029, %s28, 1
      %p2031 = scmp.lt.s32.totalorder %s2028, 7
      %s2032 = scalar_select %p2031, %s2028, 7
      %s2033 = smul.addr %s2030, 8
      %s2034 = sadd.s32 %s2032, %s2033
      %s2035 = smul.addr %s2034, 8
      %s2036 = scalar_lea.vmem %s13, %s2035
      // Predicated region
      $region73: #{pointnet_dense_cls_forward.9} parent=71 // pred_check
        %p2037 = pneg %p341
      $region74: #{pointnet_dense_cls_forward.9} parent=71 // pred_check_branch
        %2039 = sbr.rel (%p2037) target = $region76
      $region75: #{pointnet_dense_cls_forward.9} parent=71 // pred_region
        %s2040 = smul.u32 8, %s29
      $region76: #{pointnet_dense_cls_forward.9} parent=71 // pred_fallthru
        _
    $region72: #{pointnet_dense_cls_forward.9} parent=5 // pred_fallthru
      _
    %p2041 = scmp.le.s32.totalorder 2, %s19
    // Predicated region
    $region77: #{pointnet_dense_cls_forward.9} parent=5 // pred_check
      %p2042 = pneg %p2041
    $region78: #{pointnet_dense_cls_forward.9} parent=5 // pred_check_branch
      %2044 = sbr.rel (%p2042) target = $region80
    $region79: #{pointnet_dense_cls_forward.9} parent=5 // pred_region
      %s2045 = ssub.s32 %s19, 2
      // Predicated region
      $region81: #{pointnet_dense_cls_forward.9} parent=79 // pred_check
        %p2046 = pneg %p347
      $region82: #{pointnet_dense_cls_forward.9} parent=79 // pred_check_branch
        %2048 = sbr.rel (%p2046) target = $region84
      $region83: #{pointnet_dense_cls_forward.9} parent=79 // pred_region
        %s2049 = smul.u32 8, %s31
        %p2050 = scmp.lt.s32.totalorder %s30, 1
        %s2051 = scalar_select %p2050, %s30, 1
        %p2052 = scmp.lt.s32.totalorder %s2049, 7
        %s2053 = scalar_select %p2052, %s2049, 7
        %s2054 = smul.addr %s2051, 8
        %s2055 = sadd.s32 %s2053, %s2054
        %s2056 = smul.addr %s2055, 8
        %s2057 = scalar_lea.vmem %s13, %s2056
      $region84: #{pointnet_dense_cls_forward.9} parent=79 // pred_fallthru
        _
    $region80: #{pointnet_dense_cls_forward.9} parent=5 // pred_fallthru
      _
  $region6: #{pointnet_dense_cls_forward.9} parent=0 // loop_footer
    %s23 = sadd.s32 1, %s19
  $region7: #{pointnet_dense_cls_forward.9} parent=0 // loop_footer_branch
    %18 = sbr.rel target = $region3
  $region8: #{pointnet_dense_cls_forward.9} parent=0 // loop_exit
    _

</llo_original>
